<compile_context>
chip_gen: v7x
topology: tpu7x:2x2x1
jax: 0.10.0
libtpu: 0.0.40
codegen_flags: <defaults>
</compile_context>

<pallas_src>
import functools

import jax
import jax.numpy as jnp
from jax.experimental import pallas as pl
from jax.experimental.pallas import tpu as pltpu

EPS = 1e-5

# Scoped-VMEM limit: ~96 MiB on 128 MiB chips (v5e/v6e), ~48 MiB on 64 MiB v7x.
try:
    _VMEM_CAP = int(getattr(pltpu.get_tpu_info(), "vmem_capacity_bytes",
                            64 * 1024 * 1024))
except Exception:  # pragma: no cover - conservative fallback
    _VMEM_CAP = 64 * 1024 * 1024
VMEM_LIMIT = int(min(96 * 1024 * 1024, max(32 * 1024 * 1024, _VMEM_CAP * 3 // 4)))


def _round_up(x, m):
    return ((x + m - 1) // m) * m


def _pick_hw_tile(hw, requested=None, target=1024):
    """Spatial (H*W) tile per image.

    Must be a multiple of 128 (it is the lane dim of the channel-major blocks)
    or the full H*W.  Falling back to the full image is always VMEM-safe here
    because per-image blocks are small (<= a few MB at ResNet shapes)."""
    if requested is not None and hw % requested == 0 and \
            (requested % 128 == 0 or requested == hw):
        return requested
    if hw <= target:
        return hw
    t = (target // 128) * 128
    while t >= 128:
        if hw % t == 0:
            return t
        t -= 128
    return hw


# ---------------------------------------------------------------------------
# Kernel bodies
# ---------------------------------------------------------------------------
def conv1_kernel(x_ref, w_ref, h_ref, stats_ref):
    """1x1 conv over a channel-major (Cin, THW) block of the NCHW input.

    Transposes the block in-kernel (XLU) so no NCHW->NHWC HBM pass is needed,
    accumulates per-image BN1 (sum, sumsq) from the f32 accumulator, and stores
    h1 as bf16 NHWC rows."""
    @pl.when(pl.program_id(1) == 0)
    def _():
        stats_ref[...] = jnp.zeros_like(stats_ref)

    a = x_ref[...].astype(jnp.bfloat16).T                     # (THW, Cin) bf16
    h = jnp.dot(a, w_ref[...], preferred_element_type=jnp.float32)
    stats_ref[...] += jnp.concatenate(
        [jnp.sum(h, axis=0, keepdims=True),
         jnp.sum(h * h, axis=0, keepdims=True)], axis=0)
    h_ref[...] = h.astype(h_ref.dtype)


def conv2_kernel(h1_ref, scale_ref, shift_ref, w2_ref, h2_ref, stats_ref,
                 pad_ref, *, H, W):
    """Per-image: BN1 normalize (folded scale/shift) + ReLU, 3x3 conv as nine
    accumulating MXU dots over a zero-halo bf16 scratch, BN2 partial stats."""
    P = h1_ref.shape[1]
    HW = H * W

    # Zero the whole padded scratch every step: correct under megacore
    # sharding (no cross-step / cross-core init assumption) and negligible
    # next to the conv matmuls.
    pad_ref[...] = jnp.zeros_like(pad_ref)

    a = jnp.maximum(
        h1_ref[...].astype(jnp.float32) * scale_ref[...] + shift_ref[...], 0.0)
    pad_ref[1:H + 1, 1:W + 1, :] = a.astype(jnp.bfloat16).reshape(H, W, P)

    acc = None
    for idx in range(9):
        ky, kx = idx // 3, idx % 3
        tap = pad_ref[ky:ky + H, kx:kx + W, :].reshape(HW, P)
        d = jnp.dot(tap, w2_ref[idx], preferred_element_type=jnp.float32)
        acc = d if acc is None else acc + d

    stats_ref[...] = jnp.concatenate(
        [jnp.sum(acc, axis=0, keepdims=True),
         jnp.sum(acc * acc, axis=0, keepdims=True)], axis=0)
    h2_ref[...] = acc.astype(h2_ref.dtype)


def conv3_kernel(h2_ref, scale_ref, shift_ref, w_ref, h3_ref, stats_ref):
    """BN2 normalize + ReLU + 1x1 conv; emits h3 already channel-major
    (Cout, THW) bf16 so K4 can write the NCHW output with no transpose."""
    @pl.when(pl.program_id(1) == 0)
    def _():
        stats_ref[...] = jnp.zeros_like(stats_ref)

    a = jnp.maximum(
        h2_ref[...].astype(jnp.float32) * scale_ref[...] + shift_ref[...], 0.0)
    h = jnp.dot(a.astype(jnp.bfloat16), w_ref[...],
                preferred_element_type=jnp.float32)            # (THW, Cout)
    stats_ref[...] += jnp.concatenate(
        [jnp.sum(h, axis=0, keepdims=True),
         jnp.sum(h * h, axis=0, keepdims=True)], axis=0)
    h3_ref[...] = h.astype(h3_ref.dtype).T                     # (Cout, THW)


def final_kernel(h3_ref, x_ref, scale_ref, shift_ref, out_ref):
    """BN3 normalize + residual add + ReLU.  Every block is channel-major
    (C, THW), so this reads the NCHW residual and writes the NCHW output
    directly (lane dim = spatial >= 128)."""
    out_ref[...] = jnp.maximum(
        h3_ref[...].astype(jnp.float32) * scale_ref[...] + shift_ref[...]
        + x_ref[...], 0.0)


# ---------------------------------------------------------------------------
# Wrapper
# ---------------------------------------------------------------------------
def _fold_bn(stats, count, gamma, beta):
    """Fold reduced (sum, sumsq) into per-channel scale / shift (f32)."""
    mean = stats[0:1] / count
    var = jnp.maximum(stats[1:2] / count - mean * mean, 0.0)
    scale = gamma * jax.lax.rsqrt(var + EPS)
    shift = beta - mean * scale
    return scale, shift


@functools.partial(jax.jit, static_argnames=("hw_tile",))
def bottleneck_forward(x_nchw, params, hw_tile=None):
    x = x_nchw.astype(jnp.float32)
    N, Cin, H, W = x.shape
    P = params["w1"].shape[1]
    assert Cin == 4 * P, "downsample=None requires inplanes == planes*4"

    HW = H * W
    R = N * HW
    THW = _pick_hw_tile(HW, hw_tile)
    T = HW // THW

    x_cr = x.reshape(N, Cin, HW)                 # channel-major rows (no transpose)

    w1 = params["w1"].astype(jnp.bfloat16)                       # (Cin, P)
    w2 = params["w2"].reshape(9, P, P).astype(jnp.bfloat16)      # HWIO -> (9, Ci, Co)
    w3 = params["w3"].astype(jnp.bfloat16)                       # (P, Cin)

    def cparams(sem):
        return pltpu.CompilerParams(dimension_semantics=sem,
                                    vmem_limit_bytes=VMEM_LIMIT)

    # ---- K1: conv1 (1x1) + BN1 partial stats ------------------------------
    h1, stats1 = pl.pallas_call(
        conv1_kernel,
        grid=(N, T),
        in_specs=[pl.BlockSpec((None, Cin, THW), lambda n, t: (n, 0, t)),
                  pl.BlockSpec((Cin, P), lambda n, t: (0, 0))],
        out_specs=[pl.BlockSpec((None, THW, P), lambda n, t: (n, t, 0)),
                   pl.BlockSpec((None, 2, P), lambda n, t: (n, 0, 0))],
        out_shape=[jax.ShapeDtypeStruct((N, HW, P), jnp.bfloat16),
                   jax.ShapeDtypeStruct((N, 2, P), jnp.float32)],
        compiler_params=cparams(("parallel", "arbitrary")),
    )(x_cr, w1)
    scale1, shift1 = _fold_bn(jnp.sum(stats1, axis=0), R,
                              params["g1"], params["b1"])

    # ---- K2: BN1 norm + ReLU + conv2 (3x3, 9 dots) + BN2 partial stats -----
    Wpad = _round_up(W + 2, 8)
    h2, stats2 = pl.pallas_call(
        functools.partial(conv2_kernel, H=H, W=W),
        grid=(N,),
        in_specs=[pl.BlockSpec((None, HW, P), lambda n: (n, 0, 0)),
                  pl.BlockSpec((1, P), lambda n: (0, 0)),
                  pl.BlockSpec((1, P), lambda n: (0, 0)),
                  pl.BlockSpec((9, P, P), lambda n: (0, 0, 0))],
        out_specs=[pl.BlockSpec((None, HW, P), lambda n: (n, 0, 0)),
                   pl.BlockSpec((None, 2, P), lambda n: (n, 0, 0))],
        out_shape=[jax.ShapeDtypeStruct((N, HW, P), jnp.bfloat16),
                   jax.ShapeDtypeStruct((N, 2, P), jnp.float32)],
        scratch_shapes=[pltpu.VMEM((H + 2, Wpad, P), jnp.bfloat16)],
        compiler_params=cparams(("parallel",)),
    )(h1, scale1, shift1, w2)
    scale2, shift2 = _fold_bn(jnp.sum(stats2, axis=0), R,
                              params["g2"], params["b2"])

    # ---- K3: BN2 norm + ReLU + conv3 (1x1) + BN3 partial stats -------------
    h3, stats3 = pl.pallas_call(
        conv3_kernel,
        grid=(N, T),
        in_specs=[pl.BlockSpec((None, THW, P), lambda n, t: (n, t, 0)),
                  pl.BlockSpec((1, P), lambda n, t: (0, 0)),
                  pl.BlockSpec((1, P), lambda n, t: (0, 0)),
                  pl.BlockSpec((P, Cin), lambda n, t: (0, 0))],
        out_specs=[pl.BlockSpec((None, Cin, THW), lambda n, t: (n, 0, t)),
                   pl.BlockSpec((None, 2, Cin), lambda n, t: (n, 0, 0))],
        out_shape=[jax.ShapeDtypeStruct((N, Cin, HW), jnp.bfloat16),
                   jax.ShapeDtypeStruct((N, 2, Cin), jnp.float32)],
        compiler_params=cparams(("parallel", "arbitrary")),
    )(h2, scale2, shift2, w3)
    scale3, shift3 = _fold_bn(jnp.sum(stats3, axis=0), R,
                              params["g3"], params["b3"])

    # ---- K4: BN3 norm + residual add + ReLU, NCHW output directly ----------
    out = pl.pallas_call(
        final_kernel,
        grid=(N, T),
        in_specs=[pl.BlockSpec((None, Cin, THW), lambda n, t: (n, 0, t)),
                  pl.BlockSpec((None, Cin, THW), lambda n, t: (n, 0, t)),
                  pl.BlockSpec((Cin, 1), lambda n, t: (0, 0)),
                  pl.BlockSpec((Cin, 1), lambda n, t: (0, 0))],
        out_specs=pl.BlockSpec((None, Cin, THW), lambda n, t: (n, 0, t)),
        out_shape=jax.ShapeDtypeStruct((N, Cin, HW), jnp.float32),
        compiler_params=cparams(("parallel", "parallel")),
    )(h3, x_cr, scale3.reshape(Cin, 1), shift3.reshape(Cin, 1))

    return out.reshape(N, Cin, H, W)             # NCHW, no transpose needed


# ---------------------------------------------------------------------------
# Pure-JAX reference + params
# ---------------------------------------------------------------------------
def reference_forward(x_nchw, params, matmul_dtype=jnp.float32,
                      act_dtype=jnp.float32):
    """Training-mode-BN forward.  matmul_dtype=bf16 / act_dtype=bf16 mirrors
    the kernels (bf16 MXU operands, bf16 inter-stage activations, BN stats
    from the f32 accumulator); f32/f32 is the PyTorch-exact math."""
    x = jnp.transpose(x_nchw, (0, 2, 3, 1)).astype(jnp.float32)
    N, H, W, Cin = x.shape
    P = params["w1"].shape[1]

    def mm(a, w):
        return jnp.dot(a.astype(matmul_dtype), w.astype(matmul_dtype),
                       preferred_element_type=jnp.float32)

    def bn(h, g, b):
        # Stats from the full-precision pre-activation; normalize the
        # act_dtype-rounded value that is actually stored between kernels.
        mean = jnp.mean(h, axis=(0, 1, 2), keepdims=True)
        var = jnp.mean((h - mean) ** 2, axis=(0, 1, 2), keepdims=True)
        hr = h.astype(act_dtype).astype(jnp.float32)
        return (hr - mean) * jax.lax.rsqrt(var + EPS) * g + b

    h = mm(x.reshape(-1, Cin), params["w1"]).reshape(N, H, W, P)
    h = jnp.maximum(bn(h, params["g1"], params["b1"]), 0.0)
    h = jax.lax.conv_general_dilated(
        h.astype(matmul_dtype), params["w2"].astype(matmul_dtype),
        window_strides=(1, 1), padding=[(1, 1), (1, 1)],
        dimension_numbers=("NHWC", "HWIO", "NHWC"),
        preferred_element_type=jnp.float32)
    h = jnp.maximum(bn(h, params["g2"], params["b2"]), 0.0)
    h = bn(mm(h.reshape(-1, P), params["w3"]).reshape(N, H, W, Cin),
           params["g3"], params["b3"])
    return jnp.transpose(jnp.maximum(h + x, 0.0), (0, 3, 1, 2))


def init_params(key, inplanes, planes):
    assert inplanes == planes * 4, "downsample=None requires inplanes == planes*4"
    ks = jax.random.split(key, 6)
    return {
        # conv weights stored channels-last friendly:
        #   w1: (Cin, planes)            (PyTorch (planes, Cin, 1, 1))
        #   w2: (3, 3, planes, planes)   HWIO (PyTorch (planes, planes, 3, 3))
        #   w3: (planes, planes*4)       (PyTorch (planes*4, planes, 1, 1))
        "w1": 0.1 * jax.random.normal(ks[0], (inplanes, planes), jnp.float32),
        "w2": 0.1 * jax.random.normal(ks[1], (3, 3, planes, planes), jnp.float32),
        "w3": 0.1 * jax.random.normal(ks[2], (planes, planes * 4), jnp.float32),
        # BN affine params, shape (1, C) so they broadcast against (..., C).
        "g1": 1.0 + 0.1 * jax.random.normal(ks[3], (1, planes), jnp.float32),
        "b1": 0.05 * jnp.ones((1, planes), jnp.float32),
        "g2": 1.0 + 0.1 * jax.random.normal(ks[4], (1, planes), jnp.float32),
        "b2": -0.05 * jnp.ones((1, planes), jnp.float32),
        "g3": 1.0 + 0.1 * jax.random.normal(ks[5], (1, planes * 4), jnp.float32),
        "b3": 0.02 * jnp.ones((1, planes * 4), jnp.float32),
    }


if __name__ == "__main__":
    key = jax.random.PRNGKey(0)
    k_x, k_p = jax.random.split(key)

    N, planes, H, W = 2, 4, 16, 16
    inplanes = planes * 4                      # 16: identity residual is valid
    x = jax.random.normal(k_x, (N, inplanes, H, W), jnp.float32)   # NCHW

    params = init_params(k_p, inplanes, planes)

    # hw_tile=128 -> 2 spatial tiles per image, exercising the cross-step
    # BN-stats accumulation and the (parallel, arbitrary) grid.
    out = jax.block_until_ready(bottleneck_forward(x, params, hw_tile=128))
    assert out.shape == (N, inplanes, H, W)

    # Tight check vs a reference mirroring the kernel's bf16 MXU operands and
    # bf16 inter-stage activations.
    ref_bf16 = jax.block_until_ready(
        reference_forward(x, params, matmul_dtype=jnp.bfloat16,
                          act_dtype=jnp.bfloat16))
    err = float(jnp.max(jnp.abs(out - ref_bf16)))
    assert jnp.allclose(out, ref_bf16, atol=1e-2, rtol=1e-2), err

    # Loose sanity check vs the full-f32 (PyTorch-exact) forward; the only
    # difference is bf16 operand/activation rounding through three BN stages.
    ref_f32 = jax.block_until_ready(reference_forward(x, params))
    assert float(jnp.max(jnp.abs(out - ref_f32))) < 0.3

    print("KERNEL_OK")
</pallas_src>

<mosaic_0001>
module attributes {stable_mosaic.version = 11 : i64} {
  func.func @conv1_kernel(%arg0: i32, %arg1: i32, %arg2: memref<1x16x128xf32, #tpu.memory_space<vmem>>, %arg3: memref<16x4xbf16, #tpu.memory_space<vmem>>, %arg4: memref<1x128x4xbf16, #tpu.memory_space<vmem>>, %arg5: memref<1x2x4xf32, #tpu.memory_space<vmem>>) attributes {dimension_semantics = [#tpu.dimension_semantics<parallel>, #tpu.dimension_semantics<arbitrary>], iteration_bounds = array<i64: 2, 2>, scalar_prefetch = 0 : i64, scratch_operands = 0 : i64, tpu.core_type = #tpu.core_type<tc>, window_params = [{transform_indices = @transform_0, window_bounds = array<i64: 1, 16, 128>}, {pipeline_mode = #tpu.pipeline_mode<synchronous>, transform_indices = @transform_1, window_bounds = array<i64: 16, 4>}, {transform_indices = @transform_2, window_bounds = array<i64: 1, 128, 4>}, {transform_indices = @transform_3, window_bounds = array<i64: 1, 2, 4>}]} {
    %c0_i32 = arith.constant 0 : i32
    %0 = arith.cmpi eq, %arg1, %c0_i32 : i32
    %1 = arith.extui %0 : i1 to i32
    %c0_i32_0 = arith.constant 0 : i32
    %2 = arith.cmpi ne, %1, %c0_i32_0 : i32
    scf.if %2 {
      %cst_16 = arith.constant 0.000000e+00 : f32
      %25 = vector.broadcast %cst_16 : f32 to vector<2x4xf32>
      %c0_17 = arith.constant 0 : index
      %c0_18 = arith.constant 0 : index
      %c0_19 = arith.constant 0 : index
      %26 = vector.load %arg5[%c0_17, %c0_18, %c0_19] : memref<1x2x4xf32, #tpu.memory_space<vmem>>, vector<1x2x4xf32>
      %27 = vector.shape_cast %26 : vector<1x2x4xf32> to vector<2x4xf32>
      %28 = vector.shape_cast %25 : vector<2x4xf32> to vector<1x2x4xf32>
      tpu.vector_store %arg5[%c0_17, %c0_18, %c0_19], %28 {strides = array<i32>} : memref<1x2x4xf32, #tpu.memory_space<vmem>>, vector<1x2x4xf32>,
    } else {
    }
    %c0 = arith.constant 0 : index
    %c0_1 = arith.constant 0 : index
    %c0_2 = arith.constant 0 : index
    %3 = vector.load %arg2[%c0, %c0_1, %c0_2] : memref<1x16x128xf32, #tpu.memory_space<vmem>>, vector<1x16x128xf32>
    %4 = vector.shape_cast %3 : vector<1x16x128xf32> to vector<16x128xf32>
    %5 = arith.truncf %4 : vector<16x128xf32> to vector<16x128xbf16>
    %6 = tpu.transpose %5, [1, 0] : vector<16x128xbf16> -> vector<128x16xbf16>
    %c0_3 = arith.constant 0 : index
    %c0_4 = arith.constant 0 : index
    %7 = vector.load %arg3[%c0_3, %c0_4] : memref<16x4xbf16, #tpu.memory_space<vmem>>, vector<16x4xbf16>
    %cst = arith.constant dense<0.000000e+00> : vector<128x4xf32>
    %8 = tpu.matmul %6, %7, %cst {dimension_numbers = #tpu.dot_dimension_numbers<[1], [0], [0], [1], [0, 0, 1, 1], [], []>} : vector<128x16xbf16>, vector<16x4xbf16>, vector<128x4xf32> -> vector<128x4xf32>
    %c0_5 = arith.constant 0 : index
    %c0_6 = arith.constant 0 : index
    %c0_7 = arith.constant 0 : index
    %9 = vector.load %arg5[%c0_5, %c0_6, %c0_7] : memref<1x2x4xf32, #tpu.memory_space<vmem>>, vector<1x2x4xf32>
    %10 = vector.shape_cast %9 : vector<1x2x4xf32> to vector<2x4xf32>
    %cst_8 = arith.constant dense<0.000000e+00> : vector<4xf32>
    %11 = vector.multi_reduction <add>, %8, %cst_8 [0] : vector<128x4xf32> to vector<4xf32>
    %12 = vector.shape_cast %11 : vector<4xf32> to vector<1x4xf32>
    %13 = arith.mulf %8, %8 : vector<128x4xf32>
    %cst_9 = arith.constant dense<0.000000e+00> : vector<4xf32>
    %14 = vector.multi_reduction <add>, %13, %cst_9 [0] : vector<128x4xf32> to vector<4xf32>
    %15 = vector.shape_cast %14 : vector<4xf32> to vector<1x4xf32>
    %16 = tpu.concatenate %12, %15 in 0 : vector<1x4xf32>, vector<1x4xf32> -> vector<2x4xf32>
    %17 = arith.addf %10, %16 : vector<2x4xf32>
    %c0_10 = arith.constant 0 : index
    %c0_11 = arith.constant 0 : index
    %c0_12 = arith.constant 0 : index
    %18 = vector.load %arg5[%c0_10, %c0_11, %c0_12] : memref<1x2x4xf32, #tpu.memory_space<vmem>>, vector<1x2x4xf32>
    %19 = vector.shape_cast %18 : vector<1x2x4xf32> to vector<2x4xf32>
    %20 = vector.shape_cast %17 : vector<2x4xf32> to vector<1x2x4xf32>
    tpu.vector_store %arg5[%c0_10, %c0_11, %c0_12], %20 {strides = array<i32>} : memref<1x2x4xf32, #tpu.memory_space<vmem>>, vector<1x2x4xf32>,
    %21 = arith.truncf %8 : vector<128x4xf32> to vector<128x4xbf16>
    %c0_13 = arith.constant 0 : index
    %c0_14 = arith.constant 0 : index
    %c0_15 = arith.constant 0 : index
    %22 = vector.load %arg4[%c0_13, %c0_14, %c0_15] : memref<1x128x4xbf16, #tpu.memory_space<vmem>>, vector<1x128x4xbf16>
    %23 = vector.shape_cast %22 : vector<1x128x4xbf16> to vector<128x4xbf16>
    %24 = vector.shape_cast %21 : vector<128x4xbf16> to vector<1x128x4xbf16>
    tpu.vector_store %arg4[%c0_13, %c0_14, %c0_15], %24 {strides = array<i32>} : memref<1x128x4xbf16, #tpu.memory_space<vmem>>, vector<1x128x4xbf16>,
    return
  }
  func.func @transform_0(%arg0: i32, %arg1: i32) -> (i32, i32, i32) {
    %c0_i32 = arith.constant 0 : i32
    %c0_i32_0 = arith.constant 0 : i32
    return %arg0, %c0_i32, %arg1 : i32, i32, i32
  }
  func.func @transform_1(%arg0: i32, %arg1: i32) -> (i32, i32) {
    %c0_i32 = arith.constant 0 : i32
    %c0_i32_0 = arith.constant 0 : i32
    %c0_i32_1 = arith.constant 0 : i32
    return %c0_i32, %c0_i32_0 : i32, i32
  }
  func.func @transform_2(%arg0: i32, %arg1: i32) -> (i32, i32, i32) {
    %c0_i32 = arith.constant 0 : i32
    %c0_i32_0 = arith.constant 0 : i32
    return %arg0, %arg1, %c0_i32 : i32, i32, i32
  }
  func.func @transform_3(%arg0: i32, %arg1: i32) -> (i32, i32, i32) {
    %c0_i32 = arith.constant 0 : i32
    %c0_i32_0 = arith.constant 0 : i32
    %c0_i32_1 = arith.constant 0 : i32
    return %arg0, %c0_i32, %c0_i32_0 : i32, i32, i32
  }
}

module attributes {stable_mosaic.version = 11 : i64} {
  func.func @conv3_kernel(%arg0: i32, %arg1: i32, %arg2: memref<1x128x4xbf16, #tpu.memory_space<vmem>>, %arg3: memref<1x4xf32, #tpu.memory_space<vmem>>, %arg4: memref<1x4xf32, #tpu.memory_space<vmem>>, %arg5: memref<4x16xbf16, #tpu.memory_space<vmem>>, %arg6: memref<1x16x128xbf16, #tpu.memory_space<vmem>>, %arg7: memref<1x2x16xf32, #tpu.memory_space<vmem>>) attributes {dimension_semantics = [#tpu.dimension_semantics<parallel>, #tpu.dimension_semantics<arbitrary>], iteration_bounds = array<i64: 2, 2>, scalar_prefetch = 0 : i64, scratch_operands = 0 : i64, tpu.core_type = #tpu.core_type<tc>, window_params = [{transform_indices = @transform_0, window_bounds = array<i64: 1, 128, 4>}, {pipeline_mode = #tpu.pipeline_mode<synchronous>, transform_indices = @transform_1, window_bounds = array<i64: 1, 4>}, {pipeline_mode = #tpu.pipeline_mode<synchronous>, transform_indices = @transform_2, window_bounds = array<i64: 1, 4>}, {pipeline_mode = #tpu.pipeline_mode<synchronous>, transform_indices = @transform_3, window_bounds = array<i64: 4, 16>}, {transform_indices = @transform_4, window_bounds = array<i64: 1, 16, 128>}, {transform_indices = @transform_5, window_bounds = array<i64: 1, 2, 16>}]} {
    %c0_i32 = arith.constant 0 : i32
    %0 = arith.cmpi eq, %arg1, %c0_i32 : i32
    %1 = arith.extui %0 : i1 to i32
    %c0_i32_0 = arith.constant 0 : i32
    %2 = arith.cmpi ne, %1, %c0_i32_0 : i32
    scf.if %2 {
      %cst_21 = arith.constant 0.000000e+00 : f32
      %34 = vector.broadcast %cst_21 : f32 to vector<2x16xf32>
      %c0_22 = arith.constant 0 : index
      %c0_23 = arith.constant 0 : index
      %c0_24 = arith.constant 0 : index
      %35 = vector.load %arg7[%c0_22, %c0_23, %c0_24] : memref<1x2x16xf32, #tpu.memory_space<vmem>>, vector<1x2x16xf32>
      %36 = vector.shape_cast %35 : vector<1x2x16xf32> to vector<2x16xf32>
      %37 = vector.shape_cast %34 : vector<2x16xf32> to vector<1x2x16xf32>
      tpu.vector_store %arg7[%c0_22, %c0_23, %c0_24], %37 {strides = array<i32>} : memref<1x2x16xf32, #tpu.memory_space<vmem>>, vector<1x2x16xf32>,
    } else {
    }
    %c0 = arith.constant 0 : index
    %c0_1 = arith.constant 0 : index
    %c0_2 = arith.constant 0 : index
    %3 = vector.load %arg2[%c0, %c0_1, %c0_2] : memref<1x128x4xbf16, #tpu.memory_space<vmem>>, vector<1x128x4xbf16>
    %4 = vector.shape_cast %3 : vector<1x128x4xbf16> to vector<128x4xbf16>
    %5 = arith.extf %4 : vector<128x4xbf16> to vector<128x4xf32>
    %c0_3 = arith.constant 0 : index
    %c0_4 = arith.constant 0 : index
    %6 = vector.load %arg3[%c0_3, %c0_4] : memref<1x4xf32, #tpu.memory_space<vmem>>, vector<1x4xf32>
    %7 = vector.broadcast %6 : vector<1x4xf32> to vector<128x4xf32>
    %8 = arith.mulf %5, %7 : vector<128x4xf32>
    %c0_5 = arith.constant 0 : index
    %c0_6 = arith.constant 0 : index
    %9 = vector.load %arg4[%c0_5, %c0_6] : memref<1x4xf32, #tpu.memory_space<vmem>>, vector<1x4xf32>
    %10 = vector.broadcast %9 : vector<1x4xf32> to vector<128x4xf32>
    %11 = arith.addf %8, %10 : vector<128x4xf32>
    %cst = arith.constant 0.000000e+00 : f32
    %12 = vector.broadcast %cst : f32 to vector<128x4xf32>
    %13 = arith.maximumf %11, %12 : vector<128x4xf32>
    %14 = arith.truncf %13 : vector<128x4xf32> to vector<128x4xbf16>
    %c0_7 = arith.constant 0 : index
    %c0_8 = arith.constant 0 : index
    %15 = vector.load %arg5[%c0_7, %c0_8] : memref<4x16xbf16, #tpu.memory_space<vmem>>, vector<4x16xbf16>
    %cst_9 = arith.constant dense<0.000000e+00> : vector<128x16xf32>
    %16 = tpu.matmul %14, %15, %cst_9 {dimension_numbers = #tpu.dot_dimension_numbers<[1], [0], [0], [1], [0, 0, 1, 1], [], []>} : vector<128x4xbf16>, vector<4x16xbf16>, vector<128x16xf32> -> vector<128x16xf32>
    %c0_10 = arith.constant 0 : index
    %c0_11 = arith.constant 0 : index
    %c0_12 = arith.constant 0 : index
    %17 = vector.load %arg7[%c0_10, %c0_11, %c0_12] : memref<1x2x16xf32, #tpu.memory_space<vmem>>, vector<1x2x16xf32>
    %18 = vector.shape_cast %17 : vector<1x2x16xf32> to vector<2x16xf32>
    %cst_13 = arith.constant dense<0.000000e+00> : vector<16xf32>
    %19 = vector.multi_reduction <add>, %16, %cst_13 [0] : vector<128x16xf32> to vector<16xf32>
    %20 = vector.shape_cast %19 : vector<16xf32> to vector<1x16xf32>
    %21 = arith.mulf %16, %16 : vector<128x16xf32>
    %cst_14 = arith.constant dense<0.000000e+00> : vector<16xf32>
    %22 = vector.multi_reduction <add>, %21, %cst_14 [0] : vector<128x16xf32> to vector<16xf32>
    %23 = vector.shape_cast %22 : vector<16xf32> to vector<1x16xf32>
    %24 = tpu.concatenate %20, %23 in 0 : vector<1x16xf32>, vector<1x16xf32> -> vector<2x16xf32>
    %25 = arith.addf %18, %24 : vector<2x16xf32>
    %c0_15 = arith.constant 0 : index
    %c0_16 = arith.constant 0 : index
    %c0_17 = arith.constant 0 : index
    %26 = vector.load %arg7[%c0_15, %c0_16, %c0_17] : memref<1x2x16xf32, #tpu.memory_space<vmem>>, vector<1x2x16xf32>
    %27 = vector.shape_cast %26 : vector<1x2x16xf32> to vector<2x16xf32>
    %28 = vector.shape_cast %25 : vector<2x16xf32> to vector<1x2x16xf32>
    tpu.vector_store %arg7[%c0_15, %c0_16, %c0_17], %28 {strides = array<i32>} : memref<1x2x16xf32, #tpu.memory_space<vmem>>, vector<1x2x16xf32>,
    %29 = arith.truncf %16 : vector<128x16xf32> to vector<128x16xbf16>
    %30 = tpu.transpose %29, [1, 0] : vector<128x16xbf16> -> vector<16x128xbf16>
    %c0_18 = arith.constant 0 : index
    %c0_19 = arith.constant 0 : index
    %c0_20 = arith.constant 0 : index
    %31 = vector.load %arg6[%c0_18, %c0_19, %c0_20] : memref<1x16x128xbf16, #tpu.memory_space<vmem>>, vector<1x16x128xbf16>
    %32 = vector.shape_cast %31 : vector<1x16x128xbf16> to vector<16x128xbf16>
    %33 = vector.shape_cast %30 : vector<16x128xbf16> to vector<1x16x128xbf16>
    tpu.vector_store %arg6[%c0_18, %c0_19, %c0_20], %33 {strides = array<i32>} : memref<1x16x128xbf16, #tpu.memory_space<vmem>>, vector<1x16x128xbf16>,
    return
  }
  func.func @transform_0(%arg0: i32, %arg1: i32) -> (i32, i32, i32) {
    %c0_i32 = arith.constant 0 : i32
    %c0_i32_0 = arith.constant 0 : i32
    return %arg0, %arg1, %c0_i32 : i32, i32, i32
  }
  func.func @transform_1(%arg0: i32, %arg1: i32) -> (i32, i32) {
    %c0_i32 = arith.constant 0 : i32
    %c0_i32_0 = arith.constant 0 : i32
    %c0_i32_1 = arith.constant 0 : i32
    return %c0_i32, %c0_i32_0 : i32, i32
  }
  func.func @transform_2(%arg0: i32, %arg1: i32) -> (i32, i32) {
    %c0_i32 = arith.constant 0 : i32
    %c0_i32_0 = arith.constant 0 : i32
    %c0_i32_1 = arith.constant 0 : i32
    return %c0_i32, %c0_i32_0 : i32, i32
  }
  func.func @transform_3(%arg0: i32, %arg1: i32) -> (i32, i32) {
    %c0_i32 = arith.constant 0 : i32
    %c0_i32_0 = arith.constant 0 : i32
    %c0_i32_1 = arith.constant 0 : i32
    return %c0_i32, %c0_i32_0 : i32, i32
  }
  func.func @transform_4(%arg0: i32, %arg1: i32) -> (i32, i32, i32) {
    %c0_i32 = arith.constant 0 : i32
    %c0_i32_0 = arith.constant 0 : i32
    return %arg0, %c0_i32, %arg1 : i32, i32, i32
  }
  func.func @transform_5(%arg0: i32, %arg1: i32) -> (i32, i32, i32) {
    %c0_i32 = arith.constant 0 : i32
    %c0_i32_0 = arith.constant 0 : i32
    %c0_i32_1 = arith.constant 0 : i32
    return %arg0, %c0_i32, %c0_i32_0 : i32, i32, i32
  }
}

module attributes {stable_mosaic.version = 11 : i64} {
  func.func @conv2_kernel(%arg0: i32, %arg1: memref<1x256x4xbf16, #tpu.memory_space<vmem>>, %arg2: memref<1x4xf32, #tpu.memory_space<vmem>>, %arg3: memref<1x4xf32, #tpu.memory_space<vmem>>, %arg4: memref<9x4x4xbf16, #tpu.memory_space<vmem>>, %arg5: memref<1x256x4xbf16, #tpu.memory_space<vmem>>, %arg6: memref<1x2x4xf32, #tpu.memory_space<vmem>>, %arg7: memref<18x24x4xbf16, #tpu.memory_space<vmem>>) attributes {dimension_semantics = [#tpu.dimension_semantics<parallel>], iteration_bounds = array<i64: 2>, scalar_prefetch = 0 : i64, scratch_operands = 1 : i64, tpu.core_type = #tpu.core_type<tc>, window_params = [{transform_indices = @transform_0, window_bounds = array<i64: 1, 256, 4>}, {pipeline_mode = #tpu.pipeline_mode<synchronous>, transform_indices = @transform_1, window_bounds = array<i64: 1, 4>}, {pipeline_mode = #tpu.pipeline_mode<synchronous>, transform_indices = @transform_2, window_bounds = array<i64: 1, 4>}, {pipeline_mode = #tpu.pipeline_mode<synchronous>, transform_indices = @transform_3, window_bounds = array<i64: 9, 4, 4>}, {transform_indices = @transform_4, window_bounds = array<i64: 1, 256, 4>}, {transform_indices = @transform_5, window_bounds = array<i64: 1, 2, 4>}]} {
    %cst = arith.constant 0.000000e+00 : bf16
    %0 = vector.broadcast %cst : bf16 to vector<18x24x4xbf16>
    %c0 = arith.constant 0 : index
    %c0_0 = arith.constant 0 : index
    %c0_1 = arith.constant 0 : index
    %1 = vector.load %arg7[%c0, %c0_0, %c0_1] : memref<18x24x4xbf16, #tpu.memory_space<vmem>>, vector<18x24x4xbf16>
    tpu.vector_store %arg7[%c0, %c0_0, %c0_1], %0 {strides = array<i32>} : memref<18x24x4xbf16, #tpu.memory_space<vmem>>, vector<18x24x4xbf16>,
    %c0_2 = arith.constant 0 : index
    %c0_3 = arith.constant 0 : index
    %c0_4 = arith.constant 0 : index
    %2 = vector.load %arg1[%c0_2, %c0_3, %c0_4] : memref<1x256x4xbf16, #tpu.memory_space<vmem>>, vector<1x256x4xbf16>
    %3 = vector.shape_cast %2 : vector<1x256x4xbf16> to vector<256x4xbf16>
    %4 = arith.extf %3 : vector<256x4xbf16> to vector<256x4xf32>
    %c0_5 = arith.constant 0 : index
    %c0_6 = arith.constant 0 : index
    %5 = vector.load %arg2[%c0_5, %c0_6] : memref<1x4xf32, #tpu.memory_space<vmem>>, vector<1x4xf32>
    %6 = vector.broadcast %5 : vector<1x4xf32> to vector<256x4xf32>
    %7 = arith.mulf %4, %6 : vector<256x4xf32>
    %c0_7 = arith.constant 0 : index
    %c0_8 = arith.constant 0 : index
    %8 = vector.load %arg3[%c0_7, %c0_8] : memref<1x4xf32, #tpu.memory_space<vmem>>, vector<1x4xf32>
    %9 = vector.broadcast %8 : vector<1x4xf32> to vector<256x4xf32>
    %10 = arith.addf %7, %9 : vector<256x4xf32>
    %cst_9 = arith.constant 0.000000e+00 : f32
    %11 = vector.broadcast %cst_9 : f32 to vector<256x4xf32>
    %12 = arith.maximumf %10, %11 : vector<256x4xf32>
    %13 = arith.truncf %12 : vector<256x4xf32> to vector<256x4xbf16>
    %14 = vector.shape_cast %13 : vector<256x4xbf16> to vector<16x16x4xbf16>
    %c1 = arith.constant 1 : index
    %c1_10 = arith.constant 1 : index
    %c0_11 = arith.constant 0 : index
    %15 = vector.load %arg7[%c1, %c1_10, %c0_11] : memref<18x24x4xbf16, #tpu.memory_space<vmem>>, vector<16x16x4xbf16>
    tpu.vector_store %arg7[%c1, %c1_10, %c0_11], %14 {strides = array<i32>} : memref<18x24x4xbf16, #tpu.memory_space<vmem>>, vector<16x16x4xbf16>,
    %c0_12 = arith.constant 0 : index
    %c0_13 = arith.constant 0 : index
    %c0_14 = arith.constant 0 : index
    %16 = vector.load %arg7[%c0_12, %c0_13, %c0_14] : memref<18x24x4xbf16, #tpu.memory_space<vmem>>, vector<16x16x4xbf16>
    %17 = vector.shape_cast %16 : vector<16x16x4xbf16> to vector<256x4xbf16>
    %c0_15 = arith.constant 0 : index
    %c0_16 = arith.constant 0 : index
    %c0_17 = arith.constant 0 : index
    %18 = vector.load %arg4[%c0_15, %c0_16, %c0_17] : memref<9x4x4xbf16, #tpu.memory_space<vmem>>, vector<1x4x4xbf16>
    %19 = vector.shape_cast %18 : vector<1x4x4xbf16> to vector<4x4xbf16>
    %cst_18 = arith.constant dense<0.000000e+00> : vector<256x4xf32>
    %20 = tpu.matmul %17, %19, %cst_18 {dimension_numbers = #tpu.dot_dimension_numbers<[1], [0], [0], [1], [0, 0, 1, 1], [], []>} : vector<256x4xbf16>, vector<4x4xbf16>, vector<256x4xf32> -> vector<256x4xf32>
    %c0_19 = arith.constant 0 : index
    %c1_20 = arith.constant 1 : index
    %c0_21 = arith.constant 0 : index
    %21 = vector.load %arg7[%c0_19, %c1_20, %c0_21] : memref<18x24x4xbf16, #tpu.memory_space<vmem>>, vector<16x16x4xbf16>
    %22 = vector.shape_cast %21 : vector<16x16x4xbf16> to vector<256x4xbf16>
    %c1_22 = arith.constant 1 : index
    %c0_23 = arith.constant 0 : index
    %c0_24 = arith.constant 0 : index
    %23 = vector.load %arg4[%c1_22, %c0_23, %c0_24] : memref<9x4x4xbf16, #tpu.memory_space<vmem>>, vector<1x4x4xbf16>
    %24 = vector.shape_cast %23 : vector<1x4x4xbf16> to vector<4x4xbf16>
    %cst_25 = arith.constant dense<0.000000e+00> : vector<256x4xf32>
    %25 = tpu.matmul %22, %24, %cst_25 {dimension_numbers = #tpu.dot_dimension_numbers<[1], [0], [0], [1], [0, 0, 1, 1], [], []>} : vector<256x4xbf16>, vector<4x4xbf16>, vector<256x4xf32> -> vector<256x4xf32>
    %26 = arith.addf %20, %25 : vector<256x4xf32>
    %c0_26 = arith.constant 0 : index
    %c2 = arith.constant 2 : index
    %c0_27 = arith.constant 0 : index
    %27 = vector.load %arg7[%c0_26, %c2, %c0_27] : memref<18x24x4xbf16, #tpu.memory_space<vmem>>, vector<16x16x4xbf16>
    %28 = vector.shape_cast %27 : vector<16x16x4xbf16> to vector<256x4xbf16>
    %c2_28 = arith.constant 2 : index
    %c0_29 = arith.constant 0 : index
    %c0_30 = arith.constant 0 : index
    %29 = vector.load %arg4[%c2_28, %c0_29, %c0_30] : memref<9x4x4xbf16, #tpu.memory_space<vmem>>, vector<1x4x4xbf16>
    %30 = vector.shape_cast %29 : vector<1x4x4xbf16> to vector<4x4xbf16>
    %cst_31 = arith.constant dense<0.000000e+00> : vector<256x4xf32>
    %31 = tpu.matmul %28, %30, %cst_31 {dimension_numbers = #tpu.dot_dimension_numbers<[1], [0], [0], [1], [0, 0, 1, 1], [], []>} : vector<256x4xbf16>, vector<4x4xbf16>, vector<256x4xf32> -> vector<256x4xf32>
    %32 = arith.addf %26, %31 : vector<256x4xf32>
    %c1_32 = arith.constant 1 : index
    %c0_33 = arith.constant 0 : index
    %c0_34 = arith.constant 0 : index
    %33 = vector.load %arg7[%c1_32, %c0_33, %c0_34] : memref<18x24x4xbf16, #tpu.memory_space<vmem>>, vector<16x16x4xbf16>
    %34 = vector.shape_cast %33 : vector<16x16x4xbf16> to vector<256x4xbf16>
    %c3 = arith.constant 3 : index
    %c0_35 = arith.constant 0 : index
    %c0_36 = arith.constant 0 : index
    %35 = vector.load %arg4[%c3, %c0_35, %c0_36] : memref<9x4x4xbf16, #tpu.memory_space<vmem>>, vector<1x4x4xbf16>
    %36 = vector.shape_cast %35 : vector<1x4x4xbf16> to vector<4x4xbf16>
    %cst_37 = arith.constant dense<0.000000e+00> : vector<256x4xf32>
    %37 = tpu.matmul %34, %36, %cst_37 {dimension_numbers = #tpu.dot_dimension_numbers<[1], [0], [0], [1], [0, 0, 1, 1], [], []>} : vector<256x4xbf16>, vector<4x4xbf16>, vector<256x4xf32> -> vector<256x4xf32>
    %38 = arith.addf %32, %37 : vector<256x4xf32>
    %c1_38 = arith.constant 1 : index
    %c1_39 = arith.constant 1 : index
    %c0_40 = arith.constant 0 : index
    %39 = vector.load %arg7[%c1_38, %c1_39, %c0_40] : memref<18x24x4xbf16, #tpu.memory_space<vmem>>, vector<16x16x4xbf16>
    %40 = vector.shape_cast %39 : vector<16x16x4xbf16> to vector<256x4xbf16>
    %c4 = arith.constant 4 : index
    %c0_41 = arith.constant 0 : index
    %c0_42 = arith.constant 0 : index
    %41 = vector.load %arg4[%c4, %c0_41, %c0_42] : memref<9x4x4xbf16, #tpu.memory_space<vmem>>, vector<1x4x4xbf16>
    %42 = vector.shape_cast %41 : vector<1x4x4xbf16> to vector<4x4xbf16>
    %cst_43 = arith.constant dense<0.000000e+00> : vector<256x4xf32>
    %43 = tpu.matmul %40, %42, %cst_43 {dimension_numbers = #tpu.dot_dimension_numbers<[1], [0], [0], [1], [0, 0, 1, 1], [], []>} : vector<256x4xbf16>, vector<4x4xbf16>, vector<256x4xf32> -> vector<256x4xf32>
    %44 = arith.addf %38, %43 : vector<256x4xf32>
    %c1_44 = arith.constant 1 : index
    %c2_45 = arith.constant 2 : index
    %c0_46 = arith.constant 0 : index
    %45 = vector.load %arg7[%c1_44, %c2_45, %c0_46] : memref<18x24x4xbf16, #tpu.memory_space<vmem>>, vector<16x16x4xbf16>
    %46 = vector.shape_cast %45 : vector<16x16x4xbf16> to vector<256x4xbf16>
    %c5 = arith.constant 5 : index
    %c0_47 = arith.constant 0 : index
    %c0_48 = arith.constant 0 : index
    %47 = vector.load %arg4[%c5, %c0_47, %c0_48] : memref<9x4x4xbf16, #tpu.memory_space<vmem>>, vector<1x4x4xbf16>
    %48 = vector.shape_cast %47 : vector<1x4x4xbf16> to vector<4x4xbf16>
    %cst_49 = arith.constant dense<0.000000e+00> : vector<256x4xf32>
    %49 = tpu.matmul %46, %48, %cst_49 {dimension_numbers = #tpu.dot_dimension_numbers<[1], [0], [0], [1], [0, 0, 1, 1], [], []>} : vector<256x4xbf16>, vector<4x4xbf16>, vector<256x4xf32> -> vector<256x4xf32>
    %50 = arith.addf %44, %49 : vector<256x4xf32>
    %c2_50 = arith.constant 2 : index
    %c0_51 = arith.constant 0 : index
    %c0_52 = arith.constant 0 : index
    %51 = vector.load %arg7[%c2_50, %c0_51, %c0_52] : memref<18x24x4xbf16, #tpu.memory_space<vmem>>, vector<16x16x4xbf16>
    %52 = vector.shape_cast %51 : vector<16x16x4xbf16> to vector<256x4xbf16>
    %c6 = arith.constant 6 : index
    %c0_53 = arith.constant 0 : index
    %c0_54 = arith.constant 0 : index
    %53 = vector.load %arg4[%c6, %c0_53, %c0_54] : memref<9x4x4xbf16, #tpu.memory_space<vmem>>, vector<1x4x4xbf16>
    %54 = vector.shape_cast %53 : vector<1x4x4xbf16> to vector<4x4xbf16>
    %cst_55 = arith.constant dense<0.000000e+00> : vector<256x4xf32>
    %55 = tpu.matmul %52, %54, %cst_55 {dimension_numbers = #tpu.dot_dimension_numbers<[1], [0], [0], [1], [0, 0, 1, 1], [], []>} : vector<256x4xbf16>, vector<4x4xbf16>, vector<256x4xf32> -> vector<256x4xf32>
    %56 = arith.addf %50, %55 : vector<256x4xf32>
    %c2_56 = arith.constant 2 : index
    %c1_57 = arith.constant 1 : index
    %c0_58 = arith.constant 0 : index
    %57 = vector.load %arg7[%c2_56, %c1_57, %c0_58] : memref<18x24x4xbf16, #tpu.memory_space<vmem>>, vector<16x16x4xbf16>
    %58 = vector.shape_cast %57 : vector<16x16x4xbf16> to vector<256x4xbf16>
    %c7 = arith.constant 7 : index
    %c0_59 = arith.constant 0 : index
    %c0_60 = arith.constant 0 : index
    %59 = vector.load %arg4[%c7, %c0_59, %c0_60] : memref<9x4x4xbf16, #tpu.memory_space<vmem>>, vector<1x4x4xbf16>
    %60 = vector.shape_cast %59 : vector<1x4x4xbf16> to vector<4x4xbf16>
    %cst_61 = arith.constant dense<0.000000e+00> : vector<256x4xf32>
    %61 = tpu.matmul %58, %60, %cst_61 {dimension_numbers = #tpu.dot_dimension_numbers<[1], [0], [0], [1], [0, 0, 1, 1], [], []>} : vector<256x4xbf16>, vector<4x4xbf16>, vector<256x4xf32> -> vector<256x4xf32>
    %62 = arith.addf %56, %61 : vector<256x4xf32>
    %c2_62 = arith.constant 2 : index
    %c2_63 = arith.constant 2 : index
    %c0_64 = arith.constant 0 : index
    %63 = vector.load %arg7[%c2_62, %c2_63, %c0_64] : memref<18x24x4xbf16, #tpu.memory_space<vmem>>, vector<16x16x4xbf16>
    %64 = vector.shape_cast %63 : vector<16x16x4xbf16> to vector<256x4xbf16>
    %c8 = arith.constant 8 : index
    %c0_65 = arith.constant 0 : index
    %c0_66 = arith.constant 0 : index
    %65 = vector.load %arg4[%c8, %c0_65, %c0_66] : memref<9x4x4xbf16, #tpu.memory_space<vmem>>, vector<1x4x4xbf16>
    %66 = vector.shape_cast %65 : vector<1x4x4xbf16> to vector<4x4xbf16>
    %cst_67 = arith.constant dense<0.000000e+00> : vector<256x4xf32>
    %67 = tpu.matmul %64, %66, %cst_67 {dimension_numbers = #tpu.dot_dimension_numbers<[1], [0], [0], [1], [0, 0, 1, 1], [], []>} : vector<256x4xbf16>, vector<4x4xbf16>, vector<256x4xf32> -> vector<256x4xf32>
    %68 = arith.addf %62, %67 : vector<256x4xf32>
    %cst_68 = arith.constant dense<0.000000e+00> : vector<4xf32>
    %69 = vector.multi_reduction <add>, %68, %cst_68 [0] : vector<256x4xf32> to vector<4xf32>
    %70 = vector.shape_cast %69 : vector<4xf32> to vector<1x4xf32>
    %71 = arith.mulf %68, %68 : vector<256x4xf32>
    %cst_69 = arith.constant dense<0.000000e+00> : vector<4xf32>
    %72 = vector.multi_reduction <add>, %71, %cst_69 [0] : vector<256x4xf32> to vector<4xf32>
    %73 = vector.shape_cast %72 : vector<4xf32> to vector<1x4xf32>
    %74 = tpu.concatenate %70, %73 in 0 : vector<1x4xf32>, vector<1x4xf32> -> vector<2x4xf32>
    %c0_70 = arith.constant 0 : index
    %c0_71 = arith.constant 0 : index
    %c0_72 = arith.constant 0 : index
    %75 = vector.load %arg6[%c0_70, %c0_71, %c0_72] : memref<1x2x4xf32, #tpu.memory_space<vmem>>, vector<1x2x4xf32>
    %76 = vector.shape_cast %75 : vector<1x2x4xf32> to vector<2x4xf32>
    %77 = vector.shape_cast %74 : vector<2x4xf32> to vector<1x2x4xf32>
    tpu.vector_store %arg6[%c0_70, %c0_71, %c0_72], %77 {strides = array<i32>} : memref<1x2x4xf32, #tpu.memory_space<vmem>>, vector<1x2x4xf32>,
    %78 = arith.truncf %68 : vector<256x4xf32> to vector<256x4xbf16>
    %c0_73 = arith.constant 0 : index
    %c0_74 = arith.constant 0 : index
    %c0_75 = arith.constant 0 : index
    %79 = vector.load %arg5[%c0_73, %c0_74, %c0_75] : memref<1x256x4xbf16, #tpu.memory_space<vmem>>, vector<1x256x4xbf16>
    %80 = vector.shape_cast %79 : vector<1x256x4xbf16> to vector<256x4xbf16>
    %81 = vector.shape_cast %78 : vector<256x4xbf16> to vector<1x256x4xbf16>
    tpu.vector_store %arg5[%c0_73, %c0_74, %c0_75], %81 {strides = array<i32>} : memref<1x256x4xbf16, #tpu.memory_space<vmem>>, vector<1x256x4xbf16>,
    return
  }
  func.func @transform_0(%arg0: i32) -> (i32, i32, i32) {
    %c0_i32 = arith.constant 0 : i32
    %c0_i32_0 = arith.constant 0 : i32
    %c0_i32_1 = arith.constant 0 : i32
    return %arg0, %c0_i32, %c0_i32_0 : i32, i32, i32
  }
  func.func @transform_1(%arg0: i32) -> (i32, i32) {
    %c0_i32 = arith.constant 0 : i32
    %c0_i32_0 = arith.constant 0 : i32
    %c0_i32_1 = arith.constant 0 : i32
    return %c0_i32, %c0_i32_0 : i32, i32
  }
  func.func @transform_2(%arg0: i32) -> (i32, i32) {
    %c0_i32 = arith.constant 0 : i32
    %c0_i32_0 = arith.constant 0 : i32
    %c0_i32_1 = arith.constant 0 : i32
    return %c0_i32, %c0_i32_0 : i32, i32
  }
  func.func @transform_3(%arg0: i32) -> (i32, i32, i32) {
    %c0_i32 = arith.constant 0 : i32
    %c0_i32_0 = arith.constant 0 : i32
    %c0_i32_1 = arith.constant 0 : i32
    %c0_i32_2 = arith.constant 0 : i32
    return %c0_i32, %c0_i32_0, %c0_i32_1 : i32, i32, i32
  }
  func.func @transform_4(%arg0: i32) -> (i32, i32, i32) {
    %c0_i32 = arith.constant 0 : i32
    %c0_i32_0 = arith.constant 0 : i32
    %c0_i32_1 = arith.constant 0 : i32
    return %arg0, %c0_i32, %c0_i32_0 : i32, i32, i32
  }
  func.func @transform_5(%arg0: i32) -> (i32, i32, i32) {
    %c0_i32 = arith.constant 0 : i32
    %c0_i32_0 = arith.constant 0 : i32
    %c0_i32_1 = arith.constant 0 : i32
    return %arg0, %c0_i32, %c0_i32_0 : i32, i32, i32
  }
}

module attributes {stable_mosaic.version = 11 : i64} {
  func.func @final_kernel(%arg0: i32, %arg1: i32, %arg2: memref<1x16x128xbf16, #tpu.memory_space<vmem>>, %arg3: memref<1x16x128xf32, #tpu.memory_space<vmem>>, %arg4: memref<16x1xf32, #tpu.memory_space<vmem>>, %arg5: memref<16x1xf32, #tpu.memory_space<vmem>>, %arg6: memref<1x16x128xf32, #tpu.memory_space<vmem>>) attributes {dimension_semantics = [#tpu.dimension_semantics<parallel>, #tpu.dimension_semantics<parallel>], iteration_bounds = array<i64: 2, 2>, scalar_prefetch = 0 : i64, scratch_operands = 0 : i64, tpu.core_type = #tpu.core_type<tc>, window_params = [{transform_indices = @transform_0, window_bounds = array<i64: 1, 16, 128>}, {transform_indices = @transform_1, window_bounds = array<i64: 1, 16, 128>}, {pipeline_mode = #tpu.pipeline_mode<synchronous>, transform_indices = @transform_2, window_bounds = array<i64: 16, 1>}, {pipeline_mode = #tpu.pipeline_mode<synchronous>, transform_indices = @transform_3, window_bounds = array<i64: 16, 1>}, {transform_indices = @transform_4, window_bounds = array<i64: 1, 16, 128>}]} {
    %c0 = arith.constant 0 : index
    %c0_0 = arith.constant 0 : index
    %c0_1 = arith.constant 0 : index
    %0 = vector.load %arg2[%c0, %c0_0, %c0_1] : memref<1x16x128xbf16, #tpu.memory_space<vmem>>, vector<1x16x128xbf16>
    %1 = vector.shape_cast %0 : vector<1x16x128xbf16> to vector<16x128xbf16>
    %2 = arith.extf %1 : vector<16x128xbf16> to vector<16x128xf32>
    %c0_2 = arith.constant 0 : index
    %c0_3 = arith.constant 0 : index
    %3 = vector.load %arg4[%c0_2, %c0_3] : memref<16x1xf32, #tpu.memory_space<vmem>>, vector<16x1xf32>
    %4 = vector.broadcast %3 : vector<16x1xf32> to vector<16x128xf32>
    %5 = arith.mulf %2, %4 : vector<16x128xf32>
    %c0_4 = arith.constant 0 : index
    %c0_5 = arith.constant 0 : index
    %6 = vector.load %arg5[%c0_4, %c0_5] : memref<16x1xf32, #tpu.memory_space<vmem>>, vector<16x1xf32>
    %7 = vector.broadcast %6 : vector<16x1xf32> to vector<16x128xf32>
    %8 = arith.addf %5, %7 : vector<16x128xf32>
    %c0_6 = arith.constant 0 : index
    %c0_7 = arith.constant 0 : index
    %c0_8 = arith.constant 0 : index
    %9 = vector.load %arg3[%c0_6, %c0_7, %c0_8] : memref<1x16x128xf32, #tpu.memory_space<vmem>>, vector<1x16x128xf32>
    %10 = vector.shape_cast %9 : vector<1x16x128xf32> to vector<16x128xf32>
    %11 = arith.addf %8, %10 : vector<16x128xf32>
    %cst = arith.constant 0.000000e+00 : f32
    %12 = vector.broadcast %cst : f32 to vector<16x128xf32>
    %13 = arith.maximumf %11, %12 : vector<16x128xf32>
    %c0_9 = arith.constant 0 : index
    %c0_10 = arith.constant 0 : index
    %c0_11 = arith.constant 0 : index
    %14 = vector.load %arg6[%c0_9, %c0_10, %c0_11] : memref<1x16x128xf32, #tpu.memory_space<vmem>>, vector<1x16x128xf32>
    %15 = vector.shape_cast %14 : vector<1x16x128xf32> to vector<16x128xf32>
    %16 = vector.shape_cast %13 : vector<16x128xf32> to vector<1x16x128xf32>
    tpu.vector_store %arg6[%c0_9, %c0_10, %c0_11], %16 {strides = array<i32>} : memref<1x16x128xf32, #tpu.memory_space<vmem>>, vector<1x16x128xf32>,
    return
  }
  func.func @transform_0(%arg0: i32, %arg1: i32) -> (i32, i32, i32) {
    %c0_i32 = arith.constant 0 : i32
    %c0_i32_0 = arith.constant 0 : i32
    return %arg0, %c0_i32, %arg1 : i32, i32, i32
  }
  func.func @transform_1(%arg0: i32, %arg1: i32) -> (i32, i32, i32) {
    %c0_i32 = arith.constant 0 : i32
    %c0_i32_0 = arith.constant 0 : i32
    return %arg0, %c0_i32, %arg1 : i32, i32, i32
  }
  func.func @transform_2(%arg0: i32, %arg1: i32) -> (i32, i32) {
    %c0_i32 = arith.constant 0 : i32
    %c0_i32_0 = arith.constant 0 : i32
    %c0_i32_1 = arith.constant 0 : i32
    return %c0_i32, %c0_i32_0 : i32, i32
  }
  func.func @transform_3(%arg0: i32, %arg1: i32) -> (i32, i32) {
    %c0_i32 = arith.constant 0 : i32
    %c0_i32_0 = arith.constant 0 : i32
    %c0_i32_1 = arith.constant 0 : i32
    return %c0_i32, %c0_i32_0 : i32, i32
  }
  func.func @transform_4(%arg0: i32, %arg1: i32) -> (i32, i32, i32) {
    %c0_i32 = arith.constant 0 : i32
    %c0_i32_0 = arith.constant 0 : i32
    return %arg0, %c0_i32, %arg1 : i32, i32, i32
  }
}

</mosaic_0001>

<llo_original>
// kernel: bottleneck_forward.4
$region0: #{bottleneck_forward.4}
  #allocation0 [shape = 'u32[]', space=smem, size = 0x4, offset = 0x4, fixed_abs, tag = 'smem constant byte address 0x4 - core index']
  #allocation1 [shape = 'u32[144,128]{1,0:T(1,128)}', space=vmem, size = 0x12000, scoped, tag = 'internal scratch']
  %s0 = inlined_call_operand.vmem [shape: f32[2,16,256], index: 0, kind: input, shape index: {}]
  %s1 = inlined_call_operand.vmem [shape: bf16[16,4], index: 1, kind: input, shape index: {}]
  %s2 = inlined_call_operand.vmem [shape: bf16[2,256,4], index: 2, kind: output, shape index: {0}]
  %s3 = inlined_call_operand.vmem [shape: f32[2,2,4], index: 3, kind: output, shape index: {1}]
  %4 = xla_tuple %s2, %s3
  %s5 = sld [smem:[#allocation0]]
  $region91: #{bottleneck_forward.4} parent=0
    _
  %s7 = ssub.s32 1, %s5
  %s8 = scalar_select 0, %s7, %s5
  $region1: #{bottleneck_forward.4} parent=0
    #allocation2 [shape = 'u8[16384]{0}', space=vmem, size = 0x4000, scoped, tag = 'input window, operand 0']
    loop: start=0, step=1, limit=6
    $region2: #{bottleneck_forward.4} parent=1 // loop_pre_header
      _
    $region3: #{bottleneck_forward.4} parent=1 // loop_header
      %s10 = sphi 0, %s14
      %p11 = scmp.ge.s32.totalorder %s10, 6
      %s17 = sphi 0, %s29
      %s18 = sphi 0, %s25
      %s19 = sphi 0, %s17
      %s20 = sphi 0, %s18
      %s21 = sphi 0, %s19
      %s22 = sphi 0, %s20
      %s34 = sphi 0, %s36
      %s37 = sphi 0, %s34
      %s38 = sphi 0, %s37
      %s54 = sphi 0, %s38
      %s58 = sphi 0, %s58
      %s60 = sphi 0, %s58
      %s61 = sphi 0, %s60
      %s75 = sphi 0, %s61
      %s83 = sphi 0, %s85
      %s86 = sphi 0, %s83
      %s87 = sphi 0, %s86
      %s103 = sphi 0, %s87
      %s109 = sphi 0, %s111
      %s112 = sphi 0, %s109
      %s113 = sphi 0, %s112
      %s129 = sphi 0, %s113
    $region4: #{bottleneck_forward.4} parent=1 // loop_header_branch
      %13 = sbr.rel (%p11) target = $region8
    $region5: #{bottleneck_forward.4} parent=1 // loop_body
      %s15 = ssub.s32 %s10, 1
      %s16 = ssub.s32 %s10, 2
      %s23 = sadd.s32 1, %s18
      %p24 = scmp.ge.s32.totalorder %s23, 2
      %s25 = scalar_select %p24, 0, %s23
      %s26 = sadd.s32 1, %s17
      %s27 = scalar_select %p24, %s26, %s17
      %p28 = scmp.ge.s32.totalorder %s27, 2
      %s29 = scalar_select %p28, 0, %s27
      %s30 = ssub.s32 %s17, %s29
      %s31 = ssub.s32 %s18, %s25
      %s32 = sor.u32 %s30, %s31
      %p33 = scmp.eq.s32.totalorder %s32, 0
      %s35 = sadd.s32 %s34, 1
      %s36 = scalar_select %p33, %s34, %s35
      %p39 = pneg %p33
      %p40 = scmp.eq.s32.totalorder %s10, 3
      %p41 = por %p39, %p40
      %p42 = scmp.ne.s32.totalorder %s34, %s37
      %p43 = scmp.eq.s32.totalorder %s10, 0
      %p44 = por %p42, %p43
      %p45 = scmp.ne.s32.totalorder %s34, %s37
      %p46 = scmp.eq.s32.totalorder %s15, 3
      %p47 = por %p45, %p46
      %p48 = scmp.ne.s32.totalorder %s37, %s38
      %p49 = scmp.eq.s32.totalorder %s15, 0
      %p50 = por %p48, %p49
      %p51 = scmp.ne.s32.totalorder %s37, %s38
      %p52 = scmp.eq.s32.totalorder %s16, 3
      %p53 = por %p51, %p52
      %p55 = scmp.ne.s32.totalorder %s38, %s54
      %p56 = scmp.eq.s32.totalorder %s16, 0
      %p57 = por %p55, %p56
      %s59 = sadd.s32 %s58, 1
      %p62 = scmp.eq.s32.totalorder %s10, 3
      %p63 = scmp.ne.s32.totalorder %s58, %s60
      %p64 = scmp.eq.s32.totalorder %s10, 0
      %p65 = por %p63, %p64
      %p66 = scmp.ne.s32.totalorder %s58, %s60
      %p67 = scmp.eq.s32.totalorder %s15, 3
      %p68 = por %p66, %p67
      %p69 = scmp.ne.s32.totalorder %s60, %s61
      %p70 = scmp.eq.s32.totalorder %s15, 0
      %p71 = por %p69, %p70
      %p72 = scmp.ne.s32.totalorder %s60, %s61
      %p73 = scmp.eq.s32.totalorder %s16, 3
      %p74 = por %p72, %p73
      %p76 = scmp.ne.s32.totalorder %s61, %s75
      %p77 = scmp.eq.s32.totalorder %s16, 0
      %p78 = por %p76, %p77
      %s79 = ssub.s32 %s17, %s29
      %s80 = ssub.s32 %s18, %s25
      %s81 = sor.u32 %s79, %s80
      %p82 = scmp.eq.s32.totalorder %s81, 0
      %s84 = sadd.s32 %s83, 1
      %s85 = scalar_select %p82, %s83, %s84
      %p88 = pneg %p82
      %p89 = scmp.eq.s32.totalorder %s10, 3
      %p90 = por %p88, %p89
      %p91 = scmp.ne.s32.totalorder %s83, %s86
      %p92 = scmp.eq.s32.totalorder %s10, 0
      %p93 = por %p91, %p92
      %p94 = scmp.ne.s32.totalorder %s83, %s86
      %p95 = scmp.eq.s32.totalorder %s15, 3
      %p96 = por %p94, %p95
      %p97 = scmp.ne.s32.totalorder %s86, %s87
      %p98 = scmp.eq.s32.totalorder %s15, 0
      %p99 = por %p97, %p98
      %p100 = scmp.ne.s32.totalorder %s86, %s87
      %p101 = scmp.eq.s32.totalorder %s16, 3
      %p102 = por %p100, %p101
      %p104 = scmp.ne.s32.totalorder %s87, %s103
      %p105 = scmp.eq.s32.totalorder %s16, 0
      %p106 = por %p104, %p105
      %s107 = ssub.s32 %s17, %s29
      %p108 = scmp.eq.s32.totalorder %s107, 0
      %s110 = sadd.s32 %s109, 1
      %s111 = scalar_select %p108, %s109, %s110
      %p114 = pneg %p108
      %p115 = scmp.eq.s32.totalorder %s10, 3
      %p116 = por %p114, %p115
      %p117 = scmp.ne.s32.totalorder %s109, %s112
      %p118 = scmp.eq.s32.totalorder %s10, 0
      %p119 = por %p117, %p118
      %p120 = scmp.ne.s32.totalorder %s109, %s112
      %p121 = scmp.eq.s32.totalorder %s15, 3
      %p122 = por %p120, %p121
      %p123 = scmp.ne.s32.totalorder %s112, %s113
      %p124 = scmp.eq.s32.totalorder %s15, 0
      %p125 = por %p123, %p124
      %p126 = scmp.ne.s32.totalorder %s112, %s113
      %p127 = scmp.eq.s32.totalorder %s16, 3
      %p128 = por %p126, %p127
      %p130 = scmp.ne.s32.totalorder %s113, %s129
      %p131 = scmp.eq.s32.totalorder %s16, 0
      %p132 = por %p130, %p131
      %p133 = scmp.le.s32.totalorder 1, %s10
      %p134 = scmp.lt.s32.totalorder %s10, 5
      %p135 = pnand %p133, %p134
      %p136 = pneg %p135
      // Predicated region
      $region9: #{bottleneck_forward.4} parent=5 // pred_check
        _
      $region10: #{bottleneck_forward.4} parent=5 // pred_check_branch
        %138 = sbr.rel (%p135) target = $region12
      $region11: #{bottleneck_forward.4} parent=5 // pred_region
        %s139 = ssub.s32 %s10, 1
        // Predicated region
        $region13: #{bottleneck_forward.4} parent=11 // pred_check
          %p140 = pneg %p71
        $region14: #{bottleneck_forward.4} parent=11 // pred_check_branch
          %142 = sbr.rel (%p140) target = $region16
        $region15: #{bottleneck_forward.4} parent=11 // pred_region
          _
        $region16: #{bottleneck_forward.4} parent=11 // pred_fallthru
          _
      $region12: #{bottleneck_forward.4} parent=5 // pred_fallthru
        _
      %p143 = scmp.lt.s32.totalorder %s10, 4
      // Predicated region
      $region17: #{bottleneck_forward.4} parent=5 // pred_check
        %p144 = pneg %p143
      $region18: #{bottleneck_forward.4} parent=5 // pred_check_branch
        %146 = sbr.rel (%p144) target = $region20
      $region19: #{bottleneck_forward.4} parent=5 // pred_region
        // Predicated region
        $region21: #{bottleneck_forward.4} parent=19 // pred_check
          %p147 = pneg %p44
        $region22: #{bottleneck_forward.4} parent=19 // pred_check_branch
          %149 = sbr.rel (%p147) target = $region24
        $region23: #{bottleneck_forward.4} parent=19 // pred_region
          %s150 = sand.u32 %s34, 1
          %s151 = sand.u32 %s34, 1
          %s152 = smul.addr %s151, 16
          %s153 = scalar_lea.vmem [#allocation2], %s152
          %s154 = smul.addr %s17, 4
          %s155 = sadd.s32 %s18, %s154
          %s156 = smul.addr %s155, 8
          %s157 = scalar_lea.vmem %s0, %s156
          // Predicated region
          $region25: #{bottleneck_forward.4} parent=23 // pred_check
            _
          $region26: #{bottleneck_forward.4} parent=23 // pred_check_branch
            %159 = sbr.rel (0) target = $region28
          $region27: #{bottleneck_forward.4} parent=23 // pred_region
            // Predicated region
            $region29: #{bottleneck_forward.4} parent=27 // pred_check
              _
            $region30: #{bottleneck_forward.4} parent=27 // pred_check_branch
              %161 = sbr.rel (0) target = $region32
            $region31: #{bottleneck_forward.4} parent=27 // pred_region
              // Predicated region
              $region44: #{bottleneck_forward.4} parent=31 // pred_check
                _
              $region45: #{bottleneck_forward.4} parent=31 // pred_check_branch
                %178 = sbr.rel (0) target = $region47
              $region46: #{bottleneck_forward.4} parent=31 // pred_region
                loop: start=0, step=1, limit=1
                $region48: #{bottleneck_forward.4} parent=46 // loop_pre_header
                  _
                $region49: #{bottleneck_forward.4} parent=46 // loop_header
                  %s180 = sphi 0, %s184
                  %p181 = scmp.ge.s32.totalorder %s180, 1
                  %s185 = sphi %s157, %s157
                  %s186 = sphi %s153, %s153
                $region50: #{bottleneck_forward.4} parent=46 // loop_header_branch
                  %183 = sbr.rel (%p181) target = $region54
                $region51: #{bottleneck_forward.4} parent=46 // loop_body
                  %v187 = vld [vmem:[%s185] sm:$0xff]
                  %188 = vst [vmem:[%s186] sm:$0xff] %v187
                  %v189 = vld [vmem:[%s185 + $0x10] sm:$0xff]
                  %190 = vst [vmem:[%s186 + $0x8] sm:$0xff] %v189
                $region52: #{bottleneck_forward.4} parent=46 // loop_footer
                  %s184 = sadd.s32 1, %s180
                $region53: #{bottleneck_forward.4} parent=46 // loop_footer_branch
                  %179 = sbr.rel target = $region49
                $region54: #{bottleneck_forward.4} parent=46 // loop_exit
                  _
              $region47: #{bottleneck_forward.4} parent=31 // pred_fallthru
                _
              // Predicated region
              $region55: #{bottleneck_forward.4} parent=31 // pred_check
                _
              $region56: #{bottleneck_forward.4} parent=31 // pred_check_branch
                %192 = sbr.rel target = $region58
              $region57: #{bottleneck_forward.4} parent=31 // pred_region
                _
              $region58: #{bottleneck_forward.4} parent=31 // pred_fallthru
                _
            $region32: #{bottleneck_forward.4} parent=27 // pred_fallthru
              _
            // Predicated region
            $region33: #{bottleneck_forward.4} parent=27 // pred_check
              _
            $region34: #{bottleneck_forward.4} parent=27 // pred_check_branch
              %163 = sbr.rel target = $region36
            $region35: #{bottleneck_forward.4} parent=27 // pred_region
              loop: start=0, step=1, limit=1
              $region37: #{bottleneck_forward.4} parent=35 // loop_pre_header
                _
              $region38: #{bottleneck_forward.4} parent=35 // loop_header
                %s166 = sphi 0, %s170
                %p167 = scmp.ge.s32.totalorder %s166, 1
                %s171 = sphi %s157, %s157
                %s172 = sphi %s153, %s153
              $region39: #{bottleneck_forward.4} parent=35 // loop_header_branch
                %169 = sbr.rel (%p167) target = $region43
              $region40: #{bottleneck_forward.4} parent=35 // loop_body
                %v173 = vld [vmem:[%s171] sm:$0xff]
                %174 = vst [vmem:[%s172] sm:$0xff] %v173
                %v175 = vld [vmem:[%s171 + $0x10] sm:$0xff]
                %176 = vst [vmem:[%s172 + $0x8] sm:$0xff] %v175
              $region41: #{bottleneck_forward.4} parent=35 // loop_footer
                %s170 = sadd.s32 1, %s166
              $region42: #{bottleneck_forward.4} parent=35 // loop_footer_branch
                %165 = sbr.rel target = $region38
              $region43: #{bottleneck_forward.4} parent=35 // loop_exit
                _
            $region36: #{bottleneck_forward.4} parent=27 // pred_fallthru
              _
          $region28: #{bottleneck_forward.4} parent=23 // pred_fallthru
            _
          %193 = vnop
        $region24: #{bottleneck_forward.4} parent=19 // pred_fallthru
          _
      $region20: #{bottleneck_forward.4} parent=5 // pred_fallthru
        _
      %p194 = scmp.le.s32.totalorder 1, %s10
      %p195 = scmp.lt.s32.totalorder %s10, 5
      %p196 = pnand %p194, %p195
      %p197 = pneg %p196
      // Predicated region
      $region59: #{bottleneck_forward.4} parent=5 // pred_check
        _
      $region60: #{bottleneck_forward.4} parent=5 // pred_check_branch
        %199 = sbr.rel (%p196) target = $region62
      $region61: #{bottleneck_forward.4} parent=5 // pred_region
        %s200 = ssub.s32 %s10, 1
        %s201 = sand.u32 %s37, 1
        %s202 = sand.u32 %s37, 1
        %s203 = smul.addr %s202, 16
        %s204 = scalar_lea.vmem [#allocation2], %s203
        // Predicated region
        $region63: #{bottleneck_forward.4} parent=61 // pred_check
          %p205 = pneg %p50
        $region64: #{bottleneck_forward.4} parent=61 // pred_check_branch
          %207 = sbr.rel (%p205) target = $region66
        $region65: #{bottleneck_forward.4} parent=61 // pred_region
          _
        $region66: #{bottleneck_forward.4} parent=61 // pred_fallthru
          _
        %s208 = sand.u32 %s37, 1
        %s209 = sand.u32 %s37, 1
        %s210 = smul.addr %s209, 16
        %s211 = scalar_lea.vmem [#allocation2], %s210
        %p212 = pneg %p50
        %p213 = pneg %p47
        %p214 = pneg %p71
        %p215 = pneg %p68
        %p216 = pneg %p99
        %p217 = pneg %p96
        %s218 = smul.u32 16, %s20
        %p219 = scmp.lt.s32.totalorder %s19, 1
        %s220 = scalar_select %p219, %s19, 1
        %p221 = scmp.lt.s32.totalorder %s218, 31
        %s222 = scalar_select %p221, %s218, 31
        %s223 = smul.addr %s220, 32
        %s224 = sadd.s32 %s222, %s223
        %s225 = smul.addr %s224, 4
        %s226 = scalar_lea.vmem %s2, %s225
        %p227 = pneg %p125
        %p228 = pneg %p122
        %p229 = scmp.lt.s32.totalorder %s19, 1
        %s230 = scalar_select %p229, %s19, 1
        %s231 = smul.addr %s230, 2
        %s232 = scalar_lea.vmem %s3, %s231
        %s233 = smul.u32 16, %s20
        %p234 = scmp.lt.s32.totalorder %s19, 1
        %s235 = scalar_select %p234, %s19, 1
        %p236 = scmp.lt.s32.totalorder %s233, 31
        %s237 = scalar_select %p236, %s233, 31
        %s238 = smul.addr %s235, 32
        %s239 = sadd.s32 %s237, %s238
        %s240 = smul.addr %s239, 4
        %s241 = scalar_lea.vmem %s2, %s240
        %s242 = smul.u32 16, %s20
        %p243 = scmp.lt.s32.totalorder %s19, 1
        %s244 = scalar_select %p243, %s19, 1
        %s245 = smul.addr %s244, 2
        %s246 = scalar_lea.vmem %s3, %s245
        %p248 = scmp.eq.s32.totalorder %s20, 0
        // Predicated region
        $region67: #{bottleneck_forward.4} parent=61 // pred_check
          %p249 = pneg %p248
        $region68: #{bottleneck_forward.4} parent=61 // pred_check_branch
          %251 = sbr.rel (%p249) target = $region70
        $region69: #{bottleneck_forward.4} parent=61 // pred_region
          %vm252 = vcmask 25600
          %253 = vst.msk [vmem:[%s246] sm:$0x3] %vm252, 0.0
        $region70: #{bottleneck_forward.4} parent=61 // pred_fallthru
          _
        %v254 = vld [vmem:[%s204] sm:$0xff]
        %v255 = vld [vmem:[%s204 + $0x8] sm:$0xff]
        %v256 = vpack.c.bf16 %v255, %v254
        %257 = vxpose.xlu0.c.b16.start [1/8] %v256, 128
        %258 = vxpose.xlu0.c.b16.cont [2/8] 0, 128
        %259 = vxpose.xlu0.c.b16.cont [3/8] 0, 128
        %260 = vxpose.xlu0.c.b16.cont [4/8] 0, 128
        %261 = vxpose.xlu0.c.b16.cont [5/8] 0, 128
        %262 = vxpose.xlu0.c.b16.cont [6/8] 0, 128
        %263 = vxpose.xlu0.c.b16.cont [7/8] 0, 128
        %264 = vxpose.xlu0.c.b16.end [8/8] 0, 128
        %v265 = vpop.trf.xlu0
        %v266 = vpop.trf.xlu0
        %v267 = vpop.trf.xlu0
        %v268 = vpop.trf.xlu0
        %v269 = vpop.trf.xlu0
        %v270 = vpop.trf.xlu0
        %v271 = vpop.trf.xlu0
        %v272 = vpop.trf.xlu0
        %v273 = vld [vmem:[%s1] sm:$0xf]
        %v274 = vld [vmem:[%s1 + $0x4] sm:$0xf]
        %v277 = vunpack.c.l.b16 %v273
        %v278 = vunpack.c.l.b16 %v274
        %v279 = vpack.c.b16 %v278, %v277
        %vm281 = vcmask 130048
        %v283 = vsel %vm281, %v265, 0
        %v286 = vsel %vm281, %v266, 0
        %v289 = vsel %vm281, %v267, 0
        %v292 = vsel %vm281, %v268, 0
        %v295 = vsel %vm281, %v269, 0
        %v298 = vsel %vm281, %v270, 0
        %v301 = vsel %vm281, %v271, 0
        %v304 = vsel %vm281, %v272, 0
        %306 = vmatprep.subr.bf16.mxu0 0
        %307 = vmatpush1.bf16.msra.mxu0 %v279
        %308 = vmatprep.subr.bf16.mxu0 0
        %309 = vmatpush1.bf16.msra.mxu0 0
        %310 = vmatprep.subr.bf16.mxu0 0
        %311 = vmatpush1.bf16.msra.mxu0 0
        %312 = vmatprep.subr.bf16.mxu0 0
        %313 = vmatpush1.bf16.msra.mxu0 0
        %314 = vmatprep.subr.bf16.mxu0 0
        %315 = vmatpush1.bf16.msra.mxu0 0
        %316 = vmatprep.subr.bf16.mxu0 0
        %317 = vmatpush1.bf16.msra.mxu0 0
        %318 = vmatprep.subr.bf16.mxu0 0
        %319 = vmatpush1.bf16.msra.mxu0 0
        %320 = vmatprep.subr.bf16.mxu0 0
        %321 = vmatpush1.bf16.msra.mxu0 0
        %322 = vmatprep.subr.bf16.mxu0 0
        %323 = vmatpush1.bf16.msra.mxu0 0
        %324 = vmatprep.subr.bf16.mxu0 0
        %325 = vmatpush1.bf16.msra.mxu0 0
        %326 = vmatprep.subr.bf16.mxu0 0
        %327 = vmatpush1.bf16.msra.mxu0 0
        %328 = vmatprep.subr.bf16.mxu0 0
        %329 = vmatpush1.bf16.msra.mxu0 0
        %330 = vmatprep.subr.bf16.mxu0 0
        %331 = vmatpush1.bf16.msra.mxu0 0
        %332 = vmatprep.subr.bf16.mxu0 0
        %333 = vmatpush1.bf16.msra.mxu0 0
        %334 = vmatprep.subr.bf16.mxu0 0
        %335 = vmatpush1.bf16.msra.mxu0 0
        %336 = vmatprep.subr.bf16.mxu0 0
        %337 = vmatpush1.bf16.msra.mxu0 0
        %338 = vmatprep.mubr.bf16.mxu0 0
        %339 = vmatmul.mubr.bf16.gmra.mrb[0].mxu0 %v283
        %v340 = vpop.f32.mrb[0].mxu0
        %v341 = vadd.f32 0.0, %v340
        %v342 = vpop.f32.mrb[0].mxu0
        %v343 = vpop.f32.mrb[0].mxu0
        %v344 = vadd.f32 0.0, %v343
        %v345 = vpop.f32.mrb[0].mxu0
        %346 = vmatprep.mubr.bf16.mxu0 0
        %347 = vmatmul.mubr.bf16.gmra.mrb[0].mxu0 %v286
        %v348 = vpop.f32.mrb[0].mxu0
        %v349 = vadd.f32 0.0, %v348
        %v350 = vpop.f32.mrb[0].mxu0
        %v351 = vpop.f32.mrb[0].mxu0
        %v352 = vadd.f32 0.0, %v351
        %v353 = vpop.f32.mrb[0].mxu0
        %354 = vmatprep.mubr.bf16.mxu0 0
        %355 = vmatmul.mubr.bf16.gmra.mrb[0].mxu0 %v289
        %v356 = vpop.f32.mrb[0].mxu0
        %v357 = vadd.f32 0.0, %v356
        %v358 = vpop.f32.mrb[0].mxu0
        %v359 = vpop.f32.mrb[0].mxu0
        %v360 = vadd.f32 0.0, %v359
        %v361 = vpop.f32.mrb[0].mxu0
        %362 = vmatprep.mubr.bf16.mxu0 0
        %363 = vmatmul.mubr.bf16.gmra.mrb[0].mxu0 %v292
        %v364 = vpop.f32.mrb[0].mxu0
        %v365 = vadd.f32 0.0, %v364
        %v366 = vpop.f32.mrb[0].mxu0
        %v367 = vpop.f32.mrb[0].mxu0
        %v368 = vadd.f32 0.0, %v367
        %v369 = vpop.f32.mrb[0].mxu0
        %370 = vmatprep.mubr.bf16.mxu0 0
        %371 = vmatmul.mubr.bf16.gmra.mrb[0].mxu0 %v295
        %v372 = vpop.f32.mrb[0].mxu0
        %v373 = vadd.f32 0.0, %v372
        %v374 = vpop.f32.mrb[0].mxu0
        %v375 = vpop.f32.mrb[0].mxu0
        %v376 = vadd.f32 0.0, %v375
        %v377 = vpop.f32.mrb[0].mxu0
        %378 = vmatprep.mubr.bf16.mxu0 0
        %379 = vmatmul.mubr.bf16.gmra.mrb[0].mxu0 %v298
        %v380 = vpop.f32.mrb[0].mxu0
        %v381 = vadd.f32 0.0, %v380
        %v382 = vpop.f32.mrb[0].mxu0
        %v383 = vpop.f32.mrb[0].mxu0
        %v384 = vadd.f32 0.0, %v383
        %v385 = vpop.f32.mrb[0].mxu0
        %386 = vmatprep.mubr.bf16.mxu0 0
        %387 = vmatmul.mubr.bf16.gmra.mrb[0].mxu0 %v301
        %v388 = vpop.f32.mrb[0].mxu0
        %v389 = vadd.f32 0.0, %v388
        %v390 = vpop.f32.mrb[0].mxu0
        %v391 = vpop.f32.mrb[0].mxu0
        %v392 = vadd.f32 0.0, %v391
        %v393 = vpop.f32.mrb[0].mxu0
        %394 = vmatprep.mubr.bf16.mxu0 0
        %395 = vmatmul.mubr.bf16.gmra.mrb[0].mxu0 %v304
        %v396 = vpop.f32.mrb[0].mxu0
        %v397 = vadd.f32 0.0, %v396
        %v398 = vpop.f32.mrb[0].mxu0
        %v399 = vpop.f32.mrb[0].mxu0
        %v400 = vadd.f32 0.0, %v399
        %v401 = vpop.f32.mrb[0].mxu0
        %402 = vdwg.mxu0
        %v403 = vld [vmem:[%s246] sm:$0x3]
        %vm404 = vcmask 31744
        %v405 = vsel %vm404, %v341, 0.0
        %v406 = vsel %vm404, %v344, 0.0
        %v407 = vadd.f32 %v405, %v406
        %v408 = vsel %vm404, %v349, 0.0
        %v409 = vadd.f32 %v407, %v408
        %v410 = vsel %vm404, %v352, 0.0
        %v411 = vadd.f32 %v409, %v410
        %v412 = vsel %vm404, %v357, 0.0
        %v413 = vadd.f32 %v411, %v412
        %v414 = vsel %vm404, %v360, 0.0
        %v415 = vadd.f32 %v413, %v414
        %v416 = vsel %vm404, %v365, 0.0
        %v417 = vadd.f32 %v415, %v416
        %v418 = vsel %vm404, %v368, 0.0
        %v419 = vadd.f32 %v417, %v418
        %v420 = vsel %vm404, %v373, 0.0
        %v421 = vadd.f32 %v419, %v420
        %v422 = vsel %vm404, %v376, 0.0
        %v423 = vadd.f32 %v421, %v422
        %v424 = vsel %vm404, %v381, 0.0
        %v425 = vadd.f32 %v423, %v424
        %v426 = vsel %vm404, %v384, 0.0
        %v427 = vadd.f32 %v425, %v426
        %v428 = vsel %vm404, %v389, 0.0
        %v429 = vadd.f32 %v427, %v428
        %v430 = vsel %vm404, %v392, 0.0
        %v431 = vadd.f32 %v429, %v430
        %v432 = vsel %vm404, %v397, 0.0
        %v433 = vadd.f32 %v431, %v432
        %v434 = vsel %vm404, %v400, 0.0
        %v435 = vadd.f32 %v433, %v434
        %v436 = vrot.slane %v435, 4
        %v437 = vadd.f32 %v435, %v436
        %v438 = vrot.slane %v437, 2
        %v439 = vadd.f32 %v437, %v438
        %v440 = vrot.slane %v439, 1
        %v441 = vadd.f32 %v439, %v440
        %v442 = vmul.f32 %v341, %v341
        %v443 = vmul.f32 %v344, %v344
        %v444 = vmul.f32 %v349, %v349
        %v445 = vmul.f32 %v352, %v352
        %v446 = vmul.f32 %v357, %v357
        %v447 = vmul.f32 %v360, %v360
        %v448 = vmul.f32 %v365, %v365
        %v449 = vmul.f32 %v368, %v368
        %v450 = vmul.f32 %v373, %v373
        %v451 = vmul.f32 %v376, %v376
        %v452 = vmul.f32 %v381, %v381
        %v453 = vmul.f32 %v384, %v384
        %v454 = vmul.f32 %v389, %v389
        %v455 = vmul.f32 %v392, %v392
        %v456 = vmul.f32 %v397, %v397
        %v457 = vmul.f32 %v400, %v400
        %v458 = vsel %vm404, %v442, 0.0
        %v459 = vsel %vm404, %v443, 0.0
        %v460 = vadd.f32 %v458, %v459
        %v461 = vsel %vm404, %v444, 0.0
        %v462 = vadd.f32 %v460, %v461
        %v463 = vsel %vm404, %v445, 0.0
        %v464 = vadd.f32 %v462, %v463
        %v465 = vsel %vm404, %v446, 0.0
        %v466 = vadd.f32 %v464, %v465
        %v467 = vsel %vm404, %v447, 0.0
        %v468 = vadd.f32 %v466, %v467
        %v469 = vsel %vm404, %v448, 0.0
        %v470 = vadd.f32 %v468, %v469
        %v471 = vsel %vm404, %v449, 0.0
        %v472 = vadd.f32 %v470, %v471
        %v473 = vsel %vm404, %v450, 0.0
        %v474 = vadd.f32 %v472, %v473
        %v475 = vsel %vm404, %v451, 0.0
        %v476 = vadd.f32 %v474, %v475
        %v477 = vsel %vm404, %v452, 0.0
        %v478 = vadd.f32 %v476, %v477
        %v479 = vsel %vm404, %v453, 0.0
        %v480 = vadd.f32 %v478, %v479
        %v481 = vsel %vm404, %v454, 0.0
        %v482 = vadd.f32 %v480, %v481
        %v483 = vsel %vm404, %v455, 0.0
        %v484 = vadd.f32 %v482, %v483
        %v485 = vsel %vm404, %v456, 0.0
        %v486 = vadd.f32 %v484, %v485
        %v487 = vsel %vm404, %v457, 0.0
        %v488 = vadd.f32 %v486, %v487
        %v489 = vrot.slane %v488, 4
        %v490 = vadd.f32 %v488, %v489
        %v491 = vrot.slane %v490, 2
        %v492 = vadd.f32 %v490, %v491
        %v493 = vrot.slane %v492, 1
        %v494 = vadd.f32 %v492, %v493
        %vm495 = vcmask 1040384
        %v496 = vsel %vm495, %v441, %v494
        %v497 = vadd.f32 %v403, %v496
        %vm498 = vcmask 25600
        %499 = vst.msk [vmem:[%s246] sm:$0x3] %vm498, %v497
        %v500 = vpack.c.bf16 %v344, %v341
        %v501 = vpack.c.bf16 %v352, %v349
        %v502 = vpack.c.bf16 %v360, %v357
        %v503 = vpack.c.bf16 %v368, %v365
        %v504 = vpack.c.bf16 %v376, %v373
        %v505 = vpack.c.bf16 %v384, %v381
        %v506 = vpack.c.bf16 %v392, %v389
        %v507 = vpack.c.bf16 %v400, %v397
        %v516 = vunpack.c.l.b16 %v500
        %v517 = vunpack.c.h.b16 %v500
        %v518 = vunpack.c.l.b16 %v501
        %v519 = vunpack.c.h.b16 %v501
        %v520 = vunpack.c.l.b16 %v502
        %v521 = vunpack.c.h.b16 %v502
        %v522 = vunpack.c.l.b16 %v503
        %v523 = vunpack.c.h.b16 %v503
        %v524 = vunpack.c.l.b16 %v504
        %v525 = vunpack.c.h.b16 %v504
        %v526 = vunpack.c.l.b16 %v505
        %v527 = vunpack.c.h.b16 %v505
        %v528 = vunpack.c.l.b16 %v506
        %v529 = vunpack.c.h.b16 %v506
        %v530 = vunpack.c.l.b16 %v507
        %v531 = vunpack.c.h.b16 %v507
        %v532 = vpack.c.b16 %v516, %v516
        %v533 = vpack.c.b16 %v517, %v517
        %v534 = vpack.c.b16 %v518, %v518
        %v535 = vpack.c.b16 %v519, %v519
        %v536 = vpack.c.b16 %v520, %v520
        %v537 = vpack.c.b16 %v521, %v521
        %v538 = vpack.c.b16 %v522, %v522
        %v539 = vpack.c.b16 %v523, %v523
        %v540 = vpack.c.b16 %v524, %v524
        %v541 = vpack.c.b16 %v525, %v525
        %v542 = vpack.c.b16 %v526, %v526
        %v543 = vpack.c.b16 %v527, %v527
        %v544 = vpack.c.b16 %v528, %v528
        %v545 = vpack.c.b16 %v529, %v529
        %v546 = vpack.c.b16 %v530, %v530
        %v547 = vpack.c.b16 %v531, %v531
        %vm564 = vcmask 27648
        %565 = vst.msk [vmem:[%s241] sm:$0xf] %vm564, %v532
        %566 = vst.msk [vmem:[%s241 + $0x4] sm:$0xf] %vm564, %v533
        %567 = vst.msk [vmem:[%s241 + $0x8] sm:$0xf] %vm564, %v534
        %568 = vst.msk [vmem:[%s241 + $0xc] sm:$0xf] %vm564, %v535
        %569 = vst.msk [vmem:[%s241 + $0x10] sm:$0xf] %vm564, %v536
        %570 = vst.msk [vmem:[%s241 + $0x14] sm:$0xf] %vm564, %v537
        %571 = vst.msk [vmem:[%s241 + $0x18] sm:$0xf] %vm564, %v538
        %572 = vst.msk [vmem:[%s241 + $0x1c] sm:$0xf] %vm564, %v539
        %573 = vst.msk [vmem:[%s241 + $0x20] sm:$0xf] %vm564, %v540
        %574 = vst.msk [vmem:[%s241 + $0x24] sm:$0xf] %vm564, %v541
        %575 = vst.msk [vmem:[%s241 + $0x28] sm:$0xf] %vm564, %v542
        %576 = vst.msk [vmem:[%s241 + $0x2c] sm:$0xf] %vm564, %v543
        %577 = vst.msk [vmem:[%s241 + $0x30] sm:$0xf] %vm564, %v544
        %578 = vst.msk [vmem:[%s241 + $0x34] sm:$0xf] %vm564, %v545
        %579 = vst.msk [vmem:[%s241 + $0x38] sm:$0xf] %vm564, %v546
        %580 = vst.msk [vmem:[%s241 + $0x3c] sm:$0xf] %vm564, %v547
        %s581 = smul.u32 16, %s20
        %p582 = scmp.lt.s32.totalorder %s19, 1
        %s583 = scalar_select %p582, %s19, 1
        %p584 = scmp.lt.s32.totalorder %s581, 31
        %s585 = scalar_select %p584, %s581, 31
        %s586 = smul.addr %s583, 32
        %s587 = sadd.s32 %s585, %s586
        %s588 = smul.addr %s587, 4
        %s589 = scalar_lea.vmem %s2, %s588
        %p590 = scmp.lt.s32.totalorder %s19, 1
        %s591 = scalar_select %p590, %s19, 1
        %s592 = smul.addr %s591, 2
        %s593 = scalar_lea.vmem %s3, %s592
        // Predicated region
        $region71: #{bottleneck_forward.4} parent=61 // pred_check
          %p594 = pneg %p96
        $region72: #{bottleneck_forward.4} parent=61 // pred_check_branch
          %596 = sbr.rel (%p594) target = $region74
        $region73: #{bottleneck_forward.4} parent=61 // pred_region
          %s597 = smul.u32 16, %s20
        $region74: #{bottleneck_forward.4} parent=61 // pred_fallthru
          _
        // Predicated region
        $region75: #{bottleneck_forward.4} parent=61 // pred_check
          %p598 = pneg %p122
        $region76: #{bottleneck_forward.4} parent=61 // pred_check_branch
          %600 = sbr.rel (%p598) target = $region78
        $region77: #{bottleneck_forward.4} parent=61 // pred_region
          _
        $region78: #{bottleneck_forward.4} parent=61 // pred_fallthru
          _
      $region62: #{bottleneck_forward.4} parent=5 // pred_fallthru
        _
      %p601 = scmp.le.s32.totalorder 2, %s10
      // Predicated region
      $region79: #{bottleneck_forward.4} parent=5 // pred_check
        %p602 = pneg %p601
      $region80: #{bottleneck_forward.4} parent=5 // pred_check_branch
        %604 = sbr.rel (%p602) target = $region82
      $region81: #{bottleneck_forward.4} parent=5 // pred_region
        %s605 = ssub.s32 %s10, 2
        // Predicated region
        $region83: #{bottleneck_forward.4} parent=81 // pred_check
          %p606 = pneg %p102
        $region84: #{bottleneck_forward.4} parent=81 // pred_check_branch
          %608 = sbr.rel (%p606) target = $region86
        $region85: #{bottleneck_forward.4} parent=81 // pred_region
          %s609 = smul.u32 16, %s22
          %p610 = scmp.lt.s32.totalorder %s21, 1
          %s611 = scalar_select %p610, %s21, 1
          %p612 = scmp.lt.s32.totalorder %s609, 31
          %s613 = scalar_select %p612, %s609, 31
          %s614 = smul.addr %s611, 32
          %s615 = sadd.s32 %s613, %s614
          %s616 = smul.addr %s615, 4
          %s617 = scalar_lea.vmem %s2, %s616
        $region86: #{bottleneck_forward.4} parent=81 // pred_fallthru
          _
        // Predicated region
        $region87: #{bottleneck_forward.4} parent=81 // pred_check
          %p618 = pneg %p128
        $region88: #{bottleneck_forward.4} parent=81 // pred_check_branch
          %620 = sbr.rel (%p618) target = $region90
        $region89: #{bottleneck_forward.4} parent=81 // pred_region
          %p621 = scmp.lt.s32.totalorder %s21, 1
          %s622 = scalar_select %p621, %s21, 1
          %s623 = smul.addr %s622, 2
          %s624 = scalar_lea.vmem %s3, %s623
        $region90: #{bottleneck_forward.4} parent=81 // pred_fallthru
          _
      $region82: #{bottleneck_forward.4} parent=5 // pred_fallthru
        _
    $region6: #{bottleneck_forward.4} parent=1 // loop_footer
      %s14 = sadd.s32 1, %s10
    $region7: #{bottleneck_forward.4} parent=1 // loop_footer_branch
      %9 = sbr.rel target = $region3
    $region8: #{bottleneck_forward.4} parent=1 // loop_exit
      _

// kernel: bottleneck_forward.6
$region0: #{bottleneck_forward.6}
  #allocation0 [shape = 'u32[]', space=smem, size = 0x4, offset = 0x4, fixed_abs, tag = 'smem constant byte address 0x4 - core index']
  #allocation1 [shape = 'u32[144,128]{1,0:T(1,128)}', space=vmem, size = 0x12000, scoped, tag = 'internal scratch']
  %s0 = inlined_call_operand.vmem [shape: bf16[2,256,4], index: 0, kind: input, shape index: {}]
  %s1 = inlined_call_operand.vmem [shape: f32[1,4], index: 1, kind: input, shape index: {}]
  %s2 = inlined_call_operand.vmem [shape: f32[1,4], index: 2, kind: input, shape index: {}]
  %s3 = inlined_call_operand.vmem [shape: bf16[4,16], index: 3, kind: input, shape index: {}]
  %s4 = inlined_call_operand.vmem [shape: bf16[2,16,256], index: 4, kind: output, shape index: {0}]
  %s5 = inlined_call_operand.vmem [shape: f32[2,2,16], index: 5, kind: output, shape index: {1}]
  %6 = xla_tuple %s4, %s5
  %s7 = sld [smem:[#allocation0]]
  $region98: #{bottleneck_forward.6} parent=0
    _
  %s9 = ssub.s32 1, %s7
  %s10 = scalar_select 0, %s9, %s7
  $region1: #{bottleneck_forward.6} parent=0
    #allocation2 [shape = 'u8[8192]{0}', space=vmem, size = 0x2000, scoped, tag = 'output window, operand 0']
    loop: start=0, step=1, limit=6
    $region2: #{bottleneck_forward.6} parent=1 // loop_pre_header
      _
    $region3: #{bottleneck_forward.6} parent=1 // loop_header
      %s12 = sphi 0, %s16
      %p13 = scmp.ge.s32.totalorder %s12, 6
      %s19 = sphi 0, %s31
      %s20 = sphi 0, %s27
      %s21 = sphi 0, %s19
      %s22 = sphi 0, %s20
      %s23 = sphi 0, %s21
      %s24 = sphi 0, %s22
      %s36 = sphi 0, %s38
      %s39 = sphi 0, %s36
      %s40 = sphi 0, %s39
      %s56 = sphi 0, %s40
      %s60 = sphi 0, %s60
      %s62 = sphi 0, %s60
      %s63 = sphi 0, %s62
      %s77 = sphi 0, %s63
      %s81 = sphi 0, %s81
      %s83 = sphi 0, %s81
      %s84 = sphi 0, %s83
      %s98 = sphi 0, %s84
      %s102 = sphi 0, %s102
      %s104 = sphi 0, %s102
      %s105 = sphi 0, %s104
      %s119 = sphi 0, %s105
      %s127 = sphi 0, %s129
      %s130 = sphi 0, %s127
      %s131 = sphi 0, %s130
      %s147 = sphi 0, %s131
      %s153 = sphi 0, %s155
      %s156 = sphi 0, %s153
      %s157 = sphi 0, %s156
      %s173 = sphi 0, %s157
    $region4: #{bottleneck_forward.6} parent=1 // loop_header_branch
      %15 = sbr.rel (%p13) target = $region8
    $region5: #{bottleneck_forward.6} parent=1 // loop_body
      %s17 = ssub.s32 %s12, 1
      %s18 = ssub.s32 %s12, 2
      %s25 = sadd.s32 1, %s20
      %p26 = scmp.ge.s32.totalorder %s25, 2
      %s27 = scalar_select %p26, 0, %s25
      %s28 = sadd.s32 1, %s19
      %s29 = scalar_select %p26, %s28, %s19
      %p30 = scmp.ge.s32.totalorder %s29, 2
      %s31 = scalar_select %p30, 0, %s29
      %s32 = ssub.s32 %s19, %s31
      %s33 = ssub.s32 %s20, %s27
      %s34 = sor.u32 %s32, %s33
      %p35 = scmp.eq.s32.totalorder %s34, 0
      %s37 = sadd.s32 %s36, 1
      %s38 = scalar_select %p35, %s36, %s37
      %p41 = pneg %p35
      %p42 = scmp.eq.s32.totalorder %s12, 3
      %p43 = por %p41, %p42
      %p44 = scmp.ne.s32.totalorder %s36, %s39
      %p45 = scmp.eq.s32.totalorder %s12, 0
      %p46 = por %p44, %p45
      %p47 = scmp.ne.s32.totalorder %s36, %s39
      %p48 = scmp.eq.s32.totalorder %s17, 3
      %p49 = por %p47, %p48
      %p50 = scmp.ne.s32.totalorder %s39, %s40
      %p51 = scmp.eq.s32.totalorder %s17, 0
      %p52 = por %p50, %p51
      %p53 = scmp.ne.s32.totalorder %s39, %s40
      %p54 = scmp.eq.s32.totalorder %s18, 3
      %p55 = por %p53, %p54
      %p57 = scmp.ne.s32.totalorder %s40, %s56
      %p58 = scmp.eq.s32.totalorder %s18, 0
      %p59 = por %p57, %p58
      %s61 = sadd.s32 %s60, 1
      %p64 = scmp.eq.s32.totalorder %s12, 3
      %p65 = scmp.ne.s32.totalorder %s60, %s62
      %p66 = scmp.eq.s32.totalorder %s12, 0
      %p67 = por %p65, %p66
      %p68 = scmp.ne.s32.totalorder %s60, %s62
      %p69 = scmp.eq.s32.totalorder %s17, 3
      %p70 = por %p68, %p69
      %p71 = scmp.ne.s32.totalorder %s62, %s63
      %p72 = scmp.eq.s32.totalorder %s17, 0
      %p73 = por %p71, %p72
      %p74 = scmp.ne.s32.totalorder %s62, %s63
      %p75 = scmp.eq.s32.totalorder %s18, 3
      %p76 = por %p74, %p75
      %p78 = scmp.ne.s32.totalorder %s63, %s77
      %p79 = scmp.eq.s32.totalorder %s18, 0
      %p80 = por %p78, %p79
      %s82 = sadd.s32 %s81, 1
      %p85 = scmp.eq.s32.totalorder %s12, 3
      %p86 = scmp.ne.s32.totalorder %s81, %s83
      %p87 = scmp.eq.s32.totalorder %s12, 0
      %p88 = por %p86, %p87
      %p89 = scmp.ne.s32.totalorder %s81, %s83
      %p90 = scmp.eq.s32.totalorder %s17, 3
      %p91 = por %p89, %p90
      %p92 = scmp.ne.s32.totalorder %s83, %s84
      %p93 = scmp.eq.s32.totalorder %s17, 0
      %p94 = por %p92, %p93
      %p95 = scmp.ne.s32.totalorder %s83, %s84
      %p96 = scmp.eq.s32.totalorder %s18, 3
      %p97 = por %p95, %p96
      %p99 = scmp.ne.s32.totalorder %s84, %s98
      %p100 = scmp.eq.s32.totalorder %s18, 0
      %p101 = por %p99, %p100
      %s103 = sadd.s32 %s102, 1
      %p106 = scmp.eq.s32.totalorder %s12, 3
      %p107 = scmp.ne.s32.totalorder %s102, %s104
      %p108 = scmp.eq.s32.totalorder %s12, 0
      %p109 = por %p107, %p108
      %p110 = scmp.ne.s32.totalorder %s102, %s104
      %p111 = scmp.eq.s32.totalorder %s17, 3
      %p112 = por %p110, %p111
      %p113 = scmp.ne.s32.totalorder %s104, %s105
      %p114 = scmp.eq.s32.totalorder %s17, 0
      %p115 = por %p113, %p114
      %p116 = scmp.ne.s32.totalorder %s104, %s105
      %p117 = scmp.eq.s32.totalorder %s18, 3
      %p118 = por %p116, %p117
      %p120 = scmp.ne.s32.totalorder %s105, %s119
      %p121 = scmp.eq.s32.totalorder %s18, 0
      %p122 = por %p120, %p121
      %s123 = ssub.s32 %s19, %s31
      %s124 = ssub.s32 %s20, %s27
      %s125 = sor.u32 %s123, %s124
      %p126 = scmp.eq.s32.totalorder %s125, 0
      %s128 = sadd.s32 %s127, 1
      %s129 = scalar_select %p126, %s127, %s128
      %p132 = pneg %p126
      %p133 = scmp.eq.s32.totalorder %s12, 3
      %p134 = por %p132, %p133
      %p135 = scmp.ne.s32.totalorder %s127, %s130
      %p136 = scmp.eq.s32.totalorder %s12, 0
      %p137 = por %p135, %p136
      %p138 = scmp.ne.s32.totalorder %s127, %s130
      %p139 = scmp.eq.s32.totalorder %s17, 3
      %p140 = por %p138, %p139
      %p141 = scmp.ne.s32.totalorder %s130, %s131
      %p142 = scmp.eq.s32.totalorder %s17, 0
      %p143 = por %p141, %p142
      %p144 = scmp.ne.s32.totalorder %s130, %s131
      %p145 = scmp.eq.s32.totalorder %s18, 3
      %p146 = por %p144, %p145
      %p148 = scmp.ne.s32.totalorder %s131, %s147
      %p149 = scmp.eq.s32.totalorder %s18, 0
      %p150 = por %p148, %p149
      %s151 = ssub.s32 %s19, %s31
      %p152 = scmp.eq.s32.totalorder %s151, 0
      %s154 = sadd.s32 %s153, 1
      %s155 = scalar_select %p152, %s153, %s154
      %p158 = pneg %p152
      %p159 = scmp.eq.s32.totalorder %s12, 3
      %p160 = por %p158, %p159
      %p161 = scmp.ne.s32.totalorder %s153, %s156
      %p162 = scmp.eq.s32.totalorder %s12, 0
      %p163 = por %p161, %p162
      %p164 = scmp.ne.s32.totalorder %s153, %s156
      %p165 = scmp.eq.s32.totalorder %s17, 3
      %p166 = por %p164, %p165
      %p167 = scmp.ne.s32.totalorder %s156, %s157
      %p168 = scmp.eq.s32.totalorder %s17, 0
      %p169 = por %p167, %p168
      %p170 = scmp.ne.s32.totalorder %s156, %s157
      %p171 = scmp.eq.s32.totalorder %s18, 3
      %p172 = por %p170, %p171
      %p174 = scmp.ne.s32.totalorder %s157, %s173
      %p175 = scmp.eq.s32.totalorder %s18, 0
      %p176 = por %p174, %p175
      %p177 = scmp.le.s32.totalorder 1, %s12
      %p178 = scmp.lt.s32.totalorder %s12, 5
      %p179 = pnand %p177, %p178
      %p180 = pneg %p179
      // Predicated region
      $region9: #{bottleneck_forward.6} parent=5 // pred_check
        _
      $region10: #{bottleneck_forward.6} parent=5 // pred_check_branch
        %182 = sbr.rel (%p179) target = $region12
      $region11: #{bottleneck_forward.6} parent=5 // pred_region
        %s183 = ssub.s32 %s12, 1
        // Predicated region
        $region13: #{bottleneck_forward.6} parent=11 // pred_check
          %p184 = pneg %p73
        $region14: #{bottleneck_forward.6} parent=11 // pred_check_branch
          %186 = sbr.rel (%p184) target = $region16
        $region15: #{bottleneck_forward.6} parent=11 // pred_region
          _
        $region16: #{bottleneck_forward.6} parent=11 // pred_fallthru
          _
        // Predicated region
        $region17: #{bottleneck_forward.6} parent=11 // pred_check
          %p187 = pneg %p94
        $region18: #{bottleneck_forward.6} parent=11 // pred_check_branch
          %189 = sbr.rel (%p187) target = $region20
        $region19: #{bottleneck_forward.6} parent=11 // pred_region
          _
        $region20: #{bottleneck_forward.6} parent=11 // pred_fallthru
          _
        // Predicated region
        $region21: #{bottleneck_forward.6} parent=11 // pred_check
          %p190 = pneg %p115
        $region22: #{bottleneck_forward.6} parent=11 // pred_check_branch
          %192 = sbr.rel (%p190) target = $region24
        $region23: #{bottleneck_forward.6} parent=11 // pred_region
          _
        $region24: #{bottleneck_forward.6} parent=11 // pred_fallthru
          _
      $region12: #{bottleneck_forward.6} parent=5 // pred_fallthru
        _
      %p193 = scmp.lt.s32.totalorder %s12, 4
      // Predicated region
      $region25: #{bottleneck_forward.6} parent=5 // pred_check
        %p194 = pneg %p193
      $region26: #{bottleneck_forward.6} parent=5 // pred_check_branch
        %196 = sbr.rel (%p194) target = $region28
      $region27: #{bottleneck_forward.6} parent=5 // pred_region
        // Predicated region
        $region29: #{bottleneck_forward.6} parent=27 // pred_check
          %p197 = pneg %p46
        $region30: #{bottleneck_forward.6} parent=27 // pred_check_branch
          %199 = sbr.rel (%p197) target = $region32
        $region31: #{bottleneck_forward.6} parent=27 // pred_region
          %s200 = smul.u32 16, %s20
          %p201 = scmp.lt.s32.totalorder %s19, 1
          %s202 = scalar_select %p201, %s19, 1
          %p203 = scmp.lt.s32.totalorder %s200, 31
          %s204 = scalar_select %p203, %s200, 31
          %s205 = smul.addr %s202, 32
          %s206 = sadd.s32 %s204, %s205
          %s207 = smul.addr %s206, 4
          %s208 = scalar_lea.vmem %s0, %s207
          %s209 = smul.u32 16, %s20
        $region32: #{bottleneck_forward.6} parent=27 // pred_fallthru
          _
      $region28: #{bottleneck_forward.6} parent=5 // pred_fallthru
        _
      %p210 = scmp.le.s32.totalorder 1, %s12
      %p211 = scmp.lt.s32.totalorder %s12, 5
      %p212 = pnand %p210, %p211
      %p213 = pneg %p212
      // Predicated region
      $region33: #{bottleneck_forward.6} parent=5 // pred_check
        _
      $region34: #{bottleneck_forward.6} parent=5 // pred_check_branch
        %215 = sbr.rel (%p212) target = $region36
      $region35: #{bottleneck_forward.6} parent=5 // pred_region
        %s216 = ssub.s32 %s12, 1
        %s217 = smul.u32 16, %s22
        %p218 = scmp.lt.s32.totalorder %s21, 1
        %s219 = scalar_select %p218, %s21, 1
        %p220 = scmp.lt.s32.totalorder %s217, 31
        %s221 = scalar_select %p220, %s217, 31
        %s222 = smul.addr %s219, 32
        %s223 = sadd.s32 %s221, %s222
        %s224 = smul.addr %s223, 4
        %s225 = scalar_lea.vmem %s0, %s224
        %p226 = pneg %p52
        %p227 = pneg %p49
        %p228 = pneg %p73
        %p229 = pneg %p70
        %p230 = pneg %p94
        %p231 = pneg %p91
        %p232 = pneg %p115
        %p233 = pneg %p112
        %p234 = pneg %p143
        %p235 = pneg %p140
        %s236 = sand.u32 %s130, 1
        %s237 = sand.u32 %s130, 1
        %s238 = smul.addr %s237, 8
        %s239 = scalar_lea.vmem [#allocation2], %s238
        %p240 = pneg %p169
        %p241 = pneg %p166
        %p242 = scmp.lt.s32.totalorder %s21, 1
        %s243 = scalar_select %p242, %s21, 1
        %s244 = smul.addr %s243, 2
        %s245 = scalar_lea.vmem %s5, %s244
        %s246 = smul.u32 16, %s22
        %p247 = scmp.lt.s32.totalorder %s21, 1
        %s248 = scalar_select %p247, %s21, 1
        %p249 = scmp.lt.s32.totalorder %s246, 31
        %s250 = scalar_select %p249, %s246, 31
        %s251 = smul.addr %s248, 32
        %s252 = sadd.s32 %s250, %s251
        %s253 = smul.addr %s252, 4
        %s254 = scalar_lea.vmem %s0, %s253
        %s255 = smul.u32 16, %s22
        %p256 = scmp.lt.s32.totalorder %s21, 1
        %s257 = scalar_select %p256, %s21, 1
        %s258 = smul.addr %s257, 2
        %s259 = scalar_lea.vmem %s5, %s258
        %p261 = scmp.eq.s32.totalorder %s22, 0
        // Predicated region
        $region37: #{bottleneck_forward.6} parent=35 // pred_check
          %p262 = pneg %p261
        $region38: #{bottleneck_forward.6} parent=35 // pred_check_branch
          %264 = sbr.rel (%p262) target = $region40
        $region39: #{bottleneck_forward.6} parent=35 // pred_region
          %vm265 = vcmask 123904
          %266 = vst.msk [vmem:[%s259] sm:$0x3] %vm265, 0.0
        $region40: #{bottleneck_forward.6} parent=35 // pred_fallthru
          _
        %v267 = vld [vmem:[%s254] sm:$0xf]
        %v268 = vld [vmem:[%s254 + $0x4] sm:$0xf]
        %v269 = vld [vmem:[%s254 + $0x8] sm:$0xf]
        %v270 = vld [vmem:[%s254 + $0xc] sm:$0xf]
        %v271 = vld [vmem:[%s254 + $0x10] sm:$0xf]
        %v272 = vld [vmem:[%s254 + $0x14] sm:$0xf]
        %v273 = vld [vmem:[%s254 + $0x18] sm:$0xf]
        %v274 = vld [vmem:[%s254 + $0x1c] sm:$0xf]
        %v275 = vld [vmem:[%s254 + $0x20] sm:$0xf]
        %v276 = vld [vmem:[%s254 + $0x24] sm:$0xf]
        %v277 = vld [vmem:[%s254 + $0x28] sm:$0xf]
        %v278 = vld [vmem:[%s254 + $0x2c] sm:$0xf]
        %v279 = vld [vmem:[%s254 + $0x30] sm:$0xf]
        %v280 = vld [vmem:[%s254 + $0x34] sm:$0xf]
        %v281 = vld [vmem:[%s254 + $0x38] sm:$0xf]
        %v282 = vld [vmem:[%s254 + $0x3c] sm:$0xf]
        %v283 = vunpack.c.l.bf16 %v267
        %v284 = vunpack.c.l.bf16 %v268
        %v285 = vunpack.c.l.bf16 %v269
        %v286 = vunpack.c.l.bf16 %v270
        %v287 = vunpack.c.l.bf16 %v271
        %v288 = vunpack.c.l.bf16 %v272
        %v289 = vunpack.c.l.bf16 %v273
        %v290 = vunpack.c.l.bf16 %v274
        %v291 = vunpack.c.l.bf16 %v275
        %v292 = vunpack.c.l.bf16 %v276
        %v293 = vunpack.c.l.bf16 %v277
        %v294 = vunpack.c.l.bf16 %v278
        %v295 = vunpack.c.l.bf16 %v279
        %v296 = vunpack.c.l.bf16 %v280
        %v297 = vunpack.c.l.bf16 %v281
        %v298 = vunpack.c.l.bf16 %v282
        %v299 = vld [vmem:[%s1] sm:$0x1]
        %v301 = vlaneseq
        %v302 = vshrl.u32 %v301, 7
        %v303 = vsub.s32 0, %v302
        %v304 = vrot.slane %v299, %v303
        %v306 = vmul.f32 %v283, %v304
        %v307 = vmul.f32 %v284, %v304
        %v308 = vmul.f32 %v285, %v304
        %v309 = vmul.f32 %v286, %v304
        %v310 = vmul.f32 %v287, %v304
        %v311 = vmul.f32 %v288, %v304
        %v312 = vmul.f32 %v289, %v304
        %v313 = vmul.f32 %v290, %v304
        %v314 = vmul.f32 %v291, %v304
        %v315 = vmul.f32 %v292, %v304
        %v316 = vmul.f32 %v293, %v304
        %v317 = vmul.f32 %v294, %v304
        %v318 = vmul.f32 %v295, %v304
        %v319 = vmul.f32 %v296, %v304
        %v320 = vmul.f32 %v297, %v304
        %v321 = vmul.f32 %v298, %v304
        %v322 = vld [vmem:[%s2] sm:$0x1]
        %v324 = vlaneseq
        %v325 = vshrl.u32 %v324, 7
        %v326 = vsub.s32 0, %v325
        %v327 = vrot.slane %v322, %v326
        %v329 = vadd.f32 %v306, %v327
        %v330 = vadd.f32 %v307, %v327
        %v331 = vadd.f32 %v308, %v327
        %v332 = vadd.f32 %v309, %v327
        %v333 = vadd.f32 %v310, %v327
        %v334 = vadd.f32 %v311, %v327
        %v335 = vadd.f32 %v312, %v327
        %v336 = vadd.f32 %v313, %v327
        %v337 = vadd.f32 %v314, %v327
        %v338 = vadd.f32 %v315, %v327
        %v339 = vadd.f32 %v316, %v327
        %v340 = vadd.f32 %v317, %v327
        %v341 = vadd.f32 %v318, %v327
        %v342 = vadd.f32 %v319, %v327
        %v343 = vadd.f32 %v320, %v327
        %v344 = vadd.f32 %v321, %v327
        %v345 = vmax.f32 %v329, 0.0
        %v346 = vmax.f32 %v330, 0.0
        %v347 = vmax.f32 %v331, 0.0
        %v348 = vmax.f32 %v332, 0.0
        %v349 = vmax.f32 %v333, 0.0
        %v350 = vmax.f32 %v334, 0.0
        %v351 = vmax.f32 %v335, 0.0
        %v352 = vmax.f32 %v336, 0.0
        %v353 = vmax.f32 %v337, 0.0
        %v354 = vmax.f32 %v338, 0.0
        %v355 = vmax.f32 %v339, 0.0
        %v356 = vmax.f32 %v340, 0.0
        %v357 = vmax.f32 %v341, 0.0
        %v358 = vmax.f32 %v342, 0.0
        %v359 = vmax.f32 %v343, 0.0
        %v360 = vmax.f32 %v344, 0.0
        %v361 = vpack.c.bf16 %v346, %v345
        %v362 = vpack.c.bf16 %v348, %v347
        %v363 = vpack.c.bf16 %v350, %v349
        %v364 = vpack.c.bf16 %v352, %v351
        %v365 = vpack.c.bf16 %v354, %v353
        %v366 = vpack.c.bf16 %v356, %v355
        %v367 = vpack.c.bf16 %v358, %v357
        %v368 = vpack.c.bf16 %v360, %v359
        %v369 = vld [vmem:[%s3] sm:$0x3]
        %vm370 = vcmask 31744
        %v372 = vsel %vm370, %v361, 0
        %v375 = vsel %vm370, %v362, 0
        %v378 = vsel %vm370, %v363, 0
        %v381 = vsel %vm370, %v364, 0
        %v384 = vsel %vm370, %v365, 0
        %v387 = vsel %vm370, %v366, 0
        %v390 = vsel %vm370, %v367, 0
        %v393 = vsel %vm370, %v368, 0
        %vm395 = vcmask 1041408
        %v397 = vsel %vm395, %v369, 0
        %399 = vmatprep.subr.bf16.mxu0 0
        %400 = vmatpush1.bf16.msra.mxu0 %v397
        %401 = vmatprep.subr.bf16.mxu0 0
        %402 = vmatpush1.bf16.msra.mxu0 0
        %403 = vmatprep.subr.bf16.mxu0 0
        %404 = vmatpush1.bf16.msra.mxu0 0
        %405 = vmatprep.subr.bf16.mxu0 0
        %406 = vmatpush1.bf16.msra.mxu0 0
        %407 = vmatprep.subr.bf16.mxu0 0
        %408 = vmatpush1.bf16.msra.mxu0 0
        %409 = vmatprep.subr.bf16.mxu0 0
        %410 = vmatpush1.bf16.msra.mxu0 0
        %411 = vmatprep.subr.bf16.mxu0 0
        %412 = vmatpush1.bf16.msra.mxu0 0
        %413 = vmatprep.subr.bf16.mxu0 0
        %414 = vmatpush1.bf16.msra.mxu0 0
        %415 = vmatprep.subr.bf16.mxu0 0
        %416 = vmatpush1.bf16.msra.mxu0 0
        %417 = vmatprep.subr.bf16.mxu0 0
        %418 = vmatpush1.bf16.msra.mxu0 0
        %419 = vmatprep.subr.bf16.mxu0 0
        %420 = vmatpush1.bf16.msra.mxu0 0
        %421 = vmatprep.subr.bf16.mxu0 0
        %422 = vmatpush1.bf16.msra.mxu0 0
        %423 = vmatprep.subr.bf16.mxu0 0
        %424 = vmatpush1.bf16.msra.mxu0 0
        %425 = vmatprep.subr.bf16.mxu0 0
        %426 = vmatpush1.bf16.msra.mxu0 0
        %427 = vmatprep.subr.bf16.mxu0 0
        %428 = vmatpush1.bf16.msra.mxu0 0
        %429 = vmatprep.subr.bf16.mxu0 0
        %430 = vmatpush1.bf16.msra.mxu0 0
        %431 = vmatprep.mubr.bf16.mxu0 0
        %432 = vmatmul.mubr.bf16.gmra.mrb[0].mxu0 %v372
        %v433 = vpop.f32.mrb[0].mxu0
        %v434 = vadd.f32 0.0, %v433
        %v435 = vpop.f32.mrb[0].mxu0
        %v436 = vpop.f32.mrb[0].mxu0
        %v437 = vadd.f32 0.0, %v436
        %v438 = vpop.f32.mrb[0].mxu0
        %439 = vmatprep.mubr.bf16.mxu0 0
        %440 = vmatmul.mubr.bf16.gmra.mrb[0].mxu0 %v375
        %v441 = vpop.f32.mrb[0].mxu0
        %v442 = vadd.f32 0.0, %v441
        %v443 = vpop.f32.mrb[0].mxu0
        %v444 = vpop.f32.mrb[0].mxu0
        %v445 = vadd.f32 0.0, %v444
        %v446 = vpop.f32.mrb[0].mxu0
        %447 = vmatprep.mubr.bf16.mxu0 0
        %448 = vmatmul.mubr.bf16.gmra.mrb[0].mxu0 %v378
        %v449 = vpop.f32.mrb[0].mxu0
        %v450 = vadd.f32 0.0, %v449
        %v451 = vpop.f32.mrb[0].mxu0
        %v452 = vpop.f32.mrb[0].mxu0
        %v453 = vadd.f32 0.0, %v452
        %v454 = vpop.f32.mrb[0].mxu0
        %455 = vmatprep.mubr.bf16.mxu0 0
        %456 = vmatmul.mubr.bf16.gmra.mrb[0].mxu0 %v381
        %v457 = vpop.f32.mrb[0].mxu0
        %v458 = vadd.f32 0.0, %v457
        %v459 = vpop.f32.mrb[0].mxu0
        %v460 = vpop.f32.mrb[0].mxu0
        %v461 = vadd.f32 0.0, %v460
        %v462 = vpop.f32.mrb[0].mxu0
        %463 = vmatprep.mubr.bf16.mxu0 0
        %464 = vmatmul.mubr.bf16.gmra.mrb[0].mxu0 %v384
        %v465 = vpop.f32.mrb[0].mxu0
        %v466 = vadd.f32 0.0, %v465
        %v467 = vpop.f32.mrb[0].mxu0
        %v468 = vpop.f32.mrb[0].mxu0
        %v469 = vadd.f32 0.0, %v468
        %v470 = vpop.f32.mrb[0].mxu0
        %471 = vmatprep.mubr.bf16.mxu0 0
        %472 = vmatmul.mubr.bf16.gmra.mrb[0].mxu0 %v387
        %v473 = vpop.f32.mrb[0].mxu0
        %v474 = vadd.f32 0.0, %v473
        %v475 = vpop.f32.mrb[0].mxu0
        %v476 = vpop.f32.mrb[0].mxu0
        %v477 = vadd.f32 0.0, %v476
        %v478 = vpop.f32.mrb[0].mxu0
        %479 = vmatprep.mubr.bf16.mxu0 0
        %480 = vmatmul.mubr.bf16.gmra.mrb[0].mxu0 %v390
        %v481 = vpop.f32.mrb[0].mxu0
        %v482 = vadd.f32 0.0, %v481
        %v483 = vpop.f32.mrb[0].mxu0
        %v484 = vpop.f32.mrb[0].mxu0
        %v485 = vadd.f32 0.0, %v484
        %v486 = vpop.f32.mrb[0].mxu0
        %487 = vmatprep.mubr.bf16.mxu0 0
        %488 = vmatmul.mubr.bf16.gmra.mrb[0].mxu0 %v393
        %v489 = vpop.f32.mrb[0].mxu0
        %v490 = vadd.f32 0.0, %v489
        %v491 = vpop.f32.mrb[0].mxu0
        %v492 = vpop.f32.mrb[0].mxu0
        %v493 = vadd.f32 0.0, %v492
        %v494 = vpop.f32.mrb[0].mxu0
        %495 = vdwg.mxu0
        %v496 = vld [vmem:[%s259] sm:$0x3]
        %vm497 = vcmask 130048
        %v498 = vsel %vm497, %v434, 0.0
        %v499 = vsel %vm497, %v437, 0.0
        %v500 = vadd.f32 %v498, %v499
        %v501 = vsel %vm497, %v442, 0.0
        %v502 = vadd.f32 %v500, %v501
        %v503 = vsel %vm497, %v445, 0.0
        %v504 = vadd.f32 %v502, %v503
        %v505 = vsel %vm497, %v450, 0.0
        %v506 = vadd.f32 %v504, %v505
        %v507 = vsel %vm497, %v453, 0.0
        %v508 = vadd.f32 %v506, %v507
        %v509 = vsel %vm497, %v458, 0.0
        %v510 = vadd.f32 %v508, %v509
        %v511 = vsel %vm497, %v461, 0.0
        %v512 = vadd.f32 %v510, %v511
        %v513 = vsel %vm497, %v466, 0.0
        %v514 = vadd.f32 %v512, %v513
        %v515 = vsel %vm497, %v469, 0.0
        %v516 = vadd.f32 %v514, %v515
        %v517 = vsel %vm497, %v474, 0.0
        %v518 = vadd.f32 %v516, %v517
        %v519 = vsel %vm497, %v477, 0.0
        %v520 = vadd.f32 %v518, %v519
        %v521 = vsel %vm497, %v482, 0.0
        %v522 = vadd.f32 %v520, %v521
        %v523 = vsel %vm497, %v485, 0.0
        %v524 = vadd.f32 %v522, %v523
        %v525 = vsel %vm497, %v490, 0.0
        %v526 = vadd.f32 %v524, %v525
        %v527 = vsel %vm497, %v493, 0.0
        %v528 = vadd.f32 %v526, %v527
        %v529 = vrot.slane %v528, 4
        %v530 = vadd.f32 %v528, %v529
        %v531 = vrot.slane %v530, 2
        %v532 = vadd.f32 %v530, %v531
        %v533 = vrot.slane %v532, 1
        %v534 = vadd.f32 %v532, %v533
        %v535 = vmul.f32 %v434, %v434
        %v536 = vmul.f32 %v437, %v437
        %v537 = vmul.f32 %v442, %v442
        %v538 = vmul.f32 %v445, %v445
        %v539 = vmul.f32 %v450, %v450
        %v540 = vmul.f32 %v453, %v453
        %v541 = vmul.f32 %v458, %v458
        %v542 = vmul.f32 %v461, %v461
        %v543 = vmul.f32 %v466, %v466
        %v544 = vmul.f32 %v469, %v469
        %v545 = vmul.f32 %v474, %v474
        %v546 = vmul.f32 %v477, %v477
        %v547 = vmul.f32 %v482, %v482
        %v548 = vmul.f32 %v485, %v485
        %v549 = vmul.f32 %v490, %v490
        %v550 = vmul.f32 %v493, %v493
        %v551 = vsel %vm497, %v535, 0.0
        %v552 = vsel %vm497, %v536, 0.0
        %v553 = vadd.f32 %v551, %v552
        %v554 = vsel %vm497, %v537, 0.0
        %v555 = vadd.f32 %v553, %v554
        %v556 = vsel %vm497, %v538, 0.0
        %v557 = vadd.f32 %v555, %v556
        %v558 = vsel %vm497, %v539, 0.0
        %v559 = vadd.f32 %v557, %v558
        %v560 = vsel %vm497, %v540, 0.0
        %v561 = vadd.f32 %v559, %v560
        %v562 = vsel %vm497, %v541, 0.0
        %v563 = vadd.f32 %v561, %v562
        %v564 = vsel %vm497, %v542, 0.0
        %v565 = vadd.f32 %v563, %v564
        %v566 = vsel %vm497, %v543, 0.0
        %v567 = vadd.f32 %v565, %v566
        %v568 = vsel %vm497, %v544, 0.0
        %v569 = vadd.f32 %v567, %v568
        %v570 = vsel %vm497, %v545, 0.0
        %v571 = vadd.f32 %v569, %v570
        %v572 = vsel %vm497, %v546, 0.0
        %v573 = vadd.f32 %v571, %v572
        %v574 = vsel %vm497, %v547, 0.0
        %v575 = vadd.f32 %v573, %v574
        %v576 = vsel %vm497, %v548, 0.0
        %v577 = vadd.f32 %v575, %v576
        %v578 = vsel %vm497, %v549, 0.0
        %v579 = vadd.f32 %v577, %v578
        %v580 = vsel %vm497, %v550, 0.0
        %v581 = vadd.f32 %v579, %v580
        %v582 = vrot.slane %v581, 4
        %v583 = vadd.f32 %v581, %v582
        %v584 = vrot.slane %v583, 2
        %v585 = vadd.f32 %v583, %v584
        %v586 = vrot.slane %v585, 1
        %v587 = vadd.f32 %v585, %v586
        %vm588 = vcmask 1040384
        %v589 = vsel %vm588, %v534, %v587
        %v590 = vadd.f32 %v496, %v589
        %vm591 = vcmask 123904
        %592 = vst.msk [vmem:[%s259] sm:$0x3] %vm591, %v590
        %v593 = vpack.c.bf16 %v437, %v434
        %v594 = vpack.c.bf16 %v445, %v442
        %v595 = vpack.c.bf16 %v453, %v450
        %v596 = vpack.c.bf16 %v461, %v458
        %v597 = vpack.c.bf16 %v469, %v466
        %v598 = vpack.c.bf16 %v477, %v474
        %v599 = vpack.c.bf16 %v485, %v482
        %v600 = vpack.c.bf16 %v493, %v490
        %601 = vxpose.xlu0.c.b16.start [1/8] %v593, 128
        %602 = vxpose.xlu0.c.b16.cont [2/8] %v594, 128
        %603 = vxpose.xlu0.c.b16.cont [3/8] %v595, 128
        %604 = vxpose.xlu0.c.b16.cont [4/8] %v596, 128
        %605 = vxpose.xlu0.c.b16.cont [5/8] %v597, 128
        %606 = vxpose.xlu0.c.b16.cont [6/8] %v598, 128
        %607 = vxpose.xlu0.c.b16.cont [7/8] %v599, 128
        %608 = vxpose.xlu0.c.b16.end [8/8] %v600, 128
        %v609 = vpop.trf.xlu0
        %v610 = vpop.trf.xlu0
        %v611 = vpop.trf.xlu0
        %v612 = vpop.trf.xlu0
        %v613 = vpop.trf.xlu0
        %v614 = vpop.trf.xlu0
        %v615 = vpop.trf.xlu0
        %v616 = vpop.trf.xlu0
        %v618 = vunpack.c.l.b16 %v609
        %v619 = vunpack.c.h.b16 %v609
        %v620 = vpack.c.b16 %v618, %v618
        %v621 = vpack.c.b16 %v619, %v619
        %624 = vst [vmem:[%s239] sm:$0xf] %v620
        %625 = vst [vmem:[%s239 + $0x4] sm:$0xf] %v621
        %s626 = sand.u32 %s130, 1
        %s627 = sand.u32 %s130, 1
        %s628 = smul.addr %s627, 8
        %s629 = scalar_lea.vmem [#allocation2], %s628
        %p630 = scmp.lt.s32.totalorder %s21, 1
        %s631 = scalar_select %p630, %s21, 1
        %s632 = smul.addr %s631, 2
        %s633 = scalar_lea.vmem %s5, %s632
        // Predicated region
        $region41: #{bottleneck_forward.6} parent=35 // pred_check
          %p634 = pneg %p140
        $region42: #{bottleneck_forward.6} parent=35 // pred_check_branch
          %636 = sbr.rel (%p634) target = $region44
        $region43: #{bottleneck_forward.6} parent=35 // pred_region
          %s637 = smul.addr %s21, 4
          %s638 = sadd.s32 %s22, %s637
          %s639 = smul.addr %s638, 4
          %s640 = scalar_lea.vmem %s4, %s639
          // Predicated region
          $region45: #{bottleneck_forward.6} parent=43 // pred_check
            _
          $region46: #{bottleneck_forward.6} parent=43 // pred_check_branch
            %642 = sbr.rel (0) target = $region48
          $region47: #{bottleneck_forward.6} parent=43 // pred_region
            // Predicated region
            $region49: #{bottleneck_forward.6} parent=47 // pred_check
              _
            $region50: #{bottleneck_forward.6} parent=47 // pred_check_branch
              %644 = sbr.rel target = $region52
            $region51: #{bottleneck_forward.6} parent=47 // pred_region
              // Predicated region
              $region64: #{bottleneck_forward.6} parent=51 // pred_check
                _
              $region65: #{bottleneck_forward.6} parent=51 // pred_check_branch
                %661 = sbr.rel (0) target = $region67
              $region66: #{bottleneck_forward.6} parent=51 // pred_region
                loop: start=0, step=1, limit=1
                $region68: #{bottleneck_forward.6} parent=66 // loop_pre_header
                  _
                $region69: #{bottleneck_forward.6} parent=66 // loop_header
                  %s663 = sphi 0, %s667
                  %p664 = scmp.ge.s32.totalorder %s663, 1
                  %s668 = sphi %s629, %s629
                  %s669 = sphi %s640, %s640
                $region70: #{bottleneck_forward.6} parent=66 // loop_header_branch
                  %666 = sbr.rel (%p664) target = $region74
                $region71: #{bottleneck_forward.6} parent=66 // loop_body
                  _
                $region72: #{bottleneck_forward.6} parent=66 // loop_footer
                  %s667 = sadd.s32 1, %s663
                $region73: #{bottleneck_forward.6} parent=66 // loop_footer_branch
                  %662 = sbr.rel target = $region69
                $region74: #{bottleneck_forward.6} parent=66 // loop_exit
                  _
                loop: start=0, step=1, limit=1
                $region75: #{bottleneck_forward.6} parent=66 // loop_pre_header
                  _
                $region76: #{bottleneck_forward.6} parent=66 // loop_header
                  %s672 = sphi 0, %s676
                  %p673 = scmp.ge.s32.totalorder %s672, 1
                  %s677 = sphi %s629, %s629
                  %s678 = sphi %s640, %s640
                $region77: #{bottleneck_forward.6} parent=66 // loop_header_branch
                  %675 = sbr.rel (%p673) target = $region81
                $region78: #{bottleneck_forward.6} parent=66 // loop_body
                  %v679 = vld [vmem:[%s677] sm:$0xf]
                  %680 = vst [vmem:[%s678] sm:$0xf] %v679
                  %v681 = vld [vmem:[%s677 + $0x4] sm:$0xf]
                  %682 = vst [vmem:[%s678 + $0x8] sm:$0xf] %v681
                $region79: #{bottleneck_forward.6} parent=66 // loop_footer
                  %s676 = sadd.s32 1, %s672
                $region80: #{bottleneck_forward.6} parent=66 // loop_footer_branch
                  %671 = sbr.rel target = $region76
                $region81: #{bottleneck_forward.6} parent=66 // loop_exit
                  _
              $region67: #{bottleneck_forward.6} parent=51 // pred_fallthru
                _
            $region52: #{bottleneck_forward.6} parent=47 // pred_fallthru
              _
            // Predicated region
            $region53: #{bottleneck_forward.6} parent=47 // pred_check
              _
            $region54: #{bottleneck_forward.6} parent=47 // pred_check_branch
              %646 = sbr.rel (0) target = $region56
            $region55: #{bottleneck_forward.6} parent=47 // pred_region
              loop: start=0, step=1, limit=1
              $region57: #{bottleneck_forward.6} parent=55 // loop_pre_header
                _
              $region58: #{bottleneck_forward.6} parent=55 // loop_header
                %s649 = sphi 0, %s653
                %p650 = scmp.ge.s32.totalorder %s649, 1
                %s654 = sphi %s629, %s629
                %s655 = sphi %s640, %s640
              $region59: #{bottleneck_forward.6} parent=55 // loop_header_branch
                %652 = sbr.rel (%p650) target = $region63
              $region60: #{bottleneck_forward.6} parent=55 // loop_body
                %v656 = vld [vmem:[%s654] sm:$0xf]
                %657 = vst [vmem:[%s655] sm:$0xf] %v656
                %v658 = vld [vmem:[%s654 + $0x4] sm:$0xf]
                %659 = vst [vmem:[%s655 + $0x8] sm:$0xf] %v658
              $region61: #{bottleneck_forward.6} parent=55 // loop_footer
                %s653 = sadd.s32 1, %s649
              $region62: #{bottleneck_forward.6} parent=55 // loop_footer_branch
                %648 = sbr.rel target = $region58
              $region63: #{bottleneck_forward.6} parent=55 // loop_exit
                _
            $region56: #{bottleneck_forward.6} parent=47 // pred_fallthru
              _
          $region48: #{bottleneck_forward.6} parent=43 // pred_fallthru
            _
          %683 = vnop
        $region44: #{bottleneck_forward.6} parent=35 // pred_fallthru
          _
        // Predicated region
        $region82: #{bottleneck_forward.6} parent=35 // pred_check
          %p684 = pneg %p166
        $region83: #{bottleneck_forward.6} parent=35 // pred_check_branch
          %686 = sbr.rel (%p684) target = $region85
        $region84: #{bottleneck_forward.6} parent=35 // pred_region
          _
        $region85: #{bottleneck_forward.6} parent=35 // pred_fallthru
          _
      $region36: #{bottleneck_forward.6} parent=5 // pred_fallthru
        _
      %p687 = scmp.le.s32.totalorder 2, %s12
      // Predicated region
      $region86: #{bottleneck_forward.6} parent=5 // pred_check
        %p688 = pneg %p687
      $region87: #{bottleneck_forward.6} parent=5 // pred_check_branch
        %690 = sbr.rel (%p688) target = $region89
      $region88: #{bottleneck_forward.6} parent=5 // pred_region
        %s691 = ssub.s32 %s12, 2
        // Predicated region
        $region90: #{bottleneck_forward.6} parent=88 // pred_check
          %p692 = pneg %p146
        $region91: #{bottleneck_forward.6} parent=88 // pred_check_branch
          %694 = sbr.rel (%p692) target = $region93
        $region92: #{bottleneck_forward.6} parent=88 // pred_region
          %s695 = sand.u32 %s131, 1
          %s696 = sand.u32 %s131, 1
          %s697 = smul.addr %s696, 8
          %s698 = scalar_lea.vmem [#allocation2], %s697
        $region93: #{bottleneck_forward.6} parent=88 // pred_fallthru
          _
        // Predicated region
        $region94: #{bottleneck_forward.6} parent=88 // pred_check
          %p699 = pneg %p172
        $region95: #{bottleneck_forward.6} parent=88 // pred_check_branch
          %701 = sbr.rel (%p699) target = $region97
        $region96: #{bottleneck_forward.6} parent=88 // pred_region
          %p702 = scmp.lt.s32.totalorder %s23, 1
          %s703 = scalar_select %p702, %s23, 1
          %s704 = smul.addr %s703, 2
          %s705 = scalar_lea.vmem %s5, %s704
        $region97: #{bottleneck_forward.6} parent=88 // pred_fallthru
          _
      $region89: #{bottleneck_forward.6} parent=5 // pred_fallthru
        _
    $region6: #{bottleneck_forward.6} parent=1 // loop_footer
      %s16 = sadd.s32 1, %s12
    $region7: #{bottleneck_forward.6} parent=1 // loop_footer_branch
      %11 = sbr.rel target = $region3
    $region8: #{bottleneck_forward.6} parent=1 // loop_exit
      _

// kernel: bottleneck_forward.7
$region0: #{bottleneck_forward.7}
  #allocation0 [shape = 'u32[]', space=smem, size = 0x4, offset = 0x4, fixed_abs, tag = 'smem constant byte address 0x4 - core index']
  #allocation1 [shape = 'u32[144,128]{1,0:T(1,128)}', space=vmem, size = 0x12000, scoped, tag = 'internal scratch']
  %s0 = inlined_call_operand.vmem [shape: bf16[2,16,256], index: 0, kind: input, shape index: {}]
  %s1 = inlined_call_operand.vmem [shape: f32[2,16,256], index: 1, kind: input, shape index: {}]
  %s2 = inlined_call_operand.vmem [shape: f32[16,1], index: 2, kind: input, shape index: {}]
  %s3 = inlined_call_operand.vmem [shape: f32[16,1], index: 3, kind: input, shape index: {}]
  %s4 = inlined_call_operand.vmem [shape: f32[2,16,256], index: 4, kind: output, shape index: {}]
  %s5 = sld [smem:[#allocation0]]
  $region162: #{bottleneck_forward.7} parent=0
    _
  %s7 = ssub.s32 1, %s5
  %s8 = scalar_select 0, %s7, %s5
  $region1: #{bottleneck_forward.7} parent=0
    #allocation2 [shape = 'u8[8192]{0}', space=vmem, size = 0x2000, scoped, tag = 'input window, operand 0']
    #allocation3 [shape = 'u8[16384]{0}', space=vmem, size = 0x4000, scoped, tag = 'input window, operand 1']
    #allocation4 [shape = 'u8[16384]{0}', space=vmem, size = 0x4000, scoped, tag = 'output window, operand 0']
    loop: start=0, step=1, limit=6
    $region2: #{bottleneck_forward.7} parent=1 // loop_pre_header
      _
    $region3: #{bottleneck_forward.7} parent=1 // loop_header
      %s10 = sphi 0, %s14
      %p11 = scmp.ge.s32.totalorder %s10, 6
      %s17 = sphi 0, %s29
      %s18 = sphi 0, %s25
      %s19 = sphi 0, %s17
      %s20 = sphi 0, %s18
      %s21 = sphi 0, %s19
      %s22 = sphi 0, %s20
      %s34 = sphi 0, %s36
      %s37 = sphi 0, %s34
      %s38 = sphi 0, %s37
      %s54 = sphi 0, %s38
      %s62 = sphi 0, %s64
      %s65 = sphi 0, %s62
      %s66 = sphi 0, %s65
      %s82 = sphi 0, %s66
      %s86 = sphi 0, %s86
      %s88 = sphi 0, %s86
      %s89 = sphi 0, %s88
      %s103 = sphi 0, %s89
      %s107 = sphi 0, %s107
      %s109 = sphi 0, %s107
      %s110 = sphi 0, %s109
      %s124 = sphi 0, %s110
      %s132 = sphi 0, %s134
      %s135 = sphi 0, %s132
      %s136 = sphi 0, %s135
      %s152 = sphi 0, %s136
    $region4: #{bottleneck_forward.7} parent=1 // loop_header_branch
      %13 = sbr.rel (%p11) target = $region8
    $region5: #{bottleneck_forward.7} parent=1 // loop_body
      %s15 = ssub.s32 %s10, 1
      %s16 = ssub.s32 %s10, 2
      %s23 = sadd.s32 1, %s18
      %p24 = scmp.ge.s32.totalorder %s23, 2
      %s25 = scalar_select %p24, 0, %s23
      %s26 = sadd.s32 1, %s17
      %s27 = scalar_select %p24, %s26, %s17
      %p28 = scmp.ge.s32.totalorder %s27, 2
      %s29 = scalar_select %p28, 0, %s27
      %s30 = ssub.s32 %s17, %s29
      %s31 = ssub.s32 %s18, %s25
      %s32 = sor.u32 %s30, %s31
      %p33 = scmp.eq.s32.totalorder %s32, 0
      %s35 = sadd.s32 %s34, 1
      %s36 = scalar_select %p33, %s34, %s35
      %p39 = pneg %p33
      %p40 = scmp.eq.s32.totalorder %s10, 3
      %p41 = por %p39, %p40
      %p42 = scmp.ne.s32.totalorder %s34, %s37
      %p43 = scmp.eq.s32.totalorder %s10, 0
      %p44 = por %p42, %p43
      %p45 = scmp.ne.s32.totalorder %s34, %s37
      %p46 = scmp.eq.s32.totalorder %s15, 3
      %p47 = por %p45, %p46
      %p48 = scmp.ne.s32.totalorder %s37, %s38
      %p49 = scmp.eq.s32.totalorder %s15, 0
      %p50 = por %p48, %p49
      %p51 = scmp.ne.s32.totalorder %s37, %s38
      %p52 = scmp.eq.s32.totalorder %s16, 3
      %p53 = por %p51, %p52
      %p55 = scmp.ne.s32.totalorder %s38, %s54
      %p56 = scmp.eq.s32.totalorder %s16, 0
      %p57 = por %p55, %p56
      %s58 = ssub.s32 %s17, %s29
      %s59 = ssub.s32 %s18, %s25
      %s60 = sor.u32 %s58, %s59
      %p61 = scmp.eq.s32.totalorder %s60, 0
      %s63 = sadd.s32 %s62, 1
      %s64 = scalar_select %p61, %s62, %s63
      %p67 = pneg %p61
      %p68 = scmp.eq.s32.totalorder %s10, 3
      %p69 = por %p67, %p68
      %p70 = scmp.ne.s32.totalorder %s62, %s65
      %p71 = scmp.eq.s32.totalorder %s10, 0
      %p72 = por %p70, %p71
      %p73 = scmp.ne.s32.totalorder %s62, %s65
      %p74 = scmp.eq.s32.totalorder %s15, 3
      %p75 = por %p73, %p74
      %p76 = scmp.ne.s32.totalorder %s65, %s66
      %p77 = scmp.eq.s32.totalorder %s15, 0
      %p78 = por %p76, %p77
      %p79 = scmp.ne.s32.totalorder %s65, %s66
      %p80 = scmp.eq.s32.totalorder %s16, 3
      %p81 = por %p79, %p80
      %p83 = scmp.ne.s32.totalorder %s66, %s82
      %p84 = scmp.eq.s32.totalorder %s16, 0
      %p85 = por %p83, %p84
      %s87 = sadd.s32 %s86, 1
      %p90 = scmp.eq.s32.totalorder %s10, 3
      %p91 = scmp.ne.s32.totalorder %s86, %s88
      %p92 = scmp.eq.s32.totalorder %s10, 0
      %p93 = por %p91, %p92
      %p94 = scmp.ne.s32.totalorder %s86, %s88
      %p95 = scmp.eq.s32.totalorder %s15, 3
      %p96 = por %p94, %p95
      %p97 = scmp.ne.s32.totalorder %s88, %s89
      %p98 = scmp.eq.s32.totalorder %s15, 0
      %p99 = por %p97, %p98
      %p100 = scmp.ne.s32.totalorder %s88, %s89
      %p101 = scmp.eq.s32.totalorder %s16, 3
      %p102 = por %p100, %p101
      %p104 = scmp.ne.s32.totalorder %s89, %s103
      %p105 = scmp.eq.s32.totalorder %s16, 0
      %p106 = por %p104, %p105
      %s108 = sadd.s32 %s107, 1
      %p111 = scmp.eq.s32.totalorder %s10, 3
      %p112 = scmp.ne.s32.totalorder %s107, %s109
      %p113 = scmp.eq.s32.totalorder %s10, 0
      %p114 = por %p112, %p113
      %p115 = scmp.ne.s32.totalorder %s107, %s109
      %p116 = scmp.eq.s32.totalorder %s15, 3
      %p117 = por %p115, %p116
      %p118 = scmp.ne.s32.totalorder %s109, %s110
      %p119 = scmp.eq.s32.totalorder %s15, 0
      %p120 = por %p118, %p119
      %p121 = scmp.ne.s32.totalorder %s109, %s110
      %p122 = scmp.eq.s32.totalorder %s16, 3
      %p123 = por %p121, %p122
      %p125 = scmp.ne.s32.totalorder %s110, %s124
      %p126 = scmp.eq.s32.totalorder %s16, 0
      %p127 = por %p125, %p126
      %s128 = ssub.s32 %s17, %s29
      %s129 = ssub.s32 %s18, %s25
      %s130 = sor.u32 %s128, %s129
      %p131 = scmp.eq.s32.totalorder %s130, 0
      %s133 = sadd.s32 %s132, 1
      %s134 = scalar_select %p131, %s132, %s133
      %p137 = pneg %p131
      %p138 = scmp.eq.s32.totalorder %s10, 3
      %p139 = por %p137, %p138
      %p140 = scmp.ne.s32.totalorder %s132, %s135
      %p141 = scmp.eq.s32.totalorder %s10, 0
      %p142 = por %p140, %p141
      %p143 = scmp.ne.s32.totalorder %s132, %s135
      %p144 = scmp.eq.s32.totalorder %s15, 3
      %p145 = por %p143, %p144
      %p146 = scmp.ne.s32.totalorder %s135, %s136
      %p147 = scmp.eq.s32.totalorder %s15, 0
      %p148 = por %p146, %p147
      %p149 = scmp.ne.s32.totalorder %s135, %s136
      %p150 = scmp.eq.s32.totalorder %s16, 3
      %p151 = por %p149, %p150
      %p153 = scmp.ne.s32.totalorder %s136, %s152
      %p154 = scmp.eq.s32.totalorder %s16, 0
      %p155 = por %p153, %p154
      %p156 = scmp.le.s32.totalorder 1, %s10
      %p157 = scmp.lt.s32.totalorder %s10, 5
      %p158 = pnand %p156, %p157
      %p159 = pneg %p158
      // Predicated region
      $region9: #{bottleneck_forward.7} parent=5 // pred_check
        _
      $region10: #{bottleneck_forward.7} parent=5 // pred_check_branch
        %161 = sbr.rel (%p158) target = $region12
      $region11: #{bottleneck_forward.7} parent=5 // pred_region
        %s162 = ssub.s32 %s10, 1
        // Predicated region
        $region13: #{bottleneck_forward.7} parent=11 // pred_check
          %p163 = pneg %p99
        $region14: #{bottleneck_forward.7} parent=11 // pred_check_branch
          %165 = sbr.rel (%p163) target = $region16
        $region15: #{bottleneck_forward.7} parent=11 // pred_region
          _
        $region16: #{bottleneck_forward.7} parent=11 // pred_fallthru
          _
        // Predicated region
        $region17: #{bottleneck_forward.7} parent=11 // pred_check
          %p166 = pneg %p120
        $region18: #{bottleneck_forward.7} parent=11 // pred_check_branch
          %168 = sbr.rel (%p166) target = $region20
        $region19: #{bottleneck_forward.7} parent=11 // pred_region
          _
        $region20: #{bottleneck_forward.7} parent=11 // pred_fallthru
          _
      $region12: #{bottleneck_forward.7} parent=5 // pred_fallthru
        _
      %p169 = scmp.lt.s32.totalorder %s10, 4
      // Predicated region
      $region21: #{bottleneck_forward.7} parent=5 // pred_check
        %p170 = pneg %p169
      $region22: #{bottleneck_forward.7} parent=5 // pred_check_branch
        %172 = sbr.rel (%p170) target = $region24
      $region23: #{bottleneck_forward.7} parent=5 // pred_region
        // Predicated region
        $region25: #{bottleneck_forward.7} parent=23 // pred_check
          %p173 = pneg %p44
        $region26: #{bottleneck_forward.7} parent=23 // pred_check_branch
          %175 = sbr.rel (%p173) target = $region28
        $region27: #{bottleneck_forward.7} parent=23 // pred_region
          %s176 = sand.u32 %s34, 1
          %s177 = sand.u32 %s34, 1
          %s178 = smul.addr %s177, 8
          %s179 = scalar_lea.vmem [#allocation2], %s178
          %s180 = smul.addr %s17, 4
          %s181 = sadd.s32 %s18, %s180
          %s182 = smul.addr %s181, 4
          %s183 = scalar_lea.vmem %s0, %s182
          // Predicated region
          $region29: #{bottleneck_forward.7} parent=27 // pred_check
            _
          $region30: #{bottleneck_forward.7} parent=27 // pred_check_branch
            %185 = sbr.rel (0) target = $region32
          $region31: #{bottleneck_forward.7} parent=27 // pred_region
            // Predicated region
            $region33: #{bottleneck_forward.7} parent=31 // pred_check
              _
            $region34: #{bottleneck_forward.7} parent=31 // pred_check_branch
              %187 = sbr.rel target = $region36
            $region35: #{bottleneck_forward.7} parent=31 // pred_region
              // Predicated region
              $region48: #{bottleneck_forward.7} parent=35 // pred_check
                _
              $region49: #{bottleneck_forward.7} parent=35 // pred_check_branch
                %204 = sbr.rel (0) target = $region51
              $region50: #{bottleneck_forward.7} parent=35 // pred_region
                loop: start=0, step=1, limit=1
                $region52: #{bottleneck_forward.7} parent=50 // loop_pre_header
                  _
                $region53: #{bottleneck_forward.7} parent=50 // loop_header
                  %s206 = sphi 0, %s210
                  %p207 = scmp.ge.s32.totalorder %s206, 1
                  %s211 = sphi %s183, %s183
                  %s212 = sphi %s179, %s179
                $region54: #{bottleneck_forward.7} parent=50 // loop_header_branch
                  %209 = sbr.rel (%p207) target = $region58
                $region55: #{bottleneck_forward.7} parent=50 // loop_body
                  _
                $region56: #{bottleneck_forward.7} parent=50 // loop_footer
                  %s210 = sadd.s32 1, %s206
                $region57: #{bottleneck_forward.7} parent=50 // loop_footer_branch
                  %205 = sbr.rel target = $region53
                $region58: #{bottleneck_forward.7} parent=50 // loop_exit
                  _
                loop: start=0, step=1, limit=1
                $region59: #{bottleneck_forward.7} parent=50 // loop_pre_header
                  _
                $region60: #{bottleneck_forward.7} parent=50 // loop_header
                  %s215 = sphi 0, %s219
                  %p216 = scmp.ge.s32.totalorder %s215, 1
                  %s220 = sphi %s183, %s183
                  %s221 = sphi %s179, %s179
                $region61: #{bottleneck_forward.7} parent=50 // loop_header_branch
                  %218 = sbr.rel (%p216) target = $region65
                $region62: #{bottleneck_forward.7} parent=50 // loop_body
                  %v222 = vld [vmem:[%s220] sm:$0xf]
                  %223 = vst [vmem:[%s221] sm:$0xf] %v222
                  %v224 = vld [vmem:[%s220 + $0x8] sm:$0xf]
                  %225 = vst [vmem:[%s221 + $0x4] sm:$0xf] %v224
                $region63: #{bottleneck_forward.7} parent=50 // loop_footer
                  %s219 = sadd.s32 1, %s215
                $region64: #{bottleneck_forward.7} parent=50 // loop_footer_branch
                  %214 = sbr.rel target = $region60
                $region65: #{bottleneck_forward.7} parent=50 // loop_exit
                  _
              $region51: #{bottleneck_forward.7} parent=35 // pred_fallthru
                _
            $region36: #{bottleneck_forward.7} parent=31 // pred_fallthru
              _
            // Predicated region
            $region37: #{bottleneck_forward.7} parent=31 // pred_check
              _
            $region38: #{bottleneck_forward.7} parent=31 // pred_check_branch
              %189 = sbr.rel (0) target = $region40
            $region39: #{bottleneck_forward.7} parent=31 // pred_region
              loop: start=0, step=1, limit=1
              $region41: #{bottleneck_forward.7} parent=39 // loop_pre_header
                _
              $region42: #{bottleneck_forward.7} parent=39 // loop_header
                %s192 = sphi 0, %s196
                %p193 = scmp.ge.s32.totalorder %s192, 1
                %s197 = sphi %s183, %s183
                %s198 = sphi %s179, %s179
              $region43: #{bottleneck_forward.7} parent=39 // loop_header_branch
                %195 = sbr.rel (%p193) target = $region47
              $region44: #{bottleneck_forward.7} parent=39 // loop_body
                %v199 = vld [vmem:[%s197] sm:$0xf]
                %200 = vst [vmem:[%s198] sm:$0xf] %v199
                %v201 = vld [vmem:[%s197 + $0x8] sm:$0xf]
                %202 = vst [vmem:[%s198 + $0x4] sm:$0xf] %v201
              $region45: #{bottleneck_forward.7} parent=39 // loop_footer
                %s196 = sadd.s32 1, %s192
              $region46: #{bottleneck_forward.7} parent=39 // loop_footer_branch
                %191 = sbr.rel target = $region42
              $region47: #{bottleneck_forward.7} parent=39 // loop_exit
                _
            $region40: #{bottleneck_forward.7} parent=31 // pred_fallthru
              _
          $region32: #{bottleneck_forward.7} parent=27 // pred_fallthru
            _
          %226 = vnop
        $region28: #{bottleneck_forward.7} parent=23 // pred_fallthru
          _
        // Predicated region
        $region66: #{bottleneck_forward.7} parent=23 // pred_check
          %p227 = pneg %p72
        $region67: #{bottleneck_forward.7} parent=23 // pred_check_branch
          %229 = sbr.rel (%p227) target = $region69
        $region68: #{bottleneck_forward.7} parent=23 // pred_region
          %s230 = sand.u32 %s62, 1
          %s231 = sand.u32 %s62, 1
          %s232 = smul.addr %s231, 16
          %s233 = scalar_lea.vmem [#allocation3], %s232
          %s234 = smul.addr %s17, 4
          %s235 = sadd.s32 %s18, %s234
          %s236 = smul.addr %s235, 8
          %s237 = scalar_lea.vmem %s1, %s236
          // Predicated region
          $region70: #{bottleneck_forward.7} parent=68 // pred_check
            _
          $region71: #{bottleneck_forward.7} parent=68 // pred_check_branch
            %239 = sbr.rel (0) target = $region73
          $region72: #{bottleneck_forward.7} parent=68 // pred_region
            // Predicated region
            $region74: #{bottleneck_forward.7} parent=72 // pred_check
              _
            $region75: #{bottleneck_forward.7} parent=72 // pred_check_branch
              %241 = sbr.rel (0) target = $region77
            $region76: #{bottleneck_forward.7} parent=72 // pred_region
              // Predicated region
              $region89: #{bottleneck_forward.7} parent=76 // pred_check
                _
              $region90: #{bottleneck_forward.7} parent=76 // pred_check_branch
                %258 = sbr.rel (0) target = $region92
              $region91: #{bottleneck_forward.7} parent=76 // pred_region
                loop: start=0, step=1, limit=1
                $region93: #{bottleneck_forward.7} parent=91 // loop_pre_header
                  _
                $region94: #{bottleneck_forward.7} parent=91 // loop_header
                  %s260 = sphi 0, %s264
                  %p261 = scmp.ge.s32.totalorder %s260, 1
                  %s265 = sphi %s237, %s237
                  %s266 = sphi %s233, %s233
                $region95: #{bottleneck_forward.7} parent=91 // loop_header_branch
                  %263 = sbr.rel (%p261) target = $region99
                $region96: #{bottleneck_forward.7} parent=91 // loop_body
                  %v267 = vld [vmem:[%s265] sm:$0xff]
                  %268 = vst [vmem:[%s266] sm:$0xff] %v267
                  %v269 = vld [vmem:[%s265 + $0x10] sm:$0xff]
                  %270 = vst [vmem:[%s266 + $0x8] sm:$0xff] %v269
                $region97: #{bottleneck_forward.7} parent=91 // loop_footer
                  %s264 = sadd.s32 1, %s260
                $region98: #{bottleneck_forward.7} parent=91 // loop_footer_branch
                  %259 = sbr.rel target = $region94
                $region99: #{bottleneck_forward.7} parent=91 // loop_exit
                  _
              $region92: #{bottleneck_forward.7} parent=76 // pred_fallthru
                _
              // Predicated region
              $region100: #{bottleneck_forward.7} parent=76 // pred_check
                _
              $region101: #{bottleneck_forward.7} parent=76 // pred_check_branch
                %272 = sbr.rel target = $region103
              $region102: #{bottleneck_forward.7} parent=76 // pred_region
                _
              $region103: #{bottleneck_forward.7} parent=76 // pred_fallthru
                _
            $region77: #{bottleneck_forward.7} parent=72 // pred_fallthru
              _
            // Predicated region
            $region78: #{bottleneck_forward.7} parent=72 // pred_check
              _
            $region79: #{bottleneck_forward.7} parent=72 // pred_check_branch
              %243 = sbr.rel target = $region81
            $region80: #{bottleneck_forward.7} parent=72 // pred_region
              loop: start=0, step=1, limit=1
              $region82: #{bottleneck_forward.7} parent=80 // loop_pre_header
                _
              $region83: #{bottleneck_forward.7} parent=80 // loop_header
                %s246 = sphi 0, %s250
                %p247 = scmp.ge.s32.totalorder %s246, 1
                %s251 = sphi %s237, %s237
                %s252 = sphi %s233, %s233
              $region84: #{bottleneck_forward.7} parent=80 // loop_header_branch
                %249 = sbr.rel (%p247) target = $region88
              $region85: #{bottleneck_forward.7} parent=80 // loop_body
                %v253 = vld [vmem:[%s251] sm:$0xff]
                %254 = vst [vmem:[%s252] sm:$0xff] %v253
                %v255 = vld [vmem:[%s251 + $0x10] sm:$0xff]
                %256 = vst [vmem:[%s252 + $0x8] sm:$0xff] %v255
              $region86: #{bottleneck_forward.7} parent=80 // loop_footer
                %s250 = sadd.s32 1, %s246
              $region87: #{bottleneck_forward.7} parent=80 // loop_footer_branch
                %245 = sbr.rel target = $region83
              $region88: #{bottleneck_forward.7} parent=80 // loop_exit
                _
            $region81: #{bottleneck_forward.7} parent=72 // pred_fallthru
              _
          $region73: #{bottleneck_forward.7} parent=68 // pred_fallthru
            _
          %273 = vnop
        $region69: #{bottleneck_forward.7} parent=23 // pred_fallthru
          _
      $region24: #{bottleneck_forward.7} parent=5 // pred_fallthru
        _
      %p274 = scmp.le.s32.totalorder 1, %s10
      %p275 = scmp.lt.s32.totalorder %s10, 5
      %p276 = pnand %p274, %p275
      %p277 = pneg %p276
      // Predicated region
      $region104: #{bottleneck_forward.7} parent=5 // pred_check
        _
      $region105: #{bottleneck_forward.7} parent=5 // pred_check_branch
        %279 = sbr.rel (%p276) target = $region107
      $region106: #{bottleneck_forward.7} parent=5 // pred_region
        %s280 = ssub.s32 %s10, 1
        %s281 = sand.u32 %s37, 1
        %s282 = sand.u32 %s37, 1
        %s283 = smul.addr %s282, 8
        %s284 = scalar_lea.vmem [#allocation2], %s283
        // Predicated region
        $region108: #{bottleneck_forward.7} parent=106 // pred_check
          %p285 = pneg %p50
        $region109: #{bottleneck_forward.7} parent=106 // pred_check_branch
          %287 = sbr.rel (%p285) target = $region111
        $region110: #{bottleneck_forward.7} parent=106 // pred_region
          _
        $region111: #{bottleneck_forward.7} parent=106 // pred_fallthru
          _
        %s288 = sand.u32 %s65, 1
        %s289 = sand.u32 %s65, 1
        %s290 = smul.addr %s289, 16
        %s291 = scalar_lea.vmem [#allocation3], %s290
        // Predicated region
        $region112: #{bottleneck_forward.7} parent=106 // pred_check
          %p292 = pneg %p78
        $region113: #{bottleneck_forward.7} parent=106 // pred_check_branch
          %294 = sbr.rel (%p292) target = $region115
        $region114: #{bottleneck_forward.7} parent=106 // pred_region
          _
        $region115: #{bottleneck_forward.7} parent=106 // pred_fallthru
          _
        %s295 = sand.u32 %s37, 1
        %s296 = sand.u32 %s37, 1
        %s297 = smul.addr %s296, 8
        %s298 = scalar_lea.vmem [#allocation2], %s297
        %p299 = pneg %p50
        %p300 = pneg %p47
        %s301 = sand.u32 %s65, 1
        %s302 = sand.u32 %s65, 1
        %s303 = smul.addr %s302, 16
        %s304 = scalar_lea.vmem [#allocation3], %s303
        %p305 = pneg %p78
        %p306 = pneg %p75
        %p307 = pneg %p99
        %p308 = pneg %p96
        %p309 = pneg %p120
        %p310 = pneg %p117
        %p311 = pneg %p148
        %p312 = pneg %p145
        %s313 = sand.u32 %s135, 1
        %s314 = sand.u32 %s135, 1
        %s315 = smul.addr %s314, 16
        %s316 = scalar_lea.vmem [#allocation4], %s315
        %v317 = vld [vmem:[%s284] sm:$0xf]
        %v318 = vld [vmem:[%s284 + $0x4] sm:$0xf]
        %v319 = vunpack.c.l.bf16 %v317
        %v320 = vunpack.c.l.bf16 %v318
        %v321 = vld [vmem:[%s2] sm:$0xff]
        %v322 = vld [vmem:[%s2 + $0x8] sm:$0xff]
        %324 = vset.pattern.permute.xlu0 0
        %325 = vperm.xlu0 %324, %v321
        %v326 = vpop.permute.xlu0 %325
        %329 = vset.pattern.permute.xlu0 0
        %330 = vperm.xlu0 %329, %v322
        %v331 = vpop.permute.xlu0 %330
        %v333 = vmul.f32 %v319, %v326
        %v334 = vmul.f32 %v320, %v331
        %v335 = vld [vmem:[%s3] sm:$0xff]
        %v336 = vld [vmem:[%s3 + $0x8] sm:$0xff]
        %338 = vset.pattern.permute.xlu0 0
        %339 = vperm.xlu0 %338, %v335
        %v340 = vpop.permute.xlu0 %339
        %343 = vset.pattern.permute.xlu0 0
        %344 = vperm.xlu0 %343, %v336
        %v345 = vpop.permute.xlu0 %344
        %v347 = vadd.f32 %v333, %v340
        %v348 = vadd.f32 %v334, %v345
        %v349 = vld [vmem:[%s291] sm:$0xff]
        %v350 = vld [vmem:[%s291 + $0x8] sm:$0xff]
        %v351 = vadd.f32 %v347, %v349
        %v352 = vadd.f32 %v348, %v350
        %v353 = vmax.f32 %v351, 0.0
        %v354 = vmax.f32 %v352, 0.0
        %355 = vst [vmem:[%s316] sm:$0xff] %v353
        %356 = vst [vmem:[%s316 + $0x8] sm:$0xff] %v354
        %s357 = sand.u32 %s135, 1
        %s358 = sand.u32 %s135, 1
        %s359 = smul.addr %s358, 16
        %s360 = scalar_lea.vmem [#allocation4], %s359
        // Predicated region
        $region116: #{bottleneck_forward.7} parent=106 // pred_check
          %p361 = pneg %p145
        $region117: #{bottleneck_forward.7} parent=106 // pred_check_branch
          %363 = sbr.rel (%p361) target = $region119
        $region118: #{bottleneck_forward.7} parent=106 // pred_region
          %s364 = smul.addr %s19, 4
          %s365 = sadd.s32 %s20, %s364
          %s366 = smul.addr %s365, 8
          %s367 = scalar_lea.vmem %s4, %s366
          // Predicated region
          $region120: #{bottleneck_forward.7} parent=118 // pred_check
            _
          $region121: #{bottleneck_forward.7} parent=118 // pred_check_branch
            %369 = sbr.rel (0) target = $region123
          $region122: #{bottleneck_forward.7} parent=118 // pred_region
            // Predicated region
            $region124: #{bottleneck_forward.7} parent=122 // pred_check
              _
            $region125: #{bottleneck_forward.7} parent=122 // pred_check_branch
              %371 = sbr.rel (0) target = $region127
            $region126: #{bottleneck_forward.7} parent=122 // pred_region
              // Predicated region
              $region139: #{bottleneck_forward.7} parent=126 // pred_check
                _
              $region140: #{bottleneck_forward.7} parent=126 // pred_check_branch
                %388 = sbr.rel (0) target = $region142
              $region141: #{bottleneck_forward.7} parent=126 // pred_region
                loop: start=0, step=1, limit=1
                $region143: #{bottleneck_forward.7} parent=141 // loop_pre_header
                  _
                $region144: #{bottleneck_forward.7} parent=141 // loop_header
                  %s390 = sphi 0, %s394
                  %p391 = scmp.ge.s32.totalorder %s390, 1
                  %s395 = sphi %s360, %s360
                  %s396 = sphi %s367, %s367
                $region145: #{bottleneck_forward.7} parent=141 // loop_header_branch
                  %393 = sbr.rel (%p391) target = $region149
                $region146: #{bottleneck_forward.7} parent=141 // loop_body
                  %v397 = vld [vmem:[%s395] sm:$0xff]
                  %398 = vst [vmem:[%s396] sm:$0xff] %v397
                  %v399 = vld [vmem:[%s395 + $0x8] sm:$0xff]
                  %400 = vst [vmem:[%s396 + $0x10] sm:$0xff] %v399
                $region147: #{bottleneck_forward.7} parent=141 // loop_footer
                  %s394 = sadd.s32 1, %s390
                $region148: #{bottleneck_forward.7} parent=141 // loop_footer_branch
                  %389 = sbr.rel target = $region144
                $region149: #{bottleneck_forward.7} parent=141 // loop_exit
                  _
              $region142: #{bottleneck_forward.7} parent=126 // pred_fallthru
                _
              // Predicated region
              $region150: #{bottleneck_forward.7} parent=126 // pred_check
                _
              $region151: #{bottleneck_forward.7} parent=126 // pred_check_branch
                %402 = sbr.rel target = $region153
              $region152: #{bottleneck_forward.7} parent=126 // pred_region
                _
              $region153: #{bottleneck_forward.7} parent=126 // pred_fallthru
                _
            $region127: #{bottleneck_forward.7} parent=122 // pred_fallthru
              _
            // Predicated region
            $region128: #{bottleneck_forward.7} parent=122 // pred_check
              _
            $region129: #{bottleneck_forward.7} parent=122 // pred_check_branch
              %373 = sbr.rel target = $region131
            $region130: #{bottleneck_forward.7} parent=122 // pred_region
              loop: start=0, step=1, limit=1
              $region132: #{bottleneck_forward.7} parent=130 // loop_pre_header
                _
              $region133: #{bottleneck_forward.7} parent=130 // loop_header
                %s376 = sphi 0, %s380
                %p377 = scmp.ge.s32.totalorder %s376, 1
                %s381 = sphi %s360, %s360
                %s382 = sphi %s367, %s367
              $region134: #{bottleneck_forward.7} parent=130 // loop_header_branch
                %379 = sbr.rel (%p377) target = $region138
              $region135: #{bottleneck_forward.7} parent=130 // loop_body
                %v383 = vld [vmem:[%s381] sm:$0xff]
                %384 = vst [vmem:[%s382] sm:$0xff] %v383
                %v385 = vld [vmem:[%s381 + $0x8] sm:$0xff]
                %386 = vst [vmem:[%s382 + $0x10] sm:$0xff] %v385
              $region136: #{bottleneck_forward.7} parent=130 // loop_footer
                %s380 = sadd.s32 1, %s376
              $region137: #{bottleneck_forward.7} parent=130 // loop_footer_branch
                %375 = sbr.rel target = $region133
              $region138: #{bottleneck_forward.7} parent=130 // loop_exit
                _
            $region131: #{bottleneck_forward.7} parent=122 // pred_fallthru
              _
          $region123: #{bottleneck_forward.7} parent=118 // pred_fallthru
            _
          %403 = vnop
        $region119: #{bottleneck_forward.7} parent=106 // pred_fallthru
          _
      $region107: #{bottleneck_forward.7} parent=5 // pred_fallthru
        _
      %p404 = scmp.le.s32.totalorder 2, %s10
      // Predicated region
      $region154: #{bottleneck_forward.7} parent=5 // pred_check
        %p405 = pneg %p404
      $region155: #{bottleneck_forward.7} parent=5 // pred_check_branch
        %407 = sbr.rel (%p405) target = $region157
      $region156: #{bottleneck_forward.7} parent=5 // pred_region
        %s408 = ssub.s32 %s10, 2
        // Predicated region
        $region158: #{bottleneck_forward.7} parent=156 // pred_check
          %p409 = pneg %p151
        $region159: #{bottleneck_forward.7} parent=156 // pred_check_branch
          %411 = sbr.rel (%p409) target = $region161
        $region160: #{bottleneck_forward.7} parent=156 // pred_region
          %s412 = sand.u32 %s136, 1
          %s413 = sand.u32 %s136, 1
          %s414 = smul.addr %s413, 16
          %s415 = scalar_lea.vmem [#allocation4], %s414
        $region161: #{bottleneck_forward.7} parent=156 // pred_fallthru
          _
      $region157: #{bottleneck_forward.7} parent=5 // pred_fallthru
        _
    $region6: #{bottleneck_forward.7} parent=1 // loop_footer
      %s14 = sadd.s32 1, %s10
    $region7: #{bottleneck_forward.7} parent=1 // loop_footer_branch
      %9 = sbr.rel target = $region3
    $region8: #{bottleneck_forward.7} parent=1 // loop_exit
      _

// kernel: bottleneck_forward.5
$region0: #{bottleneck_forward.5}
  #allocation0 [shape = 'u32[]', space=smem, size = 0x4, offset = 0x4, fixed_abs, tag = 'smem constant byte address 0x4 - core index']
  #allocation1 [shape = 'u32[144,128]{1,0:T(1,128)}', space=vmem, size = 0x12000, scoped, tag = 'internal scratch']
  #allocation2 [shape = 'bf16[18,24,4]{2,1,0:T(8,128)(2,1)}', space=vmem, size = 0x1b000, scoped, tag = 'scratch operand']
  %s0 = inlined_call_operand.vmem [shape: bf16[2,256,4], index: 0, kind: input, shape index: {}]
  %s1 = inlined_call_operand.vmem [shape: f32[1,4], index: 1, kind: input, shape index: {}]
  %s2 = inlined_call_operand.vmem [shape: f32[1,4], index: 2, kind: input, shape index: {}]
  %s3 = inlined_call_operand.vmem [shape: bf16[9,4,4], index: 3, kind: input, shape index: {}]
  %s4 = inlined_call_operand.vmem [shape: bf16[2,256,4], index: 4, kind: output, shape index: {0}]
  %s5 = inlined_call_operand.vmem [shape: f32[2,2,4], index: 5, kind: output, shape index: {1}]
  %6 = xla_tuple %s4, %s5
  %s7 = sld [smem:[#allocation0]]
  $region57: #{bottleneck_forward.5} parent=0
    _
  %s9 = ssub.s32 1, %s7
  %s10 = scalar_select 0, %s9, %s7
  loop: start=0, step=1, limit=4
  $region2: #{bottleneck_forward.5} parent=0 // loop_pre_header
    _
  $region3: #{bottleneck_forward.5} parent=0 // loop_header
    %s12 = sphi 0, %s16
    %p13 = scmp.ge.s32.totalorder %s12, 4
    %s22 = sphi 0, %s24
    %s25 = sphi 0, %s22
    %s26 = sphi 0, %s25
    %s42 = sphi 0, %s26
    %s46 = sphi 0, %s46
    %s48 = sphi 0, %s46
    %s49 = sphi 0, %s48
    %s63 = sphi 0, %s49
    %s67 = sphi 0, %s67
    %s69 = sphi 0, %s67
    %s70 = sphi 0, %s69
    %s84 = sphi 0, %s70
    %s88 = sphi 0, %s88
    %s90 = sphi 0, %s88
    %s91 = sphi 0, %s90
    %s105 = sphi 0, %s91
    %s111 = sphi 0, %s113
    %s114 = sphi 0, %s111
    %s115 = sphi 0, %s114
    %s131 = sphi 0, %s115
    %s137 = sphi 0, %s139
    %s140 = sphi 0, %s137
    %s141 = sphi 0, %s140
    %s157 = sphi 0, %s141
  $region4: #{bottleneck_forward.5} parent=0 // loop_header_branch
    %15 = sbr.rel (%p13) target = $region8
  $region5: #{bottleneck_forward.5} parent=0 // loop_body
    %s17 = ssub.s32 %s12, 1
    %s18 = ssub.s32 %s12, 2
    %s19 = sadd.s32 %s12, 1
    %s20 = ssub.s32 %s12, %s19
    %p21 = scmp.eq.s32.totalorder %s20, 0
    %s23 = sadd.s32 %s22, 1
    %s24 = scalar_select %p21, %s22, %s23
    %p27 = pneg %p21
    %p28 = scmp.eq.s32.totalorder %s12, 1
    %p29 = por %p27, %p28
    %p30 = scmp.ne.s32.totalorder %s22, %s25
    %p31 = scmp.eq.s32.totalorder %s12, 0
    %p32 = por %p30, %p31
    %p33 = scmp.ne.s32.totalorder %s22, %s25
    %p34 = scmp.eq.s32.totalorder %s17, 1
    %p35 = por %p33, %p34
    %p36 = scmp.ne.s32.totalorder %s25, %s26
    %p37 = scmp.eq.s32.totalorder %s17, 0
    %p38 = por %p36, %p37
    %p39 = scmp.ne.s32.totalorder %s25, %s26
    %p40 = scmp.eq.s32.totalorder %s18, 1
    %p41 = por %p39, %p40
    %p43 = scmp.ne.s32.totalorder %s26, %s42
    %p44 = scmp.eq.s32.totalorder %s18, 0
    %p45 = por %p43, %p44
    %s47 = sadd.s32 %s46, 1
    %p50 = scmp.eq.s32.totalorder %s12, 1
    %p51 = scmp.ne.s32.totalorder %s46, %s48
    %p52 = scmp.eq.s32.totalorder %s12, 0
    %p53 = por %p51, %p52
    %p54 = scmp.ne.s32.totalorder %s46, %s48
    %p55 = scmp.eq.s32.totalorder %s17, 1
    %p56 = por %p54, %p55
    %p57 = scmp.ne.s32.totalorder %s48, %s49
    %p58 = scmp.eq.s32.totalorder %s17, 0
    %p59 = por %p57, %p58
    %p60 = scmp.ne.s32.totalorder %s48, %s49
    %p61 = scmp.eq.s32.totalorder %s18, 1
    %p62 = por %p60, %p61
    %p64 = scmp.ne.s32.totalorder %s49, %s63
    %p65 = scmp.eq.s32.totalorder %s18, 0
    %p66 = por %p64, %p65
    %s68 = sadd.s32 %s67, 1
    %p71 = scmp.eq.s32.totalorder %s12, 1
    %p72 = scmp.ne.s32.totalorder %s67, %s69
    %p73 = scmp.eq.s32.totalorder %s12, 0
    %p74 = por %p72, %p73
    %p75 = scmp.ne.s32.totalorder %s67, %s69
    %p76 = scmp.eq.s32.totalorder %s17, 1
    %p77 = por %p75, %p76
    %p78 = scmp.ne.s32.totalorder %s69, %s70
    %p79 = scmp.eq.s32.totalorder %s17, 0
    %p80 = por %p78, %p79
    %p81 = scmp.ne.s32.totalorder %s69, %s70
    %p82 = scmp.eq.s32.totalorder %s18, 1
    %p83 = por %p81, %p82
    %p85 = scmp.ne.s32.totalorder %s70, %s84
    %p86 = scmp.eq.s32.totalorder %s18, 0
    %p87 = por %p85, %p86
    %s89 = sadd.s32 %s88, 1
    %p92 = scmp.eq.s32.totalorder %s12, 1
    %p93 = scmp.ne.s32.totalorder %s88, %s90
    %p94 = scmp.eq.s32.totalorder %s12, 0
    %p95 = por %p93, %p94
    %p96 = scmp.ne.s32.totalorder %s88, %s90
    %p97 = scmp.eq.s32.totalorder %s17, 1
    %p98 = por %p96, %p97
    %p99 = scmp.ne.s32.totalorder %s90, %s91
    %p100 = scmp.eq.s32.totalorder %s17, 0
    %p101 = por %p99, %p100
    %p102 = scmp.ne.s32.totalorder %s90, %s91
    %p103 = scmp.eq.s32.totalorder %s18, 1
    %p104 = por %p102, %p103
    %p106 = scmp.ne.s32.totalorder %s91, %s105
    %p107 = scmp.eq.s32.totalorder %s18, 0
    %p108 = por %p106, %p107
    %s109 = ssub.s32 %s12, %s19
    %p110 = scmp.eq.s32.totalorder %s109, 0
    %s112 = sadd.s32 %s111, 1
    %s113 = scalar_select %p110, %s111, %s112
    %p116 = pneg %p110
    %p117 = scmp.eq.s32.totalorder %s12, 1
    %p118 = por %p116, %p117
    %p119 = scmp.ne.s32.totalorder %s111, %s114
    %p120 = scmp.eq.s32.totalorder %s12, 0
    %p121 = por %p119, %p120
    %p122 = scmp.ne.s32.totalorder %s111, %s114
    %p123 = scmp.eq.s32.totalorder %s17, 1
    %p124 = por %p122, %p123
    %p125 = scmp.ne.s32.totalorder %s114, %s115
    %p126 = scmp.eq.s32.totalorder %s17, 0
    %p127 = por %p125, %p126
    %p128 = scmp.ne.s32.totalorder %s114, %s115
    %p129 = scmp.eq.s32.totalorder %s18, 1
    %p130 = por %p128, %p129
    %p132 = scmp.ne.s32.totalorder %s115, %s131
    %p133 = scmp.eq.s32.totalorder %s18, 0
    %p134 = por %p132, %p133
    %s135 = ssub.s32 %s12, %s19
    %p136 = scmp.eq.s32.totalorder %s135, 0
    %s138 = sadd.s32 %s137, 1
    %s139 = scalar_select %p136, %s137, %s138
    %p142 = pneg %p136
    %p143 = scmp.eq.s32.totalorder %s12, 1
    %p144 = por %p142, %p143
    %p145 = scmp.ne.s32.totalorder %s137, %s140
    %p146 = scmp.eq.s32.totalorder %s12, 0
    %p147 = por %p145, %p146
    %p148 = scmp.ne.s32.totalorder %s137, %s140
    %p149 = scmp.eq.s32.totalorder %s17, 1
    %p150 = por %p148, %p149
    %p151 = scmp.ne.s32.totalorder %s140, %s141
    %p152 = scmp.eq.s32.totalorder %s17, 0
    %p153 = por %p151, %p152
    %p154 = scmp.ne.s32.totalorder %s140, %s141
    %p155 = scmp.eq.s32.totalorder %s18, 1
    %p156 = por %p154, %p155
    %p158 = scmp.ne.s32.totalorder %s141, %s157
    %p159 = scmp.eq.s32.totalorder %s18, 0
    %p160 = por %p158, %p159
    %p161 = scmp.le.s32.totalorder 1, %s12
    %p162 = scmp.lt.s32.totalorder %s12, 3
    %p163 = pnand %p161, %p162
    %p164 = pneg %p163
    // Predicated region
    $region9: #{bottleneck_forward.5} parent=5 // pred_check
      _
    $region10: #{bottleneck_forward.5} parent=5 // pred_check_branch
      %166 = sbr.rel (%p163) target = $region12
    $region11: #{bottleneck_forward.5} parent=5 // pred_region
      %s167 = ssub.s32 %s12, 1
      // Predicated region
      $region13: #{bottleneck_forward.5} parent=11 // pred_check
        %p168 = pneg %p59
      $region14: #{bottleneck_forward.5} parent=11 // pred_check_branch
        %170 = sbr.rel (%p168) target = $region16
      $region15: #{bottleneck_forward.5} parent=11 // pred_region
        _
      $region16: #{bottleneck_forward.5} parent=11 // pred_fallthru
        _
      // Predicated region
      $region17: #{bottleneck_forward.5} parent=11 // pred_check
        %p171 = pneg %p80
      $region18: #{bottleneck_forward.5} parent=11 // pred_check_branch
        %173 = sbr.rel (%p171) target = $region20
      $region19: #{bottleneck_forward.5} parent=11 // pred_region
        _
      $region20: #{bottleneck_forward.5} parent=11 // pred_fallthru
        _
      // Predicated region
      $region21: #{bottleneck_forward.5} parent=11 // pred_check
        %p174 = pneg %p101
      $region22: #{bottleneck_forward.5} parent=11 // pred_check_branch
        %176 = sbr.rel (%p174) target = $region24
      $region23: #{bottleneck_forward.5} parent=11 // pred_region
        _
      $region24: #{bottleneck_forward.5} parent=11 // pred_fallthru
        _
    $region12: #{bottleneck_forward.5} parent=5 // pred_fallthru
      _
    %p177 = scmp.lt.s32.totalorder %s12, 2
    // Predicated region
    $region25: #{bottleneck_forward.5} parent=5 // pred_check
      %p178 = pneg %p177
    $region26: #{bottleneck_forward.5} parent=5 // pred_check_branch
      %180 = sbr.rel (%p178) target = $region28
    $region27: #{bottleneck_forward.5} parent=5 // pred_region
      // Predicated region
      $region29: #{bottleneck_forward.5} parent=27 // pred_check
        %p181 = pneg %p32
      $region30: #{bottleneck_forward.5} parent=27 // pred_check_branch
        %183 = sbr.rel (%p181) target = $region32
      $region31: #{bottleneck_forward.5} parent=27 // pred_region
        %p184 = scmp.lt.s32.totalorder %s12, 1
        %s185 = scalar_select %p184, %s12, 1
        %s186 = smul.addr %s185, 32
        %s187 = smul.addr %s186, 4
        %s188 = scalar_lea.vmem %s0, %s187
      $region32: #{bottleneck_forward.5} parent=27 // pred_fallthru
        _
    $region28: #{bottleneck_forward.5} parent=5 // pred_fallthru
      _
    %p189 = scmp.le.s32.totalorder 1, %s12
    %p190 = scmp.lt.s32.totalorder %s12, 3
    %p191 = pnand %p189, %p190
    %p192 = pneg %p191
    // Predicated region
    $region33: #{bottleneck_forward.5} parent=5 // pred_check
      _
    $region34: #{bottleneck_forward.5} parent=5 // pred_check_branch
      %194 = sbr.rel (%p191) target = $region36
    $region35: #{bottleneck_forward.5} parent=5 // pred_region
      %s195 = ssub.s32 %s12, 1
      %p196 = scmp.lt.s32.totalorder %s17, 1
      %s197 = scalar_select %p196, %s17, 1
      %s198 = smul.addr %s197, 32
      %s199 = smul.addr %s198, 4
      %s200 = scalar_lea.vmem %s0, %s199
      %p201 = pneg %p38
      %p202 = pneg %p35
      %p203 = pneg %p59
      %p204 = pneg %p56
      %p205 = pneg %p80
      %p206 = pneg %p77
      %p207 = pneg %p101
      %p208 = pneg %p98
      %p209 = pneg %p127
      %p210 = pneg %p124
      %p211 = scmp.lt.s32.totalorder %s17, 1
      %s212 = scalar_select %p211, %s17, 1
      %s213 = smul.addr %s212, 32
      %s214 = smul.addr %s213, 4
      %s215 = scalar_lea.vmem %s4, %s214
      %p216 = pneg %p153
      %p217 = pneg %p150
      %p218 = scmp.lt.s32.totalorder %s17, 1
      %s219 = scalar_select %p218, %s17, 1
      %s220 = smul.addr %s219, 2
      %s221 = scalar_lea.vmem %s5, %s220
      %p222 = scmp.lt.s32.totalorder %s17, 1
      %s223 = scalar_select %p222, %s17, 1
      %s224 = smul.addr %s223, 32
      %s225 = smul.addr %s224, 4
      %s226 = scalar_lea.vmem %s0, %s225
      %p227 = scmp.lt.s32.totalorder %s17, 1
      %s228 = scalar_select %p227, %s17, 1
      %s229 = smul.addr %s228, 32
      %s230 = smul.addr %s229, 4
      %s231 = scalar_lea.vmem %s4, %s230
      %p232 = scmp.lt.s32.totalorder %s17, 1
      %s233 = scalar_select %p232, %s17, 1
      %s234 = smul.addr %s233, 2
      %s235 = scalar_lea.vmem %s5, %s234
      %vm237 = vcmask 27648
      %238 = vst.msk [vmem:[#allocation2] sm:$0xf] %vm237, 0
      %239 = vst.msk [vmem:[#allocation2 + $0x4] sm:$0xf] %vm237, 0
      %240 = vst.msk [vmem:[#allocation2 + $0x8] sm:$0xf] %vm237, 0
      %241 = vst.msk [vmem:[#allocation2 + $0xc] sm:$0xf] %vm237, 0
      %242 = vst.msk [vmem:[#allocation2 + $0x10] sm:$0xf] %vm237, 0
      %243 = vst.msk [vmem:[#allocation2 + $0x14] sm:$0xf] %vm237, 0
      %244 = vst.msk [vmem:[#allocation2 + $0x18] sm:$0xf] %vm237, 0
      %245 = vst.msk [vmem:[#allocation2 + $0x1c] sm:$0xf] %vm237, 0
      %246 = vst.msk [vmem:[#allocation2 + $0x20] sm:$0xf] %vm237, 0
      %247 = vst.msk [vmem:[#allocation2 + $0x24] sm:$0xf] %vm237, 0
      %248 = vst.msk [vmem:[#allocation2 + $0x28] sm:$0xf] %vm237, 0
      %249 = vst.msk [vmem:[#allocation2 + $0x2c] sm:$0xf] %vm237, 0
      %250 = vst.msk [vmem:[#allocation2 + $0x30] sm:$0xf] %vm237, 0
      %251 = vst.msk [vmem:[#allocation2 + $0x34] sm:$0xf] %vm237, 0
      %252 = vst.msk [vmem:[#allocation2 + $0x38] sm:$0xf] %vm237, 0
      %253 = vst.msk [vmem:[#allocation2 + $0x3c] sm:$0xf] %vm237, 0
      %254 = vst.msk [vmem:[#allocation2 + $0x40] sm:$0xf] %vm237, 0
      %255 = vst.msk [vmem:[#allocation2 + $0x44] sm:$0xf] %vm237, 0
      %256 = vst.msk [vmem:[#allocation2 + $0x48] sm:$0xf] %vm237, 0
      %257 = vst.msk [vmem:[#allocation2 + $0x4c] sm:$0xf] %vm237, 0
      %258 = vst.msk [vmem:[#allocation2 + $0x50] sm:$0xf] %vm237, 0
      %259 = vst.msk [vmem:[#allocation2 + $0x54] sm:$0xf] %vm237, 0
      %260 = vst.msk [vmem:[#allocation2 + $0x58] sm:$0xf] %vm237, 0
      %261 = vst.msk [vmem:[#allocation2 + $0x5c] sm:$0xf] %vm237, 0
      %262 = vst.msk [vmem:[#allocation2 + $0x60] sm:$0xf] %vm237, 0
      %263 = vst.msk [vmem:[#allocation2 + $0x64] sm:$0xf] %vm237, 0
      %264 = vst.msk [vmem:[#allocation2 + $0x68] sm:$0xf] %vm237, 0
      %265 = vst.msk [vmem:[#allocation2 + $0x6c] sm:$0xf] %vm237, 0
      %266 = vst.msk [vmem:[#allocation2 + $0x70] sm:$0xf] %vm237, 0
      %267 = vst.msk [vmem:[#allocation2 + $0x74] sm:$0xf] %vm237, 0
      %268 = vst.msk [vmem:[#allocation2 + $0x78] sm:$0xf] %vm237, 0
      %269 = vst.msk [vmem:[#allocation2 + $0x7c] sm:$0xf] %vm237, 0
      %270 = vst.msk [vmem:[#allocation2 + $0x80] sm:$0xf] %vm237, 0
      %271 = vst.msk [vmem:[#allocation2 + $0x84] sm:$0xf] %vm237, 0
      %272 = vst.msk [vmem:[#allocation2 + $0x88] sm:$0xf] %vm237, 0
      %273 = vst.msk [vmem:[#allocation2 + $0x8c] sm:$0xf] %vm237, 0
      %274 = vst.msk [vmem:[#allocation2 + $0x90] sm:$0xf] %vm237, 0
      %275 = vst.msk [vmem:[#allocation2 + $0x94] sm:$0xf] %vm237, 0
      %276 = vst.msk [vmem:[#allocation2 + $0x98] sm:$0xf] %vm237, 0
      %277 = vst.msk [vmem:[#allocation2 + $0x9c] sm:$0xf] %vm237, 0
      %278 = vst.msk [vmem:[#allocation2 + $0xa0] sm:$0xf] %vm237, 0
      %279 = vst.msk [vmem:[#allocation2 + $0xa4] sm:$0xf] %vm237, 0
      %280 = vst.msk [vmem:[#allocation2 + $0xa8] sm:$0xf] %vm237, 0
      %281 = vst.msk [vmem:[#allocation2 + $0xac] sm:$0xf] %vm237, 0
      %282 = vst.msk [vmem:[#allocation2 + $0xb0] sm:$0xf] %vm237, 0
      %283 = vst.msk [vmem:[#allocation2 + $0xb4] sm:$0xf] %vm237, 0
      %284 = vst.msk [vmem:[#allocation2 + $0xb8] sm:$0xf] %vm237, 0
      %285 = vst.msk [vmem:[#allocation2 + $0xbc] sm:$0xf] %vm237, 0
      %286 = vst.msk [vmem:[#allocation2 + $0xc0] sm:$0xf] %vm237, 0
      %287 = vst.msk [vmem:[#allocation2 + $0xc4] sm:$0xf] %vm237, 0
      %288 = vst.msk [vmem:[#allocation2 + $0xc8] sm:$0xf] %vm237, 0
      %289 = vst.msk [vmem:[#allocation2 + $0xcc] sm:$0xf] %vm237, 0
      %290 = vst.msk [vmem:[#allocation2 + $0xd0] sm:$0xf] %vm237, 0
      %291 = vst.msk [vmem:[#allocation2 + $0xd4] sm:$0xf] %vm237, 0
      %v292 = vld [vmem:[%s226] sm:$0xf]
      %v293 = vld [vmem:[%s226 + $0x4] sm:$0xf]
      %v294 = vld [vmem:[%s226 + $0x8] sm:$0xf]
      %v295 = vld [vmem:[%s226 + $0xc] sm:$0xf]
      %v296 = vld [vmem:[%s226 + $0x10] sm:$0xf]
      %v297 = vld [vmem:[%s226 + $0x14] sm:$0xf]
      %v298 = vld [vmem:[%s226 + $0x18] sm:$0xf]
      %v299 = vld [vmem:[%s226 + $0x1c] sm:$0xf]
      %v300 = vld [vmem:[%s226 + $0x20] sm:$0xf]
      %v301 = vld [vmem:[%s226 + $0x24] sm:$0xf]
      %v302 = vld [vmem:[%s226 + $0x28] sm:$0xf]
      %v303 = vld [vmem:[%s226 + $0x2c] sm:$0xf]
      %v304 = vld [vmem:[%s226 + $0x30] sm:$0xf]
      %v305 = vld [vmem:[%s226 + $0x34] sm:$0xf]
      %v306 = vld [vmem:[%s226 + $0x38] sm:$0xf]
      %v307 = vld [vmem:[%s226 + $0x3c] sm:$0xf]
      %v308 = vld [vmem:[%s226 + $0x40] sm:$0xf]
      %v309 = vld [vmem:[%s226 + $0x44] sm:$0xf]
      %v310 = vld [vmem:[%s226 + $0x48] sm:$0xf]
      %v311 = vld [vmem:[%s226 + $0x4c] sm:$0xf]
      %v312 = vld [vmem:[%s226 + $0x50] sm:$0xf]
      %v313 = vld [vmem:[%s226 + $0x54] sm:$0xf]
      %v314 = vld [vmem:[%s226 + $0x58] sm:$0xf]
      %v315 = vld [vmem:[%s226 + $0x5c] sm:$0xf]
      %v316 = vld [vmem:[%s226 + $0x60] sm:$0xf]
      %v317 = vld [vmem:[%s226 + $0x64] sm:$0xf]
      %v318 = vld [vmem:[%s226 + $0x68] sm:$0xf]
      %v319 = vld [vmem:[%s226 + $0x6c] sm:$0xf]
      %v320 = vld [vmem:[%s226 + $0x70] sm:$0xf]
      %v321 = vld [vmem:[%s226 + $0x74] sm:$0xf]
      %v322 = vld [vmem:[%s226 + $0x78] sm:$0xf]
      %v323 = vld [vmem:[%s226 + $0x7c] sm:$0xf]
      %v324 = vunpack.c.l.bf16 %v292
      %v325 = vunpack.c.l.bf16 %v293
      %v326 = vunpack.c.l.bf16 %v294
      %v327 = vunpack.c.l.bf16 %v295
      %v328 = vunpack.c.l.bf16 %v296
      %v329 = vunpack.c.l.bf16 %v297
      %v330 = vunpack.c.l.bf16 %v298
      %v331 = vunpack.c.l.bf16 %v299
      %v332 = vunpack.c.l.bf16 %v300
      %v333 = vunpack.c.l.bf16 %v301
      %v334 = vunpack.c.l.bf16 %v302
      %v335 = vunpack.c.l.bf16 %v303
      %v336 = vunpack.c.l.bf16 %v304
      %v337 = vunpack.c.l.bf16 %v305
      %v338 = vunpack.c.l.bf16 %v306
      %v339 = vunpack.c.l.bf16 %v307
      %v340 = vunpack.c.l.bf16 %v308
      %v341 = vunpack.c.l.bf16 %v309
      %v342 = vunpack.c.l.bf16 %v310
      %v343 = vunpack.c.l.bf16 %v311
      %v344 = vunpack.c.l.bf16 %v312
      %v345 = vunpack.c.l.bf16 %v313
      %v346 = vunpack.c.l.bf16 %v314
      %v347 = vunpack.c.l.bf16 %v315
      %v348 = vunpack.c.l.bf16 %v316
      %v349 = vunpack.c.l.bf16 %v317
      %v350 = vunpack.c.l.bf16 %v318
      %v351 = vunpack.c.l.bf16 %v319
      %v352 = vunpack.c.l.bf16 %v320
      %v353 = vunpack.c.l.bf16 %v321
      %v354 = vunpack.c.l.bf16 %v322
      %v355 = vunpack.c.l.bf16 %v323
      %v356 = vld [vmem:[%s1] sm:$0x1]
      %v358 = vlaneseq
      %v359 = vshrl.u32 %v358, 7
      %v360 = vsub.s32 0, %v359
      %v361 = vrot.slane %v356, %v360
      %v363 = vmul.f32 %v324, %v361
      %v364 = vmul.f32 %v325, %v361
      %v365 = vmul.f32 %v326, %v361
      %v366 = vmul.f32 %v327, %v361
      %v367 = vmul.f32 %v328, %v361
      %v368 = vmul.f32 %v329, %v361
      %v369 = vmul.f32 %v330, %v361
      %v370 = vmul.f32 %v331, %v361
      %v371 = vmul.f32 %v332, %v361
      %v372 = vmul.f32 %v333, %v361
      %v373 = vmul.f32 %v334, %v361
      %v374 = vmul.f32 %v335, %v361
      %v375 = vmul.f32 %v336, %v361
      %v376 = vmul.f32 %v337, %v361
      %v377 = vmul.f32 %v338, %v361
      %v378 = vmul.f32 %v339, %v361
      %v379 = vmul.f32 %v340, %v361
      %v380 = vmul.f32 %v341, %v361
      %v381 = vmul.f32 %v342, %v361
      %v382 = vmul.f32 %v343, %v361
      %v383 = vmul.f32 %v344, %v361
      %v384 = vmul.f32 %v345, %v361
      %v385 = vmul.f32 %v346, %v361
      %v386 = vmul.f32 %v347, %v361
      %v387 = vmul.f32 %v348, %v361
      %v388 = vmul.f32 %v349, %v361
      %v389 = vmul.f32 %v350, %v361
      %v390 = vmul.f32 %v351, %v361
      %v391 = vmul.f32 %v352, %v361
      %v392 = vmul.f32 %v353, %v361
      %v393 = vmul.f32 %v354, %v361
      %v394 = vmul.f32 %v355, %v361
      %v395 = vld [vmem:[%s2] sm:$0x1]
      %v397 = vlaneseq
      %v398 = vshrl.u32 %v397, 7
      %v399 = vsub.s32 0, %v398
      %v400 = vrot.slane %v395, %v399
      %v402 = vadd.f32 %v363, %v400
      %v403 = vadd.f32 %v364, %v400
      %v404 = vadd.f32 %v365, %v400
      %v405 = vadd.f32 %v366, %v400
      %v406 = vadd.f32 %v367, %v400
      %v407 = vadd.f32 %v368, %v400
      %v408 = vadd.f32 %v369, %v400
      %v409 = vadd.f32 %v370, %v400
      %v410 = vadd.f32 %v371, %v400
      %v411 = vadd.f32 %v372, %v400
      %v412 = vadd.f32 %v373, %v400
      %v413 = vadd.f32 %v374, %v400
      %v414 = vadd.f32 %v375, %v400
      %v415 = vadd.f32 %v376, %v400
      %v416 = vadd.f32 %v377, %v400
      %v417 = vadd.f32 %v378, %v400
      %v418 = vadd.f32 %v379, %v400
      %v419 = vadd.f32 %v380, %v400
      %v420 = vadd.f32 %v381, %v400
      %v421 = vadd.f32 %v382, %v400
      %v422 = vadd.f32 %v383, %v400
      %v423 = vadd.f32 %v384, %v400
      %v424 = vadd.f32 %v385, %v400
      %v425 = vadd.f32 %v386, %v400
      %v426 = vadd.f32 %v387, %v400
      %v427 = vadd.f32 %v388, %v400
      %v428 = vadd.f32 %v389, %v400
      %v429 = vadd.f32 %v390, %v400
      %v430 = vadd.f32 %v391, %v400
      %v431 = vadd.f32 %v392, %v400
      %v432 = vadd.f32 %v393, %v400
      %v433 = vadd.f32 %v394, %v400
      %v434 = vmax.f32 %v402, 0.0
      %v435 = vmax.f32 %v403, 0.0
      %v436 = vmax.f32 %v404, 0.0
      %v437 = vmax.f32 %v405, 0.0
      %v438 = vmax.f32 %v406, 0.0
      %v439 = vmax.f32 %v407, 0.0
      %v440 = vmax.f32 %v408, 0.0
      %v441 = vmax.f32 %v409, 0.0
      %v442 = vmax.f32 %v410, 0.0
      %v443 = vmax.f32 %v411, 0.0
      %v444 = vmax.f32 %v412, 0.0
      %v445 = vmax.f32 %v413, 0.0
      %v446 = vmax.f32 %v414, 0.0
      %v447 = vmax.f32 %v415, 0.0
      %v448 = vmax.f32 %v416, 0.0
      %v449 = vmax.f32 %v417, 0.0
      %v450 = vmax.f32 %v418, 0.0
      %v451 = vmax.f32 %v419, 0.0
      %v452 = vmax.f32 %v420, 0.0
      %v453 = vmax.f32 %v421, 0.0
      %v454 = vmax.f32 %v422, 0.0
      %v455 = vmax.f32 %v423, 0.0
      %v456 = vmax.f32 %v424, 0.0
      %v457 = vmax.f32 %v425, 0.0
      %v458 = vmax.f32 %v426, 0.0
      %v459 = vmax.f32 %v427, 0.0
      %v460 = vmax.f32 %v428, 0.0
      %v461 = vmax.f32 %v429, 0.0
      %v462 = vmax.f32 %v430, 0.0
      %v463 = vmax.f32 %v431, 0.0
      %v464 = vmax.f32 %v432, 0.0
      %v465 = vmax.f32 %v433, 0.0
      %v466 = vpack.c.bf16 %v435, %v434
      %v467 = vpack.c.bf16 %v437, %v436
      %v468 = vpack.c.bf16 %v439, %v438
      %v469 = vpack.c.bf16 %v441, %v440
      %v470 = vpack.c.bf16 %v443, %v442
      %v471 = vpack.c.bf16 %v445, %v444
      %v472 = vpack.c.bf16 %v447, %v446
      %v473 = vpack.c.bf16 %v449, %v448
      %v474 = vpack.c.bf16 %v451, %v450
      %v475 = vpack.c.bf16 %v453, %v452
      %v476 = vpack.c.bf16 %v455, %v454
      %v477 = vpack.c.bf16 %v457, %v456
      %v478 = vpack.c.bf16 %v459, %v458
      %v479 = vpack.c.bf16 %v461, %v460
      %v480 = vpack.c.bf16 %v463, %v462
      %v481 = vpack.c.bf16 %v465, %v464
      %v498 = vunpack.c.l.b16 %v466
      %v499 = vunpack.c.h.b16 %v466
      %v500 = vunpack.c.l.b16 %v467
      %v501 = vunpack.c.h.b16 %v467
      %v502 = vunpack.c.l.b16 %v468
      %v503 = vunpack.c.h.b16 %v468
      %v504 = vunpack.c.l.b16 %v469
      %v505 = vunpack.c.h.b16 %v469
      %v506 = vunpack.c.l.b16 %v470
      %v507 = vunpack.c.h.b16 %v470
      %v508 = vunpack.c.l.b16 %v471
      %v509 = vunpack.c.h.b16 %v471
      %v510 = vunpack.c.l.b16 %v472
      %v511 = vunpack.c.h.b16 %v472
      %v512 = vunpack.c.l.b16 %v473
      %v513 = vunpack.c.h.b16 %v473
      %v514 = vunpack.c.l.b16 %v474
      %v515 = vunpack.c.h.b16 %v474
      %v516 = vunpack.c.l.b16 %v475
      %v517 = vunpack.c.h.b16 %v475
      %v518 = vunpack.c.l.b16 %v476
      %v519 = vunpack.c.h.b16 %v476
      %v520 = vunpack.c.l.b16 %v477
      %v521 = vunpack.c.h.b16 %v477
      %v522 = vunpack.c.l.b16 %v478
      %v523 = vunpack.c.h.b16 %v478
      %v524 = vunpack.c.l.b16 %v479
      %v525 = vunpack.c.h.b16 %v479
      %v526 = vunpack.c.l.b16 %v480
      %v527 = vunpack.c.h.b16 %v480
      %v528 = vunpack.c.l.b16 %v481
      %v529 = vunpack.c.h.b16 %v481
      %v530 = vpack.c.b16 %v498, %v498
      %v531 = vpack.c.b16 %v499, %v499
      %v532 = vpack.c.b16 %v500, %v500
      %v533 = vpack.c.b16 %v501, %v501
      %v534 = vpack.c.b16 %v502, %v502
      %v535 = vpack.c.b16 %v503, %v503
      %v536 = vpack.c.b16 %v504, %v504
      %v537 = vpack.c.b16 %v505, %v505
      %v538 = vpack.c.b16 %v506, %v506
      %v539 = vpack.c.b16 %v507, %v507
      %v540 = vpack.c.b16 %v508, %v508
      %v541 = vpack.c.b16 %v509, %v509
      %v542 = vpack.c.b16 %v510, %v510
      %v543 = vpack.c.b16 %v511, %v511
      %v544 = vpack.c.b16 %v512, %v512
      %v545 = vpack.c.b16 %v513, %v513
      %v546 = vpack.c.b16 %v514, %v514
      %v547 = vpack.c.b16 %v515, %v515
      %v548 = vpack.c.b16 %v516, %v516
      %v549 = vpack.c.b16 %v517, %v517
      %v550 = vpack.c.b16 %v518, %v518
      %v551 = vpack.c.b16 %v519, %v519
      %v552 = vpack.c.b16 %v520, %v520
      %v553 = vpack.c.b16 %v521, %v521
      %v554 = vpack.c.b16 %v522, %v522
      %v555 = vpack.c.b16 %v523, %v523
      %v556 = vpack.c.b16 %v524, %v524
      %v557 = vpack.c.b16 %v525, %v525
      %v558 = vpack.c.b16 %v526, %v526
      %v559 = vpack.c.b16 %v527, %v527
      %v560 = vpack.c.b16 %v528, %v528
      %v561 = vpack.c.b16 %v529, %v529
      %vm562 = vsmask.f32 256
      %vm563 = vsmask.f32 4368
      %vm564 = vmor %vm562, %vm563
      %v566 = vshrl.u32 %v530, 16
      %v568 = vrot.slane %v566, 7
      %v569 = vshll.u32 %v530, 16
      %v571 = vor.u32 %v568, %v569
      %v572 = vrot.slane %v568, 4
      %v574 = vshrl.u32 %v531, 16
      %v576 = vrot.slane %v574, 7
      %v577 = vshll.u32 %v531, 16
      %v579 = vor.u32 %v576, %v577
      %v580 = vsel %vm564, %v572, %v579
      %v581 = vrot.slane %v576, 4
      %v583 = vshrl.u32 %v532, 16
      %v585 = vrot.slane %v583, 7
      %v586 = vshll.u32 %v532, 16
      %v588 = vor.u32 %v585, %v586
      %v589 = vrot.slane %v585, 4
      %v591 = vshrl.u32 %v533, 16
      %v593 = vrot.slane %v591, 7
      %v594 = vshll.u32 %v533, 16
      %v596 = vor.u32 %v593, %v594
      %v597 = vsel %vm564, %v589, %v596
      %v598 = vrot.slane %v593, 4
      %v600 = vshrl.u32 %v534, 16
      %v602 = vrot.slane %v600, 7
      %v603 = vshll.u32 %v534, 16
      %v605 = vor.u32 %v602, %v603
      %v606 = vrot.slane %v602, 4
      %v608 = vshrl.u32 %v535, 16
      %v610 = vrot.slane %v608, 7
      %v611 = vshll.u32 %v535, 16
      %v613 = vor.u32 %v610, %v611
      %v614 = vsel %vm564, %v606, %v613
      %v615 = vrot.slane %v610, 4
      %v617 = vshrl.u32 %v536, 16
      %v619 = vrot.slane %v617, 7
      %v620 = vshll.u32 %v536, 16
      %v622 = vor.u32 %v619, %v620
      %v623 = vrot.slane %v619, 4
      %v625 = vshrl.u32 %v537, 16
      %v627 = vrot.slane %v625, 7
      %v628 = vshll.u32 %v537, 16
      %v630 = vor.u32 %v627, %v628
      %v631 = vsel %vm564, %v623, %v630
      %v632 = vrot.slane %v627, 4
      %v634 = vshrl.u32 %v538, 16
      %v636 = vrot.slane %v634, 7
      %v637 = vshll.u32 %v538, 16
      %v639 = vor.u32 %v636, %v637
      %v640 = vrot.slane %v636, 4
      %v642 = vshrl.u32 %v539, 16
      %v644 = vrot.slane %v642, 7
      %v645 = vshll.u32 %v539, 16
      %v647 = vor.u32 %v644, %v645
      %v648 = vsel %vm564, %v640, %v647
      %v649 = vrot.slane %v644, 4
      %v651 = vshrl.u32 %v540, 16
      %v653 = vrot.slane %v651, 7
      %v654 = vshll.u32 %v540, 16
      %v656 = vor.u32 %v653, %v654
      %v657 = vrot.slane %v653, 4
      %v659 = vshrl.u32 %v541, 16
      %v661 = vrot.slane %v659, 7
      %v662 = vshll.u32 %v541, 16
      %v664 = vor.u32 %v661, %v662
      %v665 = vsel %vm564, %v657, %v664
      %v666 = vrot.slane %v661, 4
      %v668 = vshrl.u32 %v542, 16
      %v670 = vrot.slane %v668, 7
      %v671 = vshll.u32 %v542, 16
      %v673 = vor.u32 %v670, %v671
      %v674 = vrot.slane %v670, 4
      %v676 = vshrl.u32 %v543, 16
      %v678 = vrot.slane %v676, 7
      %v679 = vshll.u32 %v543, 16
      %v681 = vor.u32 %v678, %v679
      %v682 = vsel %vm564, %v674, %v681
      %v683 = vrot.slane %v678, 4
      %v685 = vshrl.u32 %v544, 16
      %v687 = vrot.slane %v685, 7
      %v688 = vshll.u32 %v544, 16
      %v690 = vor.u32 %v687, %v688
      %v691 = vrot.slane %v687, 4
      %v693 = vshrl.u32 %v545, 16
      %v695 = vrot.slane %v693, 7
      %v696 = vshll.u32 %v545, 16
      %v698 = vor.u32 %v695, %v696
      %v699 = vsel %vm564, %v691, %v698
      %v700 = vrot.slane %v695, 4
      %v702 = vshrl.u32 %v546, 16
      %v704 = vrot.slane %v702, 7
      %v705 = vshll.u32 %v546, 16
      %v707 = vor.u32 %v704, %v705
      %v708 = vrot.slane %v704, 4
      %v710 = vshrl.u32 %v547, 16
      %v712 = vrot.slane %v710, 7
      %v713 = vshll.u32 %v547, 16
      %v715 = vor.u32 %v712, %v713
      %v716 = vsel %vm564, %v708, %v715
      %v717 = vrot.slane %v712, 4
      %v719 = vshrl.u32 %v548, 16
      %v721 = vrot.slane %v719, 7
      %v722 = vshll.u32 %v548, 16
      %v724 = vor.u32 %v721, %v722
      %v725 = vrot.slane %v721, 4
      %v727 = vshrl.u32 %v549, 16
      %v729 = vrot.slane %v727, 7
      %v730 = vshll.u32 %v549, 16
      %v732 = vor.u32 %v729, %v730
      %v733 = vsel %vm564, %v725, %v732
      %v734 = vrot.slane %v729, 4
      %v736 = vshrl.u32 %v550, 16
      %v738 = vrot.slane %v736, 7
      %v739 = vshll.u32 %v550, 16
      %v741 = vor.u32 %v738, %v739
      %v742 = vrot.slane %v738, 4
      %v744 = vshrl.u32 %v551, 16
      %v746 = vrot.slane %v744, 7
      %v747 = vshll.u32 %v551, 16
      %v749 = vor.u32 %v746, %v747
      %v750 = vsel %vm564, %v742, %v749
      %v751 = vrot.slane %v746, 4
      %v753 = vshrl.u32 %v552, 16
      %v755 = vrot.slane %v753, 7
      %v756 = vshll.u32 %v552, 16
      %v758 = vor.u32 %v755, %v756
      %v759 = vrot.slane %v755, 4
      %v761 = vshrl.u32 %v553, 16
      %v763 = vrot.slane %v761, 7
      %v764 = vshll.u32 %v553, 16
      %v766 = vor.u32 %v763, %v764
      %v767 = vsel %vm564, %v759, %v766
      %v768 = vrot.slane %v763, 4
      %v770 = vshrl.u32 %v554, 16
      %v772 = vrot.slane %v770, 7
      %v773 = vshll.u32 %v554, 16
      %v775 = vor.u32 %v772, %v773
      %v776 = vrot.slane %v772, 4
      %v778 = vshrl.u32 %v555, 16
      %v780 = vrot.slane %v778, 7
      %v781 = vshll.u32 %v555, 16
      %v783 = vor.u32 %v780, %v781
      %v784 = vsel %vm564, %v776, %v783
      %v785 = vrot.slane %v780, 4
      %v787 = vshrl.u32 %v556, 16
      %v789 = vrot.slane %v787, 7
      %v790 = vshll.u32 %v556, 16
      %v792 = vor.u32 %v789, %v790
      %v793 = vrot.slane %v789, 4
      %v795 = vshrl.u32 %v557, 16
      %v797 = vrot.slane %v795, 7
      %v798 = vshll.u32 %v557, 16
      %v800 = vor.u32 %v797, %v798
      %v801 = vsel %vm564, %v793, %v800
      %v802 = vrot.slane %v797, 4
      %v804 = vshrl.u32 %v558, 16
      %v806 = vrot.slane %v804, 7
      %v807 = vshll.u32 %v558, 16
      %v809 = vor.u32 %v806, %v807
      %v810 = vrot.slane %v806, 4
      %v812 = vshrl.u32 %v559, 16
      %v814 = vrot.slane %v812, 7
      %v815 = vshll.u32 %v559, 16
      %v817 = vor.u32 %v814, %v815
      %v818 = vsel %vm564, %v810, %v817
      %v819 = vrot.slane %v814, 4
      %v821 = vshrl.u32 %v560, 16
      %v823 = vrot.slane %v821, 7
      %v824 = vshll.u32 %v560, 16
      %v826 = vor.u32 %v823, %v824
      %v827 = vrot.slane %v823, 4
      %v829 = vshrl.u32 %v561, 16
      %v831 = vrot.slane %v829, 7
      %v832 = vshll.u32 %v561, 16
      %v834 = vor.u32 %v831, %v832
      %v835 = vsel %vm564, %v827, %v834
      %v836 = vrot.slane %v831, 4
      %s885 = scalar_lea.vmem [#allocation2], 12
      %vm886 = vcmask 27648
      %vm887 = vsmask.f32 7938
      %vm888 = vmand %vm886, %vm887
      %v889 = vld [vmem:[%s885] sm:$0xf]
      %v890 = vsel %vm888, %v571, %v889
      %891 = vst [vmem:[%s885] sm:$0xf] %v890
      %892 = vst.msk [vmem:[%s885 + $0x4] sm:$0xf] %vm237, %v580
      %vm893 = vcmask 24576
      %vm894 = vmand %vm893, %vm562
      %v895 = vld [vmem:[%s885 + $0x8] sm:$0x1]
      %v896 = vsel %vm894, %v581, %v895
      %897 = vst [vmem:[%s885 + $0x8] sm:$0x1] %v896
      %v898 = vld [vmem:[%s885 + $0xc] sm:$0xf]
      %v899 = vsel %vm888, %v588, %v898
      %900 = vst [vmem:[%s885 + $0xc] sm:$0xf] %v899
      %901 = vst.msk [vmem:[%s885 + $0x10] sm:$0xf] %vm237, %v597
      %v902 = vld [vmem:[%s885 + $0x14] sm:$0x1]
      %v903 = vsel %vm894, %v598, %v902
      %904 = vst [vmem:[%s885 + $0x14] sm:$0x1] %v903
      %v905 = vld [vmem:[%s885 + $0x18] sm:$0xf]
      %v906 = vsel %vm888, %v605, %v905
      %907 = vst [vmem:[%s885 + $0x18] sm:$0xf] %v906
      %908 = vst.msk [vmem:[%s885 + $0x1c] sm:$0xf] %vm237, %v614
      %v909 = vld [vmem:[%s885 + $0x20] sm:$0x1]
      %v910 = vsel %vm894, %v615, %v909
      %911 = vst [vmem:[%s885 + $0x20] sm:$0x1] %v910
      %v912 = vld [vmem:[%s885 + $0x24] sm:$0xf]
      %v913 = vsel %vm888, %v622, %v912
      %914 = vst [vmem:[%s885 + $0x24] sm:$0xf] %v913
      %915 = vst.msk [vmem:[%s885 + $0x28] sm:$0xf] %vm237, %v631
      %v916 = vld [vmem:[%s885 + $0x2c] sm:$0x1]
      %v917 = vsel %vm894, %v632, %v916
      %918 = vst [vmem:[%s885 + $0x2c] sm:$0x1] %v917
      %v919 = vld [vmem:[%s885 + $0x30] sm:$0xf]
      %v920 = vsel %vm888, %v639, %v919
      %921 = vst [vmem:[%s885 + $0x30] sm:$0xf] %v920
      %922 = vst.msk [vmem:[%s885 + $0x34] sm:$0xf] %vm237, %v648
      %v923 = vld [vmem:[%s885 + $0x38] sm:$0x1]
      %v924 = vsel %vm894, %v649, %v923
      %925 = vst [vmem:[%s885 + $0x38] sm:$0x1] %v924
      %v926 = vld [vmem:[%s885 + $0x3c] sm:$0xf]
      %v927 = vsel %vm888, %v656, %v926
      %928 = vst [vmem:[%s885 + $0x3c] sm:$0xf] %v927
      %929 = vst.msk [vmem:[%s885 + $0x40] sm:$0xf] %vm237, %v665
      %v930 = vld [vmem:[%s885 + $0x44] sm:$0x1]
      %v931 = vsel %vm894, %v666, %v930
      %932 = vst [vmem:[%s885 + $0x44] sm:$0x1] %v931
      %v933 = vld [vmem:[%s885 + $0x48] sm:$0xf]
      %v934 = vsel %vm888, %v673, %v933
      %935 = vst [vmem:[%s885 + $0x48] sm:$0xf] %v934
      %936 = vst.msk [vmem:[%s885 + $0x4c] sm:$0xf] %vm237, %v682
      %v937 = vld [vmem:[%s885 + $0x50] sm:$0x1]
      %v938 = vsel %vm894, %v683, %v937
      %939 = vst [vmem:[%s885 + $0x50] sm:$0x1] %v938
      %v940 = vld [vmem:[%s885 + $0x54] sm:$0xf]
      %v941 = vsel %vm888, %v690, %v940
      %942 = vst [vmem:[%s885 + $0x54] sm:$0xf] %v941
      %943 = vst.msk [vmem:[%s885 + $0x58] sm:$0xf] %vm237, %v699
      %v944 = vld [vmem:[%s885 + $0x5c] sm:$0x1]
      %v945 = vsel %vm894, %v700, %v944
      %946 = vst [vmem:[%s885 + $0x5c] sm:$0x1] %v945
      %v947 = vld [vmem:[%s885 + $0x60] sm:$0xf]
      %v948 = vsel %vm888, %v707, %v947
      %949 = vst [vmem:[%s885 + $0x60] sm:$0xf] %v948
      %950 = vst.msk [vmem:[%s885 + $0x64] sm:$0xf] %vm237, %v716
      %v951 = vld [vmem:[%s885 + $0x68] sm:$0x1]
      %v952 = vsel %vm894, %v717, %v951
      %953 = vst [vmem:[%s885 + $0x68] sm:$0x1] %v952
      %v954 = vld [vmem:[%s885 + $0x6c] sm:$0xf]
      %v955 = vsel %vm888, %v724, %v954
      %956 = vst [vmem:[%s885 + $0x6c] sm:$0xf] %v955
      %957 = vst.msk [vmem:[%s885 + $0x70] sm:$0xf] %vm237, %v733
      %v958 = vld [vmem:[%s885 + $0x74] sm:$0x1]
      %v959 = vsel %vm894, %v734, %v958
      %960 = vst [vmem:[%s885 + $0x74] sm:$0x1] %v959
      %v961 = vld [vmem:[%s885 + $0x78] sm:$0xf]
      %v962 = vsel %vm888, %v741, %v961
      %963 = vst [vmem:[%s885 + $0x78] sm:$0xf] %v962
      %964 = vst.msk [vmem:[%s885 + $0x7c] sm:$0xf] %vm237, %v750
      %v965 = vld [vmem:[%s885 + $0x80] sm:$0x1]
      %v966 = vsel %vm894, %v751, %v965
      %967 = vst [vmem:[%s885 + $0x80] sm:$0x1] %v966
      %v968 = vld [vmem:[%s885 + $0x84] sm:$0xf]
      %v969 = vsel %vm888, %v758, %v968
      %970 = vst [vmem:[%s885 + $0x84] sm:$0xf] %v969
      %971 = vst.msk [vmem:[%s885 + $0x88] sm:$0xf] %vm237, %v767
      %v972 = vld [vmem:[%s885 + $0x8c] sm:$0x1]
      %v973 = vsel %vm894, %v768, %v972
      %974 = vst [vmem:[%s885 + $0x8c] sm:$0x1] %v973
      %v975 = vld [vmem:[%s885 + $0x90] sm:$0xf]
      %v976 = vsel %vm888, %v775, %v975
      %977 = vst [vmem:[%s885 + $0x90] sm:$0xf] %v976
      %978 = vst.msk [vmem:[%s885 + $0x94] sm:$0xf] %vm237, %v784
      %v979 = vld [vmem:[%s885 + $0x98] sm:$0x1]
      %v980 = vsel %vm894, %v785, %v979
      %981 = vst [vmem:[%s885 + $0x98] sm:$0x1] %v980
      %v982 = vld [vmem:[%s885 + $0x9c] sm:$0xf]
      %v983 = vsel %vm888, %v792, %v982
      %984 = vst [vmem:[%s885 + $0x9c] sm:$0xf] %v983
      %985 = vst.msk [vmem:[%s885 + $0xa0] sm:$0xf] %vm237, %v801
      %v986 = vld [vmem:[%s885 + $0xa4] sm:$0x1]
      %v987 = vsel %vm894, %v802, %v986
      %988 = vst [vmem:[%s885 + $0xa4] sm:$0x1] %v987
      %v989 = vld [vmem:[%s885 + $0xa8] sm:$0xf]
      %v990 = vsel %vm888, %v809, %v989
      %991 = vst [vmem:[%s885 + $0xa8] sm:$0xf] %v990
      %992 = vst.msk [vmem:[%s885 + $0xac] sm:$0xf] %vm237, %v818
      %v993 = vld [vmem:[%s885 + $0xb0] sm:$0x1]
      %v994 = vsel %vm894, %v819, %v993
      %995 = vst [vmem:[%s885 + $0xb0] sm:$0x1] %v994
      %v996 = vld [vmem:[%s885 + $0xb4] sm:$0xf]
      %v997 = vsel %vm888, %v826, %v996
      %998 = vst [vmem:[%s885 + $0xb4] sm:$0xf] %v997
      %999 = vst.msk [vmem:[%s885 + $0xb8] sm:$0xf] %vm237, %v835
      %v1000 = vld [vmem:[%s885 + $0xbc] sm:$0x1]
      %v1001 = vsel %vm894, %v836, %v1000
      %1002 = vst [vmem:[%s885 + $0xbc] sm:$0x1] %v1001
      %v1003 = vld [vmem:[#allocation2] sm:$0xf]
      %v1004 = vld [vmem:[#allocation2 + $0x4] sm:$0xf]
      %v1005 = vld [vmem:[#allocation2 + $0xc] sm:$0xf]
      %v1006 = vld [vmem:[#allocation2 + $0x10] sm:$0xf]
      %v1007 = vld [vmem:[#allocation2 + $0x18] sm:$0xf]
      %v1008 = vld [vmem:[#allocation2 + $0x1c] sm:$0xf]
      %v1009 = vld [vmem:[#allocation2 + $0x24] sm:$0xf]
      %v1010 = vld [vmem:[#allocation2 + $0x28] sm:$0xf]
      %v1011 = vld [vmem:[#allocation2 + $0x30] sm:$0xf]
      %v1012 = vld [vmem:[#allocation2 + $0x34] sm:$0xf]
      %v1013 = vld [vmem:[#allocation2 + $0x3c] sm:$0xf]
      %v1014 = vld [vmem:[#allocation2 + $0x40] sm:$0xf]
      %v1015 = vld [vmem:[#allocation2 + $0x48] sm:$0xf]
      %v1016 = vld [vmem:[#allocation2 + $0x4c] sm:$0xf]
      %v1017 = vld [vmem:[#allocation2 + $0x54] sm:$0xf]
      %v1018 = vld [vmem:[#allocation2 + $0x58] sm:$0xf]
      %v1019 = vld [vmem:[#allocation2 + $0x60] sm:$0xf]
      %v1020 = vld [vmem:[#allocation2 + $0x64] sm:$0xf]
      %v1021 = vld [vmem:[#allocation2 + $0x6c] sm:$0xf]
      %v1022 = vld [vmem:[#allocation2 + $0x70] sm:$0xf]
      %v1023 = vld [vmem:[#allocation2 + $0x78] sm:$0xf]
      %v1024 = vld [vmem:[#allocation2 + $0x7c] sm:$0xf]
      %v1025 = vld [vmem:[#allocation2 + $0x84] sm:$0xf]
      %v1026 = vld [vmem:[#allocation2 + $0x88] sm:$0xf]
      %v1027 = vld [vmem:[#allocation2 + $0x90] sm:$0xf]
      %v1028 = vld [vmem:[#allocation2 + $0x94] sm:$0xf]
      %v1029 = vld [vmem:[#allocation2 + $0x9c] sm:$0xf]
      %v1030 = vld [vmem:[#allocation2 + $0xa0] sm:$0xf]
      %v1031 = vld [vmem:[#allocation2 + $0xa8] sm:$0xf]
      %v1032 = vld [vmem:[#allocation2 + $0xac] sm:$0xf]
      %v1033 = vld [vmem:[#allocation2 + $0xb4] sm:$0xf]
      %v1034 = vld [vmem:[#allocation2 + $0xb8] sm:$0xf]
      %v1035 = vld [vmem:[%s3] sm:$0x3]
      %v1036 = vld [vmem:[#allocation2 + $0x8] sm:$0x1]
      %v1037 = vld [vmem:[#allocation2 + $0x14] sm:$0x1]
      %v1038 = vld [vmem:[#allocation2 + $0x20] sm:$0x1]
      %v1039 = vld [vmem:[#allocation2 + $0x2c] sm:$0x1]
      %v1040 = vld [vmem:[#allocation2 + $0x38] sm:$0x1]
      %v1041 = vld [vmem:[#allocation2 + $0x44] sm:$0x1]
      %v1042 = vld [vmem:[#allocation2 + $0x50] sm:$0x1]
      %v1043 = vld [vmem:[#allocation2 + $0x5c] sm:$0x1]
      %v1044 = vld [vmem:[#allocation2 + $0x68] sm:$0x1]
      %v1045 = vld [vmem:[#allocation2 + $0x74] sm:$0x1]
      %v1046 = vld [vmem:[#allocation2 + $0x80] sm:$0x1]
      %v1047 = vld [vmem:[#allocation2 + $0x8c] sm:$0x1]
      %v1048 = vld [vmem:[#allocation2 + $0x98] sm:$0x1]
      %v1049 = vld [vmem:[#allocation2 + $0xa4] sm:$0x1]
      %v1050 = vld [vmem:[#allocation2 + $0xb0] sm:$0x1]
      %v1051 = vld [vmem:[#allocation2 + $0xbc] sm:$0x1]
      %vm1052 = vsmask.f32 3328
      %vm1053 = vsmask.f32 7440
      %vm1054 = vmor %vm1052, %vm1053
      %v1056 = vshrl.u32 %v1003, 16
      %v1058 = vrot.slane %v1056, 4
      %v1059 = vshll.u32 %v1003, 16
      %v1061 = vrot.slane %v1059, 5
      %v1062 = vor.u32 %v1058, %v1061
      %v1063 = vrot.slane %v1062, 4
      %v1065 = vshll.u32 %v1004, 16
      %v1067 = vrot.slane %v1065, 5
      %v1068 = vsel %vm1054, %v1063, %v1067
      %v1069 = vshrl.u32 %v1004, 16
      %v1071 = vrot.slane %v1069, 4
      %v1072 = vor.u32 %v1071, %v1067
      %v1073 = vrot.slane %v1072, 4
      %v1075 = vshll.u32 %v1036, 16
      %v1077 = vrot.slane %v1075, 5
      %v1078 = vsel %vm1054, %v1073, %v1077
      %v1080 = vshrl.u32 %v1005, 16
      %v1082 = vrot.slane %v1080, 4
      %v1083 = vshll.u32 %v1005, 16
      %v1085 = vrot.slane %v1083, 5
      %v1086 = vor.u32 %v1082, %v1085
      %v1087 = vrot.slane %v1086, 4
      %v1089 = vshll.u32 %v1006, 16
      %v1091 = vrot.slane %v1089, 5
      %v1092 = vsel %vm1054, %v1087, %v1091
      %v1093 = vshrl.u32 %v1006, 16
      %v1095 = vrot.slane %v1093, 4
      %v1096 = vor.u32 %v1095, %v1091
      %v1097 = vrot.slane %v1096, 4
      %v1099 = vshll.u32 %v1037, 16
      %v1101 = vrot.slane %v1099, 5
      %v1102 = vsel %vm1054, %v1097, %v1101
      %v1104 = vshrl.u32 %v1007, 16
      %v1106 = vrot.slane %v1104, 4
      %v1107 = vshll.u32 %v1007, 16
      %v1109 = vrot.slane %v1107, 5
      %v1110 = vor.u32 %v1106, %v1109
      %v1111 = vrot.slane %v1110, 4
      %v1113 = vshll.u32 %v1008, 16
      %v1115 = vrot.slane %v1113, 5
      %v1116 = vsel %vm1054, %v1111, %v1115
      %v1117 = vshrl.u32 %v1008, 16
      %v1119 = vrot.slane %v1117, 4
      %v1120 = vor.u32 %v1119, %v1115
      %v1121 = vrot.slane %v1120, 4
      %v1123 = vshll.u32 %v1038, 16
      %v1125 = vrot.slane %v1123, 5
      %v1126 = vsel %vm1054, %v1121, %v1125
      %v1128 = vshrl.u32 %v1009, 16
      %v1130 = vrot.slane %v1128, 4
      %v1131 = vshll.u32 %v1009, 16
      %v1133 = vrot.slane %v1131, 5
      %v1134 = vor.u32 %v1130, %v1133
      %v1135 = vrot.slane %v1134, 4
      %v1137 = vshll.u32 %v1010, 16
      %v1139 = vrot.slane %v1137, 5
      %v1140 = vsel %vm1054, %v1135, %v1139
      %v1141 = vshrl.u32 %v1010, 16
      %v1143 = vrot.slane %v1141, 4
      %v1144 = vor.u32 %v1143, %v1139
      %v1145 = vrot.slane %v1144, 4
      %v1147 = vshll.u32 %v1039, 16
      %v1149 = vrot.slane %v1147, 5
      %v1150 = vsel %vm1054, %v1145, %v1149
      %v1152 = vshrl.u32 %v1011, 16
      %v1154 = vrot.slane %v1152, 4
      %v1155 = vshll.u32 %v1011, 16
      %v1157 = vrot.slane %v1155, 5
      %v1158 = vor.u32 %v1154, %v1157
      %v1159 = vrot.slane %v1158, 4
      %v1161 = vshll.u32 %v1012, 16
      %v1163 = vrot.slane %v1161, 5
      %v1164 = vsel %vm1054, %v1159, %v1163
      %v1165 = vshrl.u32 %v1012, 16
      %v1167 = vrot.slane %v1165, 4
      %v1168 = vor.u32 %v1167, %v1163
      %v1169 = vrot.slane %v1168, 4
      %v1171 = vshll.u32 %v1040, 16
      %v1173 = vrot.slane %v1171, 5
      %v1174 = vsel %vm1054, %v1169, %v1173
      %v1176 = vshrl.u32 %v1013, 16
      %v1178 = vrot.slane %v1176, 4
      %v1179 = vshll.u32 %v1013, 16
      %v1181 = vrot.slane %v1179, 5
      %v1182 = vor.u32 %v1178, %v1181
      %v1183 = vrot.slane %v1182, 4
      %v1185 = vshll.u32 %v1014, 16
      %v1187 = vrot.slane %v1185, 5
      %v1188 = vsel %vm1054, %v1183, %v1187
      %v1189 = vshrl.u32 %v1014, 16
      %v1191 = vrot.slane %v1189, 4
      %v1192 = vor.u32 %v1191, %v1187
      %v1193 = vrot.slane %v1192, 4
      %v1195 = vshll.u32 %v1041, 16
      %v1197 = vrot.slane %v1195, 5
      %v1198 = vsel %vm1054, %v1193, %v1197
      %v1200 = vshrl.u32 %v1015, 16
      %v1202 = vrot.slane %v1200, 4
      %v1203 = vshll.u32 %v1015, 16
      %v1205 = vrot.slane %v1203, 5
      %v1206 = vor.u32 %v1202, %v1205
      %v1207 = vrot.slane %v1206, 4
      %v1209 = vshll.u32 %v1016, 16
      %v1211 = vrot.slane %v1209, 5
      %v1212 = vsel %vm1054, %v1207, %v1211
      %v1213 = vshrl.u32 %v1016, 16
      %v1215 = vrot.slane %v1213, 4
      %v1216 = vor.u32 %v1215, %v1211
      %v1217 = vrot.slane %v1216, 4
      %v1219 = vshll.u32 %v1042, 16
      %v1221 = vrot.slane %v1219, 5
      %v1222 = vsel %vm1054, %v1217, %v1221
      %v1224 = vshrl.u32 %v1017, 16
      %v1226 = vrot.slane %v1224, 4
      %v1227 = vshll.u32 %v1017, 16
      %v1229 = vrot.slane %v1227, 5
      %v1230 = vor.u32 %v1226, %v1229
      %v1231 = vrot.slane %v1230, 4
      %v1233 = vshll.u32 %v1018, 16
      %v1235 = vrot.slane %v1233, 5
      %v1236 = vsel %vm1054, %v1231, %v1235
      %v1237 = vshrl.u32 %v1018, 16
      %v1239 = vrot.slane %v1237, 4
      %v1240 = vor.u32 %v1239, %v1235
      %v1241 = vrot.slane %v1240, 4
      %v1243 = vshll.u32 %v1043, 16
      %v1245 = vrot.slane %v1243, 5
      %v1246 = vsel %vm1054, %v1241, %v1245
      %v1248 = vshrl.u32 %v1019, 16
      %v1250 = vrot.slane %v1248, 4
      %v1251 = vshll.u32 %v1019, 16
      %v1253 = vrot.slane %v1251, 5
      %v1254 = vor.u32 %v1250, %v1253
      %v1255 = vrot.slane %v1254, 4
      %v1257 = vshll.u32 %v1020, 16
      %v1259 = vrot.slane %v1257, 5
      %v1260 = vsel %vm1054, %v1255, %v1259
      %v1261 = vshrl.u32 %v1020, 16
      %v1263 = vrot.slane %v1261, 4
      %v1264 = vor.u32 %v1263, %v1259
      %v1265 = vrot.slane %v1264, 4
      %v1267 = vshll.u32 %v1044, 16
      %v1269 = vrot.slane %v1267, 5
      %v1270 = vsel %vm1054, %v1265, %v1269
      %v1272 = vshrl.u32 %v1021, 16
      %v1274 = vrot.slane %v1272, 4
      %v1275 = vshll.u32 %v1021, 16
      %v1277 = vrot.slane %v1275, 5
      %v1278 = vor.u32 %v1274, %v1277
      %v1279 = vrot.slane %v1278, 4
      %v1281 = vshll.u32 %v1022, 16
      %v1283 = vrot.slane %v1281, 5
      %v1284 = vsel %vm1054, %v1279, %v1283
      %v1285 = vshrl.u32 %v1022, 16
      %v1287 = vrot.slane %v1285, 4
      %v1288 = vor.u32 %v1287, %v1283
      %v1289 = vrot.slane %v1288, 4
      %v1291 = vshll.u32 %v1045, 16
      %v1293 = vrot.slane %v1291, 5
      %v1294 = vsel %vm1054, %v1289, %v1293
      %v1296 = vshrl.u32 %v1023, 16
      %v1298 = vrot.slane %v1296, 4
      %v1299 = vshll.u32 %v1023, 16
      %v1301 = vrot.slane %v1299, 5
      %v1302 = vor.u32 %v1298, %v1301
      %v1303 = vrot.slane %v1302, 4
      %v1305 = vshll.u32 %v1024, 16
      %v1307 = vrot.slane %v1305, 5
      %v1308 = vsel %vm1054, %v1303, %v1307
      %v1309 = vshrl.u32 %v1024, 16
      %v1311 = vrot.slane %v1309, 4
      %v1312 = vor.u32 %v1311, %v1307
      %v1313 = vrot.slane %v1312, 4
      %v1315 = vshll.u32 %v1046, 16
      %v1317 = vrot.slane %v1315, 5
      %v1318 = vsel %vm1054, %v1313, %v1317
      %v1320 = vshrl.u32 %v1025, 16
      %v1322 = vrot.slane %v1320, 4
      %v1323 = vshll.u32 %v1025, 16
      %v1325 = vrot.slane %v1323, 5
      %v1326 = vor.u32 %v1322, %v1325
      %v1327 = vrot.slane %v1326, 4
      %v1329 = vshll.u32 %v1026, 16
      %v1331 = vrot.slane %v1329, 5
      %v1332 = vsel %vm1054, %v1327, %v1331
      %v1333 = vshrl.u32 %v1026, 16
      %v1335 = vrot.slane %v1333, 4
      %v1336 = vor.u32 %v1335, %v1331
      %v1337 = vrot.slane %v1336, 4
      %v1339 = vshll.u32 %v1047, 16
      %v1341 = vrot.slane %v1339, 5
      %v1342 = vsel %vm1054, %v1337, %v1341
      %v1344 = vshrl.u32 %v1027, 16
      %v1346 = vrot.slane %v1344, 4
      %v1347 = vshll.u32 %v1027, 16
      %v1349 = vrot.slane %v1347, 5
      %v1350 = vor.u32 %v1346, %v1349
      %v1351 = vrot.slane %v1350, 4
      %v1353 = vshll.u32 %v1028, 16
      %v1355 = vrot.slane %v1353, 5
      %v1356 = vsel %vm1054, %v1351, %v1355
      %v1357 = vshrl.u32 %v1028, 16
      %v1359 = vrot.slane %v1357, 4
      %v1360 = vor.u32 %v1359, %v1355
      %v1361 = vrot.slane %v1360, 4
      %v1363 = vshll.u32 %v1048, 16
      %v1365 = vrot.slane %v1363, 5
      %v1366 = vsel %vm1054, %v1361, %v1365
      %v1368 = vshrl.u32 %v1029, 16
      %v1370 = vrot.slane %v1368, 4
      %v1371 = vshll.u32 %v1029, 16
      %v1373 = vrot.slane %v1371, 5
      %v1374 = vor.u32 %v1370, %v1373
      %v1375 = vrot.slane %v1374, 4
      %v1377 = vshll.u32 %v1030, 16
      %v1379 = vrot.slane %v1377, 5
      %v1380 = vsel %vm1054, %v1375, %v1379
      %v1381 = vshrl.u32 %v1030, 16
      %v1383 = vrot.slane %v1381, 4
      %v1384 = vor.u32 %v1383, %v1379
      %v1385 = vrot.slane %v1384, 4
      %v1387 = vshll.u32 %v1049, 16
      %v1389 = vrot.slane %v1387, 5
      %v1390 = vsel %vm1054, %v1385, %v1389
      %v1392 = vshrl.u32 %v1031, 16
      %v1394 = vrot.slane %v1392, 4
      %v1395 = vshll.u32 %v1031, 16
      %v1397 = vrot.slane %v1395, 5
      %v1398 = vor.u32 %v1394, %v1397
      %v1399 = vrot.slane %v1398, 4
      %v1401 = vshll.u32 %v1032, 16
      %v1403 = vrot.slane %v1401, 5
      %v1404 = vsel %vm1054, %v1399, %v1403
      %v1405 = vshrl.u32 %v1032, 16
      %v1407 = vrot.slane %v1405, 4
      %v1408 = vor.u32 %v1407, %v1403
      %v1409 = vrot.slane %v1408, 4
      %v1411 = vshll.u32 %v1050, 16
      %v1413 = vrot.slane %v1411, 5
      %v1414 = vsel %vm1054, %v1409, %v1413
      %v1416 = vshrl.u32 %v1033, 16
      %v1418 = vrot.slane %v1416, 4
      %v1419 = vshll.u32 %v1033, 16
      %v1421 = vrot.slane %v1419, 5
      %v1422 = vor.u32 %v1418, %v1421
      %v1423 = vrot.slane %v1422, 4
      %v1425 = vshll.u32 %v1034, 16
      %v1427 = vrot.slane %v1425, 5
      %v1428 = vsel %vm1054, %v1423, %v1427
      %v1429 = vshrl.u32 %v1034, 16
      %v1431 = vrot.slane %v1429, 4
      %v1432 = vor.u32 %v1431, %v1427
      %v1433 = vrot.slane %v1432, 4
      %v1435 = vshll.u32 %v1051, 16
      %v1437 = vrot.slane %v1435, 5
      %v1438 = vsel %vm1054, %v1433, %v1437
      %s1439 = scalar_lea.vmem %s3, 2
      %v1440 = vld [vmem:[%s1439] sm:$0x3]
      %v1441 = vunpack.c.l.b16 %v1068
      %v1442 = vunpack.c.l.b16 %v1078
      %v1443 = vunpack.c.l.b16 %v1092
      %v1444 = vunpack.c.l.b16 %v1102
      %v1445 = vunpack.c.l.b16 %v1116
      %v1446 = vunpack.c.l.b16 %v1126
      %v1447 = vunpack.c.l.b16 %v1140
      %v1448 = vunpack.c.l.b16 %v1150
      %v1449 = vunpack.c.l.b16 %v1164
      %v1450 = vunpack.c.l.b16 %v1174
      %v1451 = vunpack.c.l.b16 %v1188
      %v1452 = vunpack.c.l.b16 %v1198
      %v1453 = vunpack.c.l.b16 %v1212
      %v1454 = vunpack.c.l.b16 %v1222
      %v1455 = vunpack.c.l.b16 %v1236
      %v1456 = vunpack.c.l.b16 %v1246
      %v1457 = vunpack.c.l.b16 %v1260
      %v1458 = vunpack.c.l.b16 %v1270
      %v1459 = vunpack.c.l.b16 %v1284
      %v1460 = vunpack.c.l.b16 %v1294
      %v1461 = vunpack.c.l.b16 %v1308
      %v1462 = vunpack.c.l.b16 %v1318
      %v1463 = vunpack.c.l.b16 %v1332
      %v1464 = vunpack.c.l.b16 %v1342
      %v1465 = vunpack.c.l.b16 %v1356
      %v1466 = vunpack.c.l.b16 %v1366
      %v1467 = vunpack.c.l.b16 %v1380
      %v1468 = vunpack.c.l.b16 %v1390
      %v1469 = vunpack.c.l.b16 %v1404
      %v1470 = vunpack.c.l.b16 %v1414
      %v1471 = vunpack.c.l.b16 %v1428
      %v1472 = vunpack.c.l.b16 %v1438
      %v1473 = vpack.c.b16 %v1442, %v1441
      %v1474 = vpack.c.b16 %v1444, %v1443
      %v1475 = vpack.c.b16 %v1446, %v1445
      %v1476 = vpack.c.b16 %v1448, %v1447
      %v1477 = vpack.c.b16 %v1450, %v1449
      %v1478 = vpack.c.b16 %v1452, %v1451
      %v1479 = vpack.c.b16 %v1454, %v1453
      %v1480 = vpack.c.b16 %v1456, %v1455
      %v1481 = vpack.c.b16 %v1458, %v1457
      %v1482 = vpack.c.b16 %v1460, %v1459
      %v1483 = vpack.c.b16 %v1462, %v1461
      %v1484 = vpack.c.b16 %v1464, %v1463
      %v1485 = vpack.c.b16 %v1466, %v1465
      %v1486 = vpack.c.b16 %v1468, %v1467
      %v1487 = vpack.c.b16 %v1470, %v1469
      %v1488 = vpack.c.b16 %v1472, %v1471
      %vm1489 = vcmask 31744
      %v1491 = vsel %vm1489, %v1473, 0
      %v1494 = vsel %vm1489, %v1474, 0
      %v1497 = vsel %vm1489, %v1475, 0
      %v1500 = vsel %vm1489, %v1476, 0
      %v1503 = vsel %vm1489, %v1477, 0
      %v1506 = vsel %vm1489, %v1478, 0
      %v1509 = vsel %vm1489, %v1479, 0
      %v1512 = vsel %vm1489, %v1480, 0
      %v1515 = vsel %vm1489, %v1481, 0
      %v1518 = vsel %vm1489, %v1482, 0
      %v1521 = vsel %vm1489, %v1483, 0
      %v1524 = vsel %vm1489, %v1484, 0
      %v1527 = vsel %vm1489, %v1485, 0
      %v1530 = vsel %vm1489, %v1486, 0
      %v1533 = vsel %vm1489, %v1487, 0
      %v1536 = vsel %vm1489, %v1488, 0
      %vm1538 = vcmask 1041408
      %v1540 = vsel %vm1538, %v1440, 0
      %1542 = vmatprep.subr.bf16.mxu0 0
      %1543 = vmatpush1.bf16.msra.mxu0 %v1540
      %1544 = vmatprep.subr.bf16.mxu0 0
      %1545 = vmatpush1.bf16.msra.mxu0 0
      %1546 = vmatprep.subr.bf16.mxu0 0
      %1547 = vmatpush1.bf16.msra.mxu0 0
      %1548 = vmatprep.subr.bf16.mxu0 0
      %1549 = vmatpush1.bf16.msra.mxu0 0
      %1550 = vmatprep.subr.bf16.mxu0 0
      %1551 = vmatpush1.bf16.msra.mxu0 0
      %1552 = vmatprep.subr.bf16.mxu0 0
      %1553 = vmatpush1.bf16.msra.mxu0 0
      %1554 = vmatprep.subr.bf16.mxu0 0
      %1555 = vmatpush1.bf16.msra.mxu0 0
      %1556 = vmatprep.subr.bf16.mxu0 0
      %1557 = vmatpush1.bf16.msra.mxu0 0
      %1558 = vmatprep.subr.bf16.mxu0 0
      %1559 = vmatpush1.bf16.msra.mxu0 0
      %1560 = vmatprep.subr.bf16.mxu0 0
      %1561 = vmatpush1.bf16.msra.mxu0 0
      %1562 = vmatprep.subr.bf16.mxu0 0
      %1563 = vmatpush1.bf16.msra.mxu0 0
      %1564 = vmatprep.subr.bf16.mxu0 0
      %1565 = vmatpush1.bf16.msra.mxu0 0
      %1566 = vmatprep.subr.bf16.mxu0 0
      %1567 = vmatpush1.bf16.msra.mxu0 0
      %1568 = vmatprep.subr.bf16.mxu0 0
      %1569 = vmatpush1.bf16.msra.mxu0 0
      %1570 = vmatprep.subr.bf16.mxu0 0
      %1571 = vmatpush1.bf16.msra.mxu0 0
      %1572 = vmatprep.subr.bf16.mxu0 0
      %1573 = vmatpush1.bf16.msra.mxu0 0
      %1574 = vmatprep.mubr.bf16.mxu0 0
      %1575 = vmatmul.mubr.bf16.gmra.mrb[0].mxu0 %v1491
      %v1576 = vpop.f32.mrb[0].mxu0
      %v1577 = vadd.f32 0.0, %v1576
      %v1578 = vpop.f32.mrb[0].mxu0
      %v1579 = vpop.f32.mrb[0].mxu0
      %v1580 = vadd.f32 0.0, %v1579
      %v1581 = vpop.f32.mrb[0].mxu0
      %1582 = vmatprep.mubr.bf16.mxu0 0
      %1583 = vmatmul.mubr.bf16.gmra.mrb[0].mxu0 %v1494
      %v1584 = vpop.f32.mrb[0].mxu0
      %v1585 = vadd.f32 0.0, %v1584
      %v1586 = vpop.f32.mrb[0].mxu0
      %v1587 = vpop.f32.mrb[0].mxu0
      %v1588 = vadd.f32 0.0, %v1587
      %v1589 = vpop.f32.mrb[0].mxu0
      %1590 = vmatprep.mubr.bf16.mxu0 0
      %1591 = vmatmul.mubr.bf16.gmra.mrb[0].mxu0 %v1497
      %v1592 = vpop.f32.mrb[0].mxu0
      %v1593 = vadd.f32 0.0, %v1592
      %v1594 = vpop.f32.mrb[0].mxu0
      %v1595 = vpop.f32.mrb[0].mxu0
      %v1596 = vadd.f32 0.0, %v1595
      %v1597 = vpop.f32.mrb[0].mxu0
      %1598 = vmatprep.mubr.bf16.mxu0 0
      %1599 = vmatmul.mubr.bf16.gmra.mrb[0].mxu0 %v1500
      %v1600 = vpop.f32.mrb[0].mxu0
      %v1601 = vadd.f32 0.0, %v1600
      %v1602 = vpop.f32.mrb[0].mxu0
      %v1603 = vpop.f32.mrb[0].mxu0
      %v1604 = vadd.f32 0.0, %v1603
      %v1605 = vpop.f32.mrb[0].mxu0
      %1606 = vmatprep.mubr.bf16.mxu0 0
      %1607 = vmatmul.mubr.bf16.gmra.mrb[0].mxu0 %v1503
      %v1608 = vpop.f32.mrb[0].mxu0
      %v1609 = vadd.f32 0.0, %v1608
      %v1610 = vpop.f32.mrb[0].mxu0
      %v1611 = vpop.f32.mrb[0].mxu0
      %v1612 = vadd.f32 0.0, %v1611
      %v1613 = vpop.f32.mrb[0].mxu0
      %1614 = vmatprep.mubr.bf16.mxu0 0
      %1615 = vmatmul.mubr.bf16.gmra.mrb[0].mxu0 %v1506
      %v1616 = vpop.f32.mrb[0].mxu0
      %v1617 = vadd.f32 0.0, %v1616
      %v1618 = vpop.f32.mrb[0].mxu0
      %v1619 = vpop.f32.mrb[0].mxu0
      %v1620 = vadd.f32 0.0, %v1619
      %v1621 = vpop.f32.mrb[0].mxu0
      %1622 = vmatprep.mubr.bf16.mxu0 0
      %1623 = vmatmul.mubr.bf16.gmra.mrb[0].mxu0 %v1509
      %v1624 = vpop.f32.mrb[0].mxu0
      %v1625 = vadd.f32 0.0, %v1624
      %v1626 = vpop.f32.mrb[0].mxu0
      %v1627 = vpop.f32.mrb[0].mxu0
      %v1628 = vadd.f32 0.0, %v1627
      %v1629 = vpop.f32.mrb[0].mxu0
      %1630 = vmatprep.mubr.bf16.mxu0 0
      %1631 = vmatmul.mubr.bf16.gmra.mrb[0].mxu0 %v1512
      %v1632 = vpop.f32.mrb[0].mxu0
      %v1633 = vadd.f32 0.0, %v1632
      %v1634 = vpop.f32.mrb[0].mxu0
      %v1635 = vpop.f32.mrb[0].mxu0
      %v1636 = vadd.f32 0.0, %v1635
      %v1637 = vpop.f32.mrb[0].mxu0
      %1638 = vmatprep.mubr.bf16.mxu0 0
      %1639 = vmatmul.mubr.bf16.gmra.mrb[0].mxu0 %v1515
      %v1640 = vpop.f32.mrb[0].mxu0
      %v1641 = vadd.f32 0.0, %v1640
      %v1642 = vpop.f32.mrb[0].mxu0
      %v1643 = vpop.f32.mrb[0].mxu0
      %v1644 = vadd.f32 0.0, %v1643
      %v1645 = vpop.f32.mrb[0].mxu0
      %1646 = vmatprep.mubr.bf16.mxu0 0
      %1647 = vmatmul.mubr.bf16.gmra.mrb[0].mxu0 %v1518
      %v1648 = vpop.f32.mrb[0].mxu0
      %v1649 = vadd.f32 0.0, %v1648
      %v1650 = vpop.f32.mrb[0].mxu0
      %v1651 = vpop.f32.mrb[0].mxu0
      %v1652 = vadd.f32 0.0, %v1651
      %v1653 = vpop.f32.mrb[0].mxu0
      %1654 = vmatprep.mubr.bf16.mxu0 0
      %1655 = vmatmul.mubr.bf16.gmra.mrb[0].mxu0 %v1521
      %v1656 = vpop.f32.mrb[0].mxu0
      %v1657 = vadd.f32 0.0, %v1656
      %v1658 = vpop.f32.mrb[0].mxu0
      %v1659 = vpop.f32.mrb[0].mxu0
      %v1660 = vadd.f32 0.0, %v1659
      %v1661 = vpop.f32.mrb[0].mxu0
      %1662 = vmatprep.mubr.bf16.mxu0 0
      %1663 = vmatmul.mubr.bf16.gmra.mrb[0].mxu0 %v1524
      %v1664 = vpop.f32.mrb[0].mxu0
      %v1665 = vadd.f32 0.0, %v1664
      %v1666 = vpop.f32.mrb[0].mxu0
      %v1667 = vpop.f32.mrb[0].mxu0
      %v1668 = vadd.f32 0.0, %v1667
      %v1669 = vpop.f32.mrb[0].mxu0
      %1670 = vmatprep.mubr.bf16.mxu0 0
      %1671 = vmatmul.mubr.bf16.gmra.mrb[0].mxu0 %v1527
      %v1672 = vpop.f32.mrb[0].mxu0
      %v1673 = vadd.f32 0.0, %v1672
      %v1674 = vpop.f32.mrb[0].mxu0
      %v1675 = vpop.f32.mrb[0].mxu0
      %v1676 = vadd.f32 0.0, %v1675
      %v1677 = vpop.f32.mrb[0].mxu0
      %1678 = vmatprep.mubr.bf16.mxu0 0
      %1679 = vmatmul.mubr.bf16.gmra.mrb[0].mxu0 %v1530
      %v1680 = vpop.f32.mrb[0].mxu0
      %v1681 = vadd.f32 0.0, %v1680
      %v1682 = vpop.f32.mrb[0].mxu0
      %v1683 = vpop.f32.mrb[0].mxu0
      %v1684 = vadd.f32 0.0, %v1683
      %v1685 = vpop.f32.mrb[0].mxu0
      %1686 = vmatprep.mubr.bf16.mxu0 0
      %1687 = vmatmul.mubr.bf16.gmra.mrb[0].mxu0 %v1533
      %v1688 = vpop.f32.mrb[0].mxu0
      %v1689 = vadd.f32 0.0, %v1688
      %v1690 = vpop.f32.mrb[0].mxu0
      %v1691 = vpop.f32.mrb[0].mxu0
      %v1692 = vadd.f32 0.0, %v1691
      %v1693 = vpop.f32.mrb[0].mxu0
      %1694 = vmatprep.mubr.bf16.mxu0 0
      %1695 = vmatmul.mubr.bf16.gmra.mrb[0].mxu0 %v1536
      %v1696 = vpop.f32.mrb[0].mxu0
      %v1697 = vadd.f32 0.0, %v1696
      %v1698 = vpop.f32.mrb[0].mxu0
      %v1699 = vpop.f32.mrb[0].mxu0
      %v1700 = vadd.f32 0.0, %v1699
      %v1701 = vpop.f32.mrb[0].mxu0
      %1702 = vdwg.mxu0
      %v1735 = vunpack.c.l.b16 %v1003
      %v1736 = vunpack.c.l.b16 %v1004
      %v1737 = vunpack.c.l.b16 %v1005
      %v1738 = vunpack.c.l.b16 %v1006
      %v1739 = vunpack.c.l.b16 %v1007
      %v1740 = vunpack.c.l.b16 %v1008
      %v1741 = vunpack.c.l.b16 %v1009
      %v1742 = vunpack.c.l.b16 %v1010
      %v1743 = vunpack.c.l.b16 %v1011
      %v1744 = vunpack.c.l.b16 %v1012
      %v1745 = vunpack.c.l.b16 %v1013
      %v1746 = vunpack.c.l.b16 %v1014
      %v1747 = vunpack.c.l.b16 %v1015
      %v1748 = vunpack.c.l.b16 %v1016
      %v1749 = vunpack.c.l.b16 %v1017
      %v1750 = vunpack.c.l.b16 %v1018
      %v1751 = vunpack.c.l.b16 %v1019
      %v1752 = vunpack.c.l.b16 %v1020
      %v1753 = vunpack.c.l.b16 %v1021
      %v1754 = vunpack.c.l.b16 %v1022
      %v1755 = vunpack.c.l.b16 %v1023
      %v1756 = vunpack.c.l.b16 %v1024
      %v1757 = vunpack.c.l.b16 %v1025
      %v1758 = vunpack.c.l.b16 %v1026
      %v1759 = vunpack.c.l.b16 %v1027
      %v1760 = vunpack.c.l.b16 %v1028
      %v1761 = vunpack.c.l.b16 %v1029
      %v1762 = vunpack.c.l.b16 %v1030
      %v1763 = vunpack.c.l.b16 %v1031
      %v1764 = vunpack.c.l.b16 %v1032
      %v1765 = vunpack.c.l.b16 %v1033
      %v1766 = vunpack.c.l.b16 %v1034
      %v1767 = vpack.c.b16 %v1736, %v1735
      %v1768 = vpack.c.b16 %v1738, %v1737
      %v1769 = vpack.c.b16 %v1740, %v1739
      %v1770 = vpack.c.b16 %v1742, %v1741
      %v1771 = vpack.c.b16 %v1744, %v1743
      %v1772 = vpack.c.b16 %v1746, %v1745
      %v1773 = vpack.c.b16 %v1748, %v1747
      %v1774 = vpack.c.b16 %v1750, %v1749
      %v1775 = vpack.c.b16 %v1752, %v1751
      %v1776 = vpack.c.b16 %v1754, %v1753
      %v1777 = vpack.c.b16 %v1756, %v1755
      %v1778 = vpack.c.b16 %v1758, %v1757
      %v1779 = vpack.c.b16 %v1760, %v1759
      %v1780 = vpack.c.b16 %v1762, %v1761
      %v1781 = vpack.c.b16 %v1764, %v1763
      %v1782 = vpack.c.b16 %v1766, %v1765
      %v1784 = vsel %vm1489, %v1767, 0
      %v1787 = vsel %vm1489, %v1768, 0
      %v1790 = vsel %vm1489, %v1769, 0
      %v1793 = vsel %vm1489, %v1770, 0
      %v1796 = vsel %vm1489, %v1771, 0
      %v1799 = vsel %vm1489, %v1772, 0
      %v1802 = vsel %vm1489, %v1773, 0
      %v1805 = vsel %vm1489, %v1774, 0
      %v1808 = vsel %vm1489, %v1775, 0
      %v1811 = vsel %vm1489, %v1776, 0
      %v1814 = vsel %vm1489, %v1777, 0
      %v1817 = vsel %vm1489, %v1778, 0
      %v1820 = vsel %vm1489, %v1779, 0
      %v1823 = vsel %vm1489, %v1780, 0
      %v1826 = vsel %vm1489, %v1781, 0
      %v1829 = vsel %vm1489, %v1782, 0
      %v1832 = vsel %vm1538, %v1035, 0
      %1834 = vmatprep.subr.bf16.mxu0 0
      %1835 = vmatpush1.bf16.msra.mxu0 %v1832
      %1836 = vmatprep.subr.bf16.mxu0 0
      %1837 = vmatpush1.bf16.msra.mxu0 0
      %1838 = vmatprep.subr.bf16.mxu0 0
      %1839 = vmatpush1.bf16.msra.mxu0 0
      %1840 = vmatprep.subr.bf16.mxu0 0
      %1841 = vmatpush1.bf16.msra.mxu0 0
      %1842 = vmatprep.subr.bf16.mxu0 0
      %1843 = vmatpush1.bf16.msra.mxu0 0
      %1844 = vmatprep.subr.bf16.mxu0 0
      %1845 = vmatpush1.bf16.msra.mxu0 0
      %1846 = vmatprep.subr.bf16.mxu0 0
      %1847 = vmatpush1.bf16.msra.mxu0 0
      %1848 = vmatprep.subr.bf16.mxu0 0
      %1849 = vmatpush1.bf16.msra.mxu0 0
      %1850 = vmatprep.subr.bf16.mxu0 0
      %1851 = vmatpush1.bf16.msra.mxu0 0
      %1852 = vmatprep.subr.bf16.mxu0 0
      %1853 = vmatpush1.bf16.msra.mxu0 0
      %1854 = vmatprep.subr.bf16.mxu0 0
      %1855 = vmatpush1.bf16.msra.mxu0 0
      %1856 = vmatprep.subr.bf16.mxu0 0
      %1857 = vmatpush1.bf16.msra.mxu0 0
      %1858 = vmatprep.subr.bf16.mxu0 0
      %1859 = vmatpush1.bf16.msra.mxu0 0
      %1860 = vmatprep.subr.bf16.mxu0 0
      %1861 = vmatpush1.bf16.msra.mxu0 0
      %1862 = vmatprep.subr.bf16.mxu0 0
      %1863 = vmatpush1.bf16.msra.mxu0 0
      %1864 = vmatprep.subr.bf16.mxu0 0
      %1865 = vmatpush1.bf16.msra.mxu0 0
      %1866 = vmatprep.mubr.bf16.mxu0 0
      %1867 = vmatmul.mubr.bf16.gmra.mrb[0].mxu0 %v1784
      %v1868 = vpop.f32.mrb[0].mxu0
      %v1869 = vadd.f32 %v1577, %v1868
      %v1870 = vpop.f32.mrb[0].mxu0
      %v1871 = vpop.f32.mrb[0].mxu0
      %v1872 = vadd.f32 %v1580, %v1871
      %v1873 = vpop.f32.mrb[0].mxu0
      %1874 = vmatprep.mubr.bf16.mxu0 0
      %1875 = vmatmul.mubr.bf16.gmra.mrb[0].mxu0 %v1787
      %v1876 = vpop.f32.mrb[0].mxu0
      %v1877 = vadd.f32 %v1585, %v1876
      %v1878 = vpop.f32.mrb[0].mxu0
      %v1879 = vpop.f32.mrb[0].mxu0
      %v1880 = vadd.f32 %v1588, %v1879
      %v1881 = vpop.f32.mrb[0].mxu0
      %1882 = vmatprep.mubr.bf16.mxu0 0
      %1883 = vmatmul.mubr.bf16.gmra.mrb[0].mxu0 %v1790
      %v1884 = vpop.f32.mrb[0].mxu0
      %v1885 = vadd.f32 %v1593, %v1884
      %v1886 = vpop.f32.mrb[0].mxu0
      %v1887 = vpop.f32.mrb[0].mxu0
      %v1888 = vadd.f32 %v1596, %v1887
      %v1889 = vpop.f32.mrb[0].mxu0
      %1890 = vmatprep.mubr.bf16.mxu0 0
      %1891 = vmatmul.mubr.bf16.gmra.mrb[0].mxu0 %v1793
      %v1892 = vpop.f32.mrb[0].mxu0
      %v1893 = vadd.f32 %v1601, %v1892
      %v1894 = vpop.f32.mrb[0].mxu0
      %v1895 = vpop.f32.mrb[0].mxu0
      %v1896 = vadd.f32 %v1604, %v1895
      %v1897 = vpop.f32.mrb[0].mxu0
      %1898 = vmatprep.mubr.bf16.mxu0 0
      %1899 = vmatmul.mubr.bf16.gmra.mrb[0].mxu0 %v1796
      %v1900 = vpop.f32.mrb[0].mxu0
      %v1901 = vadd.f32 %v1609, %v1900
      %v1902 = vpop.f32.mrb[0].mxu0
      %v1903 = vpop.f32.mrb[0].mxu0
      %v1904 = vadd.f32 %v1612, %v1903
      %v1905 = vpop.f32.mrb[0].mxu0
      %1906 = vmatprep.mubr.bf16.mxu0 0
      %1907 = vmatmul.mubr.bf16.gmra.mrb[0].mxu0 %v1799
      %v1908 = vpop.f32.mrb[0].mxu0
      %v1909 = vadd.f32 %v1617, %v1908
      %v1910 = vpop.f32.mrb[0].mxu0
      %v1911 = vpop.f32.mrb[0].mxu0
      %v1912 = vadd.f32 %v1620, %v1911
      %v1913 = vpop.f32.mrb[0].mxu0
      %1914 = vmatprep.mubr.bf16.mxu0 0
      %1915 = vmatmul.mubr.bf16.gmra.mrb[0].mxu0 %v1802
      %v1916 = vpop.f32.mrb[0].mxu0
      %v1917 = vadd.f32 %v1625, %v1916
      %v1918 = vpop.f32.mrb[0].mxu0
      %v1919 = vpop.f32.mrb[0].mxu0
      %v1920 = vadd.f32 %v1628, %v1919
      %v1921 = vpop.f32.mrb[0].mxu0
      %1922 = vmatprep.mubr.bf16.mxu0 0
      %1923 = vmatmul.mubr.bf16.gmra.mrb[0].mxu0 %v1805
      %v1924 = vpop.f32.mrb[0].mxu0
      %v1925 = vadd.f32 %v1633, %v1924
      %v1926 = vpop.f32.mrb[0].mxu0
      %v1927 = vpop.f32.mrb[0].mxu0
      %v1928 = vadd.f32 %v1636, %v1927
      %v1929 = vpop.f32.mrb[0].mxu0
      %1930 = vmatprep.mubr.bf16.mxu0 0
      %1931 = vmatmul.mubr.bf16.gmra.mrb[0].mxu0 %v1808
      %v1932 = vpop.f32.mrb[0].mxu0
      %v1933 = vadd.f32 %v1641, %v1932
      %v1934 = vpop.f32.mrb[0].mxu0
      %v1935 = vpop.f32.mrb[0].mxu0
      %v1936 = vadd.f32 %v1644, %v1935
      %v1937 = vpop.f32.mrb[0].mxu0
      %1938 = vmatprep.mubr.bf16.mxu0 0
      %1939 = vmatmul.mubr.bf16.gmra.mrb[0].mxu0 %v1811
      %v1940 = vpop.f32.mrb[0].mxu0
      %v1941 = vadd.f32 %v1649, %v1940
      %v1942 = vpop.f32.mrb[0].mxu0
      %v1943 = vpop.f32.mrb[0].mxu0
      %v1944 = vadd.f32 %v1652, %v1943
      %v1945 = vpop.f32.mrb[0].mxu0
      %1946 = vmatprep.mubr.bf16.mxu0 0
      %1947 = vmatmul.mubr.bf16.gmra.mrb[0].mxu0 %v1814
      %v1948 = vpop.f32.mrb[0].mxu0
      %v1949 = vadd.f32 %v1657, %v1948
      %v1950 = vpop.f32.mrb[0].mxu0
      %v1951 = vpop.f32.mrb[0].mxu0
      %v1952 = vadd.f32 %v1660, %v1951
      %v1953 = vpop.f32.mrb[0].mxu0
      %1954 = vmatprep.mubr.bf16.mxu0 0
      %1955 = vmatmul.mubr.bf16.gmra.mrb[0].mxu0 %v1817
      %v1956 = vpop.f32.mrb[0].mxu0
      %v1957 = vadd.f32 %v1665, %v1956
      %v1958 = vpop.f32.mrb[0].mxu0
      %v1959 = vpop.f32.mrb[0].mxu0
      %v1960 = vadd.f32 %v1668, %v1959
      %v1961 = vpop.f32.mrb[0].mxu0
      %1962 = vmatprep.mubr.bf16.mxu0 0
      %1963 = vmatmul.mubr.bf16.gmra.mrb[0].mxu0 %v1820
      %v1964 = vpop.f32.mrb[0].mxu0
      %v1965 = vadd.f32 %v1673, %v1964
      %v1966 = vpop.f32.mrb[0].mxu0
      %v1967 = vpop.f32.mrb[0].mxu0
      %v1968 = vadd.f32 %v1676, %v1967
      %v1969 = vpop.f32.mrb[0].mxu0
      %1970 = vmatprep.mubr.bf16.mxu0 0
      %1971 = vmatmul.mubr.bf16.gmra.mrb[0].mxu0 %v1823
      %v1972 = vpop.f32.mrb[0].mxu0
      %v1973 = vadd.f32 %v1681, %v1972
      %v1974 = vpop.f32.mrb[0].mxu0
      %v1975 = vpop.f32.mrb[0].mxu0
      %v1976 = vadd.f32 %v1684, %v1975
      %v1977 = vpop.f32.mrb[0].mxu0
      %1978 = vmatprep.mubr.bf16.mxu0 0
      %1979 = vmatmul.mubr.bf16.gmra.mrb[0].mxu0 %v1826
      %v1980 = vpop.f32.mrb[0].mxu0
      %v1981 = vadd.f32 %v1689, %v1980
      %v1982 = vpop.f32.mrb[0].mxu0
      %v1983 = vpop.f32.mrb[0].mxu0
      %v1984 = vadd.f32 %v1692, %v1983
      %v1985 = vpop.f32.mrb[0].mxu0
      %1986 = vmatprep.mubr.bf16.mxu0 0
      %1987 = vmatmul.mubr.bf16.gmra.mrb[0].mxu0 %v1829
      %v1988 = vpop.f32.mrb[0].mxu0
      %v1989 = vadd.f32 %v1697, %v1988
      %v1990 = vpop.f32.mrb[0].mxu0
      %v1991 = vpop.f32.mrb[0].mxu0
      %v1992 = vadd.f32 %v1700, %v1991
      %v1993 = vpop.f32.mrb[0].mxu0
      %1994 = vdwg.mxu0
      %v1995 = vld [vmem:[#allocation2] sm:$0xe]
      %v1996 = vld [vmem:[#allocation2 + $0xc] sm:$0xe]
      %v1997 = vld [vmem:[#allocation2 + $0x18] sm:$0xe]
      %v1998 = vld [vmem:[#allocation2 + $0x24] sm:$0xe]
      %v1999 = vld [vmem:[#allocation2 + $0x30] sm:$0xe]
      %v2000 = vld [vmem:[#allocation2 + $0x3c] sm:$0xe]
      %v2001 = vld [vmem:[#allocation2 + $0x48] sm:$0xe]
      %v2002 = vld [vmem:[#allocation2 + $0x54] sm:$0xe]
      %v2003 = vld [vmem:[#allocation2 + $0x60] sm:$0xe]
      %v2004 = vld [vmem:[#allocation2 + $0x6c] sm:$0xe]
      %v2005 = vld [vmem:[#allocation2 + $0x78] sm:$0xe]
      %v2006 = vld [vmem:[#allocation2 + $0x84] sm:$0xe]
      %v2007 = vld [vmem:[#allocation2 + $0x90] sm:$0xe]
      %v2008 = vld [vmem:[#allocation2 + $0x9c] sm:$0xe]
      %v2009 = vld [vmem:[#allocation2 + $0xa8] sm:$0xe]
      %v2010 = vld [vmem:[#allocation2 + $0xb4] sm:$0xe]
      %vm2043 = vcmask 1042432
      %vm2044 = vcmask 1046532
      %vm2045 = vmor %vm2043, %vm2044
      %v2046 = vrot.slane %v1995, 5
      %v2047 = vrot.slane %v2046, 4
      %v2048 = vrot.slane %v1004, 5
      %v2049 = vsel %vm2045, %v2047, %v2048
      %v2050 = vrot.slane %v2048, 4
      %v2051 = vrot.slane %v1036, 5
      %v2052 = vsel %vm2045, %v2050, %v2051
      %v2053 = vrot.slane %v1996, 5
      %v2054 = vrot.slane %v2053, 4
      %v2055 = vrot.slane %v1006, 5
      %v2056 = vsel %vm2045, %v2054, %v2055
      %v2057 = vrot.slane %v2055, 4
      %v2058 = vrot.slane %v1037, 5
      %v2059 = vsel %vm2045, %v2057, %v2058
      %v2060 = vrot.slane %v1997, 5
      %v2061 = vrot.slane %v2060, 4
      %v2062 = vrot.slane %v1008, 5
      %v2063 = vsel %vm2045, %v2061, %v2062
      %v2064 = vrot.slane %v2062, 4
      %v2065 = vrot.slane %v1038, 5
      %v2066 = vsel %vm2045, %v2064, %v2065
      %v2067 = vrot.slane %v1998, 5
      %v2068 = vrot.slane %v2067, 4
      %v2069 = vrot.slane %v1010, 5
      %v2070 = vsel %vm2045, %v2068, %v2069
      %v2071 = vrot.slane %v2069, 4
      %v2072 = vrot.slane %v1039, 5
      %v2073 = vsel %vm2045, %v2071, %v2072
      %v2074 = vrot.slane %v1999, 5
      %v2075 = vrot.slane %v2074, 4
      %v2076 = vrot.slane %v1012, 5
      %v2077 = vsel %vm2045, %v2075, %v2076
      %v2078 = vrot.slane %v2076, 4
      %v2079 = vrot.slane %v1040, 5
      %v2080 = vsel %vm2045, %v2078, %v2079
      %v2081 = vrot.slane %v2000, 5
      %v2082 = vrot.slane %v2081, 4
      %v2083 = vrot.slane %v1014, 5
      %v2084 = vsel %vm2045, %v2082, %v2083
      %v2085 = vrot.slane %v2083, 4
      %v2086 = vrot.slane %v1041, 5
      %v2087 = vsel %vm2045, %v2085, %v2086
      %v2088 = vrot.slane %v2001, 5
      %v2089 = vrot.slane %v2088, 4
      %v2090 = vrot.slane %v1016, 5
      %v2091 = vsel %vm2045, %v2089, %v2090
      %v2092 = vrot.slane %v2090, 4
      %v2093 = vrot.slane %v1042, 5
      %v2094 = vsel %vm2045, %v2092, %v2093
      %v2095 = vrot.slane %v2002, 5
      %v2096 = vrot.slane %v2095, 4
      %v2097 = vrot.slane %v1018, 5
      %v2098 = vsel %vm2045, %v2096, %v2097
      %v2099 = vrot.slane %v2097, 4
      %v2100 = vrot.slane %v1043, 5
      %v2101 = vsel %vm2045, %v2099, %v2100
      %v2102 = vrot.slane %v2003, 5
      %v2103 = vrot.slane %v2102, 4
      %v2104 = vrot.slane %v1020, 5
      %v2105 = vsel %vm2045, %v2103, %v2104
      %v2106 = vrot.slane %v2104, 4
      %v2107 = vrot.slane %v1044, 5
      %v2108 = vsel %vm2045, %v2106, %v2107
      %v2109 = vrot.slane %v2004, 5
      %v2110 = vrot.slane %v2109, 4
      %v2111 = vrot.slane %v1022, 5
      %v2112 = vsel %vm2045, %v2110, %v2111
      %v2113 = vrot.slane %v2111, 4
      %v2114 = vrot.slane %v1045, 5
      %v2115 = vsel %vm2045, %v2113, %v2114
      %v2116 = vrot.slane %v2005, 5
      %v2117 = vrot.slane %v2116, 4
      %v2118 = vrot.slane %v1024, 5
      %v2119 = vsel %vm2045, %v2117, %v2118
      %v2120 = vrot.slane %v2118, 4
      %v2121 = vrot.slane %v1046, 5
      %v2122 = vsel %vm2045, %v2120, %v2121
      %v2123 = vrot.slane %v2006, 5
      %v2124 = vrot.slane %v2123, 4
      %v2125 = vrot.slane %v1026, 5
      %v2126 = vsel %vm2045, %v2124, %v2125
      %v2127 = vrot.slane %v2125, 4
      %v2128 = vrot.slane %v1047, 5
      %v2129 = vsel %vm2045, %v2127, %v2128
      %v2130 = vrot.slane %v2007, 5
      %v2131 = vrot.slane %v2130, 4
      %v2132 = vrot.slane %v1028, 5
      %v2133 = vsel %vm2045, %v2131, %v2132
      %v2134 = vrot.slane %v2132, 4
      %v2135 = vrot.slane %v1048, 5
      %v2136 = vsel %vm2045, %v2134, %v2135
      %v2137 = vrot.slane %v2008, 5
      %v2138 = vrot.slane %v2137, 4
      %v2139 = vrot.slane %v1030, 5
      %v2140 = vsel %vm2045, %v2138, %v2139
      %v2141 = vrot.slane %v2139, 4
      %v2142 = vrot.slane %v1049, 5
      %v2143 = vsel %vm2045, %v2141, %v2142
      %v2144 = vrot.slane %v2009, 5
      %v2145 = vrot.slane %v2144, 4
      %v2146 = vrot.slane %v1032, 5
      %v2147 = vsel %vm2045, %v2145, %v2146
      %v2148 = vrot.slane %v2146, 4
      %v2149 = vrot.slane %v1050, 5
      %v2150 = vsel %vm2045, %v2148, %v2149
      %v2151 = vrot.slane %v2010, 5
      %v2152 = vrot.slane %v2151, 4
      %v2153 = vrot.slane %v1034, 5
      %v2154 = vsel %vm2045, %v2152, %v2153
      %v2155 = vrot.slane %v2153, 4
      %v2156 = vrot.slane %v1051, 5
      %v2157 = vsel %vm2045, %v2155, %v2156
      %s2158 = scalar_lea.vmem %s3, 4
      %v2159 = vld [vmem:[%s2158] sm:$0x3]
      %v2160 = vunpack.c.l.b16 %v2049
      %v2161 = vunpack.c.l.b16 %v2052
      %v2162 = vunpack.c.l.b16 %v2056
      %v2163 = vunpack.c.l.b16 %v2059
      %v2164 = vunpack.c.l.b16 %v2063
      %v2165 = vunpack.c.l.b16 %v2066
      %v2166 = vunpack.c.l.b16 %v2070
      %v2167 = vunpack.c.l.b16 %v2073
      %v2168 = vunpack.c.l.b16 %v2077
      %v2169 = vunpack.c.l.b16 %v2080
      %v2170 = vunpack.c.l.b16 %v2084
      %v2171 = vunpack.c.l.b16 %v2087
      %v2172 = vunpack.c.l.b16 %v2091
      %v2173 = vunpack.c.l.b16 %v2094
      %v2174 = vunpack.c.l.b16 %v2098
      %v2175 = vunpack.c.l.b16 %v2101
      %v2176 = vunpack.c.l.b16 %v2105
      %v2177 = vunpack.c.l.b16 %v2108
      %v2178 = vunpack.c.l.b16 %v2112
      %v2179 = vunpack.c.l.b16 %v2115
      %v2180 = vunpack.c.l.b16 %v2119
      %v2181 = vunpack.c.l.b16 %v2122
      %v2182 = vunpack.c.l.b16 %v2126
      %v2183 = vunpack.c.l.b16 %v2129
      %v2184 = vunpack.c.l.b16 %v2133
      %v2185 = vunpack.c.l.b16 %v2136
      %v2186 = vunpack.c.l.b16 %v2140
      %v2187 = vunpack.c.l.b16 %v2143
      %v2188 = vunpack.c.l.b16 %v2147
      %v2189 = vunpack.c.l.b16 %v2150
      %v2190 = vunpack.c.l.b16 %v2154
      %v2191 = vunpack.c.l.b16 %v2157
      %v2192 = vpack.c.b16 %v2161, %v2160
      %v2193 = vpack.c.b16 %v2163, %v2162
      %v2194 = vpack.c.b16 %v2165, %v2164
      %v2195 = vpack.c.b16 %v2167, %v2166
      %v2196 = vpack.c.b16 %v2169, %v2168
      %v2197 = vpack.c.b16 %v2171, %v2170
      %v2198 = vpack.c.b16 %v2173, %v2172
      %v2199 = vpack.c.b16 %v2175, %v2174
      %v2200 = vpack.c.b16 %v2177, %v2176
      %v2201 = vpack.c.b16 %v2179, %v2178
      %v2202 = vpack.c.b16 %v2181, %v2180
      %v2203 = vpack.c.b16 %v2183, %v2182
      %v2204 = vpack.c.b16 %v2185, %v2184
      %v2205 = vpack.c.b16 %v2187, %v2186
      %v2206 = vpack.c.b16 %v2189, %v2188
      %v2207 = vpack.c.b16 %v2191, %v2190
      %v2209 = vsel %vm1489, %v2192, 0
      %v2212 = vsel %vm1489, %v2193, 0
      %v2215 = vsel %vm1489, %v2194, 0
      %v2218 = vsel %vm1489, %v2195, 0
      %v2221 = vsel %vm1489, %v2196, 0
      %v2224 = vsel %vm1489, %v2197, 0
      %v2227 = vsel %vm1489, %v2198, 0
      %v2230 = vsel %vm1489, %v2199, 0
      %v2233 = vsel %vm1489, %v2200, 0
      %v2236 = vsel %vm1489, %v2201, 0
      %v2239 = vsel %vm1489, %v2202, 0
      %v2242 = vsel %vm1489, %v2203, 0
      %v2245 = vsel %vm1489, %v2204, 0
      %v2248 = vsel %vm1489, %v2205, 0
      %v2251 = vsel %vm1489, %v2206, 0
      %v2254 = vsel %vm1489, %v2207, 0
      %v2257 = vsel %vm1538, %v2159, 0
      %2259 = vmatprep.subr.bf16.mxu0 0
      %2260 = vmatpush1.bf16.msra.mxu0 %v2257
      %2261 = vmatprep.subr.bf16.mxu0 0
      %2262 = vmatpush1.bf16.msra.mxu0 0
      %2263 = vmatprep.subr.bf16.mxu0 0
      %2264 = vmatpush1.bf16.msra.mxu0 0
      %2265 = vmatprep.subr.bf16.mxu0 0
      %2266 = vmatpush1.bf16.msra.mxu0 0
      %2267 = vmatprep.subr.bf16.mxu0 0
      %2268 = vmatpush1.bf16.msra.mxu0 0
      %2269 = vmatprep.subr.bf16.mxu0 0
      %2270 = vmatpush1.bf16.msra.mxu0 0
      %2271 = vmatprep.subr.bf16.mxu0 0
      %2272 = vmatpush1.bf16.msra.mxu0 0
      %2273 = vmatprep.subr.bf16.mxu0 0
      %2274 = vmatpush1.bf16.msra.mxu0 0
      %2275 = vmatprep.subr.bf16.mxu0 0
      %2276 = vmatpush1.bf16.msra.mxu0 0
      %2277 = vmatprep.subr.bf16.mxu0 0
      %2278 = vmatpush1.bf16.msra.mxu0 0
      %2279 = vmatprep.subr.bf16.mxu0 0
      %2280 = vmatpush1.bf16.msra.mxu0 0
      %2281 = vmatprep.subr.bf16.mxu0 0
      %2282 = vmatpush1.bf16.msra.mxu0 0
      %2283 = vmatprep.subr.bf16.mxu0 0
      %2284 = vmatpush1.bf16.msra.mxu0 0
      %2285 = vmatprep.subr.bf16.mxu0 0
      %2286 = vmatpush1.bf16.msra.mxu0 0
      %2287 = vmatprep.subr.bf16.mxu0 0
      %2288 = vmatpush1.bf16.msra.mxu0 0
      %2289 = vmatprep.subr.bf16.mxu0 0
      %2290 = vmatpush1.bf16.msra.mxu0 0
      %2291 = vmatprep.mubr.bf16.mxu0 0
      %2292 = vmatmul.mubr.bf16.gmra.mrb[0].mxu0 %v2209
      %v2293 = vpop.f32.mrb[0].mxu0
      %v2294 = vadd.f32 0.0, %v2293
      %v2295 = vpop.f32.mrb[0].mxu0
      %v2296 = vpop.f32.mrb[0].mxu0
      %v2297 = vadd.f32 0.0, %v2296
      %v2298 = vpop.f32.mrb[0].mxu0
      %2299 = vmatprep.mubr.bf16.mxu0 0
      %2300 = vmatmul.mubr.bf16.gmra.mrb[0].mxu0 %v2212
      %v2301 = vpop.f32.mrb[0].mxu0
      %v2302 = vadd.f32 0.0, %v2301
      %v2303 = vpop.f32.mrb[0].mxu0
      %v2304 = vpop.f32.mrb[0].mxu0
      %v2305 = vadd.f32 0.0, %v2304
      %v2306 = vpop.f32.mrb[0].mxu0
      %2307 = vmatprep.mubr.bf16.mxu0 0
      %2308 = vmatmul.mubr.bf16.gmra.mrb[0].mxu0 %v2215
      %v2309 = vpop.f32.mrb[0].mxu0
      %v2310 = vadd.f32 0.0, %v2309
      %v2311 = vpop.f32.mrb[0].mxu0
      %v2312 = vpop.f32.mrb[0].mxu0
      %v2313 = vadd.f32 0.0, %v2312
      %v2314 = vpop.f32.mrb[0].mxu0
      %2315 = vmatprep.mubr.bf16.mxu0 0
      %2316 = vmatmul.mubr.bf16.gmra.mrb[0].mxu0 %v2218
      %v2317 = vpop.f32.mrb[0].mxu0
      %v2318 = vadd.f32 0.0, %v2317
      %v2319 = vpop.f32.mrb[0].mxu0
      %v2320 = vpop.f32.mrb[0].mxu0
      %v2321 = vadd.f32 0.0, %v2320
      %v2322 = vpop.f32.mrb[0].mxu0
      %2323 = vmatprep.mubr.bf16.mxu0 0
      %2324 = vmatmul.mubr.bf16.gmra.mrb[0].mxu0 %v2221
      %v2325 = vpop.f32.mrb[0].mxu0
      %v2326 = vadd.f32 0.0, %v2325
      %v2327 = vpop.f32.mrb[0].mxu0
      %v2328 = vpop.f32.mrb[0].mxu0
      %v2329 = vadd.f32 0.0, %v2328
      %v2330 = vpop.f32.mrb[0].mxu0
      %2331 = vmatprep.mubr.bf16.mxu0 0
      %2332 = vmatmul.mubr.bf16.gmra.mrb[0].mxu0 %v2224
      %v2333 = vpop.f32.mrb[0].mxu0
      %v2334 = vadd.f32 0.0, %v2333
      %v2335 = vpop.f32.mrb[0].mxu0
      %v2336 = vpop.f32.mrb[0].mxu0
      %v2337 = vadd.f32 0.0, %v2336
      %v2338 = vpop.f32.mrb[0].mxu0
      %2339 = vmatprep.mubr.bf16.mxu0 0
      %2340 = vmatmul.mubr.bf16.gmra.mrb[0].mxu0 %v2227
      %v2341 = vpop.f32.mrb[0].mxu0
      %v2342 = vadd.f32 0.0, %v2341
      %v2343 = vpop.f32.mrb[0].mxu0
      %v2344 = vpop.f32.mrb[0].mxu0
      %v2345 = vadd.f32 0.0, %v2344
      %v2346 = vpop.f32.mrb[0].mxu0
      %2347 = vmatprep.mubr.bf16.mxu0 0
      %2348 = vmatmul.mubr.bf16.gmra.mrb[0].mxu0 %v2230
      %v2349 = vpop.f32.mrb[0].mxu0
      %v2350 = vadd.f32 0.0, %v2349
      %v2351 = vpop.f32.mrb[0].mxu0
      %v2352 = vpop.f32.mrb[0].mxu0
      %v2353 = vadd.f32 0.0, %v2352
      %v2354 = vpop.f32.mrb[0].mxu0
      %2355 = vmatprep.mubr.bf16.mxu0 0
      %2356 = vmatmul.mubr.bf16.gmra.mrb[0].mxu0 %v2233
      %v2357 = vpop.f32.mrb[0].mxu0
      %v2358 = vadd.f32 0.0, %v2357
      %v2359 = vpop.f32.mrb[0].mxu0
      %v2360 = vpop.f32.mrb[0].mxu0
      %v2361 = vadd.f32 0.0, %v2360
      %v2362 = vpop.f32.mrb[0].mxu0
      %2363 = vmatprep.mubr.bf16.mxu0 0
      %2364 = vmatmul.mubr.bf16.gmra.mrb[0].mxu0 %v2236
      %v2365 = vpop.f32.mrb[0].mxu0
      %v2366 = vadd.f32 0.0, %v2365
      %v2367 = vpop.f32.mrb[0].mxu0
      %v2368 = vpop.f32.mrb[0].mxu0
      %v2369 = vadd.f32 0.0, %v2368
      %v2370 = vpop.f32.mrb[0].mxu0
      %2371 = vmatprep.mubr.bf16.mxu0 0
      %2372 = vmatmul.mubr.bf16.gmra.mrb[0].mxu0 %v2239
      %v2373 = vpop.f32.mrb[0].mxu0
      %v2374 = vadd.f32 0.0, %v2373
      %v2375 = vpop.f32.mrb[0].mxu0
      %v2376 = vpop.f32.mrb[0].mxu0
      %v2377 = vadd.f32 0.0, %v2376
      %v2378 = vpop.f32.mrb[0].mxu0
      %2379 = vmatprep.mubr.bf16.mxu0 0
      %2380 = vmatmul.mubr.bf16.gmra.mrb[0].mxu0 %v2242
      %v2381 = vpop.f32.mrb[0].mxu0
      %v2382 = vadd.f32 0.0, %v2381
      %v2383 = vpop.f32.mrb[0].mxu0
      %v2384 = vpop.f32.mrb[0].mxu0
      %v2385 = vadd.f32 0.0, %v2384
      %v2386 = vpop.f32.mrb[0].mxu0
      %2387 = vmatprep.mubr.bf16.mxu0 0
      %2388 = vmatmul.mubr.bf16.gmra.mrb[0].mxu0 %v2245
      %v2389 = vpop.f32.mrb[0].mxu0
      %v2390 = vadd.f32 0.0, %v2389
      %v2391 = vpop.f32.mrb[0].mxu0
      %v2392 = vpop.f32.mrb[0].mxu0
      %v2393 = vadd.f32 0.0, %v2392
      %v2394 = vpop.f32.mrb[0].mxu0
      %2395 = vmatprep.mubr.bf16.mxu0 0
      %2396 = vmatmul.mubr.bf16.gmra.mrb[0].mxu0 %v2248
      %v2397 = vpop.f32.mrb[0].mxu0
      %v2398 = vadd.f32 0.0, %v2397
      %v2399 = vpop.f32.mrb[0].mxu0
      %v2400 = vpop.f32.mrb[0].mxu0
      %v2401 = vadd.f32 0.0, %v2400
      %v2402 = vpop.f32.mrb[0].mxu0
      %2403 = vmatprep.mubr.bf16.mxu0 0
      %2404 = vmatmul.mubr.bf16.gmra.mrb[0].mxu0 %v2251
      %v2405 = vpop.f32.mrb[0].mxu0
      %v2406 = vadd.f32 0.0, %v2405
      %v2407 = vpop.f32.mrb[0].mxu0
      %v2408 = vpop.f32.mrb[0].mxu0
      %v2409 = vadd.f32 0.0, %v2408
      %v2410 = vpop.f32.mrb[0].mxu0
      %2411 = vmatprep.mubr.bf16.mxu0 0
      %2412 = vmatmul.mubr.bf16.gmra.mrb[0].mxu0 %v2254
      %v2413 = vpop.f32.mrb[0].mxu0
      %v2414 = vadd.f32 0.0, %v2413
      %v2415 = vpop.f32.mrb[0].mxu0
      %v2416 = vpop.f32.mrb[0].mxu0
      %v2417 = vadd.f32 0.0, %v2416
      %v2418 = vpop.f32.mrb[0].mxu0
      %2419 = vdwg.mxu0
      %v2420 = vadd.f32 %v1869, %v2294
      %v2421 = vadd.f32 %v1872, %v2297
      %v2422 = vadd.f32 %v1877, %v2302
      %v2423 = vadd.f32 %v1880, %v2305
      %v2424 = vadd.f32 %v1885, %v2310
      %v2425 = vadd.f32 %v1888, %v2313
      %v2426 = vadd.f32 %v1893, %v2318
      %v2427 = vadd.f32 %v1896, %v2321
      %v2428 = vadd.f32 %v1901, %v2326
      %v2429 = vadd.f32 %v1904, %v2329
      %v2430 = vadd.f32 %v1909, %v2334
      %v2431 = vadd.f32 %v1912, %v2337
      %v2432 = vadd.f32 %v1917, %v2342
      %v2433 = vadd.f32 %v1920, %v2345
      %v2434 = vadd.f32 %v1925, %v2350
      %v2435 = vadd.f32 %v1928, %v2353
      %v2436 = vadd.f32 %v1933, %v2358
      %v2437 = vadd.f32 %v1936, %v2361
      %v2438 = vadd.f32 %v1941, %v2366
      %v2439 = vadd.f32 %v1944, %v2369
      %v2440 = vadd.f32 %v1949, %v2374
      %v2441 = vadd.f32 %v1952, %v2377
      %v2442 = vadd.f32 %v1957, %v2382
      %v2443 = vadd.f32 %v1960, %v2385
      %v2444 = vadd.f32 %v1965, %v2390
      %v2445 = vadd.f32 %v1968, %v2393
      %v2446 = vadd.f32 %v1973, %v2398
      %v2447 = vadd.f32 %v1976, %v2401
      %v2448 = vadd.f32 %v1981, %v2406
      %v2449 = vadd.f32 %v1984, %v2409
      %v2450 = vadd.f32 %v1989, %v2414
      %v2451 = vadd.f32 %v1992, %v2417
      %v2452 = vld [vmem:[%s885] sm:$0xf]
      %v2453 = vld [vmem:[%s885 + $0x4] sm:$0xf]
      %v2454 = vld [vmem:[%s885 + $0xc] sm:$0xf]
      %v2455 = vld [vmem:[%s885 + $0x10] sm:$0xf]
      %v2456 = vld [vmem:[%s885 + $0x18] sm:$0xf]
      %v2457 = vld [vmem:[%s885 + $0x1c] sm:$0xf]
      %v2458 = vld [vmem:[%s885 + $0x24] sm:$0xf]
      %v2459 = vld [vmem:[%s885 + $0x28] sm:$0xf]
      %v2460 = vld [vmem:[%s885 + $0x30] sm:$0xf]
      %v2461 = vld [vmem:[%s885 + $0x34] sm:$0xf]
      %v2462 = vld [vmem:[%s885 + $0x3c] sm:$0xf]
      %v2463 = vld [vmem:[%s885 + $0x40] sm:$0xf]
      %v2464 = vld [vmem:[%s885 + $0x48] sm:$0xf]
      %v2465 = vld [vmem:[%s885 + $0x4c] sm:$0xf]
      %v2466 = vld [vmem:[%s885 + $0x54] sm:$0xf]
      %v2467 = vld [vmem:[%s885 + $0x58] sm:$0xf]
      %v2468 = vld [vmem:[%s885 + $0x60] sm:$0xf]
      %v2469 = vld [vmem:[%s885 + $0x64] sm:$0xf]
      %v2470 = vld [vmem:[%s885 + $0x6c] sm:$0xf]
      %v2471 = vld [vmem:[%s885 + $0x70] sm:$0xf]
      %v2472 = vld [vmem:[%s885 + $0x78] sm:$0xf]
      %v2473 = vld [vmem:[%s885 + $0x7c] sm:$0xf]
      %v2474 = vld [vmem:[%s885 + $0x84] sm:$0xf]
      %v2475 = vld [vmem:[%s885 + $0x88] sm:$0xf]
      %v2476 = vld [vmem:[%s885 + $0x90] sm:$0xf]
      %v2477 = vld [vmem:[%s885 + $0x94] sm:$0xf]
      %v2478 = vld [vmem:[%s885 + $0x9c] sm:$0xf]
      %v2479 = vld [vmem:[%s885 + $0xa0] sm:$0xf]
      %v2480 = vld [vmem:[%s885 + $0xa8] sm:$0xf]
      %v2481 = vld [vmem:[%s885 + $0xac] sm:$0xf]
      %v2482 = vld [vmem:[%s885 + $0xb4] sm:$0xf]
      %v2483 = vld [vmem:[%s885 + $0xb8] sm:$0xf]
      %s2484 = scalar_lea.vmem %s3, 6
      %v2485 = vld [vmem:[%s2484] sm:$0x3]
      %v2518 = vunpack.c.l.b16 %v2452
      %v2519 = vunpack.c.l.b16 %v2453
      %v2520 = vunpack.c.l.b16 %v2454
      %v2521 = vunpack.c.l.b16 %v2455
      %v2522 = vunpack.c.l.b16 %v2456
      %v2523 = vunpack.c.l.b16 %v2457
      %v2524 = vunpack.c.l.b16 %v2458
      %v2525 = vunpack.c.l.b16 %v2459
      %v2526 = vunpack.c.l.b16 %v2460
      %v2527 = vunpack.c.l.b16 %v2461
      %v2528 = vunpack.c.l.b16 %v2462
      %v2529 = vunpack.c.l.b16 %v2463
      %v2530 = vunpack.c.l.b16 %v2464
      %v2531 = vunpack.c.l.b16 %v2465
      %v2532 = vunpack.c.l.b16 %v2466
      %v2533 = vunpack.c.l.b16 %v2467
      %v2534 = vunpack.c.l.b16 %v2468
      %v2535 = vunpack.c.l.b16 %v2469
      %v2536 = vunpack.c.l.b16 %v2470
      %v2537 = vunpack.c.l.b16 %v2471
      %v2538 = vunpack.c.l.b16 %v2472
      %v2539 = vunpack.c.l.b16 %v2473
      %v2540 = vunpack.c.l.b16 %v2474
      %v2541 = vunpack.c.l.b16 %v2475
      %v2542 = vunpack.c.l.b16 %v2476
      %v2543 = vunpack.c.l.b16 %v2477
      %v2544 = vunpack.c.l.b16 %v2478
      %v2545 = vunpack.c.l.b16 %v2479
      %v2546 = vunpack.c.l.b16 %v2480
      %v2547 = vunpack.c.l.b16 %v2481
      %v2548 = vunpack.c.l.b16 %v2482
      %v2549 = vunpack.c.l.b16 %v2483
      %v2550 = vpack.c.b16 %v2519, %v2518
      %v2551 = vpack.c.b16 %v2521, %v2520
      %v2552 = vpack.c.b16 %v2523, %v2522
      %v2553 = vpack.c.b16 %v2525, %v2524
      %v2554 = vpack.c.b16 %v2527, %v2526
      %v2555 = vpack.c.b16 %v2529, %v2528
      %v2556 = vpack.c.b16 %v2531, %v2530
      %v2557 = vpack.c.b16 %v2533, %v2532
      %v2558 = vpack.c.b16 %v2535, %v2534
      %v2559 = vpack.c.b16 %v2537, %v2536
      %v2560 = vpack.c.b16 %v2539, %v2538
      %v2561 = vpack.c.b16 %v2541, %v2540
      %v2562 = vpack.c.b16 %v2543, %v2542
      %v2563 = vpack.c.b16 %v2545, %v2544
      %v2564 = vpack.c.b16 %v2547, %v2546
      %v2565 = vpack.c.b16 %v2549, %v2548
      %v2567 = vsel %vm1489, %v2550, 0
      %v2570 = vsel %vm1489, %v2551, 0
      %v2573 = vsel %vm1489, %v2552, 0
      %v2576 = vsel %vm1489, %v2553, 0
      %v2579 = vsel %vm1489, %v2554, 0
      %v2582 = vsel %vm1489, %v2555, 0
      %v2585 = vsel %vm1489, %v2556, 0
      %v2588 = vsel %vm1489, %v2557, 0
      %v2591 = vsel %vm1489, %v2558, 0
      %v2594 = vsel %vm1489, %v2559, 0
      %v2597 = vsel %vm1489, %v2560, 0
      %v2600 = vsel %vm1489, %v2561, 0
      %v2603 = vsel %vm1489, %v2562, 0
      %v2606 = vsel %vm1489, %v2563, 0
      %v2609 = vsel %vm1489, %v2564, 0
      %v2612 = vsel %vm1489, %v2565, 0
      %v2615 = vsel %vm1538, %v2485, 0
      %2617 = vmatprep.subr.bf16.mxu0 0
      %2618 = vmatpush1.bf16.msra.mxu0 %v2615
      %2619 = vmatprep.subr.bf16.mxu0 0
      %2620 = vmatpush1.bf16.msra.mxu0 0
      %2621 = vmatprep.subr.bf16.mxu0 0
      %2622 = vmatpush1.bf16.msra.mxu0 0
      %2623 = vmatprep.subr.bf16.mxu0 0
      %2624 = vmatpush1.bf16.msra.mxu0 0
      %2625 = vmatprep.subr.bf16.mxu0 0
      %2626 = vmatpush1.bf16.msra.mxu0 0
      %2627 = vmatprep.subr.bf16.mxu0 0
      %2628 = vmatpush1.bf16.msra.mxu0 0
      %2629 = vmatprep.subr.bf16.mxu0 0
      %2630 = vmatpush1.bf16.msra.mxu0 0
      %2631 = vmatprep.subr.bf16.mxu0 0
      %2632 = vmatpush1.bf16.msra.mxu0 0
      %2633 = vmatprep.subr.bf16.mxu0 0
      %2634 = vmatpush1.bf16.msra.mxu0 0
      %2635 = vmatprep.subr.bf16.mxu0 0
      %2636 = vmatpush1.bf16.msra.mxu0 0
      %2637 = vmatprep.subr.bf16.mxu0 0
      %2638 = vmatpush1.bf16.msra.mxu0 0
      %2639 = vmatprep.subr.bf16.mxu0 0
      %2640 = vmatpush1.bf16.msra.mxu0 0
      %2641 = vmatprep.subr.bf16.mxu0 0
      %2642 = vmatpush1.bf16.msra.mxu0 0
      %2643 = vmatprep.subr.bf16.mxu0 0
      %2644 = vmatpush1.bf16.msra.mxu0 0
      %2645 = vmatprep.subr.bf16.mxu0 0
      %2646 = vmatpush1.bf16.msra.mxu0 0
      %2647 = vmatprep.subr.bf16.mxu0 0
      %2648 = vmatpush1.bf16.msra.mxu0 0
      %2649 = vmatprep.mubr.bf16.mxu0 0
      %2650 = vmatmul.mubr.bf16.gmra.mrb[0].mxu0 %v2567
      %v2651 = vpop.f32.mrb[0].mxu0
      %v2652 = vadd.f32 0.0, %v2651
      %v2653 = vpop.f32.mrb[0].mxu0
      %v2654 = vpop.f32.mrb[0].mxu0
      %v2655 = vadd.f32 0.0, %v2654
      %v2656 = vpop.f32.mrb[0].mxu0
      %2657 = vmatprep.mubr.bf16.mxu0 0
      %2658 = vmatmul.mubr.bf16.gmra.mrb[0].mxu0 %v2570
      %v2659 = vpop.f32.mrb[0].mxu0
      %v2660 = vadd.f32 0.0, %v2659
      %v2661 = vpop.f32.mrb[0].mxu0
      %v2662 = vpop.f32.mrb[0].mxu0
      %v2663 = vadd.f32 0.0, %v2662
      %v2664 = vpop.f32.mrb[0].mxu0
      %2665 = vmatprep.mubr.bf16.mxu0 0
      %2666 = vmatmul.mubr.bf16.gmra.mrb[0].mxu0 %v2573
      %v2667 = vpop.f32.mrb[0].mxu0
      %v2668 = vadd.f32 0.0, %v2667
      %v2669 = vpop.f32.mrb[0].mxu0
      %v2670 = vpop.f32.mrb[0].mxu0
      %v2671 = vadd.f32 0.0, %v2670
      %v2672 = vpop.f32.mrb[0].mxu0
      %2673 = vmatprep.mubr.bf16.mxu0 0
      %2674 = vmatmul.mubr.bf16.gmra.mrb[0].mxu0 %v2576
      %v2675 = vpop.f32.mrb[0].mxu0
      %v2676 = vadd.f32 0.0, %v2675
      %v2677 = vpop.f32.mrb[0].mxu0
      %v2678 = vpop.f32.mrb[0].mxu0
      %v2679 = vadd.f32 0.0, %v2678
      %v2680 = vpop.f32.mrb[0].mxu0
      %2681 = vmatprep.mubr.bf16.mxu0 0
      %2682 = vmatmul.mubr.bf16.gmra.mrb[0].mxu0 %v2579
      %v2683 = vpop.f32.mrb[0].mxu0
      %v2684 = vadd.f32 0.0, %v2683
      %v2685 = vpop.f32.mrb[0].mxu0
      %v2686 = vpop.f32.mrb[0].mxu0
      %v2687 = vadd.f32 0.0, %v2686
      %v2688 = vpop.f32.mrb[0].mxu0
      %2689 = vmatprep.mubr.bf16.mxu0 0
      %2690 = vmatmul.mubr.bf16.gmra.mrb[0].mxu0 %v2582
      %v2691 = vpop.f32.mrb[0].mxu0
      %v2692 = vadd.f32 0.0, %v2691
      %v2693 = vpop.f32.mrb[0].mxu0
      %v2694 = vpop.f32.mrb[0].mxu0
      %v2695 = vadd.f32 0.0, %v2694
      %v2696 = vpop.f32.mrb[0].mxu0
      %2697 = vmatprep.mubr.bf16.mxu0 0
      %2698 = vmatmul.mubr.bf16.gmra.mrb[0].mxu0 %v2585
      %v2699 = vpop.f32.mrb[0].mxu0
      %v2700 = vadd.f32 0.0, %v2699
      %v2701 = vpop.f32.mrb[0].mxu0
      %v2702 = vpop.f32.mrb[0].mxu0
      %v2703 = vadd.f32 0.0, %v2702
      %v2704 = vpop.f32.mrb[0].mxu0
      %2705 = vmatprep.mubr.bf16.mxu0 0
      %2706 = vmatmul.mubr.bf16.gmra.mrb[0].mxu0 %v2588
      %v2707 = vpop.f32.mrb[0].mxu0
      %v2708 = vadd.f32 0.0, %v2707
      %v2709 = vpop.f32.mrb[0].mxu0
      %v2710 = vpop.f32.mrb[0].mxu0
      %v2711 = vadd.f32 0.0, %v2710
      %v2712 = vpop.f32.mrb[0].mxu0
      %2713 = vmatprep.mubr.bf16.mxu0 0
      %2714 = vmatmul.mubr.bf16.gmra.mrb[0].mxu0 %v2591
      %v2715 = vpop.f32.mrb[0].mxu0
      %v2716 = vadd.f32 0.0, %v2715
      %v2717 = vpop.f32.mrb[0].mxu0
      %v2718 = vpop.f32.mrb[0].mxu0
      %v2719 = vadd.f32 0.0, %v2718
      %v2720 = vpop.f32.mrb[0].mxu0
      %2721 = vmatprep.mubr.bf16.mxu0 0
      %2722 = vmatmul.mubr.bf16.gmra.mrb[0].mxu0 %v2594
      %v2723 = vpop.f32.mrb[0].mxu0
      %v2724 = vadd.f32 0.0, %v2723
      %v2725 = vpop.f32.mrb[0].mxu0
      %v2726 = vpop.f32.mrb[0].mxu0
      %v2727 = vadd.f32 0.0, %v2726
      %v2728 = vpop.f32.mrb[0].mxu0
      %2729 = vmatprep.mubr.bf16.mxu0 0
      %2730 = vmatmul.mubr.bf16.gmra.mrb[0].mxu0 %v2597
      %v2731 = vpop.f32.mrb[0].mxu0
      %v2732 = vadd.f32 0.0, %v2731
      %v2733 = vpop.f32.mrb[0].mxu0
      %v2734 = vpop.f32.mrb[0].mxu0
      %v2735 = vadd.f32 0.0, %v2734
      %v2736 = vpop.f32.mrb[0].mxu0
      %2737 = vmatprep.mubr.bf16.mxu0 0
      %2738 = vmatmul.mubr.bf16.gmra.mrb[0].mxu0 %v2600
      %v2739 = vpop.f32.mrb[0].mxu0
      %v2740 = vadd.f32 0.0, %v2739
      %v2741 = vpop.f32.mrb[0].mxu0
      %v2742 = vpop.f32.mrb[0].mxu0
      %v2743 = vadd.f32 0.0, %v2742
      %v2744 = vpop.f32.mrb[0].mxu0
      %2745 = vmatprep.mubr.bf16.mxu0 0
      %2746 = vmatmul.mubr.bf16.gmra.mrb[0].mxu0 %v2603
      %v2747 = vpop.f32.mrb[0].mxu0
      %v2748 = vadd.f32 0.0, %v2747
      %v2749 = vpop.f32.mrb[0].mxu0
      %v2750 = vpop.f32.mrb[0].mxu0
      %v2751 = vadd.f32 0.0, %v2750
      %v2752 = vpop.f32.mrb[0].mxu0
      %2753 = vmatprep.mubr.bf16.mxu0 0
      %2754 = vmatmul.mubr.bf16.gmra.mrb[0].mxu0 %v2606
      %v2755 = vpop.f32.mrb[0].mxu0
      %v2756 = vadd.f32 0.0, %v2755
      %v2757 = vpop.f32.mrb[0].mxu0
      %v2758 = vpop.f32.mrb[0].mxu0
      %v2759 = vadd.f32 0.0, %v2758
      %v2760 = vpop.f32.mrb[0].mxu0
      %2761 = vmatprep.mubr.bf16.mxu0 0
      %2762 = vmatmul.mubr.bf16.gmra.mrb[0].mxu0 %v2609
      %v2763 = vpop.f32.mrb[0].mxu0
      %v2764 = vadd.f32 0.0, %v2763
      %v2765 = vpop.f32.mrb[0].mxu0
      %v2766 = vpop.f32.mrb[0].mxu0
      %v2767 = vadd.f32 0.0, %v2766
      %v2768 = vpop.f32.mrb[0].mxu0
      %2769 = vmatprep.mubr.bf16.mxu0 0
      %2770 = vmatmul.mubr.bf16.gmra.mrb[0].mxu0 %v2612
      %v2771 = vpop.f32.mrb[0].mxu0
      %v2772 = vadd.f32 0.0, %v2771
      %v2773 = vpop.f32.mrb[0].mxu0
      %v2774 = vpop.f32.mrb[0].mxu0
      %v2775 = vadd.f32 0.0, %v2774
      %v2776 = vpop.f32.mrb[0].mxu0
      %2777 = vdwg.mxu0
      %v2778 = vadd.f32 %v2420, %v2652
      %v2779 = vadd.f32 %v2421, %v2655
      %v2780 = vadd.f32 %v2422, %v2660
      %v2781 = vadd.f32 %v2423, %v2663
      %v2782 = vadd.f32 %v2424, %v2668
      %v2783 = vadd.f32 %v2425, %v2671
      %v2784 = vadd.f32 %v2426, %v2676
      %v2785 = vadd.f32 %v2427, %v2679
      %v2786 = vadd.f32 %v2428, %v2684
      %v2787 = vadd.f32 %v2429, %v2687
      %v2788 = vadd.f32 %v2430, %v2692
      %v2789 = vadd.f32 %v2431, %v2695
      %v2790 = vadd.f32 %v2432, %v2700
      %v2791 = vadd.f32 %v2433, %v2703
      %v2792 = vadd.f32 %v2434, %v2708
      %v2793 = vadd.f32 %v2435, %v2711
      %v2794 = vadd.f32 %v2436, %v2716
      %v2795 = vadd.f32 %v2437, %v2719
      %v2796 = vadd.f32 %v2438, %v2724
      %v2797 = vadd.f32 %v2439, %v2727
      %v2798 = vadd.f32 %v2440, %v2732
      %v2799 = vadd.f32 %v2441, %v2735
      %v2800 = vadd.f32 %v2442, %v2740
      %v2801 = vadd.f32 %v2443, %v2743
      %v2802 = vadd.f32 %v2444, %v2748
      %v2803 = vadd.f32 %v2445, %v2751
      %v2804 = vadd.f32 %v2446, %v2756
      %v2805 = vadd.f32 %v2447, %v2759
      %v2806 = vadd.f32 %v2448, %v2764
      %v2807 = vadd.f32 %v2449, %v2767
      %v2808 = vadd.f32 %v2450, %v2772
      %v2809 = vadd.f32 %v2451, %v2775
      %v2810 = vld [vmem:[%s885] sm:$0xf]
      %v2811 = vld [vmem:[%s885 + $0x4] sm:$0xf]
      %v2812 = vld [vmem:[%s885 + $0x8] sm:$0x1]
      %v2813 = vld [vmem:[%s885 + $0xc] sm:$0xf]
      %v2814 = vld [vmem:[%s885 + $0x10] sm:$0xf]
      %v2815 = vld [vmem:[%s885 + $0x14] sm:$0x1]
      %v2816 = vld [vmem:[%s885 + $0x18] sm:$0xf]
      %v2817 = vld [vmem:[%s885 + $0x1c] sm:$0xf]
      %v2818 = vld [vmem:[%s885 + $0x20] sm:$0x1]
      %v2819 = vld [vmem:[%s885 + $0x24] sm:$0xf]
      %v2820 = vld [vmem:[%s885 + $0x28] sm:$0xf]
      %v2821 = vld [vmem:[%s885 + $0x2c] sm:$0x1]
      %v2822 = vld [vmem:[%s885 + $0x30] sm:$0xf]
      %v2823 = vld [vmem:[%s885 + $0x34] sm:$0xf]
      %v2824 = vld [vmem:[%s885 + $0x38] sm:$0x1]
      %v2825 = vld [vmem:[%s885 + $0x3c] sm:$0xf]
      %v2826 = vld [vmem:[%s885 + $0x40] sm:$0xf]
      %v2827 = vld [vmem:[%s885 + $0x44] sm:$0x1]
      %v2828 = vld [vmem:[%s885 + $0x48] sm:$0xf]
      %v2829 = vld [vmem:[%s885 + $0x4c] sm:$0xf]
      %v2830 = vld [vmem:[%s885 + $0x50] sm:$0x1]
      %v2831 = vld [vmem:[%s885 + $0x54] sm:$0xf]
      %v2832 = vld [vmem:[%s885 + $0x58] sm:$0xf]
      %v2833 = vld [vmem:[%s885 + $0x5c] sm:$0x1]
      %v2834 = vld [vmem:[%s885 + $0x60] sm:$0xf]
      %v2835 = vld [vmem:[%s885 + $0x64] sm:$0xf]
      %v2836 = vld [vmem:[%s885 + $0x68] sm:$0x1]
      %v2837 = vld [vmem:[%s885 + $0x6c] sm:$0xf]
      %v2838 = vld [vmem:[%s885 + $0x70] sm:$0xf]
      %v2839 = vld [vmem:[%s885 + $0x74] sm:$0x1]
      %v2840 = vld [vmem:[%s885 + $0x78] sm:$0xf]
      %v2841 = vld [vmem:[%s885 + $0x7c] sm:$0xf]
      %v2842 = vld [vmem:[%s885 + $0x80] sm:$0x1]
      %v2843 = vld [vmem:[%s885 + $0x84] sm:$0xf]
      %v2844 = vld [vmem:[%s885 + $0x88] sm:$0xf]
      %v2845 = vld [vmem:[%s885 + $0x8c] sm:$0x1]
      %v2846 = vld [vmem:[%s885 + $0x90] sm:$0xf]
      %v2847 = vld [vmem:[%s885 + $0x94] sm:$0xf]
      %v2848 = vld [vmem:[%s885 + $0x98] sm:$0x1]
      %v2849 = vld [vmem:[%s885 + $0x9c] sm:$0xf]
      %v2850 = vld [vmem:[%s885 + $0xa0] sm:$0xf]
      %v2851 = vld [vmem:[%s885 + $0xa4] sm:$0x1]
      %v2852 = vld [vmem:[%s885 + $0xa8] sm:$0xf]
      %v2853 = vld [vmem:[%s885 + $0xac] sm:$0xf]
      %v2854 = vld [vmem:[%s885 + $0xb0] sm:$0x1]
      %v2855 = vld [vmem:[%s885 + $0xb4] sm:$0xf]
      %v2856 = vld [vmem:[%s885 + $0xb8] sm:$0xf]
      %v2857 = vld [vmem:[%s885 + $0xbc] sm:$0x1]
      %v2859 = vshrl.u32 %v2810, 16
      %v2861 = vrot.slane %v2859, 4
      %v2862 = vshll.u32 %v2810, 16
      %v2864 = vrot.slane %v2862, 5
      %v2865 = vor.u32 %v2861, %v2864
      %v2866 = vrot.slane %v2865, 4
      %v2868 = vshll.u32 %v2811, 16
      %v2870 = vrot.slane %v2868, 5
      %v2871 = vsel %vm1054, %v2866, %v2870
      %v2872 = vshrl.u32 %v2811, 16
      %v2874 = vrot.slane %v2872, 4
      %v2875 = vor.u32 %v2874, %v2870
      %v2876 = vrot.slane %v2875, 4
      %v2878 = vshll.u32 %v2812, 16
      %v2880 = vrot.slane %v2878, 5
      %v2881 = vsel %vm1054, %v2876, %v2880
      %v2883 = vshrl.u32 %v2813, 16
      %v2885 = vrot.slane %v2883, 4
      %v2886 = vshll.u32 %v2813, 16
      %v2888 = vrot.slane %v2886, 5
      %v2889 = vor.u32 %v2885, %v2888
      %v2890 = vrot.slane %v2889, 4
      %v2892 = vshll.u32 %v2814, 16
      %v2894 = vrot.slane %v2892, 5
      %v2895 = vsel %vm1054, %v2890, %v2894
      %v2896 = vshrl.u32 %v2814, 16
      %v2898 = vrot.slane %v2896, 4
      %v2899 = vor.u32 %v2898, %v2894
      %v2900 = vrot.slane %v2899, 4
      %v2902 = vshll.u32 %v2815, 16
      %v2904 = vrot.slane %v2902, 5
      %v2905 = vsel %vm1054, %v2900, %v2904
      %v2907 = vshrl.u32 %v2816, 16
      %v2909 = vrot.slane %v2907, 4
      %v2910 = vshll.u32 %v2816, 16
      %v2912 = vrot.slane %v2910, 5
      %v2913 = vor.u32 %v2909, %v2912
      %v2914 = vrot.slane %v2913, 4
      %v2916 = vshll.u32 %v2817, 16
      %v2918 = vrot.slane %v2916, 5
      %v2919 = vsel %vm1054, %v2914, %v2918
      %v2920 = vshrl.u32 %v2817, 16
      %v2922 = vrot.slane %v2920, 4
      %v2923 = vor.u32 %v2922, %v2918
      %v2924 = vrot.slane %v2923, 4
      %v2926 = vshll.u32 %v2818, 16
      %v2928 = vrot.slane %v2926, 5
      %v2929 = vsel %vm1054, %v2924, %v2928
      %v2931 = vshrl.u32 %v2819, 16
      %v2933 = vrot.slane %v2931, 4
      %v2934 = vshll.u32 %v2819, 16
      %v2936 = vrot.slane %v2934, 5
      %v2937 = vor.u32 %v2933, %v2936
      %v2938 = vrot.slane %v2937, 4
      %v2940 = vshll.u32 %v2820, 16
      %v2942 = vrot.slane %v2940, 5
      %v2943 = vsel %vm1054, %v2938, %v2942
      %v2944 = vshrl.u32 %v2820, 16
      %v2946 = vrot.slane %v2944, 4
      %v2947 = vor.u32 %v2946, %v2942
      %v2948 = vrot.slane %v2947, 4
      %v2950 = vshll.u32 %v2821, 16
      %v2952 = vrot.slane %v2950, 5
      %v2953 = vsel %vm1054, %v2948, %v2952
      %v2955 = vshrl.u32 %v2822, 16
      %v2957 = vrot.slane %v2955, 4
      %v2958 = vshll.u32 %v2822, 16
      %v2960 = vrot.slane %v2958, 5
      %v2961 = vor.u32 %v2957, %v2960
      %v2962 = vrot.slane %v2961, 4
      %v2964 = vshll.u32 %v2823, 16
      %v2966 = vrot.slane %v2964, 5
      %v2967 = vsel %vm1054, %v2962, %v2966
      %v2968 = vshrl.u32 %v2823, 16
      %v2970 = vrot.slane %v2968, 4
      %v2971 = vor.u32 %v2970, %v2966
      %v2972 = vrot.slane %v2971, 4
      %v2974 = vshll.u32 %v2824, 16
      %v2976 = vrot.slane %v2974, 5
      %v2977 = vsel %vm1054, %v2972, %v2976
      %v2979 = vshrl.u32 %v2825, 16
      %v2981 = vrot.slane %v2979, 4
      %v2982 = vshll.u32 %v2825, 16
      %v2984 = vrot.slane %v2982, 5
      %v2985 = vor.u32 %v2981, %v2984
      %v2986 = vrot.slane %v2985, 4
      %v2988 = vshll.u32 %v2826, 16
      %v2990 = vrot.slane %v2988, 5
      %v2991 = vsel %vm1054, %v2986, %v2990
      %v2992 = vshrl.u32 %v2826, 16
      %v2994 = vrot.slane %v2992, 4
      %v2995 = vor.u32 %v2994, %v2990
      %v2996 = vrot.slane %v2995, 4
      %v2998 = vshll.u32 %v2827, 16
      %v3000 = vrot.slane %v2998, 5
      %v3001 = vsel %vm1054, %v2996, %v3000
      %v3003 = vshrl.u32 %v2828, 16
      %v3005 = vrot.slane %v3003, 4
      %v3006 = vshll.u32 %v2828, 16
      %v3008 = vrot.slane %v3006, 5
      %v3009 = vor.u32 %v3005, %v3008
      %v3010 = vrot.slane %v3009, 4
      %v3012 = vshll.u32 %v2829, 16
      %v3014 = vrot.slane %v3012, 5
      %v3015 = vsel %vm1054, %v3010, %v3014
      %v3016 = vshrl.u32 %v2829, 16
      %v3018 = vrot.slane %v3016, 4
      %v3019 = vor.u32 %v3018, %v3014
      %v3020 = vrot.slane %v3019, 4
      %v3022 = vshll.u32 %v2830, 16
      %v3024 = vrot.slane %v3022, 5
      %v3025 = vsel %vm1054, %v3020, %v3024
      %v3027 = vshrl.u32 %v2831, 16
      %v3029 = vrot.slane %v3027, 4
      %v3030 = vshll.u32 %v2831, 16
      %v3032 = vrot.slane %v3030, 5
      %v3033 = vor.u32 %v3029, %v3032
      %v3034 = vrot.slane %v3033, 4
      %v3036 = vshll.u32 %v2832, 16
      %v3038 = vrot.slane %v3036, 5
      %v3039 = vsel %vm1054, %v3034, %v3038
      %v3040 = vshrl.u32 %v2832, 16
      %v3042 = vrot.slane %v3040, 4
      %v3043 = vor.u32 %v3042, %v3038
      %v3044 = vrot.slane %v3043, 4
      %v3046 = vshll.u32 %v2833, 16
      %v3048 = vrot.slane %v3046, 5
      %v3049 = vsel %vm1054, %v3044, %v3048
      %v3051 = vshrl.u32 %v2834, 16
      %v3053 = vrot.slane %v3051, 4
      %v3054 = vshll.u32 %v2834, 16
      %v3056 = vrot.slane %v3054, 5
      %v3057 = vor.u32 %v3053, %v3056
      %v3058 = vrot.slane %v3057, 4
      %v3060 = vshll.u32 %v2835, 16
      %v3062 = vrot.slane %v3060, 5
      %v3063 = vsel %vm1054, %v3058, %v3062
      %v3064 = vshrl.u32 %v2835, 16
      %v3066 = vrot.slane %v3064, 4
      %v3067 = vor.u32 %v3066, %v3062
      %v3068 = vrot.slane %v3067, 4
      %v3070 = vshll.u32 %v2836, 16
      %v3072 = vrot.slane %v3070, 5
      %v3073 = vsel %vm1054, %v3068, %v3072
      %v3075 = vshrl.u32 %v2837, 16
      %v3077 = vrot.slane %v3075, 4
      %v3078 = vshll.u32 %v2837, 16
      %v3080 = vrot.slane %v3078, 5
      %v3081 = vor.u32 %v3077, %v3080
      %v3082 = vrot.slane %v3081, 4
      %v3084 = vshll.u32 %v2838, 16
      %v3086 = vrot.slane %v3084, 5
      %v3087 = vsel %vm1054, %v3082, %v3086
      %v3088 = vshrl.u32 %v2838, 16
      %v3090 = vrot.slane %v3088, 4
      %v3091 = vor.u32 %v3090, %v3086
      %v3092 = vrot.slane %v3091, 4
      %v3094 = vshll.u32 %v2839, 16
      %v3096 = vrot.slane %v3094, 5
      %v3097 = vsel %vm1054, %v3092, %v3096
      %v3099 = vshrl.u32 %v2840, 16
      %v3101 = vrot.slane %v3099, 4
      %v3102 = vshll.u32 %v2840, 16
      %v3104 = vrot.slane %v3102, 5
      %v3105 = vor.u32 %v3101, %v3104
      %v3106 = vrot.slane %v3105, 4
      %v3108 = vshll.u32 %v2841, 16
      %v3110 = vrot.slane %v3108, 5
      %v3111 = vsel %vm1054, %v3106, %v3110
      %v3112 = vshrl.u32 %v2841, 16
      %v3114 = vrot.slane %v3112, 4
      %v3115 = vor.u32 %v3114, %v3110
      %v3116 = vrot.slane %v3115, 4
      %v3118 = vshll.u32 %v2842, 16
      %v3120 = vrot.slane %v3118, 5
      %v3121 = vsel %vm1054, %v3116, %v3120
      %v3123 = vshrl.u32 %v2843, 16
      %v3125 = vrot.slane %v3123, 4
      %v3126 = vshll.u32 %v2843, 16
      %v3128 = vrot.slane %v3126, 5
      %v3129 = vor.u32 %v3125, %v3128
      %v3130 = vrot.slane %v3129, 4
      %v3132 = vshll.u32 %v2844, 16
      %v3134 = vrot.slane %v3132, 5
      %v3135 = vsel %vm1054, %v3130, %v3134
      %v3136 = vshrl.u32 %v2844, 16
      %v3138 = vrot.slane %v3136, 4
      %v3139 = vor.u32 %v3138, %v3134
      %v3140 = vrot.slane %v3139, 4
      %v3142 = vshll.u32 %v2845, 16
      %v3144 = vrot.slane %v3142, 5
      %v3145 = vsel %vm1054, %v3140, %v3144
      %v3147 = vshrl.u32 %v2846, 16
      %v3149 = vrot.slane %v3147, 4
      %v3150 = vshll.u32 %v2846, 16
      %v3152 = vrot.slane %v3150, 5
      %v3153 = vor.u32 %v3149, %v3152
      %v3154 = vrot.slane %v3153, 4
      %v3156 = vshll.u32 %v2847, 16
      %v3158 = vrot.slane %v3156, 5
      %v3159 = vsel %vm1054, %v3154, %v3158
      %v3160 = vshrl.u32 %v2847, 16
      %v3162 = vrot.slane %v3160, 4
      %v3163 = vor.u32 %v3162, %v3158
      %v3164 = vrot.slane %v3163, 4
      %v3166 = vshll.u32 %v2848, 16
      %v3168 = vrot.slane %v3166, 5
      %v3169 = vsel %vm1054, %v3164, %v3168
      %v3171 = vshrl.u32 %v2849, 16
      %v3173 = vrot.slane %v3171, 4
      %v3174 = vshll.u32 %v2849, 16
      %v3176 = vrot.slane %v3174, 5
      %v3177 = vor.u32 %v3173, %v3176
      %v3178 = vrot.slane %v3177, 4
      %v3180 = vshll.u32 %v2850, 16
      %v3182 = vrot.slane %v3180, 5
      %v3183 = vsel %vm1054, %v3178, %v3182
      %v3184 = vshrl.u32 %v2850, 16
      %v3186 = vrot.slane %v3184, 4
      %v3187 = vor.u32 %v3186, %v3182
      %v3188 = vrot.slane %v3187, 4
      %v3190 = vshll.u32 %v2851, 16
      %v3192 = vrot.slane %v3190, 5
      %v3193 = vsel %vm1054, %v3188, %v3192
      %v3195 = vshrl.u32 %v2852, 16
      %v3197 = vrot.slane %v3195, 4
      %v3198 = vshll.u32 %v2852, 16
      %v3200 = vrot.slane %v3198, 5
      %v3201 = vor.u32 %v3197, %v3200
      %v3202 = vrot.slane %v3201, 4
      %v3204 = vshll.u32 %v2853, 16
      %v3206 = vrot.slane %v3204, 5
      %v3207 = vsel %vm1054, %v3202, %v3206
      %v3208 = vshrl.u32 %v2853, 16
      %v3210 = vrot.slane %v3208, 4
      %v3211 = vor.u32 %v3210, %v3206
      %v3212 = vrot.slane %v3211, 4
      %v3214 = vshll.u32 %v2854, 16
      %v3216 = vrot.slane %v3214, 5
      %v3217 = vsel %vm1054, %v3212, %v3216
      %v3219 = vshrl.u32 %v2855, 16
      %v3221 = vrot.slane %v3219, 4
      %v3222 = vshll.u32 %v2855, 16
      %v3224 = vrot.slane %v3222, 5
      %v3225 = vor.u32 %v3221, %v3224
      %v3226 = vrot.slane %v3225, 4
      %v3228 = vshll.u32 %v2856, 16
      %v3230 = vrot.slane %v3228, 5
      %v3231 = vsel %vm1054, %v3226, %v3230
      %v3232 = vshrl.u32 %v2856, 16
      %v3234 = vrot.slane %v3232, 4
      %v3235 = vor.u32 %v3234, %v3230
      %v3236 = vrot.slane %v3235, 4
      %v3238 = vshll.u32 %v2857, 16
      %v3240 = vrot.slane %v3238, 5
      %v3241 = vsel %vm1054, %v3236, %v3240
      %s3242 = scalar_lea.vmem %s3, 8
      %v3243 = vld [vmem:[%s3242] sm:$0x3]
      %v3244 = vunpack.c.l.b16 %v2871
      %v3245 = vunpack.c.l.b16 %v2881
      %v3246 = vunpack.c.l.b16 %v2895
      %v3247 = vunpack.c.l.b16 %v2905
      %v3248 = vunpack.c.l.b16 %v2919
      %v3249 = vunpack.c.l.b16 %v2929
      %v3250 = vunpack.c.l.b16 %v2943
      %v3251 = vunpack.c.l.b16 %v2953
      %v3252 = vunpack.c.l.b16 %v2967
      %v3253 = vunpack.c.l.b16 %v2977
      %v3254 = vunpack.c.l.b16 %v2991
      %v3255 = vunpack.c.l.b16 %v3001
      %v3256 = vunpack.c.l.b16 %v3015
      %v3257 = vunpack.c.l.b16 %v3025
      %v3258 = vunpack.c.l.b16 %v3039
      %v3259 = vunpack.c.l.b16 %v3049
      %v3260 = vunpack.c.l.b16 %v3063
      %v3261 = vunpack.c.l.b16 %v3073
      %v3262 = vunpack.c.l.b16 %v3087
      %v3263 = vunpack.c.l.b16 %v3097
      %v3264 = vunpack.c.l.b16 %v3111
      %v3265 = vunpack.c.l.b16 %v3121
      %v3266 = vunpack.c.l.b16 %v3135
      %v3267 = vunpack.c.l.b16 %v3145
      %v3268 = vunpack.c.l.b16 %v3159
      %v3269 = vunpack.c.l.b16 %v3169
      %v3270 = vunpack.c.l.b16 %v3183
      %v3271 = vunpack.c.l.b16 %v3193
      %v3272 = vunpack.c.l.b16 %v3207
      %v3273 = vunpack.c.l.b16 %v3217
      %v3274 = vunpack.c.l.b16 %v3231
      %v3275 = vunpack.c.l.b16 %v3241
      %v3276 = vpack.c.b16 %v3245, %v3244
      %v3277 = vpack.c.b16 %v3247, %v3246
      %v3278 = vpack.c.b16 %v3249, %v3248
      %v3279 = vpack.c.b16 %v3251, %v3250
      %v3280 = vpack.c.b16 %v3253, %v3252
      %v3281 = vpack.c.b16 %v3255, %v3254
      %v3282 = vpack.c.b16 %v3257, %v3256
      %v3283 = vpack.c.b16 %v3259, %v3258
      %v3284 = vpack.c.b16 %v3261, %v3260
      %v3285 = vpack.c.b16 %v3263, %v3262
      %v3286 = vpack.c.b16 %v3265, %v3264
      %v3287 = vpack.c.b16 %v3267, %v3266
      %v3288 = vpack.c.b16 %v3269, %v3268
      %v3289 = vpack.c.b16 %v3271, %v3270
      %v3290 = vpack.c.b16 %v3273, %v3272
      %v3291 = vpack.c.b16 %v3275, %v3274
      %v3293 = vsel %vm1489, %v3276, 0
      %v3296 = vsel %vm1489, %v3277, 0
      %v3299 = vsel %vm1489, %v3278, 0
      %v3302 = vsel %vm1489, %v3279, 0
      %v3305 = vsel %vm1489, %v3280, 0
      %v3308 = vsel %vm1489, %v3281, 0
      %v3311 = vsel %vm1489, %v3282, 0
      %v3314 = vsel %vm1489, %v3283, 0
      %v3317 = vsel %vm1489, %v3284, 0
      %v3320 = vsel %vm1489, %v3285, 0
      %v3323 = vsel %vm1489, %v3286, 0
      %v3326 = vsel %vm1489, %v3287, 0
      %v3329 = vsel %vm1489, %v3288, 0
      %v3332 = vsel %vm1489, %v3289, 0
      %v3335 = vsel %vm1489, %v3290, 0
      %v3338 = vsel %vm1489, %v3291, 0
      %v3341 = vsel %vm1538, %v3243, 0
      %3343 = vmatprep.subr.bf16.mxu0 0
      %3344 = vmatpush1.bf16.msra.mxu0 %v3341
      %3345 = vmatprep.subr.bf16.mxu0 0
      %3346 = vmatpush1.bf16.msra.mxu0 0
      %3347 = vmatprep.subr.bf16.mxu0 0
      %3348 = vmatpush1.bf16.msra.mxu0 0
      %3349 = vmatprep.subr.bf16.mxu0 0
      %3350 = vmatpush1.bf16.msra.mxu0 0
      %3351 = vmatprep.subr.bf16.mxu0 0
      %3352 = vmatpush1.bf16.msra.mxu0 0
      %3353 = vmatprep.subr.bf16.mxu0 0
      %3354 = vmatpush1.bf16.msra.mxu0 0
      %3355 = vmatprep.subr.bf16.mxu0 0
      %3356 = vmatpush1.bf16.msra.mxu0 0
      %3357 = vmatprep.subr.bf16.mxu0 0
      %3358 = vmatpush1.bf16.msra.mxu0 0
      %3359 = vmatprep.subr.bf16.mxu0 0
      %3360 = vmatpush1.bf16.msra.mxu0 0
      %3361 = vmatprep.subr.bf16.mxu0 0
      %3362 = vmatpush1.bf16.msra.mxu0 0
      %3363 = vmatprep.subr.bf16.mxu0 0
      %3364 = vmatpush1.bf16.msra.mxu0 0
      %3365 = vmatprep.subr.bf16.mxu0 0
      %3366 = vmatpush1.bf16.msra.mxu0 0
      %3367 = vmatprep.subr.bf16.mxu0 0
      %3368 = vmatpush1.bf16.msra.mxu0 0
      %3369 = vmatprep.subr.bf16.mxu0 0
      %3370 = vmatpush1.bf16.msra.mxu0 0
      %3371 = vmatprep.subr.bf16.mxu0 0
      %3372 = vmatpush1.bf16.msra.mxu0 0
      %3373 = vmatprep.subr.bf16.mxu0 0
      %3374 = vmatpush1.bf16.msra.mxu0 0
      %3375 = vmatprep.mubr.bf16.mxu0 0
      %3376 = vmatmul.mubr.bf16.gmra.mrb[0].mxu0 %v3293
      %v3377 = vpop.f32.mrb[0].mxu0
      %v3378 = vadd.f32 0.0, %v3377
      %v3379 = vpop.f32.mrb[0].mxu0
      %v3380 = vpop.f32.mrb[0].mxu0
      %v3381 = vadd.f32 0.0, %v3380
      %v3382 = vpop.f32.mrb[0].mxu0
      %3383 = vmatprep.mubr.bf16.mxu0 0
      %3384 = vmatmul.mubr.bf16.gmra.mrb[0].mxu0 %v3296
      %v3385 = vpop.f32.mrb[0].mxu0
      %v3386 = vadd.f32 0.0, %v3385
      %v3387 = vpop.f32.mrb[0].mxu0
      %v3388 = vpop.f32.mrb[0].mxu0
      %v3389 = vadd.f32 0.0, %v3388
      %v3390 = vpop.f32.mrb[0].mxu0
      %3391 = vmatprep.mubr.bf16.mxu0 0
      %3392 = vmatmul.mubr.bf16.gmra.mrb[0].mxu0 %v3299
      %v3393 = vpop.f32.mrb[0].mxu0
      %v3394 = vadd.f32 0.0, %v3393
      %v3395 = vpop.f32.mrb[0].mxu0
      %v3396 = vpop.f32.mrb[0].mxu0
      %v3397 = vadd.f32 0.0, %v3396
      %v3398 = vpop.f32.mrb[0].mxu0
      %3399 = vmatprep.mubr.bf16.mxu0 0
      %3400 = vmatmul.mubr.bf16.gmra.mrb[0].mxu0 %v3302
      %v3401 = vpop.f32.mrb[0].mxu0
      %v3402 = vadd.f32 0.0, %v3401
      %v3403 = vpop.f32.mrb[0].mxu0
      %v3404 = vpop.f32.mrb[0].mxu0
      %v3405 = vadd.f32 0.0, %v3404
      %v3406 = vpop.f32.mrb[0].mxu0
      %3407 = vmatprep.mubr.bf16.mxu0 0
      %3408 = vmatmul.mubr.bf16.gmra.mrb[0].mxu0 %v3305
      %v3409 = vpop.f32.mrb[0].mxu0
      %v3410 = vadd.f32 0.0, %v3409
      %v3411 = vpop.f32.mrb[0].mxu0
      %v3412 = vpop.f32.mrb[0].mxu0
      %v3413 = vadd.f32 0.0, %v3412
      %v3414 = vpop.f32.mrb[0].mxu0
      %3415 = vmatprep.mubr.bf16.mxu0 0
      %3416 = vmatmul.mubr.bf16.gmra.mrb[0].mxu0 %v3308
      %v3417 = vpop.f32.mrb[0].mxu0
      %v3418 = vadd.f32 0.0, %v3417
      %v3419 = vpop.f32.mrb[0].mxu0
      %v3420 = vpop.f32.mrb[0].mxu0
      %v3421 = vadd.f32 0.0, %v3420
      %v3422 = vpop.f32.mrb[0].mxu0
      %3423 = vmatprep.mubr.bf16.mxu0 0
      %3424 = vmatmul.mubr.bf16.gmra.mrb[0].mxu0 %v3311
      %v3425 = vpop.f32.mrb[0].mxu0
      %v3426 = vadd.f32 0.0, %v3425
      %v3427 = vpop.f32.mrb[0].mxu0
      %v3428 = vpop.f32.mrb[0].mxu0
      %v3429 = vadd.f32 0.0, %v3428
      %v3430 = vpop.f32.mrb[0].mxu0
      %3431 = vmatprep.mubr.bf16.mxu0 0
      %3432 = vmatmul.mubr.bf16.gmra.mrb[0].mxu0 %v3314
      %v3433 = vpop.f32.mrb[0].mxu0
      %v3434 = vadd.f32 0.0, %v3433
      %v3435 = vpop.f32.mrb[0].mxu0
      %v3436 = vpop.f32.mrb[0].mxu0
      %v3437 = vadd.f32 0.0, %v3436
      %v3438 = vpop.f32.mrb[0].mxu0
      %3439 = vmatprep.mubr.bf16.mxu0 0
      %3440 = vmatmul.mubr.bf16.gmra.mrb[0].mxu0 %v3317
      %v3441 = vpop.f32.mrb[0].mxu0
      %v3442 = vadd.f32 0.0, %v3441
      %v3443 = vpop.f32.mrb[0].mxu0
      %v3444 = vpop.f32.mrb[0].mxu0
      %v3445 = vadd.f32 0.0, %v3444
      %v3446 = vpop.f32.mrb[0].mxu0
      %3447 = vmatprep.mubr.bf16.mxu0 0
      %3448 = vmatmul.mubr.bf16.gmra.mrb[0].mxu0 %v3320
      %v3449 = vpop.f32.mrb[0].mxu0
      %v3450 = vadd.f32 0.0, %v3449
      %v3451 = vpop.f32.mrb[0].mxu0
      %v3452 = vpop.f32.mrb[0].mxu0
      %v3453 = vadd.f32 0.0, %v3452
      %v3454 = vpop.f32.mrb[0].mxu0
      %3455 = vmatprep.mubr.bf16.mxu0 0
      %3456 = vmatmul.mubr.bf16.gmra.mrb[0].mxu0 %v3323
      %v3457 = vpop.f32.mrb[0].mxu0
      %v3458 = vadd.f32 0.0, %v3457
      %v3459 = vpop.f32.mrb[0].mxu0
      %v3460 = vpop.f32.mrb[0].mxu0
      %v3461 = vadd.f32 0.0, %v3460
      %v3462 = vpop.f32.mrb[0].mxu0
      %3463 = vmatprep.mubr.bf16.mxu0 0
      %3464 = vmatmul.mubr.bf16.gmra.mrb[0].mxu0 %v3326
      %v3465 = vpop.f32.mrb[0].mxu0
      %v3466 = vadd.f32 0.0, %v3465
      %v3467 = vpop.f32.mrb[0].mxu0
      %v3468 = vpop.f32.mrb[0].mxu0
      %v3469 = vadd.f32 0.0, %v3468
      %v3470 = vpop.f32.mrb[0].mxu0
      %3471 = vmatprep.mubr.bf16.mxu0 0
      %3472 = vmatmul.mubr.bf16.gmra.mrb[0].mxu0 %v3329
      %v3473 = vpop.f32.mrb[0].mxu0
      %v3474 = vadd.f32 0.0, %v3473
      %v3475 = vpop.f32.mrb[0].mxu0
      %v3476 = vpop.f32.mrb[0].mxu0
      %v3477 = vadd.f32 0.0, %v3476
      %v3478 = vpop.f32.mrb[0].mxu0
      %3479 = vmatprep.mubr.bf16.mxu0 0
      %3480 = vmatmul.mubr.bf16.gmra.mrb[0].mxu0 %v3332
      %v3481 = vpop.f32.mrb[0].mxu0
      %v3482 = vadd.f32 0.0, %v3481
      %v3483 = vpop.f32.mrb[0].mxu0
      %v3484 = vpop.f32.mrb[0].mxu0
      %v3485 = vadd.f32 0.0, %v3484
      %v3486 = vpop.f32.mrb[0].mxu0
      %3487 = vmatprep.mubr.bf16.mxu0 0
      %3488 = vmatmul.mubr.bf16.gmra.mrb[0].mxu0 %v3335
      %v3489 = vpop.f32.mrb[0].mxu0
      %v3490 = vadd.f32 0.0, %v3489
      %v3491 = vpop.f32.mrb[0].mxu0
      %v3492 = vpop.f32.mrb[0].mxu0
      %v3493 = vadd.f32 0.0, %v3492
      %v3494 = vpop.f32.mrb[0].mxu0
      %3495 = vmatprep.mubr.bf16.mxu0 0
      %3496 = vmatmul.mubr.bf16.gmra.mrb[0].mxu0 %v3338
      %v3497 = vpop.f32.mrb[0].mxu0
      %v3498 = vadd.f32 0.0, %v3497
      %v3499 = vpop.f32.mrb[0].mxu0
      %v3500 = vpop.f32.mrb[0].mxu0
      %v3501 = vadd.f32 0.0, %v3500
      %v3502 = vpop.f32.mrb[0].mxu0
      %3503 = vdwg.mxu0
      %v3504 = vadd.f32 %v2778, %v3378
      %v3505 = vadd.f32 %v2779, %v3381
      %v3506 = vadd.f32 %v2780, %v3386
      %v3507 = vadd.f32 %v2781, %v3389
      %v3508 = vadd.f32 %v2782, %v3394
      %v3509 = vadd.f32 %v2783, %v3397
      %v3510 = vadd.f32 %v2784, %v3402
      %v3511 = vadd.f32 %v2785, %v3405
      %v3512 = vadd.f32 %v2786, %v3410
      %v3513 = vadd.f32 %v2787, %v3413
      %v3514 = vadd.f32 %v2788, %v3418
      %v3515 = vadd.f32 %v2789, %v3421
      %v3516 = vadd.f32 %v2790, %v3426
      %v3517 = vadd.f32 %v2791, %v3429
      %v3518 = vadd.f32 %v2792, %v3434
      %v3519 = vadd.f32 %v2793, %v3437
      %v3520 = vadd.f32 %v2794, %v3442
      %v3521 = vadd.f32 %v2795, %v3445
      %v3522 = vadd.f32 %v2796, %v3450
      %v3523 = vadd.f32 %v2797, %v3453
      %v3524 = vadd.f32 %v2798, %v3458
      %v3525 = vadd.f32 %v2799, %v3461
      %v3526 = vadd.f32 %v2800, %v3466
      %v3527 = vadd.f32 %v2801, %v3469
      %v3528 = vadd.f32 %v2802, %v3474
      %v3529 = vadd.f32 %v2803, %v3477
      %v3530 = vadd.f32 %v2804, %v3482
      %v3531 = vadd.f32 %v2805, %v3485
      %v3532 = vadd.f32 %v2806, %v3490
      %v3533 = vadd.f32 %v2807, %v3493
      %v3534 = vadd.f32 %v2808, %v3498
      %v3535 = vadd.f32 %v2809, %v3501
      %v3536 = vld [vmem:[%s885] sm:$0xe]
      %v3537 = vld [vmem:[%s885 + $0xc] sm:$0xe]
      %v3538 = vld [vmem:[%s885 + $0x18] sm:$0xe]
      %v3539 = vld [vmem:[%s885 + $0x24] sm:$0xe]
      %v3540 = vld [vmem:[%s885 + $0x30] sm:$0xe]
      %v3541 = vld [vmem:[%s885 + $0x3c] sm:$0xe]
      %v3542 = vld [vmem:[%s885 + $0x48] sm:$0xe]
      %v3543 = vld [vmem:[%s885 + $0x54] sm:$0xe]
      %v3544 = vld [vmem:[%s885 + $0x60] sm:$0xe]
      %v3545 = vld [vmem:[%s885 + $0x6c] sm:$0xe]
      %v3546 = vld [vmem:[%s885 + $0x78] sm:$0xe]
      %v3547 = vld [vmem:[%s885 + $0x84] sm:$0xe]
      %v3548 = vld [vmem:[%s885 + $0x90] sm:$0xe]
      %v3549 = vld [vmem:[%s885 + $0x9c] sm:$0xe]
      %v3550 = vld [vmem:[%s885 + $0xa8] sm:$0xe]
      %v3551 = vld [vmem:[%s885 + $0xb4] sm:$0xe]
      %v3600 = vrot.slane %v3536, 5
      %v3601 = vrot.slane %v3600, 4
      %v3602 = vrot.slane %v2811, 5
      %v3603 = vsel %vm2045, %v3601, %v3602
      %v3604 = vrot.slane %v3602, 4
      %v3605 = vrot.slane %v2812, 5
      %v3606 = vsel %vm2045, %v3604, %v3605
      %v3607 = vrot.slane %v3537, 5
      %v3608 = vrot.slane %v3607, 4
      %v3609 = vrot.slane %v2814, 5
      %v3610 = vsel %vm2045, %v3608, %v3609
      %v3611 = vrot.slane %v3609, 4
      %v3612 = vrot.slane %v2815, 5
      %v3613 = vsel %vm2045, %v3611, %v3612
      %v3614 = vrot.slane %v3538, 5
      %v3615 = vrot.slane %v3614, 4
      %v3616 = vrot.slane %v2817, 5
      %v3617 = vsel %vm2045, %v3615, %v3616
      %v3618 = vrot.slane %v3616, 4
      %v3619 = vrot.slane %v2818, 5
      %v3620 = vsel %vm2045, %v3618, %v3619
      %v3621 = vrot.slane %v3539, 5
      %v3622 = vrot.slane %v3621, 4
      %v3623 = vrot.slane %v2820, 5
      %v3624 = vsel %vm2045, %v3622, %v3623
      %v3625 = vrot.slane %v3623, 4
      %v3626 = vrot.slane %v2821, 5
      %v3627 = vsel %vm2045, %v3625, %v3626
      %v3628 = vrot.slane %v3540, 5
      %v3629 = vrot.slane %v3628, 4
      %v3630 = vrot.slane %v2823, 5
      %v3631 = vsel %vm2045, %v3629, %v3630
      %v3632 = vrot.slane %v3630, 4
      %v3633 = vrot.slane %v2824, 5
      %v3634 = vsel %vm2045, %v3632, %v3633
      %v3635 = vrot.slane %v3541, 5
      %v3636 = vrot.slane %v3635, 4
      %v3637 = vrot.slane %v2826, 5
      %v3638 = vsel %vm2045, %v3636, %v3637
      %v3639 = vrot.slane %v3637, 4
      %v3640 = vrot.slane %v2827, 5
      %v3641 = vsel %vm2045, %v3639, %v3640
      %v3642 = vrot.slane %v3542, 5
      %v3643 = vrot.slane %v3642, 4
      %v3644 = vrot.slane %v2829, 5
      %v3645 = vsel %vm2045, %v3643, %v3644
      %v3646 = vrot.slane %v3644, 4
      %v3647 = vrot.slane %v2830, 5
      %v3648 = vsel %vm2045, %v3646, %v3647
      %v3649 = vrot.slane %v3543, 5
      %v3650 = vrot.slane %v3649, 4
      %v3651 = vrot.slane %v2832, 5
      %v3652 = vsel %vm2045, %v3650, %v3651
      %v3653 = vrot.slane %v3651, 4
      %v3654 = vrot.slane %v2833, 5
      %v3655 = vsel %vm2045, %v3653, %v3654
      %v3656 = vrot.slane %v3544, 5
      %v3657 = vrot.slane %v3656, 4
      %v3658 = vrot.slane %v2835, 5
      %v3659 = vsel %vm2045, %v3657, %v3658
      %v3660 = vrot.slane %v3658, 4
      %v3661 = vrot.slane %v2836, 5
      %v3662 = vsel %vm2045, %v3660, %v3661
      %v3663 = vrot.slane %v3545, 5
      %v3664 = vrot.slane %v3663, 4
      %v3665 = vrot.slane %v2838, 5
      %v3666 = vsel %vm2045, %v3664, %v3665
      %v3667 = vrot.slane %v3665, 4
      %v3668 = vrot.slane %v2839, 5
      %v3669 = vsel %vm2045, %v3667, %v3668
      %v3670 = vrot.slane %v3546, 5
      %v3671 = vrot.slane %v3670, 4
      %v3672 = vrot.slane %v2841, 5
      %v3673 = vsel %vm2045, %v3671, %v3672
      %v3674 = vrot.slane %v3672, 4
      %v3675 = vrot.slane %v2842, 5
      %v3676 = vsel %vm2045, %v3674, %v3675
      %v3677 = vrot.slane %v3547, 5
      %v3678 = vrot.slane %v3677, 4
      %v3679 = vrot.slane %v2844, 5
      %v3680 = vsel %vm2045, %v3678, %v3679
      %v3681 = vrot.slane %v3679, 4
      %v3682 = vrot.slane %v2845, 5
      %v3683 = vsel %vm2045, %v3681, %v3682
      %v3684 = vrot.slane %v3548, 5
      %v3685 = vrot.slane %v3684, 4
      %v3686 = vrot.slane %v2847, 5
      %v3687 = vsel %vm2045, %v3685, %v3686
      %v3688 = vrot.slane %v3686, 4
      %v3689 = vrot.slane %v2848, 5
      %v3690 = vsel %vm2045, %v3688, %v3689
      %v3691 = vrot.slane %v3549, 5
      %v3692 = vrot.slane %v3691, 4
      %v3693 = vrot.slane %v2850, 5
      %v3694 = vsel %vm2045, %v3692, %v3693
      %v3695 = vrot.slane %v3693, 4
      %v3696 = vrot.slane %v2851, 5
      %v3697 = vsel %vm2045, %v3695, %v3696
      %v3698 = vrot.slane %v3550, 5
      %v3699 = vrot.slane %v3698, 4
      %v3700 = vrot.slane %v2853, 5
      %v3701 = vsel %vm2045, %v3699, %v3700
      %v3702 = vrot.slane %v3700, 4
      %v3703 = vrot.slane %v2854, 5
      %v3704 = vsel %vm2045, %v3702, %v3703
      %v3705 = vrot.slane %v3551, 5
      %v3706 = vrot.slane %v3705, 4
      %v3707 = vrot.slane %v2856, 5
      %v3708 = vsel %vm2045, %v3706, %v3707
      %v3709 = vrot.slane %v3707, 4
      %v3710 = vrot.slane %v2857, 5
      %v3711 = vsel %vm2045, %v3709, %v3710
      %s3712 = scalar_lea.vmem %s3, 10
      %v3713 = vld [vmem:[%s3712] sm:$0x3]
      %v3714 = vunpack.c.l.b16 %v3603
      %v3715 = vunpack.c.l.b16 %v3606
      %v3716 = vunpack.c.l.b16 %v3610
      %v3717 = vunpack.c.l.b16 %v3613
      %v3718 = vunpack.c.l.b16 %v3617
      %v3719 = vunpack.c.l.b16 %v3620
      %v3720 = vunpack.c.l.b16 %v3624
      %v3721 = vunpack.c.l.b16 %v3627
      %v3722 = vunpack.c.l.b16 %v3631
      %v3723 = vunpack.c.l.b16 %v3634
      %v3724 = vunpack.c.l.b16 %v3638
      %v3725 = vunpack.c.l.b16 %v3641
      %v3726 = vunpack.c.l.b16 %v3645
      %v3727 = vunpack.c.l.b16 %v3648
      %v3728 = vunpack.c.l.b16 %v3652
      %v3729 = vunpack.c.l.b16 %v3655
      %v3730 = vunpack.c.l.b16 %v3659
      %v3731 = vunpack.c.l.b16 %v3662
      %v3732 = vunpack.c.l.b16 %v3666
      %v3733 = vunpack.c.l.b16 %v3669
      %v3734 = vunpack.c.l.b16 %v3673
      %v3735 = vunpack.c.l.b16 %v3676
      %v3736 = vunpack.c.l.b16 %v3680
      %v3737 = vunpack.c.l.b16 %v3683
      %v3738 = vunpack.c.l.b16 %v3687
      %v3739 = vunpack.c.l.b16 %v3690
      %v3740 = vunpack.c.l.b16 %v3694
      %v3741 = vunpack.c.l.b16 %v3697
      %v3742 = vunpack.c.l.b16 %v3701
      %v3743 = vunpack.c.l.b16 %v3704
      %v3744 = vunpack.c.l.b16 %v3708
      %v3745 = vunpack.c.l.b16 %v3711
      %v3746 = vpack.c.b16 %v3715, %v3714
      %v3747 = vpack.c.b16 %v3717, %v3716
      %v3748 = vpack.c.b16 %v3719, %v3718
      %v3749 = vpack.c.b16 %v3721, %v3720
      %v3750 = vpack.c.b16 %v3723, %v3722
      %v3751 = vpack.c.b16 %v3725, %v3724
      %v3752 = vpack.c.b16 %v3727, %v3726
      %v3753 = vpack.c.b16 %v3729, %v3728
      %v3754 = vpack.c.b16 %v3731, %v3730
      %v3755 = vpack.c.b16 %v3733, %v3732
      %v3756 = vpack.c.b16 %v3735, %v3734
      %v3757 = vpack.c.b16 %v3737, %v3736
      %v3758 = vpack.c.b16 %v3739, %v3738
      %v3759 = vpack.c.b16 %v3741, %v3740
      %v3760 = vpack.c.b16 %v3743, %v3742
      %v3761 = vpack.c.b16 %v3745, %v3744
      %v3763 = vsel %vm1489, %v3746, 0
      %v3766 = vsel %vm1489, %v3747, 0
      %v3769 = vsel %vm1489, %v3748, 0
      %v3772 = vsel %vm1489, %v3749, 0
      %v3775 = vsel %vm1489, %v3750, 0
      %v3778 = vsel %vm1489, %v3751, 0
      %v3781 = vsel %vm1489, %v3752, 0
      %v3784 = vsel %vm1489, %v3753, 0
      %v3787 = vsel %vm1489, %v3754, 0
      %v3790 = vsel %vm1489, %v3755, 0
      %v3793 = vsel %vm1489, %v3756, 0
      %v3796 = vsel %vm1489, %v3757, 0
      %v3799 = vsel %vm1489, %v3758, 0
      %v3802 = vsel %vm1489, %v3759, 0
      %v3805 = vsel %vm1489, %v3760, 0
      %v3808 = vsel %vm1489, %v3761, 0
      %v3811 = vsel %vm1538, %v3713, 0
      %3813 = vmatprep.subr.bf16.mxu0 0
      %3814 = vmatpush1.bf16.msra.mxu0 %v3811
      %3815 = vmatprep.subr.bf16.mxu0 0
      %3816 = vmatpush1.bf16.msra.mxu0 0
      %3817 = vmatprep.subr.bf16.mxu0 0
      %3818 = vmatpush1.bf16.msra.mxu0 0
      %3819 = vmatprep.subr.bf16.mxu0 0
      %3820 = vmatpush1.bf16.msra.mxu0 0
      %3821 = vmatprep.subr.bf16.mxu0 0
      %3822 = vmatpush1.bf16.msra.mxu0 0
      %3823 = vmatprep.subr.bf16.mxu0 0
      %3824 = vmatpush1.bf16.msra.mxu0 0
      %3825 = vmatprep.subr.bf16.mxu0 0
      %3826 = vmatpush1.bf16.msra.mxu0 0
      %3827 = vmatprep.subr.bf16.mxu0 0
      %3828 = vmatpush1.bf16.msra.mxu0 0
      %3829 = vmatprep.subr.bf16.mxu0 0
      %3830 = vmatpush1.bf16.msra.mxu0 0
      %3831 = vmatprep.subr.bf16.mxu0 0
      %3832 = vmatpush1.bf16.msra.mxu0 0
      %3833 = vmatprep.subr.bf16.mxu0 0
      %3834 = vmatpush1.bf16.msra.mxu0 0
      %3835 = vmatprep.subr.bf16.mxu0 0
      %3836 = vmatpush1.bf16.msra.mxu0 0
      %3837 = vmatprep.subr.bf16.mxu0 0
      %3838 = vmatpush1.bf16.msra.mxu0 0
      %3839 = vmatprep.subr.bf16.mxu0 0
      %3840 = vmatpush1.bf16.msra.mxu0 0
      %3841 = vmatprep.subr.bf16.mxu0 0
      %3842 = vmatpush1.bf16.msra.mxu0 0
      %3843 = vmatprep.subr.bf16.mxu0 0
      %3844 = vmatpush1.bf16.msra.mxu0 0
      %3845 = vmatprep.mubr.bf16.mxu0 0
      %3846 = vmatmul.mubr.bf16.gmra.mrb[0].mxu0 %v3763
      %v3847 = vpop.f32.mrb[0].mxu0
      %v3848 = vadd.f32 0.0, %v3847
      %v3849 = vpop.f32.mrb[0].mxu0
      %v3850 = vpop.f32.mrb[0].mxu0
      %v3851 = vadd.f32 0.0, %v3850
      %v3852 = vpop.f32.mrb[0].mxu0
      %3853 = vmatprep.mubr.bf16.mxu0 0
      %3854 = vmatmul.mubr.bf16.gmra.mrb[0].mxu0 %v3766
      %v3855 = vpop.f32.mrb[0].mxu0
      %v3856 = vadd.f32 0.0, %v3855
      %v3857 = vpop.f32.mrb[0].mxu0
      %v3858 = vpop.f32.mrb[0].mxu0
      %v3859 = vadd.f32 0.0, %v3858
      %v3860 = vpop.f32.mrb[0].mxu0
      %3861 = vmatprep.mubr.bf16.mxu0 0
      %3862 = vmatmul.mubr.bf16.gmra.mrb[0].mxu0 %v3769
      %v3863 = vpop.f32.mrb[0].mxu0
      %v3864 = vadd.f32 0.0, %v3863
      %v3865 = vpop.f32.mrb[0].mxu0
      %v3866 = vpop.f32.mrb[0].mxu0
      %v3867 = vadd.f32 0.0, %v3866
      %v3868 = vpop.f32.mrb[0].mxu0
      %3869 = vmatprep.mubr.bf16.mxu0 0
      %3870 = vmatmul.mubr.bf16.gmra.mrb[0].mxu0 %v3772
      %v3871 = vpop.f32.mrb[0].mxu0
      %v3872 = vadd.f32 0.0, %v3871
      %v3873 = vpop.f32.mrb[0].mxu0
      %v3874 = vpop.f32.mrb[0].mxu0
      %v3875 = vadd.f32 0.0, %v3874
      %v3876 = vpop.f32.mrb[0].mxu0
      %3877 = vmatprep.mubr.bf16.mxu0 0
      %3878 = vmatmul.mubr.bf16.gmra.mrb[0].mxu0 %v3775
      %v3879 = vpop.f32.mrb[0].mxu0
      %v3880 = vadd.f32 0.0, %v3879
      %v3881 = vpop.f32.mrb[0].mxu0
      %v3882 = vpop.f32.mrb[0].mxu0
      %v3883 = vadd.f32 0.0, %v3882
      %v3884 = vpop.f32.mrb[0].mxu0
      %3885 = vmatprep.mubr.bf16.mxu0 0
      %3886 = vmatmul.mubr.bf16.gmra.mrb[0].mxu0 %v3778
      %v3887 = vpop.f32.mrb[0].mxu0
      %v3888 = vadd.f32 0.0, %v3887
      %v3889 = vpop.f32.mrb[0].mxu0
      %v3890 = vpop.f32.mrb[0].mxu0
      %v3891 = vadd.f32 0.0, %v3890
      %v3892 = vpop.f32.mrb[0].mxu0
      %3893 = vmatprep.mubr.bf16.mxu0 0
      %3894 = vmatmul.mubr.bf16.gmra.mrb[0].mxu0 %v3781
      %v3895 = vpop.f32.mrb[0].mxu0
      %v3896 = vadd.f32 0.0, %v3895
      %v3897 = vpop.f32.mrb[0].mxu0
      %v3898 = vpop.f32.mrb[0].mxu0
      %v3899 = vadd.f32 0.0, %v3898
      %v3900 = vpop.f32.mrb[0].mxu0
      %3901 = vmatprep.mubr.bf16.mxu0 0
      %3902 = vmatmul.mubr.bf16.gmra.mrb[0].mxu0 %v3784
      %v3903 = vpop.f32.mrb[0].mxu0
      %v3904 = vadd.f32 0.0, %v3903
      %v3905 = vpop.f32.mrb[0].mxu0
      %v3906 = vpop.f32.mrb[0].mxu0
      %v3907 = vadd.f32 0.0, %v3906
      %v3908 = vpop.f32.mrb[0].mxu0
      %3909 = vmatprep.mubr.bf16.mxu0 0
      %3910 = vmatmul.mubr.bf16.gmra.mrb[0].mxu0 %v3787
      %v3911 = vpop.f32.mrb[0].mxu0
      %v3912 = vadd.f32 0.0, %v3911
      %v3913 = vpop.f32.mrb[0].mxu0
      %v3914 = vpop.f32.mrb[0].mxu0
      %v3915 = vadd.f32 0.0, %v3914
      %v3916 = vpop.f32.mrb[0].mxu0
      %3917 = vmatprep.mubr.bf16.mxu0 0
      %3918 = vmatmul.mubr.bf16.gmra.mrb[0].mxu0 %v3790
      %v3919 = vpop.f32.mrb[0].mxu0
      %v3920 = vadd.f32 0.0, %v3919
      %v3921 = vpop.f32.mrb[0].mxu0
      %v3922 = vpop.f32.mrb[0].mxu0
      %v3923 = vadd.f32 0.0, %v3922
      %v3924 = vpop.f32.mrb[0].mxu0
      %3925 = vmatprep.mubr.bf16.mxu0 0
      %3926 = vmatmul.mubr.bf16.gmra.mrb[0].mxu0 %v3793
      %v3927 = vpop.f32.mrb[0].mxu0
      %v3928 = vadd.f32 0.0, %v3927
      %v3929 = vpop.f32.mrb[0].mxu0
      %v3930 = vpop.f32.mrb[0].mxu0
      %v3931 = vadd.f32 0.0, %v3930
      %v3932 = vpop.f32.mrb[0].mxu0
      %3933 = vmatprep.mubr.bf16.mxu0 0
      %3934 = vmatmul.mubr.bf16.gmra.mrb[0].mxu0 %v3796
      %v3935 = vpop.f32.mrb[0].mxu0
      %v3936 = vadd.f32 0.0, %v3935
      %v3937 = vpop.f32.mrb[0].mxu0
      %v3938 = vpop.f32.mrb[0].mxu0
      %v3939 = vadd.f32 0.0, %v3938
      %v3940 = vpop.f32.mrb[0].mxu0
      %3941 = vmatprep.mubr.bf16.mxu0 0
      %3942 = vmatmul.mubr.bf16.gmra.mrb[0].mxu0 %v3799
      %v3943 = vpop.f32.mrb[0].mxu0
      %v3944 = vadd.f32 0.0, %v3943
      %v3945 = vpop.f32.mrb[0].mxu0
      %v3946 = vpop.f32.mrb[0].mxu0
      %v3947 = vadd.f32 0.0, %v3946
      %v3948 = vpop.f32.mrb[0].mxu0
      %3949 = vmatprep.mubr.bf16.mxu0 0
      %3950 = vmatmul.mubr.bf16.gmra.mrb[0].mxu0 %v3802
      %v3951 = vpop.f32.mrb[0].mxu0
      %v3952 = vadd.f32 0.0, %v3951
      %v3953 = vpop.f32.mrb[0].mxu0
      %v3954 = vpop.f32.mrb[0].mxu0
      %v3955 = vadd.f32 0.0, %v3954
      %v3956 = vpop.f32.mrb[0].mxu0
      %3957 = vmatprep.mubr.bf16.mxu0 0
      %3958 = vmatmul.mubr.bf16.gmra.mrb[0].mxu0 %v3805
      %v3959 = vpop.f32.mrb[0].mxu0
      %v3960 = vadd.f32 0.0, %v3959
      %v3961 = vpop.f32.mrb[0].mxu0
      %v3962 = vpop.f32.mrb[0].mxu0
      %v3963 = vadd.f32 0.0, %v3962
      %v3964 = vpop.f32.mrb[0].mxu0
      %3965 = vmatprep.mubr.bf16.mxu0 0
      %3966 = vmatmul.mubr.bf16.gmra.mrb[0].mxu0 %v3808
      %v3967 = vpop.f32.mrb[0].mxu0
      %v3968 = vadd.f32 0.0, %v3967
      %v3969 = vpop.f32.mrb[0].mxu0
      %v3970 = vpop.f32.mrb[0].mxu0
      %v3971 = vadd.f32 0.0, %v3970
      %v3972 = vpop.f32.mrb[0].mxu0
      %3973 = vdwg.mxu0
      %v3974 = vadd.f32 %v3504, %v3848
      %v3975 = vadd.f32 %v3505, %v3851
      %v3976 = vadd.f32 %v3506, %v3856
      %v3977 = vadd.f32 %v3507, %v3859
      %v3978 = vadd.f32 %v3508, %v3864
      %v3979 = vadd.f32 %v3509, %v3867
      %v3980 = vadd.f32 %v3510, %v3872
      %v3981 = vadd.f32 %v3511, %v3875
      %v3982 = vadd.f32 %v3512, %v3880
      %v3983 = vadd.f32 %v3513, %v3883
      %v3984 = vadd.f32 %v3514, %v3888
      %v3985 = vadd.f32 %v3515, %v3891
      %v3986 = vadd.f32 %v3516, %v3896
      %v3987 = vadd.f32 %v3517, %v3899
      %v3988 = vadd.f32 %v3518, %v3904
      %v3989 = vadd.f32 %v3519, %v3907
      %v3990 = vadd.f32 %v3520, %v3912
      %v3991 = vadd.f32 %v3521, %v3915
      %v3992 = vadd.f32 %v3522, %v3920
      %v3993 = vadd.f32 %v3523, %v3923
      %v3994 = vadd.f32 %v3524, %v3928
      %v3995 = vadd.f32 %v3525, %v3931
      %v3996 = vadd.f32 %v3526, %v3936
      %v3997 = vadd.f32 %v3527, %v3939
      %v3998 = vadd.f32 %v3528, %v3944
      %v3999 = vadd.f32 %v3529, %v3947
      %v4000 = vadd.f32 %v3530, %v3952
      %v4001 = vadd.f32 %v3531, %v3955
      %v4002 = vadd.f32 %v3532, %v3960
      %v4003 = vadd.f32 %v3533, %v3963
      %v4004 = vadd.f32 %v3534, %v3968
      %v4005 = vadd.f32 %v3535, %v3971
      %s4006 = scalar_lea.vmem [#allocation2], 24
      %v4007 = vld [vmem:[%s4006] sm:$0xf]
      %v4008 = vld [vmem:[%s4006 + $0x4] sm:$0xf]
      %v4009 = vld [vmem:[%s4006 + $0xc] sm:$0xf]
      %v4010 = vld [vmem:[%s4006 + $0x10] sm:$0xf]
      %v4011 = vld [vmem:[%s4006 + $0x18] sm:$0xf]
      %v4012 = vld [vmem:[%s4006 + $0x1c] sm:$0xf]
      %v4013 = vld [vmem:[%s4006 + $0x24] sm:$0xf]
      %v4014 = vld [vmem:[%s4006 + $0x28] sm:$0xf]
      %v4015 = vld [vmem:[%s4006 + $0x30] sm:$0xf]
      %v4016 = vld [vmem:[%s4006 + $0x34] sm:$0xf]
      %v4017 = vld [vmem:[%s4006 + $0x3c] sm:$0xf]
      %v4018 = vld [vmem:[%s4006 + $0x40] sm:$0xf]
      %v4019 = vld [vmem:[%s4006 + $0x48] sm:$0xf]
      %v4020 = vld [vmem:[%s4006 + $0x4c] sm:$0xf]
      %v4021 = vld [vmem:[%s4006 + $0x54] sm:$0xf]
      %v4022 = vld [vmem:[%s4006 + $0x58] sm:$0xf]
      %v4023 = vld [vmem:[%s4006 + $0x60] sm:$0xf]
      %v4024 = vld [vmem:[%s4006 + $0x64] sm:$0xf]
      %v4025 = vld [vmem:[%s4006 + $0x6c] sm:$0xf]
      %v4026 = vld [vmem:[%s4006 + $0x70] sm:$0xf]
      %v4027 = vld [vmem:[%s4006 + $0x78] sm:$0xf]
      %v4028 = vld [vmem:[%s4006 + $0x7c] sm:$0xf]
      %v4029 = vld [vmem:[%s4006 + $0x84] sm:$0xf]
      %v4030 = vld [vmem:[%s4006 + $0x88] sm:$0xf]
      %v4031 = vld [vmem:[%s4006 + $0x90] sm:$0xf]
      %v4032 = vld [vmem:[%s4006 + $0x94] sm:$0xf]
      %v4033 = vld [vmem:[%s4006 + $0x9c] sm:$0xf]
      %v4034 = vld [vmem:[%s4006 + $0xa0] sm:$0xf]
      %v4035 = vld [vmem:[%s4006 + $0xa8] sm:$0xf]
      %v4036 = vld [vmem:[%s4006 + $0xac] sm:$0xf]
      %v4037 = vld [vmem:[%s4006 + $0xb4] sm:$0xf]
      %v4038 = vld [vmem:[%s4006 + $0xb8] sm:$0xf]
      %s4039 = scalar_lea.vmem %s3, 12
      %v4040 = vld [vmem:[%s4039] sm:$0x3]
      %v4073 = vunpack.c.l.b16 %v4007
      %v4074 = vunpack.c.l.b16 %v4008
      %v4075 = vunpack.c.l.b16 %v4009
      %v4076 = vunpack.c.l.b16 %v4010
      %v4077 = vunpack.c.l.b16 %v4011
      %v4078 = vunpack.c.l.b16 %v4012
      %v4079 = vunpack.c.l.b16 %v4013
      %v4080 = vunpack.c.l.b16 %v4014
      %v4081 = vunpack.c.l.b16 %v4015
      %v4082 = vunpack.c.l.b16 %v4016
      %v4083 = vunpack.c.l.b16 %v4017
      %v4084 = vunpack.c.l.b16 %v4018
      %v4085 = vunpack.c.l.b16 %v4019
      %v4086 = vunpack.c.l.b16 %v4020
      %v4087 = vunpack.c.l.b16 %v4021
      %v4088 = vunpack.c.l.b16 %v4022
      %v4089 = vunpack.c.l.b16 %v4023
      %v4090 = vunpack.c.l.b16 %v4024
      %v4091 = vunpack.c.l.b16 %v4025
      %v4092 = vunpack.c.l.b16 %v4026
      %v4093 = vunpack.c.l.b16 %v4027
      %v4094 = vunpack.c.l.b16 %v4028
      %v4095 = vunpack.c.l.b16 %v4029
      %v4096 = vunpack.c.l.b16 %v4030
      %v4097 = vunpack.c.l.b16 %v4031
      %v4098 = vunpack.c.l.b16 %v4032
      %v4099 = vunpack.c.l.b16 %v4033
      %v4100 = vunpack.c.l.b16 %v4034
      %v4101 = vunpack.c.l.b16 %v4035
      %v4102 = vunpack.c.l.b16 %v4036
      %v4103 = vunpack.c.l.b16 %v4037
      %v4104 = vunpack.c.l.b16 %v4038
      %v4105 = vpack.c.b16 %v4074, %v4073
      %v4106 = vpack.c.b16 %v4076, %v4075
      %v4107 = vpack.c.b16 %v4078, %v4077
      %v4108 = vpack.c.b16 %v4080, %v4079
      %v4109 = vpack.c.b16 %v4082, %v4081
      %v4110 = vpack.c.b16 %v4084, %v4083
      %v4111 = vpack.c.b16 %v4086, %v4085
      %v4112 = vpack.c.b16 %v4088, %v4087
      %v4113 = vpack.c.b16 %v4090, %v4089
      %v4114 = vpack.c.b16 %v4092, %v4091
      %v4115 = vpack.c.b16 %v4094, %v4093
      %v4116 = vpack.c.b16 %v4096, %v4095
      %v4117 = vpack.c.b16 %v4098, %v4097
      %v4118 = vpack.c.b16 %v4100, %v4099
      %v4119 = vpack.c.b16 %v4102, %v4101
      %v4120 = vpack.c.b16 %v4104, %v4103
      %v4122 = vsel %vm1489, %v4105, 0
      %v4125 = vsel %vm1489, %v4106, 0
      %v4128 = vsel %vm1489, %v4107, 0
      %v4131 = vsel %vm1489, %v4108, 0
      %v4134 = vsel %vm1489, %v4109, 0
      %v4137 = vsel %vm1489, %v4110, 0
      %v4140 = vsel %vm1489, %v4111, 0
      %v4143 = vsel %vm1489, %v4112, 0
      %v4146 = vsel %vm1489, %v4113, 0
      %v4149 = vsel %vm1489, %v4114, 0
      %v4152 = vsel %vm1489, %v4115, 0
      %v4155 = vsel %vm1489, %v4116, 0
      %v4158 = vsel %vm1489, %v4117, 0
      %v4161 = vsel %vm1489, %v4118, 0
      %v4164 = vsel %vm1489, %v4119, 0
      %v4167 = vsel %vm1489, %v4120, 0
      %v4170 = vsel %vm1538, %v4040, 0
      %4172 = vmatprep.subr.bf16.mxu0 0
      %4173 = vmatpush1.bf16.msra.mxu0 %v4170
      %4174 = vmatprep.subr.bf16.mxu0 0
      %4175 = vmatpush1.bf16.msra.mxu0 0
      %4176 = vmatprep.subr.bf16.mxu0 0
      %4177 = vmatpush1.bf16.msra.mxu0 0
      %4178 = vmatprep.subr.bf16.mxu0 0
      %4179 = vmatpush1.bf16.msra.mxu0 0
      %4180 = vmatprep.subr.bf16.mxu0 0
      %4181 = vmatpush1.bf16.msra.mxu0 0
      %4182 = vmatprep.subr.bf16.mxu0 0
      %4183 = vmatpush1.bf16.msra.mxu0 0
      %4184 = vmatprep.subr.bf16.mxu0 0
      %4185 = vmatpush1.bf16.msra.mxu0 0
      %4186 = vmatprep.subr.bf16.mxu0 0
      %4187 = vmatpush1.bf16.msra.mxu0 0
      %4188 = vmatprep.subr.bf16.mxu0 0
      %4189 = vmatpush1.bf16.msra.mxu0 0
      %4190 = vmatprep.subr.bf16.mxu0 0
      %4191 = vmatpush1.bf16.msra.mxu0 0
      %4192 = vmatprep.subr.bf16.mxu0 0
      %4193 = vmatpush1.bf16.msra.mxu0 0
      %4194 = vmatprep.subr.bf16.mxu0 0
      %4195 = vmatpush1.bf16.msra.mxu0 0
      %4196 = vmatprep.subr.bf16.mxu0 0
      %4197 = vmatpush1.bf16.msra.mxu0 0
      %4198 = vmatprep.subr.bf16.mxu0 0
      %4199 = vmatpush1.bf16.msra.mxu0 0
      %4200 = vmatprep.subr.bf16.mxu0 0
      %4201 = vmatpush1.bf16.msra.mxu0 0
      %4202 = vmatprep.subr.bf16.mxu0 0
      %4203 = vmatpush1.bf16.msra.mxu0 0
      %4204 = vmatprep.mubr.bf16.mxu0 0
      %4205 = vmatmul.mubr.bf16.gmra.mrb[0].mxu0 %v4122
      %v4206 = vpop.f32.mrb[0].mxu0
      %v4207 = vadd.f32 0.0, %v4206
      %v4208 = vpop.f32.mrb[0].mxu0
      %v4209 = vpop.f32.mrb[0].mxu0
      %v4210 = vadd.f32 0.0, %v4209
      %v4211 = vpop.f32.mrb[0].mxu0
      %4212 = vmatprep.mubr.bf16.mxu0 0
      %4213 = vmatmul.mubr.bf16.gmra.mrb[0].mxu0 %v4125
      %v4214 = vpop.f32.mrb[0].mxu0
      %v4215 = vadd.f32 0.0, %v4214
      %v4216 = vpop.f32.mrb[0].mxu0
      %v4217 = vpop.f32.mrb[0].mxu0
      %v4218 = vadd.f32 0.0, %v4217
      %v4219 = vpop.f32.mrb[0].mxu0
      %4220 = vmatprep.mubr.bf16.mxu0 0
      %4221 = vmatmul.mubr.bf16.gmra.mrb[0].mxu0 %v4128
      %v4222 = vpop.f32.mrb[0].mxu0
      %v4223 = vadd.f32 0.0, %v4222
      %v4224 = vpop.f32.mrb[0].mxu0
      %v4225 = vpop.f32.mrb[0].mxu0
      %v4226 = vadd.f32 0.0, %v4225
      %v4227 = vpop.f32.mrb[0].mxu0
      %4228 = vmatprep.mubr.bf16.mxu0 0
      %4229 = vmatmul.mubr.bf16.gmra.mrb[0].mxu0 %v4131
      %v4230 = vpop.f32.mrb[0].mxu0
      %v4231 = vadd.f32 0.0, %v4230
      %v4232 = vpop.f32.mrb[0].mxu0
      %v4233 = vpop.f32.mrb[0].mxu0
      %v4234 = vadd.f32 0.0, %v4233
      %v4235 = vpop.f32.mrb[0].mxu0
      %4236 = vmatprep.mubr.bf16.mxu0 0
      %4237 = vmatmul.mubr.bf16.gmra.mrb[0].mxu0 %v4134
      %v4238 = vpop.f32.mrb[0].mxu0
      %v4239 = vadd.f32 0.0, %v4238
      %v4240 = vpop.f32.mrb[0].mxu0
      %v4241 = vpop.f32.mrb[0].mxu0
      %v4242 = vadd.f32 0.0, %v4241
      %v4243 = vpop.f32.mrb[0].mxu0
      %4244 = vmatprep.mubr.bf16.mxu0 0
      %4245 = vmatmul.mubr.bf16.gmra.mrb[0].mxu0 %v4137
      %v4246 = vpop.f32.mrb[0].mxu0
      %v4247 = vadd.f32 0.0, %v4246
      %v4248 = vpop.f32.mrb[0].mxu0
      %v4249 = vpop.f32.mrb[0].mxu0
      %v4250 = vadd.f32 0.0, %v4249
      %v4251 = vpop.f32.mrb[0].mxu0
      %4252 = vmatprep.mubr.bf16.mxu0 0
      %4253 = vmatmul.mubr.bf16.gmra.mrb[0].mxu0 %v4140
      %v4254 = vpop.f32.mrb[0].mxu0
      %v4255 = vadd.f32 0.0, %v4254
      %v4256 = vpop.f32.mrb[0].mxu0
      %v4257 = vpop.f32.mrb[0].mxu0
      %v4258 = vadd.f32 0.0, %v4257
      %v4259 = vpop.f32.mrb[0].mxu0
      %4260 = vmatprep.mubr.bf16.mxu0 0
      %4261 = vmatmul.mubr.bf16.gmra.mrb[0].mxu0 %v4143
      %v4262 = vpop.f32.mrb[0].mxu0
      %v4263 = vadd.f32 0.0, %v4262
      %v4264 = vpop.f32.mrb[0].mxu0
      %v4265 = vpop.f32.mrb[0].mxu0
      %v4266 = vadd.f32 0.0, %v4265
      %v4267 = vpop.f32.mrb[0].mxu0
      %4268 = vmatprep.mubr.bf16.mxu0 0
      %4269 = vmatmul.mubr.bf16.gmra.mrb[0].mxu0 %v4146
      %v4270 = vpop.f32.mrb[0].mxu0
      %v4271 = vadd.f32 0.0, %v4270
      %v4272 = vpop.f32.mrb[0].mxu0
      %v4273 = vpop.f32.mrb[0].mxu0
      %v4274 = vadd.f32 0.0, %v4273
      %v4275 = vpop.f32.mrb[0].mxu0
      %4276 = vmatprep.mubr.bf16.mxu0 0
      %4277 = vmatmul.mubr.bf16.gmra.mrb[0].mxu0 %v4149
      %v4278 = vpop.f32.mrb[0].mxu0
      %v4279 = vadd.f32 0.0, %v4278
      %v4280 = vpop.f32.mrb[0].mxu0
      %v4281 = vpop.f32.mrb[0].mxu0
      %v4282 = vadd.f32 0.0, %v4281
      %v4283 = vpop.f32.mrb[0].mxu0
      %4284 = vmatprep.mubr.bf16.mxu0 0
      %4285 = vmatmul.mubr.bf16.gmra.mrb[0].mxu0 %v4152
      %v4286 = vpop.f32.mrb[0].mxu0
      %v4287 = vadd.f32 0.0, %v4286
      %v4288 = vpop.f32.mrb[0].mxu0
      %v4289 = vpop.f32.mrb[0].mxu0
      %v4290 = vadd.f32 0.0, %v4289
      %v4291 = vpop.f32.mrb[0].mxu0
      %4292 = vmatprep.mubr.bf16.mxu0 0
      %4293 = vmatmul.mubr.bf16.gmra.mrb[0].mxu0 %v4155
      %v4294 = vpop.f32.mrb[0].mxu0
      %v4295 = vadd.f32 0.0, %v4294
      %v4296 = vpop.f32.mrb[0].mxu0
      %v4297 = vpop.f32.mrb[0].mxu0
      %v4298 = vadd.f32 0.0, %v4297
      %v4299 = vpop.f32.mrb[0].mxu0
      %4300 = vmatprep.mubr.bf16.mxu0 0
      %4301 = vmatmul.mubr.bf16.gmra.mrb[0].mxu0 %v4158
      %v4302 = vpop.f32.mrb[0].mxu0
      %v4303 = vadd.f32 0.0, %v4302
      %v4304 = vpop.f32.mrb[0].mxu0
      %v4305 = vpop.f32.mrb[0].mxu0
      %v4306 = vadd.f32 0.0, %v4305
      %v4307 = vpop.f32.mrb[0].mxu0
      %4308 = vmatprep.mubr.bf16.mxu0 0
      %4309 = vmatmul.mubr.bf16.gmra.mrb[0].mxu0 %v4161
      %v4310 = vpop.f32.mrb[0].mxu0
      %v4311 = vadd.f32 0.0, %v4310
      %v4312 = vpop.f32.mrb[0].mxu0
      %v4313 = vpop.f32.mrb[0].mxu0
      %v4314 = vadd.f32 0.0, %v4313
      %v4315 = vpop.f32.mrb[0].mxu0
      %4316 = vmatprep.mubr.bf16.mxu0 0
      %4317 = vmatmul.mubr.bf16.gmra.mrb[0].mxu0 %v4164
      %v4318 = vpop.f32.mrb[0].mxu0
      %v4319 = vadd.f32 0.0, %v4318
      %v4320 = vpop.f32.mrb[0].mxu0
      %v4321 = vpop.f32.mrb[0].mxu0
      %v4322 = vadd.f32 0.0, %v4321
      %v4323 = vpop.f32.mrb[0].mxu0
      %4324 = vmatprep.mubr.bf16.mxu0 0
      %4325 = vmatmul.mubr.bf16.gmra.mrb[0].mxu0 %v4167
      %v4326 = vpop.f32.mrb[0].mxu0
      %v4327 = vadd.f32 0.0, %v4326
      %v4328 = vpop.f32.mrb[0].mxu0
      %v4329 = vpop.f32.mrb[0].mxu0
      %v4330 = vadd.f32 0.0, %v4329
      %v4331 = vpop.f32.mrb[0].mxu0
      %4332 = vdwg.mxu0
      %v4333 = vadd.f32 %v3974, %v4207
      %v4334 = vadd.f32 %v3975, %v4210
      %v4335 = vadd.f32 %v3976, %v4215
      %v4336 = vadd.f32 %v3977, %v4218
      %v4337 = vadd.f32 %v3978, %v4223
      %v4338 = vadd.f32 %v3979, %v4226
      %v4339 = vadd.f32 %v3980, %v4231
      %v4340 = vadd.f32 %v3981, %v4234
      %v4341 = vadd.f32 %v3982, %v4239
      %v4342 = vadd.f32 %v3983, %v4242
      %v4343 = vadd.f32 %v3984, %v4247
      %v4344 = vadd.f32 %v3985, %v4250
      %v4345 = vadd.f32 %v3986, %v4255
      %v4346 = vadd.f32 %v3987, %v4258
      %v4347 = vadd.f32 %v3988, %v4263
      %v4348 = vadd.f32 %v3989, %v4266
      %v4349 = vadd.f32 %v3990, %v4271
      %v4350 = vadd.f32 %v3991, %v4274
      %v4351 = vadd.f32 %v3992, %v4279
      %v4352 = vadd.f32 %v3993, %v4282
      %v4353 = vadd.f32 %v3994, %v4287
      %v4354 = vadd.f32 %v3995, %v4290
      %v4355 = vadd.f32 %v3996, %v4295
      %v4356 = vadd.f32 %v3997, %v4298
      %v4357 = vadd.f32 %v3998, %v4303
      %v4358 = vadd.f32 %v3999, %v4306
      %v4359 = vadd.f32 %v4000, %v4311
      %v4360 = vadd.f32 %v4001, %v4314
      %v4361 = vadd.f32 %v4002, %v4319
      %v4362 = vadd.f32 %v4003, %v4322
      %v4363 = vadd.f32 %v4004, %v4327
      %v4364 = vadd.f32 %v4005, %v4330
      %v4365 = vld [vmem:[%s4006] sm:$0xf]
      %v4366 = vld [vmem:[%s4006 + $0x4] sm:$0xf]
      %v4367 = vld [vmem:[%s4006 + $0x8] sm:$0x1]
      %v4368 = vld [vmem:[%s4006 + $0xc] sm:$0xf]
      %v4369 = vld [vmem:[%s4006 + $0x10] sm:$0xf]
      %v4370 = vld [vmem:[%s4006 + $0x14] sm:$0x1]
      %v4371 = vld [vmem:[%s4006 + $0x18] sm:$0xf]
      %v4372 = vld [vmem:[%s4006 + $0x1c] sm:$0xf]
      %v4373 = vld [vmem:[%s4006 + $0x20] sm:$0x1]
      %v4374 = vld [vmem:[%s4006 + $0x24] sm:$0xf]
      %v4375 = vld [vmem:[%s4006 + $0x28] sm:$0xf]
      %v4376 = vld [vmem:[%s4006 + $0x2c] sm:$0x1]
      %v4377 = vld [vmem:[%s4006 + $0x30] sm:$0xf]
      %v4378 = vld [vmem:[%s4006 + $0x34] sm:$0xf]
      %v4379 = vld [vmem:[%s4006 + $0x38] sm:$0x1]
      %v4380 = vld [vmem:[%s4006 + $0x3c] sm:$0xf]
      %v4381 = vld [vmem:[%s4006 + $0x40] sm:$0xf]
      %v4382 = vld [vmem:[%s4006 + $0x44] sm:$0x1]
      %v4383 = vld [vmem:[%s4006 + $0x48] sm:$0xf]
      %v4384 = vld [vmem:[%s4006 + $0x4c] sm:$0xf]
      %v4385 = vld [vmem:[%s4006 + $0x50] sm:$0x1]
      %v4386 = vld [vmem:[%s4006 + $0x54] sm:$0xf]
      %v4387 = vld [vmem:[%s4006 + $0x58] sm:$0xf]
      %v4388 = vld [vmem:[%s4006 + $0x5c] sm:$0x1]
      %v4389 = vld [vmem:[%s4006 + $0x60] sm:$0xf]
      %v4390 = vld [vmem:[%s4006 + $0x64] sm:$0xf]
      %v4391 = vld [vmem:[%s4006 + $0x68] sm:$0x1]
      %v4392 = vld [vmem:[%s4006 + $0x6c] sm:$0xf]
      %v4393 = vld [vmem:[%s4006 + $0x70] sm:$0xf]
      %v4394 = vld [vmem:[%s4006 + $0x74] sm:$0x1]
      %v4395 = vld [vmem:[%s4006 + $0x78] sm:$0xf]
      %v4396 = vld [vmem:[%s4006 + $0x7c] sm:$0xf]
      %v4397 = vld [vmem:[%s4006 + $0x80] sm:$0x1]
      %v4398 = vld [vmem:[%s4006 + $0x84] sm:$0xf]
      %v4399 = vld [vmem:[%s4006 + $0x88] sm:$0xf]
      %v4400 = vld [vmem:[%s4006 + $0x8c] sm:$0x1]
      %v4401 = vld [vmem:[%s4006 + $0x90] sm:$0xf]
      %v4402 = vld [vmem:[%s4006 + $0x94] sm:$0xf]
      %v4403 = vld [vmem:[%s4006 + $0x98] sm:$0x1]
      %v4404 = vld [vmem:[%s4006 + $0x9c] sm:$0xf]
      %v4405 = vld [vmem:[%s4006 + $0xa0] sm:$0xf]
      %v4406 = vld [vmem:[%s4006 + $0xa4] sm:$0x1]
      %v4407 = vld [vmem:[%s4006 + $0xa8] sm:$0xf]
      %v4408 = vld [vmem:[%s4006 + $0xac] sm:$0xf]
      %v4409 = vld [vmem:[%s4006 + $0xb0] sm:$0x1]
      %v4410 = vld [vmem:[%s4006 + $0xb4] sm:$0xf]
      %v4411 = vld [vmem:[%s4006 + $0xb8] sm:$0xf]
      %v4412 = vld [vmem:[%s4006 + $0xbc] sm:$0x1]
      %v4414 = vshrl.u32 %v4365, 16
      %v4416 = vrot.slane %v4414, 4
      %v4417 = vshll.u32 %v4365, 16
      %v4419 = vrot.slane %v4417, 5
      %v4420 = vor.u32 %v4416, %v4419
      %v4421 = vrot.slane %v4420, 4
      %v4423 = vshll.u32 %v4366, 16
      %v4425 = vrot.slane %v4423, 5
      %v4426 = vsel %vm1054, %v4421, %v4425
      %v4427 = vshrl.u32 %v4366, 16
      %v4429 = vrot.slane %v4427, 4
      %v4430 = vor.u32 %v4429, %v4425
      %v4431 = vrot.slane %v4430, 4
      %v4433 = vshll.u32 %v4367, 16
      %v4435 = vrot.slane %v4433, 5
      %v4436 = vsel %vm1054, %v4431, %v4435
      %v4438 = vshrl.u32 %v4368, 16
      %v4440 = vrot.slane %v4438, 4
      %v4441 = vshll.u32 %v4368, 16
      %v4443 = vrot.slane %v4441, 5
      %v4444 = vor.u32 %v4440, %v4443
      %v4445 = vrot.slane %v4444, 4
      %v4447 = vshll.u32 %v4369, 16
      %v4449 = vrot.slane %v4447, 5
      %v4450 = vsel %vm1054, %v4445, %v4449
      %v4451 = vshrl.u32 %v4369, 16
      %v4453 = vrot.slane %v4451, 4
      %v4454 = vor.u32 %v4453, %v4449
      %v4455 = vrot.slane %v4454, 4
      %v4457 = vshll.u32 %v4370, 16
      %v4459 = vrot.slane %v4457, 5
      %v4460 = vsel %vm1054, %v4455, %v4459
      %v4462 = vshrl.u32 %v4371, 16
      %v4464 = vrot.slane %v4462, 4
      %v4465 = vshll.u32 %v4371, 16
      %v4467 = vrot.slane %v4465, 5
      %v4468 = vor.u32 %v4464, %v4467
      %v4469 = vrot.slane %v4468, 4
      %v4471 = vshll.u32 %v4372, 16
      %v4473 = vrot.slane %v4471, 5
      %v4474 = vsel %vm1054, %v4469, %v4473
      %v4475 = vshrl.u32 %v4372, 16
      %v4477 = vrot.slane %v4475, 4
      %v4478 = vor.u32 %v4477, %v4473
      %v4479 = vrot.slane %v4478, 4
      %v4481 = vshll.u32 %v4373, 16
      %v4483 = vrot.slane %v4481, 5
      %v4484 = vsel %vm1054, %v4479, %v4483
      %v4486 = vshrl.u32 %v4374, 16
      %v4488 = vrot.slane %v4486, 4
      %v4489 = vshll.u32 %v4374, 16
      %v4491 = vrot.slane %v4489, 5
      %v4492 = vor.u32 %v4488, %v4491
      %v4493 = vrot.slane %v4492, 4
      %v4495 = vshll.u32 %v4375, 16
      %v4497 = vrot.slane %v4495, 5
      %v4498 = vsel %vm1054, %v4493, %v4497
      %v4499 = vshrl.u32 %v4375, 16
      %v4501 = vrot.slane %v4499, 4
      %v4502 = vor.u32 %v4501, %v4497
      %v4503 = vrot.slane %v4502, 4
      %v4505 = vshll.u32 %v4376, 16
      %v4507 = vrot.slane %v4505, 5
      %v4508 = vsel %vm1054, %v4503, %v4507
      %v4510 = vshrl.u32 %v4377, 16
      %v4512 = vrot.slane %v4510, 4
      %v4513 = vshll.u32 %v4377, 16
      %v4515 = vrot.slane %v4513, 5
      %v4516 = vor.u32 %v4512, %v4515
      %v4517 = vrot.slane %v4516, 4
      %v4519 = vshll.u32 %v4378, 16
      %v4521 = vrot.slane %v4519, 5
      %v4522 = vsel %vm1054, %v4517, %v4521
      %v4523 = vshrl.u32 %v4378, 16
      %v4525 = vrot.slane %v4523, 4
      %v4526 = vor.u32 %v4525, %v4521
      %v4527 = vrot.slane %v4526, 4
      %v4529 = vshll.u32 %v4379, 16
      %v4531 = vrot.slane %v4529, 5
      %v4532 = vsel %vm1054, %v4527, %v4531
      %v4534 = vshrl.u32 %v4380, 16
      %v4536 = vrot.slane %v4534, 4
      %v4537 = vshll.u32 %v4380, 16
      %v4539 = vrot.slane %v4537, 5
      %v4540 = vor.u32 %v4536, %v4539
      %v4541 = vrot.slane %v4540, 4
      %v4543 = vshll.u32 %v4381, 16
      %v4545 = vrot.slane %v4543, 5
      %v4546 = vsel %vm1054, %v4541, %v4545
      %v4547 = vshrl.u32 %v4381, 16
      %v4549 = vrot.slane %v4547, 4
      %v4550 = vor.u32 %v4549, %v4545
      %v4551 = vrot.slane %v4550, 4
      %v4553 = vshll.u32 %v4382, 16
      %v4555 = vrot.slane %v4553, 5
      %v4556 = vsel %vm1054, %v4551, %v4555
      %v4558 = vshrl.u32 %v4383, 16
      %v4560 = vrot.slane %v4558, 4
      %v4561 = vshll.u32 %v4383, 16
      %v4563 = vrot.slane %v4561, 5
      %v4564 = vor.u32 %v4560, %v4563
      %v4565 = vrot.slane %v4564, 4
      %v4567 = vshll.u32 %v4384, 16
      %v4569 = vrot.slane %v4567, 5
      %v4570 = vsel %vm1054, %v4565, %v4569
      %v4571 = vshrl.u32 %v4384, 16
      %v4573 = vrot.slane %v4571, 4
      %v4574 = vor.u32 %v4573, %v4569
      %v4575 = vrot.slane %v4574, 4
      %v4577 = vshll.u32 %v4385, 16
      %v4579 = vrot.slane %v4577, 5
      %v4580 = vsel %vm1054, %v4575, %v4579
      %v4582 = vshrl.u32 %v4386, 16
      %v4584 = vrot.slane %v4582, 4
      %v4585 = vshll.u32 %v4386, 16
      %v4587 = vrot.slane %v4585, 5
      %v4588 = vor.u32 %v4584, %v4587
      %v4589 = vrot.slane %v4588, 4
      %v4591 = vshll.u32 %v4387, 16
      %v4593 = vrot.slane %v4591, 5
      %v4594 = vsel %vm1054, %v4589, %v4593
      %v4595 = vshrl.u32 %v4387, 16
      %v4597 = vrot.slane %v4595, 4
      %v4598 = vor.u32 %v4597, %v4593
      %v4599 = vrot.slane %v4598, 4
      %v4601 = vshll.u32 %v4388, 16
      %v4603 = vrot.slane %v4601, 5
      %v4604 = vsel %vm1054, %v4599, %v4603
      %v4606 = vshrl.u32 %v4389, 16
      %v4608 = vrot.slane %v4606, 4
      %v4609 = vshll.u32 %v4389, 16
      %v4611 = vrot.slane %v4609, 5
      %v4612 = vor.u32 %v4608, %v4611
      %v4613 = vrot.slane %v4612, 4
      %v4615 = vshll.u32 %v4390, 16
      %v4617 = vrot.slane %v4615, 5
      %v4618 = vsel %vm1054, %v4613, %v4617
      %v4619 = vshrl.u32 %v4390, 16
      %v4621 = vrot.slane %v4619, 4
      %v4622 = vor.u32 %v4621, %v4617
      %v4623 = vrot.slane %v4622, 4
      %v4625 = vshll.u32 %v4391, 16
      %v4627 = vrot.slane %v4625, 5
      %v4628 = vsel %vm1054, %v4623, %v4627
      %v4630 = vshrl.u32 %v4392, 16
      %v4632 = vrot.slane %v4630, 4
      %v4633 = vshll.u32 %v4392, 16
      %v4635 = vrot.slane %v4633, 5
      %v4636 = vor.u32 %v4632, %v4635
      %v4637 = vrot.slane %v4636, 4
      %v4639 = vshll.u32 %v4393, 16
      %v4641 = vrot.slane %v4639, 5
      %v4642 = vsel %vm1054, %v4637, %v4641
      %v4643 = vshrl.u32 %v4393, 16
      %v4645 = vrot.slane %v4643, 4
      %v4646 = vor.u32 %v4645, %v4641
      %v4647 = vrot.slane %v4646, 4
      %v4649 = vshll.u32 %v4394, 16
      %v4651 = vrot.slane %v4649, 5
      %v4652 = vsel %vm1054, %v4647, %v4651
      %v4654 = vshrl.u32 %v4395, 16
      %v4656 = vrot.slane %v4654, 4
      %v4657 = vshll.u32 %v4395, 16
      %v4659 = vrot.slane %v4657, 5
      %v4660 = vor.u32 %v4656, %v4659
      %v4661 = vrot.slane %v4660, 4
      %v4663 = vshll.u32 %v4396, 16
      %v4665 = vrot.slane %v4663, 5
      %v4666 = vsel %vm1054, %v4661, %v4665
      %v4667 = vshrl.u32 %v4396, 16
      %v4669 = vrot.slane %v4667, 4
      %v4670 = vor.u32 %v4669, %v4665
      %v4671 = vrot.slane %v4670, 4
      %v4673 = vshll.u32 %v4397, 16
      %v4675 = vrot.slane %v4673, 5
      %v4676 = vsel %vm1054, %v4671, %v4675
      %v4678 = vshrl.u32 %v4398, 16
      %v4680 = vrot.slane %v4678, 4
      %v4681 = vshll.u32 %v4398, 16
      %v4683 = vrot.slane %v4681, 5
      %v4684 = vor.u32 %v4680, %v4683
      %v4685 = vrot.slane %v4684, 4
      %v4687 = vshll.u32 %v4399, 16
      %v4689 = vrot.slane %v4687, 5
      %v4690 = vsel %vm1054, %v4685, %v4689
      %v4691 = vshrl.u32 %v4399, 16
      %v4693 = vrot.slane %v4691, 4
      %v4694 = vor.u32 %v4693, %v4689
      %v4695 = vrot.slane %v4694, 4
      %v4697 = vshll.u32 %v4400, 16
      %v4699 = vrot.slane %v4697, 5
      %v4700 = vsel %vm1054, %v4695, %v4699
      %v4702 = vshrl.u32 %v4401, 16
      %v4704 = vrot.slane %v4702, 4
      %v4705 = vshll.u32 %v4401, 16
      %v4707 = vrot.slane %v4705, 5
      %v4708 = vor.u32 %v4704, %v4707
      %v4709 = vrot.slane %v4708, 4
      %v4711 = vshll.u32 %v4402, 16
      %v4713 = vrot.slane %v4711, 5
      %v4714 = vsel %vm1054, %v4709, %v4713
      %v4715 = vshrl.u32 %v4402, 16
      %v4717 = vrot.slane %v4715, 4
      %v4718 = vor.u32 %v4717, %v4713
      %v4719 = vrot.slane %v4718, 4
      %v4721 = vshll.u32 %v4403, 16
      %v4723 = vrot.slane %v4721, 5
      %v4724 = vsel %vm1054, %v4719, %v4723
      %v4726 = vshrl.u32 %v4404, 16
      %v4728 = vrot.slane %v4726, 4
      %v4729 = vshll.u32 %v4404, 16
      %v4731 = vrot.slane %v4729, 5
      %v4732 = vor.u32 %v4728, %v4731
      %v4733 = vrot.slane %v4732, 4
      %v4735 = vshll.u32 %v4405, 16
      %v4737 = vrot.slane %v4735, 5
      %v4738 = vsel %vm1054, %v4733, %v4737
      %v4739 = vshrl.u32 %v4405, 16
      %v4741 = vrot.slane %v4739, 4
      %v4742 = vor.u32 %v4741, %v4737
      %v4743 = vrot.slane %v4742, 4
      %v4745 = vshll.u32 %v4406, 16
      %v4747 = vrot.slane %v4745, 5
      %v4748 = vsel %vm1054, %v4743, %v4747
      %v4750 = vshrl.u32 %v4407, 16
      %v4752 = vrot.slane %v4750, 4
      %v4753 = vshll.u32 %v4407, 16
      %v4755 = vrot.slane %v4753, 5
      %v4756 = vor.u32 %v4752, %v4755
      %v4757 = vrot.slane %v4756, 4
      %v4759 = vshll.u32 %v4408, 16
      %v4761 = vrot.slane %v4759, 5
      %v4762 = vsel %vm1054, %v4757, %v4761
      %v4763 = vshrl.u32 %v4408, 16
      %v4765 = vrot.slane %v4763, 4
      %v4766 = vor.u32 %v4765, %v4761
      %v4767 = vrot.slane %v4766, 4
      %v4769 = vshll.u32 %v4409, 16
      %v4771 = vrot.slane %v4769, 5
      %v4772 = vsel %vm1054, %v4767, %v4771
      %v4774 = vshrl.u32 %v4410, 16
      %v4776 = vrot.slane %v4774, 4
      %v4777 = vshll.u32 %v4410, 16
      %v4779 = vrot.slane %v4777, 5
      %v4780 = vor.u32 %v4776, %v4779
      %v4781 = vrot.slane %v4780, 4
      %v4783 = vshll.u32 %v4411, 16
      %v4785 = vrot.slane %v4783, 5
      %v4786 = vsel %vm1054, %v4781, %v4785
      %v4787 = vshrl.u32 %v4411, 16
      %v4789 = vrot.slane %v4787, 4
      %v4790 = vor.u32 %v4789, %v4785
      %v4791 = vrot.slane %v4790, 4
      %v4793 = vshll.u32 %v4412, 16
      %v4795 = vrot.slane %v4793, 5
      %v4796 = vsel %vm1054, %v4791, %v4795
      %s4797 = scalar_lea.vmem %s3, 14
      %v4798 = vld [vmem:[%s4797] sm:$0x3]
      %v4799 = vunpack.c.l.b16 %v4426
      %v4800 = vunpack.c.l.b16 %v4436
      %v4801 = vunpack.c.l.b16 %v4450
      %v4802 = vunpack.c.l.b16 %v4460
      %v4803 = vunpack.c.l.b16 %v4474
      %v4804 = vunpack.c.l.b16 %v4484
      %v4805 = vunpack.c.l.b16 %v4498
      %v4806 = vunpack.c.l.b16 %v4508
      %v4807 = vunpack.c.l.b16 %v4522
      %v4808 = vunpack.c.l.b16 %v4532
      %v4809 = vunpack.c.l.b16 %v4546
      %v4810 = vunpack.c.l.b16 %v4556
      %v4811 = vunpack.c.l.b16 %v4570
      %v4812 = vunpack.c.l.b16 %v4580
      %v4813 = vunpack.c.l.b16 %v4594
      %v4814 = vunpack.c.l.b16 %v4604
      %v4815 = vunpack.c.l.b16 %v4618
      %v4816 = vunpack.c.l.b16 %v4628
      %v4817 = vunpack.c.l.b16 %v4642
      %v4818 = vunpack.c.l.b16 %v4652
      %v4819 = vunpack.c.l.b16 %v4666
      %v4820 = vunpack.c.l.b16 %v4676
      %v4821 = vunpack.c.l.b16 %v4690
      %v4822 = vunpack.c.l.b16 %v4700
      %v4823 = vunpack.c.l.b16 %v4714
      %v4824 = vunpack.c.l.b16 %v4724
      %v4825 = vunpack.c.l.b16 %v4738
      %v4826 = vunpack.c.l.b16 %v4748
      %v4827 = vunpack.c.l.b16 %v4762
      %v4828 = vunpack.c.l.b16 %v4772
      %v4829 = vunpack.c.l.b16 %v4786
      %v4830 = vunpack.c.l.b16 %v4796
      %v4831 = vpack.c.b16 %v4800, %v4799
      %v4832 = vpack.c.b16 %v4802, %v4801
      %v4833 = vpack.c.b16 %v4804, %v4803
      %v4834 = vpack.c.b16 %v4806, %v4805
      %v4835 = vpack.c.b16 %v4808, %v4807
      %v4836 = vpack.c.b16 %v4810, %v4809
      %v4837 = vpack.c.b16 %v4812, %v4811
      %v4838 = vpack.c.b16 %v4814, %v4813
      %v4839 = vpack.c.b16 %v4816, %v4815
      %v4840 = vpack.c.b16 %v4818, %v4817
      %v4841 = vpack.c.b16 %v4820, %v4819
      %v4842 = vpack.c.b16 %v4822, %v4821
      %v4843 = vpack.c.b16 %v4824, %v4823
      %v4844 = vpack.c.b16 %v4826, %v4825
      %v4845 = vpack.c.b16 %v4828, %v4827
      %v4846 = vpack.c.b16 %v4830, %v4829
      %v4848 = vsel %vm1489, %v4831, 0
      %v4851 = vsel %vm1489, %v4832, 0
      %v4854 = vsel %vm1489, %v4833, 0
      %v4857 = vsel %vm1489, %v4834, 0
      %v4860 = vsel %vm1489, %v4835, 0
      %v4863 = vsel %vm1489, %v4836, 0
      %v4866 = vsel %vm1489, %v4837, 0
      %v4869 = vsel %vm1489, %v4838, 0
      %v4872 = vsel %vm1489, %v4839, 0
      %v4875 = vsel %vm1489, %v4840, 0
      %v4878 = vsel %vm1489, %v4841, 0
      %v4881 = vsel %vm1489, %v4842, 0
      %v4884 = vsel %vm1489, %v4843, 0
      %v4887 = vsel %vm1489, %v4844, 0
      %v4890 = vsel %vm1489, %v4845, 0
      %v4893 = vsel %vm1489, %v4846, 0
      %v4896 = vsel %vm1538, %v4798, 0
      %4898 = vmatprep.subr.bf16.mxu0 0
      %4899 = vmatpush1.bf16.msra.mxu0 %v4896
      %4900 = vmatprep.subr.bf16.mxu0 0
      %4901 = vmatpush1.bf16.msra.mxu0 0
      %4902 = vmatprep.subr.bf16.mxu0 0
      %4903 = vmatpush1.bf16.msra.mxu0 0
      %4904 = vmatprep.subr.bf16.mxu0 0
      %4905 = vmatpush1.bf16.msra.mxu0 0
      %4906 = vmatprep.subr.bf16.mxu0 0
      %4907 = vmatpush1.bf16.msra.mxu0 0
      %4908 = vmatprep.subr.bf16.mxu0 0
      %4909 = vmatpush1.bf16.msra.mxu0 0
      %4910 = vmatprep.subr.bf16.mxu0 0
      %4911 = vmatpush1.bf16.msra.mxu0 0
      %4912 = vmatprep.subr.bf16.mxu0 0
      %4913 = vmatpush1.bf16.msra.mxu0 0
      %4914 = vmatprep.subr.bf16.mxu0 0
      %4915 = vmatpush1.bf16.msra.mxu0 0
      %4916 = vmatprep.subr.bf16.mxu0 0
      %4917 = vmatpush1.bf16.msra.mxu0 0
      %4918 = vmatprep.subr.bf16.mxu0 0
      %4919 = vmatpush1.bf16.msra.mxu0 0
      %4920 = vmatprep.subr.bf16.mxu0 0
      %4921 = vmatpush1.bf16.msra.mxu0 0
      %4922 = vmatprep.subr.bf16.mxu0 0
      %4923 = vmatpush1.bf16.msra.mxu0 0
      %4924 = vmatprep.subr.bf16.mxu0 0
      %4925 = vmatpush1.bf16.msra.mxu0 0
      %4926 = vmatprep.subr.bf16.mxu0 0
      %4927 = vmatpush1.bf16.msra.mxu0 0
      %4928 = vmatprep.subr.bf16.mxu0 0
      %4929 = vmatpush1.bf16.msra.mxu0 0
      %4930 = vmatprep.mubr.bf16.mxu0 0
      %4931 = vmatmul.mubr.bf16.gmra.mrb[0].mxu0 %v4848
      %v4932 = vpop.f32.mrb[0].mxu0
      %v4933 = vadd.f32 0.0, %v4932
      %v4934 = vpop.f32.mrb[0].mxu0
      %v4935 = vpop.f32.mrb[0].mxu0
      %v4936 = vadd.f32 0.0, %v4935
      %v4937 = vpop.f32.mrb[0].mxu0
      %4938 = vmatprep.mubr.bf16.mxu0 0
      %4939 = vmatmul.mubr.bf16.gmra.mrb[0].mxu0 %v4851
      %v4940 = vpop.f32.mrb[0].mxu0
      %v4941 = vadd.f32 0.0, %v4940
      %v4942 = vpop.f32.mrb[0].mxu0
      %v4943 = vpop.f32.mrb[0].mxu0
      %v4944 = vadd.f32 0.0, %v4943
      %v4945 = vpop.f32.mrb[0].mxu0
      %4946 = vmatprep.mubr.bf16.mxu0 0
      %4947 = vmatmul.mubr.bf16.gmra.mrb[0].mxu0 %v4854
      %v4948 = vpop.f32.mrb[0].mxu0
      %v4949 = vadd.f32 0.0, %v4948
      %v4950 = vpop.f32.mrb[0].mxu0
      %v4951 = vpop.f32.mrb[0].mxu0
      %v4952 = vadd.f32 0.0, %v4951
      %v4953 = vpop.f32.mrb[0].mxu0
      %4954 = vmatprep.mubr.bf16.mxu0 0
      %4955 = vmatmul.mubr.bf16.gmra.mrb[0].mxu0 %v4857
      %v4956 = vpop.f32.mrb[0].mxu0
      %v4957 = vadd.f32 0.0, %v4956
      %v4958 = vpop.f32.mrb[0].mxu0
      %v4959 = vpop.f32.mrb[0].mxu0
      %v4960 = vadd.f32 0.0, %v4959
      %v4961 = vpop.f32.mrb[0].mxu0
      %4962 = vmatprep.mubr.bf16.mxu0 0
      %4963 = vmatmul.mubr.bf16.gmra.mrb[0].mxu0 %v4860
      %v4964 = vpop.f32.mrb[0].mxu0
      %v4965 = vadd.f32 0.0, %v4964
      %v4966 = vpop.f32.mrb[0].mxu0
      %v4967 = vpop.f32.mrb[0].mxu0
      %v4968 = vadd.f32 0.0, %v4967
      %v4969 = vpop.f32.mrb[0].mxu0
      %4970 = vmatprep.mubr.bf16.mxu0 0
      %4971 = vmatmul.mubr.bf16.gmra.mrb[0].mxu0 %v4863
      %v4972 = vpop.f32.mrb[0].mxu0
      %v4973 = vadd.f32 0.0, %v4972
      %v4974 = vpop.f32.mrb[0].mxu0
      %v4975 = vpop.f32.mrb[0].mxu0
      %v4976 = vadd.f32 0.0, %v4975
      %v4977 = vpop.f32.mrb[0].mxu0
      %4978 = vmatprep.mubr.bf16.mxu0 0
      %4979 = vmatmul.mubr.bf16.gmra.mrb[0].mxu0 %v4866
      %v4980 = vpop.f32.mrb[0].mxu0
      %v4981 = vadd.f32 0.0, %v4980
      %v4982 = vpop.f32.mrb[0].mxu0
      %v4983 = vpop.f32.mrb[0].mxu0
      %v4984 = vadd.f32 0.0, %v4983
      %v4985 = vpop.f32.mrb[0].mxu0
      %4986 = vmatprep.mubr.bf16.mxu0 0
      %4987 = vmatmul.mubr.bf16.gmra.mrb[0].mxu0 %v4869
      %v4988 = vpop.f32.mrb[0].mxu0
      %v4989 = vadd.f32 0.0, %v4988
      %v4990 = vpop.f32.mrb[0].mxu0
      %v4991 = vpop.f32.mrb[0].mxu0
      %v4992 = vadd.f32 0.0, %v4991
      %v4993 = vpop.f32.mrb[0].mxu0
      %4994 = vmatprep.mubr.bf16.mxu0 0
      %4995 = vmatmul.mubr.bf16.gmra.mrb[0].mxu0 %v4872
      %v4996 = vpop.f32.mrb[0].mxu0
      %v4997 = vadd.f32 0.0, %v4996
      %v4998 = vpop.f32.mrb[0].mxu0
      %v4999 = vpop.f32.mrb[0].mxu0
      %v5000 = vadd.f32 0.0, %v4999
      %v5001 = vpop.f32.mrb[0].mxu0
      %5002 = vmatprep.mubr.bf16.mxu0 0
      %5003 = vmatmul.mubr.bf16.gmra.mrb[0].mxu0 %v4875
      %v5004 = vpop.f32.mrb[0].mxu0
      %v5005 = vadd.f32 0.0, %v5004
      %v5006 = vpop.f32.mrb[0].mxu0
      %v5007 = vpop.f32.mrb[0].mxu0
      %v5008 = vadd.f32 0.0, %v5007
      %v5009 = vpop.f32.mrb[0].mxu0
      %5010 = vmatprep.mubr.bf16.mxu0 0
      %5011 = vmatmul.mubr.bf16.gmra.mrb[0].mxu0 %v4878
      %v5012 = vpop.f32.mrb[0].mxu0
      %v5013 = vadd.f32 0.0, %v5012
      %v5014 = vpop.f32.mrb[0].mxu0
      %v5015 = vpop.f32.mrb[0].mxu0
      %v5016 = vadd.f32 0.0, %v5015
      %v5017 = vpop.f32.mrb[0].mxu0
      %5018 = vmatprep.mubr.bf16.mxu0 0
      %5019 = vmatmul.mubr.bf16.gmra.mrb[0].mxu0 %v4881
      %v5020 = vpop.f32.mrb[0].mxu0
      %v5021 = vadd.f32 0.0, %v5020
      %v5022 = vpop.f32.mrb[0].mxu0
      %v5023 = vpop.f32.mrb[0].mxu0
      %v5024 = vadd.f32 0.0, %v5023
      %v5025 = vpop.f32.mrb[0].mxu0
      %5026 = vmatprep.mubr.bf16.mxu0 0
      %5027 = vmatmul.mubr.bf16.gmra.mrb[0].mxu0 %v4884
      %v5028 = vpop.f32.mrb[0].mxu0
      %v5029 = vadd.f32 0.0, %v5028
      %v5030 = vpop.f32.mrb[0].mxu0
      %v5031 = vpop.f32.mrb[0].mxu0
      %v5032 = vadd.f32 0.0, %v5031
      %v5033 = vpop.f32.mrb[0].mxu0
      %5034 = vmatprep.mubr.bf16.mxu0 0
      %5035 = vmatmul.mubr.bf16.gmra.mrb[0].mxu0 %v4887
      %v5036 = vpop.f32.mrb[0].mxu0
      %v5037 = vadd.f32 0.0, %v5036
      %v5038 = vpop.f32.mrb[0].mxu0
      %v5039 = vpop.f32.mrb[0].mxu0
      %v5040 = vadd.f32 0.0, %v5039
      %v5041 = vpop.f32.mrb[0].mxu0
      %5042 = vmatprep.mubr.bf16.mxu0 0
      %5043 = vmatmul.mubr.bf16.gmra.mrb[0].mxu0 %v4890
      %v5044 = vpop.f32.mrb[0].mxu0
      %v5045 = vadd.f32 0.0, %v5044
      %v5046 = vpop.f32.mrb[0].mxu0
      %v5047 = vpop.f32.mrb[0].mxu0
      %v5048 = vadd.f32 0.0, %v5047
      %v5049 = vpop.f32.mrb[0].mxu0
      %5050 = vmatprep.mubr.bf16.mxu0 0
      %5051 = vmatmul.mubr.bf16.gmra.mrb[0].mxu0 %v4893
      %v5052 = vpop.f32.mrb[0].mxu0
      %v5053 = vadd.f32 0.0, %v5052
      %v5054 = vpop.f32.mrb[0].mxu0
      %v5055 = vpop.f32.mrb[0].mxu0
      %v5056 = vadd.f32 0.0, %v5055
      %v5057 = vpop.f32.mrb[0].mxu0
      %5058 = vdwg.mxu0
      %v5059 = vadd.f32 %v4333, %v4933
      %v5060 = vadd.f32 %v4334, %v4936
      %v5061 = vadd.f32 %v4335, %v4941
      %v5062 = vadd.f32 %v4336, %v4944
      %v5063 = vadd.f32 %v4337, %v4949
      %v5064 = vadd.f32 %v4338, %v4952
      %v5065 = vadd.f32 %v4339, %v4957
      %v5066 = vadd.f32 %v4340, %v4960
      %v5067 = vadd.f32 %v4341, %v4965
      %v5068 = vadd.f32 %v4342, %v4968
      %v5069 = vadd.f32 %v4343, %v4973
      %v5070 = vadd.f32 %v4344, %v4976
      %v5071 = vadd.f32 %v4345, %v4981
      %v5072 = vadd.f32 %v4346, %v4984
      %v5073 = vadd.f32 %v4347, %v4989
      %v5074 = vadd.f32 %v4348, %v4992
      %v5075 = vadd.f32 %v4349, %v4997
      %v5076 = vadd.f32 %v4350, %v5000
      %v5077 = vadd.f32 %v4351, %v5005
      %v5078 = vadd.f32 %v4352, %v5008
      %v5079 = vadd.f32 %v4353, %v5013
      %v5080 = vadd.f32 %v4354, %v5016
      %v5081 = vadd.f32 %v4355, %v5021
      %v5082 = vadd.f32 %v4356, %v5024
      %v5083 = vadd.f32 %v4357, %v5029
      %v5084 = vadd.f32 %v4358, %v5032
      %v5085 = vadd.f32 %v4359, %v5037
      %v5086 = vadd.f32 %v4360, %v5040
      %v5087 = vadd.f32 %v4361, %v5045
      %v5088 = vadd.f32 %v4362, %v5048
      %v5089 = vadd.f32 %v4363, %v5053
      %v5090 = vadd.f32 %v4364, %v5056
      %v5091 = vld [vmem:[%s4006] sm:$0xe]
      %v5092 = vld [vmem:[%s4006 + $0xc] sm:$0xe]
      %v5093 = vld [vmem:[%s4006 + $0x18] sm:$0xe]
      %v5094 = vld [vmem:[%s4006 + $0x24] sm:$0xe]
      %v5095 = vld [vmem:[%s4006 + $0x30] sm:$0xe]
      %v5096 = vld [vmem:[%s4006 + $0x3c] sm:$0xe]
      %v5097 = vld [vmem:[%s4006 + $0x48] sm:$0xe]
      %v5098 = vld [vmem:[%s4006 + $0x54] sm:$0xe]
      %v5099 = vld [vmem:[%s4006 + $0x60] sm:$0xe]
      %v5100 = vld [vmem:[%s4006 + $0x6c] sm:$0xe]
      %v5101 = vld [vmem:[%s4006 + $0x78] sm:$0xe]
      %v5102 = vld [vmem:[%s4006 + $0x84] sm:$0xe]
      %v5103 = vld [vmem:[%s4006 + $0x90] sm:$0xe]
      %v5104 = vld [vmem:[%s4006 + $0x9c] sm:$0xe]
      %v5105 = vld [vmem:[%s4006 + $0xa8] sm:$0xe]
      %v5106 = vld [vmem:[%s4006 + $0xb4] sm:$0xe]
      %v5155 = vrot.slane %v5091, 5
      %v5156 = vrot.slane %v5155, 4
      %v5157 = vrot.slane %v4366, 5
      %v5158 = vsel %vm2045, %v5156, %v5157
      %v5159 = vrot.slane %v5157, 4
      %v5160 = vrot.slane %v4367, 5
      %v5161 = vsel %vm2045, %v5159, %v5160
      %v5162 = vrot.slane %v5092, 5
      %v5163 = vrot.slane %v5162, 4
      %v5164 = vrot.slane %v4369, 5
      %v5165 = vsel %vm2045, %v5163, %v5164
      %v5166 = vrot.slane %v5164, 4
      %v5167 = vrot.slane %v4370, 5
      %v5168 = vsel %vm2045, %v5166, %v5167
      %v5169 = vrot.slane %v5093, 5
      %v5170 = vrot.slane %v5169, 4
      %v5171 = vrot.slane %v4372, 5
      %v5172 = vsel %vm2045, %v5170, %v5171
      %v5173 = vrot.slane %v5171, 4
      %v5174 = vrot.slane %v4373, 5
      %v5175 = vsel %vm2045, %v5173, %v5174
      %v5176 = vrot.slane %v5094, 5
      %v5177 = vrot.slane %v5176, 4
      %v5178 = vrot.slane %v4375, 5
      %v5179 = vsel %vm2045, %v5177, %v5178
      %v5180 = vrot.slane %v5178, 4
      %v5181 = vrot.slane %v4376, 5
      %v5182 = vsel %vm2045, %v5180, %v5181
      %v5183 = vrot.slane %v5095, 5
      %v5184 = vrot.slane %v5183, 4
      %v5185 = vrot.slane %v4378, 5
      %v5186 = vsel %vm2045, %v5184, %v5185
      %v5187 = vrot.slane %v5185, 4
      %v5188 = vrot.slane %v4379, 5
      %v5189 = vsel %vm2045, %v5187, %v5188
      %v5190 = vrot.slane %v5096, 5
      %v5191 = vrot.slane %v5190, 4
      %v5192 = vrot.slane %v4381, 5
      %v5193 = vsel %vm2045, %v5191, %v5192
      %v5194 = vrot.slane %v5192, 4
      %v5195 = vrot.slane %v4382, 5
      %v5196 = vsel %vm2045, %v5194, %v5195
      %v5197 = vrot.slane %v5097, 5
      %v5198 = vrot.slane %v5197, 4
      %v5199 = vrot.slane %v4384, 5
      %v5200 = vsel %vm2045, %v5198, %v5199
      %v5201 = vrot.slane %v5199, 4
      %v5202 = vrot.slane %v4385, 5
      %v5203 = vsel %vm2045, %v5201, %v5202
      %v5204 = vrot.slane %v5098, 5
      %v5205 = vrot.slane %v5204, 4
      %v5206 = vrot.slane %v4387, 5
      %v5207 = vsel %vm2045, %v5205, %v5206
      %v5208 = vrot.slane %v5206, 4
      %v5209 = vrot.slane %v4388, 5
      %v5210 = vsel %vm2045, %v5208, %v5209
      %v5211 = vrot.slane %v5099, 5
      %v5212 = vrot.slane %v5211, 4
      %v5213 = vrot.slane %v4390, 5
      %v5214 = vsel %vm2045, %v5212, %v5213
      %v5215 = vrot.slane %v5213, 4
      %v5216 = vrot.slane %v4391, 5
      %v5217 = vsel %vm2045, %v5215, %v5216
      %v5218 = vrot.slane %v5100, 5
      %v5219 = vrot.slane %v5218, 4
      %v5220 = vrot.slane %v4393, 5
      %v5221 = vsel %vm2045, %v5219, %v5220
      %v5222 = vrot.slane %v5220, 4
      %v5223 = vrot.slane %v4394, 5
      %v5224 = vsel %vm2045, %v5222, %v5223
      %v5225 = vrot.slane %v5101, 5
      %v5226 = vrot.slane %v5225, 4
      %v5227 = vrot.slane %v4396, 5
      %v5228 = vsel %vm2045, %v5226, %v5227
      %v5229 = vrot.slane %v5227, 4
      %v5230 = vrot.slane %v4397, 5
      %v5231 = vsel %vm2045, %v5229, %v5230
      %v5232 = vrot.slane %v5102, 5
      %v5233 = vrot.slane %v5232, 4
      %v5234 = vrot.slane %v4399, 5
      %v5235 = vsel %vm2045, %v5233, %v5234
      %v5236 = vrot.slane %v5234, 4
      %v5237 = vrot.slane %v4400, 5
      %v5238 = vsel %vm2045, %v5236, %v5237
      %v5239 = vrot.slane %v5103, 5
      %v5240 = vrot.slane %v5239, 4
      %v5241 = vrot.slane %v4402, 5
      %v5242 = vsel %vm2045, %v5240, %v5241
      %v5243 = vrot.slane %v5241, 4
      %v5244 = vrot.slane %v4403, 5
      %v5245 = vsel %vm2045, %v5243, %v5244
      %v5246 = vrot.slane %v5104, 5
      %v5247 = vrot.slane %v5246, 4
      %v5248 = vrot.slane %v4405, 5
      %v5249 = vsel %vm2045, %v5247, %v5248
      %v5250 = vrot.slane %v5248, 4
      %v5251 = vrot.slane %v4406, 5
      %v5252 = vsel %vm2045, %v5250, %v5251
      %v5253 = vrot.slane %v5105, 5
      %v5254 = vrot.slane %v5253, 4
      %v5255 = vrot.slane %v4408, 5
      %v5256 = vsel %vm2045, %v5254, %v5255
      %v5257 = vrot.slane %v5255, 4
      %v5258 = vrot.slane %v4409, 5
      %v5259 = vsel %vm2045, %v5257, %v5258
      %v5260 = vrot.slane %v5106, 5
      %v5261 = vrot.slane %v5260, 4
      %v5262 = vrot.slane %v4411, 5
      %v5263 = vsel %vm2045, %v5261, %v5262
      %v5264 = vrot.slane %v5262, 4
      %v5265 = vrot.slane %v4412, 5
      %v5266 = vsel %vm2045, %v5264, %v5265
      %s5267 = scalar_lea.vmem %s3, 16
      %v5268 = vld [vmem:[%s5267] sm:$0x3]
      %v5269 = vunpack.c.l.b16 %v5158
      %v5270 = vunpack.c.l.b16 %v5161
      %v5271 = vunpack.c.l.b16 %v5165
      %v5272 = vunpack.c.l.b16 %v5168
      %v5273 = vunpack.c.l.b16 %v5172
      %v5274 = vunpack.c.l.b16 %v5175
      %v5275 = vunpack.c.l.b16 %v5179
      %v5276 = vunpack.c.l.b16 %v5182
      %v5277 = vunpack.c.l.b16 %v5186
      %v5278 = vunpack.c.l.b16 %v5189
      %v5279 = vunpack.c.l.b16 %v5193
      %v5280 = vunpack.c.l.b16 %v5196
      %v5281 = vunpack.c.l.b16 %v5200
      %v5282 = vunpack.c.l.b16 %v5203
      %v5283 = vunpack.c.l.b16 %v5207
      %v5284 = vunpack.c.l.b16 %v5210
      %v5285 = vunpack.c.l.b16 %v5214
      %v5286 = vunpack.c.l.b16 %v5217
      %v5287 = vunpack.c.l.b16 %v5221
      %v5288 = vunpack.c.l.b16 %v5224
      %v5289 = vunpack.c.l.b16 %v5228
      %v5290 = vunpack.c.l.b16 %v5231
      %v5291 = vunpack.c.l.b16 %v5235
      %v5292 = vunpack.c.l.b16 %v5238
      %v5293 = vunpack.c.l.b16 %v5242
      %v5294 = vunpack.c.l.b16 %v5245
      %v5295 = vunpack.c.l.b16 %v5249
      %v5296 = vunpack.c.l.b16 %v5252
      %v5297 = vunpack.c.l.b16 %v5256
      %v5298 = vunpack.c.l.b16 %v5259
      %v5299 = vunpack.c.l.b16 %v5263
      %v5300 = vunpack.c.l.b16 %v5266
      %v5301 = vpack.c.b16 %v5270, %v5269
      %v5302 = vpack.c.b16 %v5272, %v5271
      %v5303 = vpack.c.b16 %v5274, %v5273
      %v5304 = vpack.c.b16 %v5276, %v5275
      %v5305 = vpack.c.b16 %v5278, %v5277
      %v5306 = vpack.c.b16 %v5280, %v5279
      %v5307 = vpack.c.b16 %v5282, %v5281
      %v5308 = vpack.c.b16 %v5284, %v5283
      %v5309 = vpack.c.b16 %v5286, %v5285
      %v5310 = vpack.c.b16 %v5288, %v5287
      %v5311 = vpack.c.b16 %v5290, %v5289
      %v5312 = vpack.c.b16 %v5292, %v5291
      %v5313 = vpack.c.b16 %v5294, %v5293
      %v5314 = vpack.c.b16 %v5296, %v5295
      %v5315 = vpack.c.b16 %v5298, %v5297
      %v5316 = vpack.c.b16 %v5300, %v5299
      %v5318 = vsel %vm1489, %v5301, 0
      %v5321 = vsel %vm1489, %v5302, 0
      %v5324 = vsel %vm1489, %v5303, 0
      %v5327 = vsel %vm1489, %v5304, 0
      %v5330 = vsel %vm1489, %v5305, 0
      %v5333 = vsel %vm1489, %v5306, 0
      %v5336 = vsel %vm1489, %v5307, 0
      %v5339 = vsel %vm1489, %v5308, 0
      %v5342 = vsel %vm1489, %v5309, 0
      %v5345 = vsel %vm1489, %v5310, 0
      %v5348 = vsel %vm1489, %v5311, 0
      %v5351 = vsel %vm1489, %v5312, 0
      %v5354 = vsel %vm1489, %v5313, 0
      %v5357 = vsel %vm1489, %v5314, 0
      %v5360 = vsel %vm1489, %v5315, 0
      %v5363 = vsel %vm1489, %v5316, 0
      %v5366 = vsel %vm1538, %v5268, 0
      %5368 = vmatprep.subr.bf16.mxu0 0
      %5369 = vmatpush1.bf16.msra.mxu0 %v5366
      %5370 = vmatprep.subr.bf16.mxu0 0
      %5371 = vmatpush1.bf16.msra.mxu0 0
      %5372 = vmatprep.subr.bf16.mxu0 0
      %5373 = vmatpush1.bf16.msra.mxu0 0
      %5374 = vmatprep.subr.bf16.mxu0 0
      %5375 = vmatpush1.bf16.msra.mxu0 0
      %5376 = vmatprep.subr.bf16.mxu0 0
      %5377 = vmatpush1.bf16.msra.mxu0 0
      %5378 = vmatprep.subr.bf16.mxu0 0
      %5379 = vmatpush1.bf16.msra.mxu0 0
      %5380 = vmatprep.subr.bf16.mxu0 0
      %5381 = vmatpush1.bf16.msra.mxu0 0
      %5382 = vmatprep.subr.bf16.mxu0 0
      %5383 = vmatpush1.bf16.msra.mxu0 0
      %5384 = vmatprep.subr.bf16.mxu0 0
      %5385 = vmatpush1.bf16.msra.mxu0 0
      %5386 = vmatprep.subr.bf16.mxu0 0
      %5387 = vmatpush1.bf16.msra.mxu0 0
      %5388 = vmatprep.subr.bf16.mxu0 0
      %5389 = vmatpush1.bf16.msra.mxu0 0
      %5390 = vmatprep.subr.bf16.mxu0 0
      %5391 = vmatpush1.bf16.msra.mxu0 0
      %5392 = vmatprep.subr.bf16.mxu0 0
      %5393 = vmatpush1.bf16.msra.mxu0 0
      %5394 = vmatprep.subr.bf16.mxu0 0
      %5395 = vmatpush1.bf16.msra.mxu0 0
      %5396 = vmatprep.subr.bf16.mxu0 0
      %5397 = vmatpush1.bf16.msra.mxu0 0
      %5398 = vmatprep.subr.bf16.mxu0 0
      %5399 = vmatpush1.bf16.msra.mxu0 0
      %5400 = vmatprep.mubr.bf16.mxu0 0
      %5401 = vmatmul.mubr.bf16.gmra.mrb[0].mxu0 %v5318
      %v5402 = vpop.f32.mrb[0].mxu0
      %v5403 = vadd.f32 0.0, %v5402
      %v5404 = vpop.f32.mrb[0].mxu0
      %v5405 = vpop.f32.mrb[0].mxu0
      %v5406 = vadd.f32 0.0, %v5405
      %v5407 = vpop.f32.mrb[0].mxu0
      %5408 = vmatprep.mubr.bf16.mxu0 0
      %5409 = vmatmul.mubr.bf16.gmra.mrb[0].mxu0 %v5321
      %v5410 = vpop.f32.mrb[0].mxu0
      %v5411 = vadd.f32 0.0, %v5410
      %v5412 = vpop.f32.mrb[0].mxu0
      %v5413 = vpop.f32.mrb[0].mxu0
      %v5414 = vadd.f32 0.0, %v5413
      %v5415 = vpop.f32.mrb[0].mxu0
      %5416 = vmatprep.mubr.bf16.mxu0 0
      %5417 = vmatmul.mubr.bf16.gmra.mrb[0].mxu0 %v5324
      %v5418 = vpop.f32.mrb[0].mxu0
      %v5419 = vadd.f32 0.0, %v5418
      %v5420 = vpop.f32.mrb[0].mxu0
      %v5421 = vpop.f32.mrb[0].mxu0
      %v5422 = vadd.f32 0.0, %v5421
      %v5423 = vpop.f32.mrb[0].mxu0
      %5424 = vmatprep.mubr.bf16.mxu0 0
      %5425 = vmatmul.mubr.bf16.gmra.mrb[0].mxu0 %v5327
      %v5426 = vpop.f32.mrb[0].mxu0
      %v5427 = vadd.f32 0.0, %v5426
      %v5428 = vpop.f32.mrb[0].mxu0
      %v5429 = vpop.f32.mrb[0].mxu0
      %v5430 = vadd.f32 0.0, %v5429
      %v5431 = vpop.f32.mrb[0].mxu0
      %5432 = vmatprep.mubr.bf16.mxu0 0
      %5433 = vmatmul.mubr.bf16.gmra.mrb[0].mxu0 %v5330
      %v5434 = vpop.f32.mrb[0].mxu0
      %v5435 = vadd.f32 0.0, %v5434
      %v5436 = vpop.f32.mrb[0].mxu0
      %v5437 = vpop.f32.mrb[0].mxu0
      %v5438 = vadd.f32 0.0, %v5437
      %v5439 = vpop.f32.mrb[0].mxu0
      %5440 = vmatprep.mubr.bf16.mxu0 0
      %5441 = vmatmul.mubr.bf16.gmra.mrb[0].mxu0 %v5333
      %v5442 = vpop.f32.mrb[0].mxu0
      %v5443 = vadd.f32 0.0, %v5442
      %v5444 = vpop.f32.mrb[0].mxu0
      %v5445 = vpop.f32.mrb[0].mxu0
      %v5446 = vadd.f32 0.0, %v5445
      %v5447 = vpop.f32.mrb[0].mxu0
      %5448 = vmatprep.mubr.bf16.mxu0 0
      %5449 = vmatmul.mubr.bf16.gmra.mrb[0].mxu0 %v5336
      %v5450 = vpop.f32.mrb[0].mxu0
      %v5451 = vadd.f32 0.0, %v5450
      %v5452 = vpop.f32.mrb[0].mxu0
      %v5453 = vpop.f32.mrb[0].mxu0
      %v5454 = vadd.f32 0.0, %v5453
      %v5455 = vpop.f32.mrb[0].mxu0
      %5456 = vmatprep.mubr.bf16.mxu0 0
      %5457 = vmatmul.mubr.bf16.gmra.mrb[0].mxu0 %v5339
      %v5458 = vpop.f32.mrb[0].mxu0
      %v5459 = vadd.f32 0.0, %v5458
      %v5460 = vpop.f32.mrb[0].mxu0
      %v5461 = vpop.f32.mrb[0].mxu0
      %v5462 = vadd.f32 0.0, %v5461
      %v5463 = vpop.f32.mrb[0].mxu0
      %5464 = vmatprep.mubr.bf16.mxu0 0
      %5465 = vmatmul.mubr.bf16.gmra.mrb[0].mxu0 %v5342
      %v5466 = vpop.f32.mrb[0].mxu0
      %v5467 = vadd.f32 0.0, %v5466
      %v5468 = vpop.f32.mrb[0].mxu0
      %v5469 = vpop.f32.mrb[0].mxu0
      %v5470 = vadd.f32 0.0, %v5469
      %v5471 = vpop.f32.mrb[0].mxu0
      %5472 = vmatprep.mubr.bf16.mxu0 0
      %5473 = vmatmul.mubr.bf16.gmra.mrb[0].mxu0 %v5345
      %v5474 = vpop.f32.mrb[0].mxu0
      %v5475 = vadd.f32 0.0, %v5474
      %v5476 = vpop.f32.mrb[0].mxu0
      %v5477 = vpop.f32.mrb[0].mxu0
      %v5478 = vadd.f32 0.0, %v5477
      %v5479 = vpop.f32.mrb[0].mxu0
      %5480 = vmatprep.mubr.bf16.mxu0 0
      %5481 = vmatmul.mubr.bf16.gmra.mrb[0].mxu0 %v5348
      %v5482 = vpop.f32.mrb[0].mxu0
      %v5483 = vadd.f32 0.0, %v5482
      %v5484 = vpop.f32.mrb[0].mxu0
      %v5485 = vpop.f32.mrb[0].mxu0
      %v5486 = vadd.f32 0.0, %v5485
      %v5487 = vpop.f32.mrb[0].mxu0
      %5488 = vmatprep.mubr.bf16.mxu0 0
      %5489 = vmatmul.mubr.bf16.gmra.mrb[0].mxu0 %v5351
      %v5490 = vpop.f32.mrb[0].mxu0
      %v5491 = vadd.f32 0.0, %v5490
      %v5492 = vpop.f32.mrb[0].mxu0
      %v5493 = vpop.f32.mrb[0].mxu0
      %v5494 = vadd.f32 0.0, %v5493
      %v5495 = vpop.f32.mrb[0].mxu0
      %5496 = vmatprep.mubr.bf16.mxu0 0
      %5497 = vmatmul.mubr.bf16.gmra.mrb[0].mxu0 %v5354
      %v5498 = vpop.f32.mrb[0].mxu0
      %v5499 = vadd.f32 0.0, %v5498
      %v5500 = vpop.f32.mrb[0].mxu0
      %v5501 = vpop.f32.mrb[0].mxu0
      %v5502 = vadd.f32 0.0, %v5501
      %v5503 = vpop.f32.mrb[0].mxu0
      %5504 = vmatprep.mubr.bf16.mxu0 0
      %5505 = vmatmul.mubr.bf16.gmra.mrb[0].mxu0 %v5357
      %v5506 = vpop.f32.mrb[0].mxu0
      %v5507 = vadd.f32 0.0, %v5506
      %v5508 = vpop.f32.mrb[0].mxu0
      %v5509 = vpop.f32.mrb[0].mxu0
      %v5510 = vadd.f32 0.0, %v5509
      %v5511 = vpop.f32.mrb[0].mxu0
      %5512 = vmatprep.mubr.bf16.mxu0 0
      %5513 = vmatmul.mubr.bf16.gmra.mrb[0].mxu0 %v5360
      %v5514 = vpop.f32.mrb[0].mxu0
      %v5515 = vadd.f32 0.0, %v5514
      %v5516 = vpop.f32.mrb[0].mxu0
      %v5517 = vpop.f32.mrb[0].mxu0
      %v5518 = vadd.f32 0.0, %v5517
      %v5519 = vpop.f32.mrb[0].mxu0
      %5520 = vmatprep.mubr.bf16.mxu0 0
      %5521 = vmatmul.mubr.bf16.gmra.mrb[0].mxu0 %v5363
      %v5522 = vpop.f32.mrb[0].mxu0
      %v5523 = vadd.f32 0.0, %v5522
      %v5524 = vpop.f32.mrb[0].mxu0
      %v5525 = vpop.f32.mrb[0].mxu0
      %v5526 = vadd.f32 0.0, %v5525
      %v5527 = vpop.f32.mrb[0].mxu0
      %5528 = vdwg.mxu0
      %v5529 = vadd.f32 %v5059, %v5403
      %v5530 = vadd.f32 %v5060, %v5406
      %v5531 = vadd.f32 %v5061, %v5411
      %v5532 = vadd.f32 %v5062, %v5414
      %v5533 = vadd.f32 %v5063, %v5419
      %v5534 = vadd.f32 %v5064, %v5422
      %v5535 = vadd.f32 %v5065, %v5427
      %v5536 = vadd.f32 %v5066, %v5430
      %v5537 = vadd.f32 %v5067, %v5435
      %v5538 = vadd.f32 %v5068, %v5438
      %v5539 = vadd.f32 %v5069, %v5443
      %v5540 = vadd.f32 %v5070, %v5446
      %v5541 = vadd.f32 %v5071, %v5451
      %v5542 = vadd.f32 %v5072, %v5454
      %v5543 = vadd.f32 %v5073, %v5459
      %v5544 = vadd.f32 %v5074, %v5462
      %v5545 = vadd.f32 %v5075, %v5467
      %v5546 = vadd.f32 %v5076, %v5470
      %v5547 = vadd.f32 %v5077, %v5475
      %v5548 = vadd.f32 %v5078, %v5478
      %v5549 = vadd.f32 %v5079, %v5483
      %v5550 = vadd.f32 %v5080, %v5486
      %v5551 = vadd.f32 %v5081, %v5491
      %v5552 = vadd.f32 %v5082, %v5494
      %v5553 = vadd.f32 %v5083, %v5499
      %v5554 = vadd.f32 %v5084, %v5502
      %v5555 = vadd.f32 %v5085, %v5507
      %v5556 = vadd.f32 %v5086, %v5510
      %v5557 = vadd.f32 %v5087, %v5515
      %v5558 = vadd.f32 %v5088, %v5518
      %v5559 = vadd.f32 %v5089, %v5523
      %v5560 = vadd.f32 %v5090, %v5526
      %v5561 = vsel %vm1489, %v5529, 0.0
      %v5562 = vsel %vm1489, %v5530, 0.0
      %v5563 = vadd.f32 %v5561, %v5562
      %v5564 = vsel %vm1489, %v5531, 0.0
      %v5565 = vadd.f32 %v5563, %v5564
      %v5566 = vsel %vm1489, %v5532, 0.0
      %v5567 = vadd.f32 %v5565, %v5566
      %v5568 = vsel %vm1489, %v5533, 0.0
      %v5569 = vadd.f32 %v5567, %v5568
      %v5570 = vsel %vm1489, %v5534, 0.0
      %v5571 = vadd.f32 %v5569, %v5570
      %v5572 = vsel %vm1489, %v5535, 0.0
      %v5573 = vadd.f32 %v5571, %v5572
      %v5574 = vsel %vm1489, %v5536, 0.0
      %v5575 = vadd.f32 %v5573, %v5574
      %v5576 = vsel %vm1489, %v5537, 0.0
      %v5577 = vadd.f32 %v5575, %v5576
      %v5578 = vsel %vm1489, %v5538, 0.0
      %v5579 = vadd.f32 %v5577, %v5578
      %v5580 = vsel %vm1489, %v5539, 0.0
      %v5581 = vadd.f32 %v5579, %v5580
      %v5582 = vsel %vm1489, %v5540, 0.0
      %v5583 = vadd.f32 %v5581, %v5582
      %v5584 = vsel %vm1489, %v5541, 0.0
      %v5585 = vadd.f32 %v5583, %v5584
      %v5586 = vsel %vm1489, %v5542, 0.0
      %v5587 = vadd.f32 %v5585, %v5586
      %v5588 = vsel %vm1489, %v5543, 0.0
      %v5589 = vadd.f32 %v5587, %v5588
      %v5590 = vsel %vm1489, %v5544, 0.0
      %v5591 = vadd.f32 %v5589, %v5590
      %v5592 = vsel %vm1489, %v5545, 0.0
      %v5593 = vadd.f32 %v5591, %v5592
      %v5594 = vsel %vm1489, %v5546, 0.0
      %v5595 = vadd.f32 %v5593, %v5594
      %v5596 = vsel %vm1489, %v5547, 0.0
      %v5597 = vadd.f32 %v5595, %v5596
      %v5598 = vsel %vm1489, %v5548, 0.0
      %v5599 = vadd.f32 %v5597, %v5598
      %v5600 = vsel %vm1489, %v5549, 0.0
      %v5601 = vadd.f32 %v5599, %v5600
      %v5602 = vsel %vm1489, %v5550, 0.0
      %v5603 = vadd.f32 %v5601, %v5602
      %v5604 = vsel %vm1489, %v5551, 0.0
      %v5605 = vadd.f32 %v5603, %v5604
      %v5606 = vsel %vm1489, %v5552, 0.0
      %v5607 = vadd.f32 %v5605, %v5606
      %v5608 = vsel %vm1489, %v5553, 0.0
      %v5609 = vadd.f32 %v5607, %v5608
      %v5610 = vsel %vm1489, %v5554, 0.0
      %v5611 = vadd.f32 %v5609, %v5610
      %v5612 = vsel %vm1489, %v5555, 0.0
      %v5613 = vadd.f32 %v5611, %v5612
      %v5614 = vsel %vm1489, %v5556, 0.0
      %v5615 = vadd.f32 %v5613, %v5614
      %v5616 = vsel %vm1489, %v5557, 0.0
      %v5617 = vadd.f32 %v5615, %v5616
      %v5618 = vsel %vm1489, %v5558, 0.0
      %v5619 = vadd.f32 %v5617, %v5618
      %v5620 = vsel %vm1489, %v5559, 0.0
      %v5621 = vadd.f32 %v5619, %v5620
      %v5622 = vsel %vm1489, %v5560, 0.0
      %v5623 = vadd.f32 %v5621, %v5622
      %v5624 = vrot.slane %v5623, 4
      %v5625 = vadd.f32 %v5623, %v5624
      %v5626 = vrot.slane %v5625, 2
      %v5627 = vadd.f32 %v5625, %v5626
      %v5628 = vrot.slane %v5627, 1
      %v5629 = vadd.f32 %v5627, %v5628
      %v5630 = vmul.f32 %v5529, %v5529
      %v5631 = vmul.f32 %v5530, %v5530
      %v5632 = vmul.f32 %v5531, %v5531
      %v5633 = vmul.f32 %v5532, %v5532
      %v5634 = vmul.f32 %v5533, %v5533
      %v5635 = vmul.f32 %v5534, %v5534
      %v5636 = vmul.f32 %v5535, %v5535
      %v5637 = vmul.f32 %v5536, %v5536
      %v5638 = vmul.f32 %v5537, %v5537
      %v5639 = vmul.f32 %v5538, %v5538
      %v5640 = vmul.f32 %v5539, %v5539
      %v5641 = vmul.f32 %v5540, %v5540
      %v5642 = vmul.f32 %v5541, %v5541
      %v5643 = vmul.f32 %v5542, %v5542
      %v5644 = vmul.f32 %v5543, %v5543
      %v5645 = vmul.f32 %v5544, %v5544
      %v5646 = vmul.f32 %v5545, %v5545
      %v5647 = vmul.f32 %v5546, %v5546
      %v5648 = vmul.f32 %v5547, %v5547
      %v5649 = vmul.f32 %v5548, %v5548
      %v5650 = vmul.f32 %v5549, %v5549
      %v5651 = vmul.f32 %v5550, %v5550
      %v5652 = vmul.f32 %v5551, %v5551
      %v5653 = vmul.f32 %v5552, %v5552
      %v5654 = vmul.f32 %v5553, %v5553
      %v5655 = vmul.f32 %v5554, %v5554
      %v5656 = vmul.f32 %v5555, %v5555
      %v5657 = vmul.f32 %v5556, %v5556
      %v5658 = vmul.f32 %v5557, %v5557
      %v5659 = vmul.f32 %v5558, %v5558
      %v5660 = vmul.f32 %v5559, %v5559
      %v5661 = vmul.f32 %v5560, %v5560
      %v5662 = vsel %vm1489, %v5630, 0.0
      %v5663 = vsel %vm1489, %v5631, 0.0
      %v5664 = vadd.f32 %v5662, %v5663
      %v5665 = vsel %vm1489, %v5632, 0.0
      %v5666 = vadd.f32 %v5664, %v5665
      %v5667 = vsel %vm1489, %v5633, 0.0
      %v5668 = vadd.f32 %v5666, %v5667
      %v5669 = vsel %vm1489, %v5634, 0.0
      %v5670 = vadd.f32 %v5668, %v5669
      %v5671 = vsel %vm1489, %v5635, 0.0
      %v5672 = vadd.f32 %v5670, %v5671
      %v5673 = vsel %vm1489, %v5636, 0.0
      %v5674 = vadd.f32 %v5672, %v5673
      %v5675 = vsel %vm1489, %v5637, 0.0
      %v5676 = vadd.f32 %v5674, %v5675
      %v5677 = vsel %vm1489, %v5638, 0.0
      %v5678 = vadd.f32 %v5676, %v5677
      %v5679 = vsel %vm1489, %v5639, 0.0
      %v5680 = vadd.f32 %v5678, %v5679
      %v5681 = vsel %vm1489, %v5640, 0.0
      %v5682 = vadd.f32 %v5680, %v5681
      %v5683 = vsel %vm1489, %v5641, 0.0
      %v5684 = vadd.f32 %v5682, %v5683
      %v5685 = vsel %vm1489, %v5642, 0.0
      %v5686 = vadd.f32 %v5684, %v5685
      %v5687 = vsel %vm1489, %v5643, 0.0
      %v5688 = vadd.f32 %v5686, %v5687
      %v5689 = vsel %vm1489, %v5644, 0.0
      %v5690 = vadd.f32 %v5688, %v5689
      %v5691 = vsel %vm1489, %v5645, 0.0
      %v5692 = vadd.f32 %v5690, %v5691
      %v5693 = vsel %vm1489, %v5646, 0.0
      %v5694 = vadd.f32 %v5692, %v5693
      %v5695 = vsel %vm1489, %v5647, 0.0
      %v5696 = vadd.f32 %v5694, %v5695
      %v5697 = vsel %vm1489, %v5648, 0.0
      %v5698 = vadd.f32 %v5696, %v5697
      %v5699 = vsel %vm1489, %v5649, 0.0
      %v5700 = vadd.f32 %v5698, %v5699
      %v5701 = vsel %vm1489, %v5650, 0.0
      %v5702 = vadd.f32 %v5700, %v5701
      %v5703 = vsel %vm1489, %v5651, 0.0
      %v5704 = vadd.f32 %v5702, %v5703
      %v5705 = vsel %vm1489, %v5652, 0.0
      %v5706 = vadd.f32 %v5704, %v5705
      %v5707 = vsel %vm1489, %v5653, 0.0
      %v5708 = vadd.f32 %v5706, %v5707
      %v5709 = vsel %vm1489, %v5654, 0.0
      %v5710 = vadd.f32 %v5708, %v5709
      %v5711 = vsel %vm1489, %v5655, 0.0
      %v5712 = vadd.f32 %v5710, %v5711
      %v5713 = vsel %vm1489, %v5656, 0.0
      %v5714 = vadd.f32 %v5712, %v5713
      %v5715 = vsel %vm1489, %v5657, 0.0
      %v5716 = vadd.f32 %v5714, %v5715
      %v5717 = vsel %vm1489, %v5658, 0.0
      %v5718 = vadd.f32 %v5716, %v5717
      %v5719 = vsel %vm1489, %v5659, 0.0
      %v5720 = vadd.f32 %v5718, %v5719
      %v5721 = vsel %vm1489, %v5660, 0.0
      %v5722 = vadd.f32 %v5720, %v5721
      %v5723 = vsel %vm1489, %v5661, 0.0
      %v5724 = vadd.f32 %v5722, %v5723
      %v5725 = vrot.slane %v5724, 4
      %v5726 = vadd.f32 %v5724, %v5725
      %v5727 = vrot.slane %v5726, 2
      %v5728 = vadd.f32 %v5726, %v5727
      %v5729 = vrot.slane %v5728, 1
      %v5730 = vadd.f32 %v5728, %v5729
      %vm5731 = vcmask 1040384
      %v5732 = vsel %vm5731, %v5629, %v5730
      %vm5733 = vcmask 25600
      %5734 = vst.msk [vmem:[%s235] sm:$0x3] %vm5733, %v5732
      %v5735 = vpack.c.bf16 %v5530, %v5529
      %v5736 = vpack.c.bf16 %v5532, %v5531
      %v5737 = vpack.c.bf16 %v5534, %v5533
      %v5738 = vpack.c.bf16 %v5536, %v5535
      %v5739 = vpack.c.bf16 %v5538, %v5537
      %v5740 = vpack.c.bf16 %v5540, %v5539
      %v5741 = vpack.c.bf16 %v5542, %v5541
      %v5742 = vpack.c.bf16 %v5544, %v5543
      %v5743 = vpack.c.bf16 %v5546, %v5545
      %v5744 = vpack.c.bf16 %v5548, %v5547
      %v5745 = vpack.c.bf16 %v5550, %v5549
      %v5746 = vpack.c.bf16 %v5552, %v5551
      %v5747 = vpack.c.bf16 %v5554, %v5553
      %v5748 = vpack.c.bf16 %v5556, %v5555
      %v5749 = vpack.c.bf16 %v5558, %v5557
      %v5750 = vpack.c.bf16 %v5560, %v5559
      %v5767 = vunpack.c.l.b16 %v5735
      %v5768 = vunpack.c.h.b16 %v5735
      %v5769 = vunpack.c.l.b16 %v5736
      %v5770 = vunpack.c.h.b16 %v5736
      %v5771 = vunpack.c.l.b16 %v5737
      %v5772 = vunpack.c.h.b16 %v5737
      %v5773 = vunpack.c.l.b16 %v5738
      %v5774 = vunpack.c.h.b16 %v5738
      %v5775 = vunpack.c.l.b16 %v5739
      %v5776 = vunpack.c.h.b16 %v5739
      %v5777 = vunpack.c.l.b16 %v5740
      %v5778 = vunpack.c.h.b16 %v5740
      %v5779 = vunpack.c.l.b16 %v5741
      %v5780 = vunpack.c.h.b16 %v5741
      %v5781 = vunpack.c.l.b16 %v5742
      %v5782 = vunpack.c.h.b16 %v5742
      %v5783 = vunpack.c.l.b16 %v5743
      %v5784 = vunpack.c.h.b16 %v5743
      %v5785 = vunpack.c.l.b16 %v5744
      %v5786 = vunpack.c.h.b16 %v5744
      %v5787 = vunpack.c.l.b16 %v5745
      %v5788 = vunpack.c.h.b16 %v5745
      %v5789 = vunpack.c.l.b16 %v5746
      %v5790 = vunpack.c.h.b16 %v5746
      %v5791 = vunpack.c.l.b16 %v5747
      %v5792 = vunpack.c.h.b16 %v5747
      %v5793 = vunpack.c.l.b16 %v5748
      %v5794 = vunpack.c.h.b16 %v5748
      %v5795 = vunpack.c.l.b16 %v5749
      %v5796 = vunpack.c.h.b16 %v5749
      %v5797 = vunpack.c.l.b16 %v5750
      %v5798 = vunpack.c.h.b16 %v5750
      %v5799 = vpack.c.b16 %v5767, %v5767
      %v5800 = vpack.c.b16 %v5768, %v5768
      %v5801 = vpack.c.b16 %v5769, %v5769
      %v5802 = vpack.c.b16 %v5770, %v5770
      %v5803 = vpack.c.b16 %v5771, %v5771
      %v5804 = vpack.c.b16 %v5772, %v5772
      %v5805 = vpack.c.b16 %v5773, %v5773
      %v5806 = vpack.c.b16 %v5774, %v5774
      %v5807 = vpack.c.b16 %v5775, %v5775
      %v5808 = vpack.c.b16 %v5776, %v5776
      %v5809 = vpack.c.b16 %v5777, %v5777
      %v5810 = vpack.c.b16 %v5778, %v5778
      %v5811 = vpack.c.b16 %v5779, %v5779
      %v5812 = vpack.c.b16 %v5780, %v5780
      %v5813 = vpack.c.b16 %v5781, %v5781
      %v5814 = vpack.c.b16 %v5782, %v5782
      %v5815 = vpack.c.b16 %v5783, %v5783
      %v5816 = vpack.c.b16 %v5784, %v5784
      %v5817 = vpack.c.b16 %v5785, %v5785
      %v5818 = vpack.c.b16 %v5786, %v5786
      %v5819 = vpack.c.b16 %v5787, %v5787
      %v5820 = vpack.c.b16 %v5788, %v5788
      %v5821 = vpack.c.b16 %v5789, %v5789
      %v5822 = vpack.c.b16 %v5790, %v5790
      %v5823 = vpack.c.b16 %v5791, %v5791
      %v5824 = vpack.c.b16 %v5792, %v5792
      %v5825 = vpack.c.b16 %v5793, %v5793
      %v5826 = vpack.c.b16 %v5794, %v5794
      %v5827 = vpack.c.b16 %v5795, %v5795
      %v5828 = vpack.c.b16 %v5796, %v5796
      %v5829 = vpack.c.b16 %v5797, %v5797
      %v5830 = vpack.c.b16 %v5798, %v5798
      %5863 = vst.msk [vmem:[%s231] sm:$0xf] %vm237, %v5799
      %5864 = vst.msk [vmem:[%s231 + $0x4] sm:$0xf] %vm237, %v5800
      %5865 = vst.msk [vmem:[%s231 + $0x8] sm:$0xf] %vm237, %v5801
      %5866 = vst.msk [vmem:[%s231 + $0xc] sm:$0xf] %vm237, %v5802
      %5867 = vst.msk [vmem:[%s231 + $0x10] sm:$0xf] %vm237, %v5803
      %5868 = vst.msk [vmem:[%s231 + $0x14] sm:$0xf] %vm237, %v5804
      %5869 = vst.msk [vmem:[%s231 + $0x18] sm:$0xf] %vm237, %v5805
      %5870 = vst.msk [vmem:[%s231 + $0x1c] sm:$0xf] %vm237, %v5806
      %5871 = vst.msk [vmem:[%s231 + $0x20] sm:$0xf] %vm237, %v5807
      %5872 = vst.msk [vmem:[%s231 + $0x24] sm:$0xf] %vm237, %v5808
      %5873 = vst.msk [vmem:[%s231 + $0x28] sm:$0xf] %vm237, %v5809
      %5874 = vst.msk [vmem:[%s231 + $0x2c] sm:$0xf] %vm237, %v5810
      %5875 = vst.msk [vmem:[%s231 + $0x30] sm:$0xf] %vm237, %v5811
      %5876 = vst.msk [vmem:[%s231 + $0x34] sm:$0xf] %vm237, %v5812
      %5877 = vst.msk [vmem:[%s231 + $0x38] sm:$0xf] %vm237, %v5813
      %5878 = vst.msk [vmem:[%s231 + $0x3c] sm:$0xf] %vm237, %v5814
      %5879 = vst.msk [vmem:[%s231 + $0x40] sm:$0xf] %vm237, %v5815
      %5880 = vst.msk [vmem:[%s231 + $0x44] sm:$0xf] %vm237, %v5816
      %5881 = vst.msk [vmem:[%s231 + $0x48] sm:$0xf] %vm237, %v5817
      %5882 = vst.msk [vmem:[%s231 + $0x4c] sm:$0xf] %vm237, %v5818
      %5883 = vst.msk [vmem:[%s231 + $0x50] sm:$0xf] %vm237, %v5819
      %5884 = vst.msk [vmem:[%s231 + $0x54] sm:$0xf] %vm237, %v5820
      %5885 = vst.msk [vmem:[%s231 + $0x58] sm:$0xf] %vm237, %v5821
      %5886 = vst.msk [vmem:[%s231 + $0x5c] sm:$0xf] %vm237, %v5822
      %5887 = vst.msk [vmem:[%s231 + $0x60] sm:$0xf] %vm237, %v5823
      %5888 = vst.msk [vmem:[%s231 + $0x64] sm:$0xf] %vm237, %v5824
      %5889 = vst.msk [vmem:[%s231 + $0x68] sm:$0xf] %vm237, %v5825
      %5890 = vst.msk [vmem:[%s231 + $0x6c] sm:$0xf] %vm237, %v5826
      %5891 = vst.msk [vmem:[%s231 + $0x70] sm:$0xf] %vm237, %v5827
      %5892 = vst.msk [vmem:[%s231 + $0x74] sm:$0xf] %vm237, %v5828
      %5893 = vst.msk [vmem:[%s231 + $0x78] sm:$0xf] %vm237, %v5829
      %5894 = vst.msk [vmem:[%s231 + $0x7c] sm:$0xf] %vm237, %v5830
      %p5895 = scmp.lt.s32.totalorder %s17, 1
      %s5896 = scalar_select %p5895, %s17, 1
      %s5897 = smul.addr %s5896, 32
      %s5898 = smul.addr %s5897, 4
      %s5899 = scalar_lea.vmem %s4, %s5898
      %p5900 = scmp.lt.s32.totalorder %s17, 1
      %s5901 = scalar_select %p5900, %s17, 1
      %s5902 = smul.addr %s5901, 2
      %s5903 = scalar_lea.vmem %s5, %s5902
      // Predicated region
      $region37: #{bottleneck_forward.5} parent=35 // pred_check
        %p5904 = pneg %p124
      $region38: #{bottleneck_forward.5} parent=35 // pred_check_branch
        %5906 = sbr.rel (%p5904) target = $region40
      $region39: #{bottleneck_forward.5} parent=35 // pred_region
        _
      $region40: #{bottleneck_forward.5} parent=35 // pred_fallthru
        _
      // Predicated region
      $region41: #{bottleneck_forward.5} parent=35 // pred_check
        %p5907 = pneg %p150
      $region42: #{bottleneck_forward.5} parent=35 // pred_check_branch
        %5909 = sbr.rel (%p5907) target = $region44
      $region43: #{bottleneck_forward.5} parent=35 // pred_region
        _
      $region44: #{bottleneck_forward.5} parent=35 // pred_fallthru
        _
    $region36: #{bottleneck_forward.5} parent=5 // pred_fallthru
      _
    %p5910 = scmp.le.s32.totalorder 2, %s12
    // Predicated region
    $region45: #{bottleneck_forward.5} parent=5 // pred_check
      %p5911 = pneg %p5910
    $region46: #{bottleneck_forward.5} parent=5 // pred_check_branch
      %5913 = sbr.rel (%p5911) target = $region48
    $region47: #{bottleneck_forward.5} parent=5 // pred_region
      %s5914 = ssub.s32 %s12, 2
      // Predicated region
      $region49: #{bottleneck_forward.5} parent=47 // pred_check
        %p5915 = pneg %p130
      $region50: #{bottleneck_forward.5} parent=47 // pred_check_branch
        %5917 = sbr.rel (%p5915) target = $region52
      $region51: #{bottleneck_forward.5} parent=47 // pred_region
        %p5918 = scmp.lt.s32.totalorder %s18, 1
        %s5919 = scalar_select %p5918, %s18, 1
        %s5920 = smul.addr %s5919, 32
        %s5921 = smul.addr %s5920, 4
        %s5922 = scalar_lea.vmem %s4, %s5921
      $region52: #{bottleneck_forward.5} parent=47 // pred_fallthru
        _
      // Predicated region
      $region53: #{bottleneck_forward.5} parent=47 // pred_check
        %p5923 = pneg %p156
      $region54: #{bottleneck_forward.5} parent=47 // pred_check_branch
        %5925 = sbr.rel (%p5923) target = $region56
      $region55: #{bottleneck_forward.5} parent=47 // pred_region
        %p5926 = scmp.lt.s32.totalorder %s18, 1
        %s5927 = scalar_select %p5926, %s18, 1
        %s5928 = smul.addr %s5927, 2
        %s5929 = scalar_lea.vmem %s5, %s5928
      $region56: #{bottleneck_forward.5} parent=47 // pred_fallthru
        _
    $region48: #{bottleneck_forward.5} parent=5 // pred_fallthru
      _
  $region6: #{bottleneck_forward.5} parent=0 // loop_footer
    %s16 = sadd.s32 1, %s12
  $region7: #{bottleneck_forward.5} parent=0 // loop_footer_branch
    %11 = sbr.rel target = $region3
  $region8: #{bottleneck_forward.5} parent=0 // loop_exit
    _

</llo_original>
